<compile_context>
chip_gen: v6e
topology: v6e:2x2x1
jax: 0.10.0
libtpu: 0.0.40
codegen_flags: <defaults>
</compile_context>

<pallas_src>
import functools
import math

import jax
import jax.numpy as jnp
import numpy as np
from jax.experimental import pallas as pl
from jax.experimental.pallas import tpu as pltpu

_SQRT_2PI = math.sqrt(2.0 * math.pi)
_PRIMES = (1, 2654435761, 805459861)


# ------------------------------------------------------------------ kernels --

def _corner_coeffs_idxs(posi, frac, one_m, *, resolution, codebook_size):
    """All 8 corner trilinear weights and hashed table indices.

    posi/frac/one_m are [3, T] (xyz on sublanes, points on lanes).
    Returns two lists of eight [1, T] arrays (float32 coeffs, int32 indices).
    """
    coeffs, idxs = [], []
    dense = resolution ** 3 <= codebook_size
    # codebook_size is a power of two (load-bearing): the int64 torch hash
    # mod codebook equals this low-bit int32 computation.
    mask = codebook_size - 1
    p1 = _PRIMES[1] % codebook_size
    p2 = _PRIMES[2] % codebook_size
    for k in range(8):
        bx, by, bz = (k >> 2) & 1, (k >> 1) & 1, k & 1
        c0 = posi[0:1, :] + bx
        c1 = posi[1:2, :] + by
        c2 = posi[2:3, :] + bz
        w0 = frac[0:1, :] if bx else one_m[0:1, :]
        w1 = frac[1:2, :] if by else one_m[1:2, :]
        w2 = frac[2:3, :] if bz else one_m[2:3, :]
        coeffs.append(w0 * w1 * w2)
        if dense:
            idxs.append(c0 + c1 * resolution + c2 * (resolution * resolution))
        else:
            idxs.append(((c0 & mask) ^ ((c1 * p1) & mask)
                         ^ ((c2 * p2) & mask)) & mask)
    return coeffs, idxs


def _splash_encoding_kernel(coords_ref, *refs, lods, feature_dim,
                            codebook_size, num_gauss, gather_dtype):
    """Fused all-LoD kernel. Statically unrolled over LoDs and corners.

    coords_ref: [3, T]           (xyz sublanes, points on lanes)
    refs[:n_lods]: per-LoD packed tables, transposed to [C, num_idx]
    refs[n_lods]: feat out [F*num_lods, T]
    refs[n_lods+1] (if any splash LoD): gmm out [num_gauss, T]
    """
    n_lods = len(lods)
    table_refs = refs[:n_lods]
    feat_ref = refs[n_lods]
    gmm_ref = refs[n_lods + 1] if num_gauss > 0 else None
    F = feature_dim

    coords = coords_ref[...]                              # [3, T]
    T = coords.shape[1]
    cx = coords[0:1, :]
    cy = coords[1:2, :]
    cz = coords[2:3, :]

    feat_rows, gmm_rows = [], []
    for li, (resolution, S) in enumerate(lods):
        table = table_refs[li][...]                       # [C, num_idx]
        num_idx = table.shape[1]

        x = jnp.clip(float(resolution) * coords, 0.0,
                     float(resolution - 1 - 0.001))       # [3, T]
        pos = jnp.floor(x)
        frac = x - pos
        one_m = 1.0 - frac
        posi = pos.astype(jnp.int32)
        coeffs, idxs = _corner_coeffs_idxs(
            posi, frac, one_m, resolution=resolution,
            codebook_size=codebook_size)

        if S == 0:
            # Plain hash-grid LoD: fold the 8 trilinear weights into one
            # weighted one-hot and do a single [F,num_idx]x[num_idx,T] matmul.
            iota = jax.lax.broadcasted_iota(jnp.int32, (num_idx, T), 0)
            w = jnp.where(iota == idxs[0], coeffs[0], 0.0)
            for k in range(1, 8):
                w = w + jnp.where(iota == idxs[k], coeffs[k], 0.0)
            feat_rows.append(
                jnp.dot(table, w, preferred_element_type=jnp.float32))  # [F,T]
        else:
            # Splash LoD: one fused 8-corner gather matmul, then lane-dense
            # Gaussian weighting ([*, 8T] arrays keep points on lanes).
            idx_all = jnp.concatenate(idxs, axis=1)        # [1, 8T]
            coeff_all = jnp.concatenate(coeffs, axis=1)    # [1, 8T]
            iota = jax.lax.broadcasted_iota(jnp.int32, (num_idx, 8 * T), 0)
            one_hot = (iota == idx_all).astype(gather_dtype)   # [num_idx, 8T]
            g = jnp.dot(table.astype(gather_dtype), one_hot,
                        preferred_element_type=jnp.float32)    # [C, 8T]

            mean_x = g[0 * S:1 * S, :]                     # [S, 8T]
            mean_y = g[1 * S:2 * S, :]
            mean_z = g[2 * S:3 * S, :]
            std = jnp.abs(g[3 * S:4 * S, :])
            feat_g = g[4 * S:, :]                          # [F*S, 8T]

            cx8 = jnp.concatenate([cx] * 8, axis=1)        # [1, 8T]
            cy8 = jnp.concatenate([cy] * 8, axis=1)
            cz8 = jnp.concatenate([cz] * 8, axis=1)
            dx = cx8 - mean_x
            dy = cy8 - mean_y
            dz = cz8 - mean_z
            d2 = dx * dx + dy * dy + dz * dz               # [S, 8T]

            sq_dist = d2 / (2.0 * std * std + 1e-7)
            gau_w = jnp.exp(-sq_dist) / (_SQRT_2PI * std + 1e-7)   # [S, 8T]
            # NOTE: no epsilon here, matching the reference/torch semantics.
            dist_w = d2 / (std * std)
            gmm_cand = 0.5 * dist_w - jnp.log(coeff_all + 1e-7)    # [S, 8T]

            # min over S splashes (sublanes), then over the 8 corner chunks
            # (aligned lane slices of width T — no relayout needed).
            m = jnp.min(gmm_cand, axis=0, keepdims=True)   # [1, 8T]
            gm = m[:, 0:T]
            for k in range(1, 8):
                gm = jnp.minimum(gm, m[:, k * T:(k + 1) * T])
            gmm_rows.append(gm)                            # [1, T]

            f_rows = []
            for f in range(F):
                s = jnp.sum(feat_g[f * S:(f + 1) * S, :] * gau_w,
                            axis=0, keepdims=True) * coeff_all     # [1, 8T]
                acc = s[:, 0:T]
                for k in range(1, 8):
                    acc = acc + s[:, k * T:(k + 1) * T]
                f_rows.append(acc)
            feat_rows.append(jnp.concatenate(f_rows, axis=0))      # [F, T]

    feat_ref[...] = jnp.concatenate(feat_rows, axis=0)     # [F*num_lods, T]
    if gmm_ref is not None:
        gmm_ref[...] = jnp.concatenate(gmm_rows, axis=0)   # [num_gauss, T]


# ----------------------------------------------------------------- encoding --

class SplashEncodingPallas:
    """JAX/Pallas port of SplashEncoding.forward (interpolate semantics).

    Returns (feats [B, Ns, F*num_lods], gmm [B*Ns, num_gaussian_lods]) — the
    gmm columns already correspond only to LoDs with splashes, which is what
    forward()'s `gmm[:, num_splashes > 0]` masking selects.
    """

    def __init__(self, key, base_resolution=4, per_level_scale=1.5, n_levels=4,
                 n_features_per_level=2, num_splashes=4, log2_hashmap_size=8,
                 splits=(0.5, 0.75), tile_n=256, use_bf16_gather=False):
        splits = sorted(splits, reverse=True)
        self.num_lods = n_levels
        self.F = n_features_per_level
        self.hashmap_size = 2 ** log2_hashmap_size
        assert self.hashmap_size & (self.hashmap_size - 1) == 0
        self.tile_n = tile_n
        self.use_bf16_gather = use_bf16_gather

        self.resolutions, self.num_splashes = [], []
        for i in range(n_levels):
            self.resolutions.append(int(base_resolution * per_level_scale ** i))
            ns = 0
            for j, sp in enumerate(splits):
                if i >= n_levels * sp:
                    ns = num_splashes // (2 ** j)
                    break
            self.num_splashes.append(ns)
        self.num_gauss = sum(1 for s in self.num_splashes if s > 0)

        self.feat_begin, self.gau_begin, self.num_idxes = [0], [0], []
        for i in range(n_levels):
            ni = min(self.resolutions[i] ** 3, self.hashmap_size)
            self.num_idxes.append(ni)
            self.feat_begin.append(self.feat_begin[-1] + ni * max(self.num_splashes[i], 1))
            self.gau_begin.append(self.gau_begin[-1] + ni * self.num_splashes[i])
        self.total_feats = self.feat_begin[-1]
        self.total_gaus = self.gau_begin[-1]

        # Deterministic synthetic parameters (match __init__ distributions).
        k1, k2, k3, k4 = jax.random.split(key, 4)
        self.feats = jax.random.normal(k1, (self.total_feats, self.F), jnp.float32) * 0.01
        pts = jax.random.normal(k2, (self.total_gaus, 3), jnp.float32)
        r = jnp.sqrt(jax.random.uniform(k3, (self.total_gaus, 1), jnp.float32))
        pts = pts / jnp.linalg.norm(pts, axis=1, keepdims=True) * r
        self.means = pts * 0.25 + 0.5
        self.stds = 0.125 + 0.02 * jax.random.normal(k4, (self.total_gaus, 1), jnp.float32)

        # Pre-pack per-LoD parameter tables transposed to [C, num_idx], so the
        # in-kernel gather matmul produces lane-dense (points-on-lanes) tiles.
        #   splash LoDs: rows = mean_x(S) | mean_y(S) | mean_z(S) | std(S) | feat_f(S)...
        #   plain  LoDs: rows = F feature rows
        self.tables = []
        for i in range(n_levels):
            ni, S = self.num_idxes[i], self.num_splashes[i]
            feats_l = self.feats[self.feat_begin[i]:self.feat_begin[i + 1]]
            feats_l = feats_l.reshape(ni, max(S, 1), self.F)
            if S > 0:
                means_l = self.means[self.gau_begin[i]:self.gau_begin[i + 1]].reshape(ni, S, 3)
                stds_l = self.stds[self.gau_begin[i]:self.gau_begin[i + 1]].reshape(ni, S, 1)
                rows = [means_l[:, :, 0].T, means_l[:, :, 1].T, means_l[:, :, 2].T,
                        stds_l[:, :, 0].T]
                rows += [feats_l[:, :, f].T for f in range(self.F)]
                self.tables.append(jnp.concatenate(rows, axis=0))      # [S*(4+F), ni]
            else:
                self.tables.append(feats_l.reshape(ni, self.F).T)      # [F, ni]

    def __call__(self, coords):
        output_shape = coords.shape[:-1]
        c2 = coords.reshape(-1, 3).astype(jnp.float32)
        N = c2.shape[0]
        T = self.tile_n
        n_pad = max(T, ((N + T - 1) // T) * T)
        c_pad = jnp.pad(c2, ((0, n_pad - N), (0, 0)))   # zeros are valid coords
        coords_t = c_pad.T                               # [3, n_pad]

        n_lods, Fd, num_gauss = self.num_lods, self.F, self.num_gauss
        kernel = functools.partial(
            _splash_encoding_kernel,
            lods=tuple(zip(self.resolutions, self.num_splashes)),
            feature_dim=Fd, codebook_size=self.hashmap_size,
            num_gauss=num_gauss,
            gather_dtype=jnp.bfloat16 if self.use_bf16_gather else jnp.float32)

        in_specs = [pl.BlockSpec((3, T), lambda i: (0, i))]
        for t in self.tables:                            # tables stay resident
            in_specs.append(pl.BlockSpec(t.shape, lambda i: (0, 0)))

        out_shapes = [jax.ShapeDtypeStruct((Fd * n_lods, n_pad), jnp.float32)]
        out_specs = [pl.BlockSpec((Fd * n_lods, T), lambda i: (0, i))]
        if num_gauss > 0:
            out_shapes.append(jax.ShapeDtypeStruct((num_gauss, n_pad), jnp.float32))
            out_specs.append(pl.BlockSpec((num_gauss, T), lambda i: (0, i)))

        outs = pl.pallas_call(
            kernel,
            out_shape=tuple(out_shapes),
            grid=(n_pad // T,),
            in_specs=in_specs,
            out_specs=tuple(out_specs),
            compiler_params=pltpu.CompilerParams(
                dimension_semantics=("parallel",)),
        )(coords_t, *self.tables)

        feats = outs[0].T[:N]                            # [N, F*num_lods]
        feats = feats.reshape(*output_shape, feats.shape[-1])
        if num_gauss > 0:
            gmms = outs[1].T[:N]                         # [N, num_gauss]
        else:
            gmms = jnp.zeros((N, 0), jnp.float32)
        return feats, gmms


# ---------------------------------------------------------- pure-JAX reference

def _reference_forward(enc, coords):
    output_shape = coords.shape[:-1]
    c = coords.reshape(-1, 3).astype(jnp.float32)
    N = c.shape[0]
    offsets = jnp.array([[(k >> 2) & 1, (k >> 1) & 1, k & 1] for k in range(8)],
                        jnp.int32)
    feat_blocks, gmm_blocks = [], []
    for i in range(enc.num_lods):
        res, S, ni, F = enc.resolutions[i], enc.num_splashes[i], enc.num_idxes[i], enc.F
        feats_l = enc.feats[enc.feat_begin[i]:enc.feat_begin[i + 1]].reshape(ni, max(S, 1), F)
        x = jnp.clip(res * c, 0.0, res - 1 - 0.001)
        pos = jnp.floor(x)
        frac = x - pos
        one_m = 1.0 - frac
        posi = pos.astype(jnp.int32)
        corners = posi[:, None, :] + offsets[None]
        w = jnp.where(offsets[None].astype(bool), frac[:, None, :], one_m[:, None, :])
        coeffs = jnp.prod(w, axis=-1)                                # [N, 8]
        if res ** 3 <= enc.hashmap_size:
            idx = corners[..., 0] + corners[..., 1] * res + corners[..., 2] * res * res
        else:
            m = enc.hashmap_size - 1
            p1 = _PRIMES[1] % enc.hashmap_size
            p2 = _PRIMES[2] % enc.hashmap_size
            idx = ((corners[..., 0] & m) ^ ((corners[..., 1] * p1) & m)
                   ^ ((corners[..., 2] * p2) & m)) & m
        flat = idx.reshape(-1)
        if S > 0:
            means_l = enc.means[enc.gau_begin[i]:enc.gau_begin[i + 1]].reshape(ni, S, 3)
            stds_l = enc.stds[enc.gau_begin[i]:enc.gau_begin[i + 1]].reshape(ni, S, 1)
            mean = jnp.take(means_l, flat, axis=0).reshape(N, 8, S, 3)
            std = jnp.abs(jnp.take(stds_l, flat, axis=0).reshape(N, 8, S, 1))
            ft = jnp.take(feats_l, flat, axis=0).reshape(N, 8, S, F)
            diff = c[:, None, None, :] - mean
            sq = jnp.sum(diff ** 2 / (2 * std ** 2 + 1e-7), axis=-1, keepdims=True)
            gw = jnp.exp(-sq) / (_SQRT_2PI * std + 1e-7)
            dw = jnp.sum(jnp.abs(diff / std) ** 2, axis=-1, keepdims=True)
            cf = coeffs[:, :, None, None]
            gmm = jnp.min((0.5 * dw - jnp.log(cf + 1e-7)).reshape(N, 8 * S), axis=-1)
            fc = jnp.sum(ft * gw * cf, axis=(1, 2))
            gmm_blocks.append(gmm[:, None])
        else:
            ft = jnp.take(feats_l.reshape(ni, F), flat, axis=0).reshape(N, 8, F)
            fc = jnp.sum(ft * coeffs[:, :, None], axis=1)
        feat_blocks.append(fc)
    feats = jnp.concatenate(feat_blocks, axis=-1).reshape(*output_shape, -1)
    gmms = jnp.concatenate(gmm_blocks, axis=-1)
    return feats, gmms


# --------------------------------------------------------------------- main --

if __name__ == "__main__":
    key = jax.random.PRNGKey(0)
    pkey, ckey = jax.random.split(key)

    # Small config consistent with the module: 4 LoDs, 2 feats/level,
    # splashes on the last two LoDs ([0, 0, 2, 4]).
    enc = SplashEncodingPallas(pkey, base_resolution=4, per_level_scale=1.5,
                               n_levels=4, n_features_per_level=2,
                               num_splashes=4, log2_hashmap_size=8,
                               splits=(0.5, 0.75), tile_n=256)

    coords = jax.random.uniform(ckey, (2, 8, 3), jnp.float32)    # [batch, samples, 3]

    feats, gmms = enc(coords)
    jax.block_until_ready((feats, gmms))

    assert feats.shape == (2, 8, enc.F * enc.num_lods), feats.shape
    assert gmms.shape == (16, enc.num_gauss), gmms.shape

    ref_feats, ref_gmms = _reference_forward(enc, coords)
    np.testing.assert_allclose(np.asarray(feats), np.asarray(ref_feats),
                               rtol=1e-2, atol=1e-4)
    np.testing.assert_allclose(np.asarray(gmms), np.asarray(ref_gmms),
                               rtol=1e-2, atol=1e-3)

    print("KERNEL_OK")
</pallas_src>

<mosaic_0001>
module attributes {stable_mosaic.version = 11 : i64} {
  func.func @_splash_encoding_kernel(%arg0: i32, %arg1: memref<3x256xf32, #tpu.memory_space<vmem>>, %arg2: memref<2x64xf32, #tpu.memory_space<vmem>>, %arg3: memref<2x216xf32, #tpu.memory_space<vmem>>, %arg4: memref<12x256xf32, #tpu.memory_space<vmem>>, %arg5: memref<24x256xf32, #tpu.memory_space<vmem>>, %arg6: memref<8x256xf32, #tpu.memory_space<vmem>>, %arg7: memref<2x256xf32, #tpu.memory_space<vmem>>) attributes {dimension_semantics = [#tpu.dimension_semantics<parallel>], iteration_bounds = array<i64: 1>, scalar_prefetch = 0 : i64, scratch_operands = 0 : i64, tpu.core_type = #tpu.core_type<tc>, window_params = [{transform_indices = @transform_0, window_bounds = array<i64: 3, 256>}, {pipeline_mode = #tpu.pipeline_mode<synchronous>, transform_indices = @transform_1, window_bounds = array<i64: 2, 64>}, {pipeline_mode = #tpu.pipeline_mode<synchronous>, transform_indices = @transform_2, window_bounds = array<i64: 2, 216>}, {pipeline_mode = #tpu.pipeline_mode<synchronous>, transform_indices = @transform_3, window_bounds = array<i64: 12, 256>}, {pipeline_mode = #tpu.pipeline_mode<synchronous>, transform_indices = @transform_4, window_bounds = array<i64: 24, 256>}, {transform_indices = @transform_5, window_bounds = array<i64: 8, 256>}, {transform_indices = @transform_6, window_bounds = array<i64: 2, 256>}]} {
    %c0 = arith.constant 0 : index
    %c0_0 = arith.constant 0 : index
    %0 = vector.load %arg1[%c0, %c0_0] : memref<3x256xf32, #tpu.memory_space<vmem>>, vector<3x256xf32>
    %1 = vector.extract_strided_slice %0 {offsets = [0, 0], sizes = [1, 256], strides = [1, 1]} : vector<3x256xf32> to vector<1x256xf32>
    %2 = vector.extract_strided_slice %0 {offsets = [1, 0], sizes = [1, 256], strides = [1, 1]} : vector<3x256xf32> to vector<1x256xf32>
    %3 = vector.extract_strided_slice %0 {offsets = [2, 0], sizes = [1, 256], strides = [1, 1]} : vector<3x256xf32> to vector<1x256xf32>
    %c0_1 = arith.constant 0 : index
    %c0_2 = arith.constant 0 : index
    %4 = vector.load %arg2[%c0_1, %c0_2] : memref<2x64xf32, #tpu.memory_space<vmem>>, vector<2x64xf32>
    %cst = arith.constant 4.000000e+00 : f32
    %5 = vector.broadcast %cst : f32 to vector<3x256xf32>
    %6 = arith.mulf %5, %0 : vector<3x256xf32>
    %cst_3 = arith.constant 0.000000e+00 : f32
    %cst_4 = arith.constant 2.999000e+00 : f32
    %7 = vector.broadcast %cst_3 : f32 to vector<3x256xf32>
    %8 = arith.maximumf %7, %6 : vector<3x256xf32>
    %9 = vector.broadcast %cst_4 : f32 to vector<3x256xf32>
    %10 = arith.minimumf %9, %8 : vector<3x256xf32>
    %11 = math.floor %10 : vector<3x256xf32>
    %12 = arith.subf %10, %11 : vector<3x256xf32>
    %cst_5 = arith.constant 1.000000e+00 : f32
    %13 = vector.broadcast %cst_5 : f32 to vector<3x256xf32>
    %14 = arith.subf %13, %12 : vector<3x256xf32>
    %15 = arith.fptosi %11 : vector<3x256xf32> to vector<3x256xi32>
    %16 = vector.extract_strided_slice %15 {offsets = [0, 0], sizes = [1, 256], strides = [1, 1]} : vector<3x256xi32> to vector<1x256xi32>
    %c0_i32 = arith.constant 0 : i32
    %17 = vector.broadcast %c0_i32 : i32 to vector<1x256xi32>
    %18 = arith.addi %16, %17 : vector<1x256xi32>
    %19 = vector.extract_strided_slice %15 {offsets = [1, 0], sizes = [1, 256], strides = [1, 1]} : vector<3x256xi32> to vector<1x256xi32>
    %c0_i32_6 = arith.constant 0 : i32
    %20 = vector.broadcast %c0_i32_6 : i32 to vector<1x256xi32>
    %21 = arith.addi %19, %20 : vector<1x256xi32>
    %22 = vector.extract_strided_slice %15 {offsets = [2, 0], sizes = [1, 256], strides = [1, 1]} : vector<3x256xi32> to vector<1x256xi32>
    %c0_i32_7 = arith.constant 0 : i32
    %23 = vector.broadcast %c0_i32_7 : i32 to vector<1x256xi32>
    %24 = arith.addi %22, %23 : vector<1x256xi32>
    %25 = vector.extract_strided_slice %14 {offsets = [0, 0], sizes = [1, 256], strides = [1, 1]} : vector<3x256xf32> to vector<1x256xf32>
    %26 = vector.extract_strided_slice %14 {offsets = [1, 0], sizes = [1, 256], strides = [1, 1]} : vector<3x256xf32> to vector<1x256xf32>
    %27 = vector.extract_strided_slice %14 {offsets = [2, 0], sizes = [1, 256], strides = [1, 1]} : vector<3x256xf32> to vector<1x256xf32>
    %28 = arith.mulf %25, %26 : vector<1x256xf32>
    %29 = arith.mulf %28, %27 : vector<1x256xf32>
    %c4_i32 = arith.constant 4 : i32
    %30 = vector.broadcast %c4_i32 : i32 to vector<1x256xi32>
    %31 = arith.muli %21, %30 : vector<1x256xi32>
    %32 = arith.addi %18, %31 : vector<1x256xi32>
    %c16_i32 = arith.constant 16 : i32
    %33 = vector.broadcast %c16_i32 : i32 to vector<1x256xi32>
    %34 = arith.muli %24, %33 : vector<1x256xi32>
    %35 = arith.addi %32, %34 : vector<1x256xi32>
    %36 = vector.extract_strided_slice %15 {offsets = [0, 0], sizes = [1, 256], strides = [1, 1]} : vector<3x256xi32> to vector<1x256xi32>
    %c0_i32_8 = arith.constant 0 : i32
    %37 = vector.broadcast %c0_i32_8 : i32 to vector<1x256xi32>
    %38 = arith.addi %36, %37 : vector<1x256xi32>
    %39 = vector.extract_strided_slice %15 {offsets = [1, 0], sizes = [1, 256], strides = [1, 1]} : vector<3x256xi32> to vector<1x256xi32>
    %c0_i32_9 = arith.constant 0 : i32
    %40 = vector.broadcast %c0_i32_9 : i32 to vector<1x256xi32>
    %41 = arith.addi %39, %40 : vector<1x256xi32>
    %42 = vector.extract_strided_slice %15 {offsets = [2, 0], sizes = [1, 256], strides = [1, 1]} : vector<3x256xi32> to vector<1x256xi32>
    %c1_i32 = arith.constant 1 : i32
    %43 = vector.broadcast %c1_i32 : i32 to vector<1x256xi32>
    %44 = arith.addi %42, %43 : vector<1x256xi32>
    %45 = vector.extract_strided_slice %14 {offsets = [0, 0], sizes = [1, 256], strides = [1, 1]} : vector<3x256xf32> to vector<1x256xf32>
    %46 = vector.extract_strided_slice %14 {offsets = [1, 0], sizes = [1, 256], strides = [1, 1]} : vector<3x256xf32> to vector<1x256xf32>
    %47 = vector.extract_strided_slice %12 {offsets = [2, 0], sizes = [1, 256], strides = [1, 1]} : vector<3x256xf32> to vector<1x256xf32>
    %48 = arith.mulf %45, %46 : vector<1x256xf32>
    %49 = arith.mulf %48, %47 : vector<1x256xf32>
    %c4_i32_10 = arith.constant 4 : i32
    %50 = vector.broadcast %c4_i32_10 : i32 to vector<1x256xi32>
    %51 = arith.muli %41, %50 : vector<1x256xi32>
    %52 = arith.addi %38, %51 : vector<1x256xi32>
    %c16_i32_11 = arith.constant 16 : i32
    %53 = vector.broadcast %c16_i32_11 : i32 to vector<1x256xi32>
    %54 = arith.muli %44, %53 : vector<1x256xi32>
    %55 = arith.addi %52, %54 : vector<1x256xi32>
    %56 = vector.extract_strided_slice %15 {offsets = [0, 0], sizes = [1, 256], strides = [1, 1]} : vector<3x256xi32> to vector<1x256xi32>
    %c0_i32_12 = arith.constant 0 : i32
    %57 = vector.broadcast %c0_i32_12 : i32 to vector<1x256xi32>
    %58 = arith.addi %56, %57 : vector<1x256xi32>
    %59 = vector.extract_strided_slice %15 {offsets = [1, 0], sizes = [1, 256], strides = [1, 1]} : vector<3x256xi32> to vector<1x256xi32>
    %c1_i32_13 = arith.constant 1 : i32
    %60 = vector.broadcast %c1_i32_13 : i32 to vector<1x256xi32>
    %61 = arith.addi %59, %60 : vector<1x256xi32>
    %62 = vector.extract_strided_slice %15 {offsets = [2, 0], sizes = [1, 256], strides = [1, 1]} : vector<3x256xi32> to vector<1x256xi32>
    %c0_i32_14 = arith.constant 0 : i32
    %63 = vector.broadcast %c0_i32_14 : i32 to vector<1x256xi32>
    %64 = arith.addi %62, %63 : vector<1x256xi32>
    %65 = vector.extract_strided_slice %14 {offsets = [0, 0], sizes = [1, 256], strides = [1, 1]} : vector<3x256xf32> to vector<1x256xf32>
    %66 = vector.extract_strided_slice %12 {offsets = [1, 0], sizes = [1, 256], strides = [1, 1]} : vector<3x256xf32> to vector<1x256xf32>
    %67 = vector.extract_strided_slice %14 {offsets = [2, 0], sizes = [1, 256], strides = [1, 1]} : vector<3x256xf32> to vector<1x256xf32>
    %68 = arith.mulf %65, %66 : vector<1x256xf32>
    %69 = arith.mulf %68, %67 : vector<1x256xf32>
    %c4_i32_15 = arith.constant 4 : i32
    %70 = vector.broadcast %c4_i32_15 : i32 to vector<1x256xi32>
    %71 = arith.muli %61, %70 : vector<1x256xi32>
    %72 = arith.addi %58, %71 : vector<1x256xi32>
    %c16_i32_16 = arith.constant 16 : i32
    %73 = vector.broadcast %c16_i32_16 : i32 to vector<1x256xi32>
    %74 = arith.muli %64, %73 : vector<1x256xi32>
    %75 = arith.addi %72, %74 : vector<1x256xi32>
    %76 = vector.extract_strided_slice %15 {offsets = [0, 0], sizes = [1, 256], strides = [1, 1]} : vector<3x256xi32> to vector<1x256xi32>
    %c0_i32_17 = arith.constant 0 : i32
    %77 = vector.broadcast %c0_i32_17 : i32 to vector<1x256xi32>
    %78 = arith.addi %76, %77 : vector<1x256xi32>
    %79 = vector.extract_strided_slice %15 {offsets = [1, 0], sizes = [1, 256], strides = [1, 1]} : vector<3x256xi32> to vector<1x256xi32>
    %c1_i32_18 = arith.constant 1 : i32
    %80 = vector.broadcast %c1_i32_18 : i32 to vector<1x256xi32>
    %81 = arith.addi %79, %80 : vector<1x256xi32>
    %82 = vector.extract_strided_slice %15 {offsets = [2, 0], sizes = [1, 256], strides = [1, 1]} : vector<3x256xi32> to vector<1x256xi32>
    %c1_i32_19 = arith.constant 1 : i32
    %83 = vector.broadcast %c1_i32_19 : i32 to vector<1x256xi32>
    %84 = arith.addi %82, %83 : vector<1x256xi32>
    %85 = vector.extract_strided_slice %14 {offsets = [0, 0], sizes = [1, 256], strides = [1, 1]} : vector<3x256xf32> to vector<1x256xf32>
    %86 = vector.extract_strided_slice %12 {offsets = [1, 0], sizes = [1, 256], strides = [1, 1]} : vector<3x256xf32> to vector<1x256xf32>
    %87 = vector.extract_strided_slice %12 {offsets = [2, 0], sizes = [1, 256], strides = [1, 1]} : vector<3x256xf32> to vector<1x256xf32>
    %88 = arith.mulf %85, %86 : vector<1x256xf32>
    %89 = arith.mulf %88, %87 : vector<1x256xf32>
    %c4_i32_20 = arith.constant 4 : i32
    %90 = vector.broadcast %c4_i32_20 : i32 to vector<1x256xi32>
    %91 = arith.muli %81, %90 : vector<1x256xi32>
    %92 = arith.addi %78, %91 : vector<1x256xi32>
    %c16_i32_21 = arith.constant 16 : i32
    %93 = vector.broadcast %c16_i32_21 : i32 to vector<1x256xi32>
    %94 = arith.muli %84, %93 : vector<1x256xi32>
    %95 = arith.addi %92, %94 : vector<1x256xi32>
    %96 = vector.extract_strided_slice %15 {offsets = [0, 0], sizes = [1, 256], strides = [1, 1]} : vector<3x256xi32> to vector<1x256xi32>
    %c1_i32_22 = arith.constant 1 : i32
    %97 = vector.broadcast %c1_i32_22 : i32 to vector<1x256xi32>
    %98 = arith.addi %96, %97 : vector<1x256xi32>
    %99 = vector.extract_strided_slice %15 {offsets = [1, 0], sizes = [1, 256], strides = [1, 1]} : vector<3x256xi32> to vector<1x256xi32>
    %c0_i32_23 = arith.constant 0 : i32
    %100 = vector.broadcast %c0_i32_23 : i32 to vector<1x256xi32>
    %101 = arith.addi %99, %100 : vector<1x256xi32>
    %102 = vector.extract_strided_slice %15 {offsets = [2, 0], sizes = [1, 256], strides = [1, 1]} : vector<3x256xi32> to vector<1x256xi32>
    %c0_i32_24 = arith.constant 0 : i32
    %103 = vector.broadcast %c0_i32_24 : i32 to vector<1x256xi32>
    %104 = arith.addi %102, %103 : vector<1x256xi32>
    %105 = vector.extract_strided_slice %12 {offsets = [0, 0], sizes = [1, 256], strides = [1, 1]} : vector<3x256xf32> to vector<1x256xf32>
    %106 = vector.extract_strided_slice %14 {offsets = [1, 0], sizes = [1, 256], strides = [1, 1]} : vector<3x256xf32> to vector<1x256xf32>
    %107 = vector.extract_strided_slice %14 {offsets = [2, 0], sizes = [1, 256], strides = [1, 1]} : vector<3x256xf32> to vector<1x256xf32>
    %108 = arith.mulf %105, %106 : vector<1x256xf32>
    %109 = arith.mulf %108, %107 : vector<1x256xf32>
    %c4_i32_25 = arith.constant 4 : i32
    %110 = vector.broadcast %c4_i32_25 : i32 to vector<1x256xi32>
    %111 = arith.muli %101, %110 : vector<1x256xi32>
    %112 = arith.addi %98, %111 : vector<1x256xi32>
    %c16_i32_26 = arith.constant 16 : i32
    %113 = vector.broadcast %c16_i32_26 : i32 to vector<1x256xi32>
    %114 = arith.muli %104, %113 : vector<1x256xi32>
    %115 = arith.addi %112, %114 : vector<1x256xi32>
    %116 = vector.extract_strided_slice %15 {offsets = [0, 0], sizes = [1, 256], strides = [1, 1]} : vector<3x256xi32> to vector<1x256xi32>
    %c1_i32_27 = arith.constant 1 : i32
    %117 = vector.broadcast %c1_i32_27 : i32 to vector<1x256xi32>
    %118 = arith.addi %116, %117 : vector<1x256xi32>
    %119 = vector.extract_strided_slice %15 {offsets = [1, 0], sizes = [1, 256], strides = [1, 1]} : vector<3x256xi32> to vector<1x256xi32>
    %c0_i32_28 = arith.constant 0 : i32
    %120 = vector.broadcast %c0_i32_28 : i32 to vector<1x256xi32>
    %121 = arith.addi %119, %120 : vector<1x256xi32>
    %122 = vector.extract_strided_slice %15 {offsets = [2, 0], sizes = [1, 256], strides = [1, 1]} : vector<3x256xi32> to vector<1x256xi32>
    %c1_i32_29 = arith.constant 1 : i32
    %123 = vector.broadcast %c1_i32_29 : i32 to vector<1x256xi32>
    %124 = arith.addi %122, %123 : vector<1x256xi32>
    %125 = vector.extract_strided_slice %12 {offsets = [0, 0], sizes = [1, 256], strides = [1, 1]} : vector<3x256xf32> to vector<1x256xf32>
    %126 = vector.extract_strided_slice %14 {offsets = [1, 0], sizes = [1, 256], strides = [1, 1]} : vector<3x256xf32> to vector<1x256xf32>
    %127 = vector.extract_strided_slice %12 {offsets = [2, 0], sizes = [1, 256], strides = [1, 1]} : vector<3x256xf32> to vector<1x256xf32>
    %128 = arith.mulf %125, %126 : vector<1x256xf32>
    %129 = arith.mulf %128, %127 : vector<1x256xf32>
    %c4_i32_30 = arith.constant 4 : i32
    %130 = vector.broadcast %c4_i32_30 : i32 to vector<1x256xi32>
    %131 = arith.muli %121, %130 : vector<1x256xi32>
    %132 = arith.addi %118, %131 : vector<1x256xi32>
    %c16_i32_31 = arith.constant 16 : i32
    %133 = vector.broadcast %c16_i32_31 : i32 to vector<1x256xi32>
    %134 = arith.muli %124, %133 : vector<1x256xi32>
    %135 = arith.addi %132, %134 : vector<1x256xi32>
    %136 = vector.extract_strided_slice %15 {offsets = [0, 0], sizes = [1, 256], strides = [1, 1]} : vector<3x256xi32> to vector<1x256xi32>
    %c1_i32_32 = arith.constant 1 : i32
    %137 = vector.broadcast %c1_i32_32 : i32 to vector<1x256xi32>
    %138 = arith.addi %136, %137 : vector<1x256xi32>
    %139 = vector.extract_strided_slice %15 {offsets = [1, 0], sizes = [1, 256], strides = [1, 1]} : vector<3x256xi32> to vector<1x256xi32>
    %c1_i32_33 = arith.constant 1 : i32
    %140 = vector.broadcast %c1_i32_33 : i32 to vector<1x256xi32>
    %141 = arith.addi %139, %140 : vector<1x256xi32>
    %142 = vector.extract_strided_slice %15 {offsets = [2, 0], sizes = [1, 256], strides = [1, 1]} : vector<3x256xi32> to vector<1x256xi32>
    %c0_i32_34 = arith.constant 0 : i32
    %143 = vector.broadcast %c0_i32_34 : i32 to vector<1x256xi32>
    %144 = arith.addi %142, %143 : vector<1x256xi32>
    %145 = vector.extract_strided_slice %12 {offsets = [0, 0], sizes = [1, 256], strides = [1, 1]} : vector<3x256xf32> to vector<1x256xf32>
    %146 = vector.extract_strided_slice %12 {offsets = [1, 0], sizes = [1, 256], strides = [1, 1]} : vector<3x256xf32> to vector<1x256xf32>
    %147 = vector.extract_strided_slice %14 {offsets = [2, 0], sizes = [1, 256], strides = [1, 1]} : vector<3x256xf32> to vector<1x256xf32>
    %148 = arith.mulf %145, %146 : vector<1x256xf32>
    %149 = arith.mulf %148, %147 : vector<1x256xf32>
    %c4_i32_35 = arith.constant 4 : i32
    %150 = vector.broadcast %c4_i32_35 : i32 to vector<1x256xi32>
    %151 = arith.muli %141, %150 : vector<1x256xi32>
    %152 = arith.addi %138, %151 : vector<1x256xi32>
    %c16_i32_36 = arith.constant 16 : i32
    %153 = vector.broadcast %c16_i32_36 : i32 to vector<1x256xi32>
    %154 = arith.muli %144, %153 : vector<1x256xi32>
    %155 = arith.addi %152, %154 : vector<1x256xi32>
    %156 = vector.extract_strided_slice %15 {offsets = [0, 0], sizes = [1, 256], strides = [1, 1]} : vector<3x256xi32> to vector<1x256xi32>
    %c1_i32_37 = arith.constant 1 : i32
    %157 = vector.broadcast %c1_i32_37 : i32 to vector<1x256xi32>
    %158 = arith.addi %156, %157 : vector<1x256xi32>
    %159 = vector.extract_strided_slice %15 {offsets = [1, 0], sizes = [1, 256], strides = [1, 1]} : vector<3x256xi32> to vector<1x256xi32>
    %c1_i32_38 = arith.constant 1 : i32
    %160 = vector.broadcast %c1_i32_38 : i32 to vector<1x256xi32>
    %161 = arith.addi %159, %160 : vector<1x256xi32>
    %162 = vector.extract_strided_slice %15 {offsets = [2, 0], sizes = [1, 256], strides = [1, 1]} : vector<3x256xi32> to vector<1x256xi32>
    %c1_i32_39 = arith.constant 1 : i32
    %163 = vector.broadcast %c1_i32_39 : i32 to vector<1x256xi32>
    %164 = arith.addi %162, %163 : vector<1x256xi32>
    %165 = vector.extract_strided_slice %12 {offsets = [0, 0], sizes = [1, 256], strides = [1, 1]} : vector<3x256xf32> to vector<1x256xf32>
    %166 = vector.extract_strided_slice %12 {offsets = [1, 0], sizes = [1, 256], strides = [1, 1]} : vector<3x256xf32> to vector<1x256xf32>
    %167 = vector.extract_strided_slice %12 {offsets = [2, 0], sizes = [1, 256], strides = [1, 1]} : vector<3x256xf32> to vector<1x256xf32>
    %168 = arith.mulf %165, %166 : vector<1x256xf32>
    %169 = arith.mulf %168, %167 : vector<1x256xf32>
    %c4_i32_40 = arith.constant 4 : i32
    %170 = vector.broadcast %c4_i32_40 : i32 to vector<1x256xi32>
    %171 = arith.muli %161, %170 : vector<1x256xi32>
    %172 = arith.addi %158, %171 : vector<1x256xi32>
    %c16_i32_41 = arith.constant 16 : i32
    %173 = vector.broadcast %c16_i32_41 : i32 to vector<1x256xi32>
    %174 = arith.muli %164, %173 : vector<1x256xi32>
    %175 = arith.addi %172, %174 : vector<1x256xi32>
    %176 = tpu.iota {dimensions = array<i32: 0>} : vector<64x256xi32>
    %177 = vector.broadcast %35 : vector<1x256xi32> to vector<64x256xi32>
    %178 = arith.cmpi eq, %176, %177 : vector<64x256xi32>
    %cst_42 = arith.constant 0.000000e+00 : f32
    %179 = vector.shape_cast %29 : vector<1x256xf32> to vector<1x256xf32>
    %180 = vector.broadcast %179 : vector<1x256xf32> to vector<64x256xf32>
    %181 = vector.broadcast %cst_42 : f32 to vector<64x256xf32>
    %182 = arith.select %178, %180, %181 : vector<64x256xi1>, vector<64x256xf32>
    %183 = vector.broadcast %55 : vector<1x256xi32> to vector<64x256xi32>
    %184 = arith.cmpi eq, %176, %183 : vector<64x256xi32>
    %cst_43 = arith.constant 0.000000e+00 : f32
    %185 = vector.shape_cast %49 : vector<1x256xf32> to vector<1x256xf32>
    %186 = vector.broadcast %185 : vector<1x256xf32> to vector<64x256xf32>
    %187 = vector.broadcast %cst_43 : f32 to vector<64x256xf32>
    %188 = arith.select %184, %186, %187 : vector<64x256xi1>, vector<64x256xf32>
    %189 = arith.addf %182, %188 : vector<64x256xf32>
    %190 = vector.broadcast %75 : vector<1x256xi32> to vector<64x256xi32>
    %191 = arith.cmpi eq, %176, %190 : vector<64x256xi32>
    %cst_44 = arith.constant 0.000000e+00 : f32
    %192 = vector.shape_cast %69 : vector<1x256xf32> to vector<1x256xf32>
    %193 = vector.broadcast %192 : vector<1x256xf32> to vector<64x256xf32>
    %194 = vector.broadcast %cst_44 : f32 to vector<64x256xf32>
    %195 = arith.select %191, %193, %194 : vector<64x256xi1>, vector<64x256xf32>
    %196 = arith.addf %189, %195 : vector<64x256xf32>
    %197 = vector.broadcast %95 : vector<1x256xi32> to vector<64x256xi32>
    %198 = arith.cmpi eq, %176, %197 : vector<64x256xi32>
    %cst_45 = arith.constant 0.000000e+00 : f32
    %199 = vector.shape_cast %89 : vector<1x256xf32> to vector<1x256xf32>
    %200 = vector.broadcast %199 : vector<1x256xf32> to vector<64x256xf32>
    %201 = vector.broadcast %cst_45 : f32 to vector<64x256xf32>
    %202 = arith.select %198, %200, %201 : vector<64x256xi1>, vector<64x256xf32>
    %203 = arith.addf %196, %202 : vector<64x256xf32>
    %204 = vector.broadcast %115 : vector<1x256xi32> to vector<64x256xi32>
    %205 = arith.cmpi eq, %176, %204 : vector<64x256xi32>
    %cst_46 = arith.constant 0.000000e+00 : f32
    %206 = vector.shape_cast %109 : vector<1x256xf32> to vector<1x256xf32>
    %207 = vector.broadcast %206 : vector<1x256xf32> to vector<64x256xf32>
    %208 = vector.broadcast %cst_46 : f32 to vector<64x256xf32>
    %209 = arith.select %205, %207, %208 : vector<64x256xi1>, vector<64x256xf32>
    %210 = arith.addf %203, %209 : vector<64x256xf32>
    %211 = vector.broadcast %135 : vector<1x256xi32> to vector<64x256xi32>
    %212 = arith.cmpi eq, %176, %211 : vector<64x256xi32>
    %cst_47 = arith.constant 0.000000e+00 : f32
    %213 = vector.shape_cast %129 : vector<1x256xf32> to vector<1x256xf32>
    %214 = vector.broadcast %213 : vector<1x256xf32> to vector<64x256xf32>
    %215 = vector.broadcast %cst_47 : f32 to vector<64x256xf32>
    %216 = arith.select %212, %214, %215 : vector<64x256xi1>, vector<64x256xf32>
    %217 = arith.addf %210, %216 : vector<64x256xf32>
    %218 = vector.broadcast %155 : vector<1x256xi32> to vector<64x256xi32>
    %219 = arith.cmpi eq, %176, %218 : vector<64x256xi32>
    %cst_48 = arith.constant 0.000000e+00 : f32
    %220 = vector.shape_cast %149 : vector<1x256xf32> to vector<1x256xf32>
    %221 = vector.broadcast %220 : vector<1x256xf32> to vector<64x256xf32>
    %222 = vector.broadcast %cst_48 : f32 to vector<64x256xf32>
    %223 = arith.select %219, %221, %222 : vector<64x256xi1>, vector<64x256xf32>
    %224 = arith.addf %217, %223 : vector<64x256xf32>
    %225 = vector.broadcast %175 : vector<1x256xi32> to vector<64x256xi32>
    %226 = arith.cmpi eq, %176, %225 : vector<64x256xi32>
    %cst_49 = arith.constant 0.000000e+00 : f32
    %227 = vector.shape_cast %169 : vector<1x256xf32> to vector<1x256xf32>
    %228 = vector.broadcast %227 : vector<1x256xf32> to vector<64x256xf32>
    %229 = vector.broadcast %cst_49 : f32 to vector<64x256xf32>
    %230 = arith.select %226, %228, %229 : vector<64x256xi1>, vector<64x256xf32>
    %231 = arith.addf %224, %230 : vector<64x256xf32>
    %cst_50 = arith.constant dense<0.000000e+00> : vector<2x256xf32>
    %232 = tpu.matmul %4, %231, %cst_50 {dimension_numbers = #tpu.dot_dimension_numbers<[1], [0], [0], [1], [0, 0, 1, 1], [], []>} : vector<2x64xf32>, vector<64x256xf32>, vector<2x256xf32> -> vector<2x256xf32>
    %c0_51 = arith.constant 0 : index
    %c0_52 = arith.constant 0 : index
    %233 = vector.load %arg3[%c0_51, %c0_52] : memref<2x216xf32, #tpu.memory_space<vmem>>, vector<2x216xf32>
    %cst_53 = arith.constant 6.000000e+00 : f32
    %234 = vector.broadcast %cst_53 : f32 to vector<3x256xf32>
    %235 = arith.mulf %234, %0 : vector<3x256xf32>
    %cst_54 = arith.constant 0.000000e+00 : f32
    %cst_55 = arith.constant 4.999000e+00 : f32
    %236 = vector.broadcast %cst_54 : f32 to vector<3x256xf32>
    %237 = arith.maximumf %236, %235 : vector<3x256xf32>
    %238 = vector.broadcast %cst_55 : f32 to vector<3x256xf32>
    %239 = arith.minimumf %238, %237 : vector<3x256xf32>
    %240 = math.floor %239 : vector<3x256xf32>
    %241 = arith.subf %239, %240 : vector<3x256xf32>
    %cst_56 = arith.constant 1.000000e+00 : f32
    %242 = vector.broadcast %cst_56 : f32 to vector<3x256xf32>
    %243 = arith.subf %242, %241 : vector<3x256xf32>
    %244 = arith.fptosi %240 : vector<3x256xf32> to vector<3x256xi32>
    %245 = vector.extract_strided_slice %244 {offsets = [0, 0], sizes = [1, 256], strides = [1, 1]} : vector<3x256xi32> to vector<1x256xi32>
    %c0_i32_57 = arith.constant 0 : i32
    %246 = vector.broadcast %c0_i32_57 : i32 to vector<1x256xi32>
    %247 = arith.addi %245, %246 : vector<1x256xi32>
    %248 = vector.extract_strided_slice %244 {offsets = [1, 0], sizes = [1, 256], strides = [1, 1]} : vector<3x256xi32> to vector<1x256xi32>
    %c0_i32_58 = arith.constant 0 : i32
    %249 = vector.broadcast %c0_i32_58 : i32 to vector<1x256xi32>
    %250 = arith.addi %248, %249 : vector<1x256xi32>
    %251 = vector.extract_strided_slice %244 {offsets = [2, 0], sizes = [1, 256], strides = [1, 1]} : vector<3x256xi32> to vector<1x256xi32>
    %c0_i32_59 = arith.constant 0 : i32
    %252 = vector.broadcast %c0_i32_59 : i32 to vector<1x256xi32>
    %253 = arith.addi %251, %252 : vector<1x256xi32>
    %254 = vector.extract_strided_slice %243 {offsets = [0, 0], sizes = [1, 256], strides = [1, 1]} : vector<3x256xf32> to vector<1x256xf32>
    %255 = vector.extract_strided_slice %243 {offsets = [1, 0], sizes = [1, 256], strides = [1, 1]} : vector<3x256xf32> to vector<1x256xf32>
    %256 = vector.extract_strided_slice %243 {offsets = [2, 0], sizes = [1, 256], strides = [1, 1]} : vector<3x256xf32> to vector<1x256xf32>
    %257 = arith.mulf %254, %255 : vector<1x256xf32>
    %258 = arith.mulf %257, %256 : vector<1x256xf32>
    %c6_i32 = arith.constant 6 : i32
    %259 = vector.broadcast %c6_i32 : i32 to vector<1x256xi32>
    %260 = arith.muli %250, %259 : vector<1x256xi32>
    %261 = arith.addi %247, %260 : vector<1x256xi32>
    %c36_i32 = arith.constant 36 : i32
    %262 = vector.broadcast %c36_i32 : i32 to vector<1x256xi32>
    %263 = arith.muli %253, %262 : vector<1x256xi32>
    %264 = arith.addi %261, %263 : vector<1x256xi32>
    %265 = vector.extract_strided_slice %244 {offsets = [0, 0], sizes = [1, 256], strides = [1, 1]} : vector<3x256xi32> to vector<1x256xi32>
    %c0_i32_60 = arith.constant 0 : i32
    %266 = vector.broadcast %c0_i32_60 : i32 to vector<1x256xi32>
    %267 = arith.addi %265, %266 : vector<1x256xi32>
    %268 = vector.extract_strided_slice %244 {offsets = [1, 0], sizes = [1, 256], strides = [1, 1]} : vector<3x256xi32> to vector<1x256xi32>
    %c0_i32_61 = arith.constant 0 : i32
    %269 = vector.broadcast %c0_i32_61 : i32 to vector<1x256xi32>
    %270 = arith.addi %268, %269 : vector<1x256xi32>
    %271 = vector.extract_strided_slice %244 {offsets = [2, 0], sizes = [1, 256], strides = [1, 1]} : vector<3x256xi32> to vector<1x256xi32>
    %c1_i32_62 = arith.constant 1 : i32
    %272 = vector.broadcast %c1_i32_62 : i32 to vector<1x256xi32>
    %273 = arith.addi %271, %272 : vector<1x256xi32>
    %274 = vector.extract_strided_slice %243 {offsets = [0, 0], sizes = [1, 256], strides = [1, 1]} : vector<3x256xf32> to vector<1x256xf32>
    %275 = vector.extract_strided_slice %243 {offsets = [1, 0], sizes = [1, 256], strides = [1, 1]} : vector<3x256xf32> to vector<1x256xf32>
    %276 = vector.extract_strided_slice %241 {offsets = [2, 0], sizes = [1, 256], strides = [1, 1]} : vector<3x256xf32> to vector<1x256xf32>
    %277 = arith.mulf %274, %275 : vector<1x256xf32>
    %278 = arith.mulf %277, %276 : vector<1x256xf32>
    %c6_i32_63 = arith.constant 6 : i32
    %279 = vector.broadcast %c6_i32_63 : i32 to vector<1x256xi32>
    %280 = arith.muli %270, %279 : vector<1x256xi32>
    %281 = arith.addi %267, %280 : vector<1x256xi32>
    %c36_i32_64 = arith.constant 36 : i32
    %282 = vector.broadcast %c36_i32_64 : i32 to vector<1x256xi32>
    %283 = arith.muli %273, %282 : vector<1x256xi32>
    %284 = arith.addi %281, %283 : vector<1x256xi32>
    %285 = vector.extract_strided_slice %244 {offsets = [0, 0], sizes = [1, 256], strides = [1, 1]} : vector<3x256xi32> to vector<1x256xi32>
    %c0_i32_65 = arith.constant 0 : i32
    %286 = vector.broadcast %c0_i32_65 : i32 to vector<1x256xi32>
    %287 = arith.addi %285, %286 : vector<1x256xi32>
    %288 = vector.extract_strided_slice %244 {offsets = [1, 0], sizes = [1, 256], strides = [1, 1]} : vector<3x256xi32> to vector<1x256xi32>
    %c1_i32_66 = arith.constant 1 : i32
    %289 = vector.broadcast %c1_i32_66 : i32 to vector<1x256xi32>
    %290 = arith.addi %288, %289 : vector<1x256xi32>
    %291 = vector.extract_strided_slice %244 {offsets = [2, 0], sizes = [1, 256], strides = [1, 1]} : vector<3x256xi32> to vector<1x256xi32>
    %c0_i32_67 = arith.constant 0 : i32
    %292 = vector.broadcast %c0_i32_67 : i32 to vector<1x256xi32>
    %293 = arith.addi %291, %292 : vector<1x256xi32>
    %294 = vector.extract_strided_slice %243 {offsets = [0, 0], sizes = [1, 256], strides = [1, 1]} : vector<3x256xf32> to vector<1x256xf32>
    %295 = vector.extract_strided_slice %241 {offsets = [1, 0], sizes = [1, 256], strides = [1, 1]} : vector<3x256xf32> to vector<1x256xf32>
    %296 = vector.extract_strided_slice %243 {offsets = [2, 0], sizes = [1, 256], strides = [1, 1]} : vector<3x256xf32> to vector<1x256xf32>
    %297 = arith.mulf %294, %295 : vector<1x256xf32>
    %298 = arith.mulf %297, %296 : vector<1x256xf32>
    %c6_i32_68 = arith.constant 6 : i32
    %299 = vector.broadcast %c6_i32_68 : i32 to vector<1x256xi32>
    %300 = arith.muli %290, %299 : vector<1x256xi32>
    %301 = arith.addi %287, %300 : vector<1x256xi32>
    %c36_i32_69 = arith.constant 36 : i32
    %302 = vector.broadcast %c36_i32_69 : i32 to vector<1x256xi32>
    %303 = arith.muli %293, %302 : vector<1x256xi32>
    %304 = arith.addi %301, %303 : vector<1x256xi32>
    %305 = vector.extract_strided_slice %244 {offsets = [0, 0], sizes = [1, 256], strides = [1, 1]} : vector<3x256xi32> to vector<1x256xi32>
    %c0_i32_70 = arith.constant 0 : i32
    %306 = vector.broadcast %c0_i32_70 : i32 to vector<1x256xi32>
    %307 = arith.addi %305, %306 : vector<1x256xi32>
    %308 = vector.extract_strided_slice %244 {offsets = [1, 0], sizes = [1, 256], strides = [1, 1]} : vector<3x256xi32> to vector<1x256xi32>
    %c1_i32_71 = arith.constant 1 : i32
    %309 = vector.broadcast %c1_i32_71 : i32 to vector<1x256xi32>
    %310 = arith.addi %308, %309 : vector<1x256xi32>
    %311 = vector.extract_strided_slice %244 {offsets = [2, 0], sizes = [1, 256], strides = [1, 1]} : vector<3x256xi32> to vector<1x256xi32>
    %c1_i32_72 = arith.constant 1 : i32
    %312 = vector.broadcast %c1_i32_72 : i32 to vector<1x256xi32>
    %313 = arith.addi %311, %312 : vector<1x256xi32>
    %314 = vector.extract_strided_slice %243 {offsets = [0, 0], sizes = [1, 256], strides = [1, 1]} : vector<3x256xf32> to vector<1x256xf32>
    %315 = vector.extract_strided_slice %241 {offsets = [1, 0], sizes = [1, 256], strides = [1, 1]} : vector<3x256xf32> to vector<1x256xf32>
    %316 = vector.extract_strided_slice %241 {offsets = [2, 0], sizes = [1, 256], strides = [1, 1]} : vector<3x256xf32> to vector<1x256xf32>
    %317 = arith.mulf %314, %315 : vector<1x256xf32>
    %318 = arith.mulf %317, %316 : vector<1x256xf32>
    %c6_i32_73 = arith.constant 6 : i32
    %319 = vector.broadcast %c6_i32_73 : i32 to vector<1x256xi32>
    %320 = arith.muli %310, %319 : vector<1x256xi32>
    %321 = arith.addi %307, %320 : vector<1x256xi32>
    %c36_i32_74 = arith.constant 36 : i32
    %322 = vector.broadcast %c36_i32_74 : i32 to vector<1x256xi32>
    %323 = arith.muli %313, %322 : vector<1x256xi32>
    %324 = arith.addi %321, %323 : vector<1x256xi32>
    %325 = vector.extract_strided_slice %244 {offsets = [0, 0], sizes = [1, 256], strides = [1, 1]} : vector<3x256xi32> to vector<1x256xi32>
    %c1_i32_75 = arith.constant 1 : i32
    %326 = vector.broadcast %c1_i32_75 : i32 to vector<1x256xi32>
    %327 = arith.addi %325, %326 : vector<1x256xi32>
    %328 = vector.extract_strided_slice %244 {offsets = [1, 0], sizes = [1, 256], strides = [1, 1]} : vector<3x256xi32> to vector<1x256xi32>
    %c0_i32_76 = arith.constant 0 : i32
    %329 = vector.broadcast %c0_i32_76 : i32 to vector<1x256xi32>
    %330 = arith.addi %328, %329 : vector<1x256xi32>
    %331 = vector.extract_strided_slice %244 {offsets = [2, 0], sizes = [1, 256], strides = [1, 1]} : vector<3x256xi32> to vector<1x256xi32>
    %c0_i32_77 = arith.constant 0 : i32
    %332 = vector.broadcast %c0_i32_77 : i32 to vector<1x256xi32>
    %333 = arith.addi %331, %332 : vector<1x256xi32>
    %334 = vector.extract_strided_slice %241 {offsets = [0, 0], sizes = [1, 256], strides = [1, 1]} : vector<3x256xf32> to vector<1x256xf32>
    %335 = vector.extract_strided_slice %243 {offsets = [1, 0], sizes = [1, 256], strides = [1, 1]} : vector<3x256xf32> to vector<1x256xf32>
    %336 = vector.extract_strided_slice %243 {offsets = [2, 0], sizes = [1, 256], strides = [1, 1]} : vector<3x256xf32> to vector<1x256xf32>
    %337 = arith.mulf %334, %335 : vector<1x256xf32>
    %338 = arith.mulf %337, %336 : vector<1x256xf32>
    %c6_i32_78 = arith.constant 6 : i32
    %339 = vector.broadcast %c6_i32_78 : i32 to vector<1x256xi32>
    %340 = arith.muli %330, %339 : vector<1x256xi32>
    %341 = arith.addi %327, %340 : vector<1x256xi32>
    %c36_i32_79 = arith.constant 36 : i32
    %342 = vector.broadcast %c36_i32_79 : i32 to vector<1x256xi32>
    %343 = arith.muli %333, %342 : vector<1x256xi32>
    %344 = arith.addi %341, %343 : vector<1x256xi32>
    %345 = vector.extract_strided_slice %244 {offsets = [0, 0], sizes = [1, 256], strides = [1, 1]} : vector<3x256xi32> to vector<1x256xi32>
    %c1_i32_80 = arith.constant 1 : i32
    %346 = vector.broadcast %c1_i32_80 : i32 to vector<1x256xi32>
    %347 = arith.addi %345, %346 : vector<1x256xi32>
    %348 = vector.extract_strided_slice %244 {offsets = [1, 0], sizes = [1, 256], strides = [1, 1]} : vector<3x256xi32> to vector<1x256xi32>
    %c0_i32_81 = arith.constant 0 : i32
    %349 = vector.broadcast %c0_i32_81 : i32 to vector<1x256xi32>
    %350 = arith.addi %348, %349 : vector<1x256xi32>
    %351 = vector.extract_strided_slice %244 {offsets = [2, 0], sizes = [1, 256], strides = [1, 1]} : vector<3x256xi32> to vector<1x256xi32>
    %c1_i32_82 = arith.constant 1 : i32
    %352 = vector.broadcast %c1_i32_82 : i32 to vector<1x256xi32>
    %353 = arith.addi %351, %352 : vector<1x256xi32>
    %354 = vector.extract_strided_slice %241 {offsets = [0, 0], sizes = [1, 256], strides = [1, 1]} : vector<3x256xf32> to vector<1x256xf32>
    %355 = vector.extract_strided_slice %243 {offsets = [1, 0], sizes = [1, 256], strides = [1, 1]} : vector<3x256xf32> to vector<1x256xf32>
    %356 = vector.extract_strided_slice %241 {offsets = [2, 0], sizes = [1, 256], strides = [1, 1]} : vector<3x256xf32> to vector<1x256xf32>
    %357 = arith.mulf %354, %355 : vector<1x256xf32>
    %358 = arith.mulf %357, %356 : vector<1x256xf32>
    %c6_i32_83 = arith.constant 6 : i32
    %359 = vector.broadcast %c6_i32_83 : i32 to vector<1x256xi32>
    %360 = arith.muli %350, %359 : vector<1x256xi32>
    %361 = arith.addi %347, %360 : vector<1x256xi32>
    %c36_i32_84 = arith.constant 36 : i32
    %362 = vector.broadcast %c36_i32_84 : i32 to vector<1x256xi32>
    %363 = arith.muli %353, %362 : vector<1x256xi32>
    %364 = arith.addi %361, %363 : vector<1x256xi32>
    %365 = vector.extract_strided_slice %244 {offsets = [0, 0], sizes = [1, 256], strides = [1, 1]} : vector<3x256xi32> to vector<1x256xi32>
    %c1_i32_85 = arith.constant 1 : i32
    %366 = vector.broadcast %c1_i32_85 : i32 to vector<1x256xi32>
    %367 = arith.addi %365, %366 : vector<1x256xi32>
    %368 = vector.extract_strided_slice %244 {offsets = [1, 0], sizes = [1, 256], strides = [1, 1]} : vector<3x256xi32> to vector<1x256xi32>
    %c1_i32_86 = arith.constant 1 : i32
    %369 = vector.broadcast %c1_i32_86 : i32 to vector<1x256xi32>
    %370 = arith.addi %368, %369 : vector<1x256xi32>
    %371 = vector.extract_strided_slice %244 {offsets = [2, 0], sizes = [1, 256], strides = [1, 1]} : vector<3x256xi32> to vector<1x256xi32>
    %c0_i32_87 = arith.constant 0 : i32
    %372 = vector.broadcast %c0_i32_87 : i32 to vector<1x256xi32>
    %373 = arith.addi %371, %372 : vector<1x256xi32>
    %374 = vector.extract_strided_slice %241 {offsets = [0, 0], sizes = [1, 256], strides = [1, 1]} : vector<3x256xf32> to vector<1x256xf32>
    %375 = vector.extract_strided_slice %241 {offsets = [1, 0], sizes = [1, 256], strides = [1, 1]} : vector<3x256xf32> to vector<1x256xf32>
    %376 = vector.extract_strided_slice %243 {offsets = [2, 0], sizes = [1, 256], strides = [1, 1]} : vector<3x256xf32> to vector<1x256xf32>
    %377 = arith.mulf %374, %375 : vector<1x256xf32>
    %378 = arith.mulf %377, %376 : vector<1x256xf32>
    %c6_i32_88 = arith.constant 6 : i32
    %379 = vector.broadcast %c6_i32_88 : i32 to vector<1x256xi32>
    %380 = arith.muli %370, %379 : vector<1x256xi32>
    %381 = arith.addi %367, %380 : vector<1x256xi32>
    %c36_i32_89 = arith.constant 36 : i32
    %382 = vector.broadcast %c36_i32_89 : i32 to vector<1x256xi32>
    %383 = arith.muli %373, %382 : vector<1x256xi32>
    %384 = arith.addi %381, %383 : vector<1x256xi32>
    %385 = vector.extract_strided_slice %244 {offsets = [0, 0], sizes = [1, 256], strides = [1, 1]} : vector<3x256xi32> to vector<1x256xi32>
    %c1_i32_90 = arith.constant 1 : i32
    %386 = vector.broadcast %c1_i32_90 : i32 to vector<1x256xi32>
    %387 = arith.addi %385, %386 : vector<1x256xi32>
    %388 = vector.extract_strided_slice %244 {offsets = [1, 0], sizes = [1, 256], strides = [1, 1]} : vector<3x256xi32> to vector<1x256xi32>
    %c1_i32_91 = arith.constant 1 : i32
    %389 = vector.broadcast %c1_i32_91 : i32 to vector<1x256xi32>
    %390 = arith.addi %388, %389 : vector<1x256xi32>
    %391 = vector.extract_strided_slice %244 {offsets = [2, 0], sizes = [1, 256], strides = [1, 1]} : vector<3x256xi32> to vector<1x256xi32>
    %c1_i32_92 = arith.constant 1 : i32
    %392 = vector.broadcast %c1_i32_92 : i32 to vector<1x256xi32>
    %393 = arith.addi %391, %392 : vector<1x256xi32>
    %394 = vector.extract_strided_slice %241 {offsets = [0, 0], sizes = [1, 256], strides = [1, 1]} : vector<3x256xf32> to vector<1x256xf32>
    %395 = vector.extract_strided_slice %241 {offsets = [1, 0], sizes = [1, 256], strides = [1, 1]} : vector<3x256xf32> to vector<1x256xf32>
    %396 = vector.extract_strided_slice %241 {offsets = [2, 0], sizes = [1, 256], strides = [1, 1]} : vector<3x256xf32> to vector<1x256xf32>
    %397 = arith.mulf %394, %395 : vector<1x256xf32>
    %398 = arith.mulf %397, %396 : vector<1x256xf32>
    %c6_i32_93 = arith.constant 6 : i32
    %399 = vector.broadcast %c6_i32_93 : i32 to vector<1x256xi32>
    %400 = arith.muli %390, %399 : vector<1x256xi32>
    %401 = arith.addi %387, %400 : vector<1x256xi32>
    %c36_i32_94 = arith.constant 36 : i32
    %402 = vector.broadcast %c36_i32_94 : i32 to vector<1x256xi32>
    %403 = arith.muli %393, %402 : vector<1x256xi32>
    %404 = arith.addi %401, %403 : vector<1x256xi32>
    %405 = tpu.iota {dimensions = array<i32: 0>} : vector<216x256xi32>
    %406 = vector.broadcast %264 : vector<1x256xi32> to vector<216x256xi32>
    %407 = arith.cmpi eq, %405, %406 : vector<216x256xi32>
    %cst_95 = arith.constant 0.000000e+00 : f32
    %408 = vector.shape_cast %258 : vector<1x256xf32> to vector<1x256xf32>
    %409 = vector.broadcast %408 : vector<1x256xf32> to vector<216x256xf32>
    %410 = vector.broadcast %cst_95 : f32 to vector<216x256xf32>
    %411 = arith.select %407, %409, %410 : vector<216x256xi1>, vector<216x256xf32>
    %412 = vector.broadcast %284 : vector<1x256xi32> to vector<216x256xi32>
    %413 = arith.cmpi eq, %405, %412 : vector<216x256xi32>
    %cst_96 = arith.constant 0.000000e+00 : f32
    %414 = vector.shape_cast %278 : vector<1x256xf32> to vector<1x256xf32>
    %415 = vector.broadcast %414 : vector<1x256xf32> to vector<216x256xf32>
    %416 = vector.broadcast %cst_96 : f32 to vector<216x256xf32>
    %417 = arith.select %413, %415, %416 : vector<216x256xi1>, vector<216x256xf32>
    %418 = arith.addf %411, %417 : vector<216x256xf32>
    %419 = vector.broadcast %304 : vector<1x256xi32> to vector<216x256xi32>
    %420 = arith.cmpi eq, %405, %419 : vector<216x256xi32>
    %cst_97 = arith.constant 0.000000e+00 : f32
    %421 = vector.shape_cast %298 : vector<1x256xf32> to vector<1x256xf32>
    %422 = vector.broadcast %421 : vector<1x256xf32> to vector<216x256xf32>
    %423 = vector.broadcast %cst_97 : f32 to vector<216x256xf32>
    %424 = arith.select %420, %422, %423 : vector<216x256xi1>, vector<216x256xf32>
    %425 = arith.addf %418, %424 : vector<216x256xf32>
    %426 = vector.broadcast %324 : vector<1x256xi32> to vector<216x256xi32>
    %427 = arith.cmpi eq, %405, %426 : vector<216x256xi32>
    %cst_98 = arith.constant 0.000000e+00 : f32
    %428 = vector.shape_cast %318 : vector<1x256xf32> to vector<1x256xf32>
    %429 = vector.broadcast %428 : vector<1x256xf32> to vector<216x256xf32>
    %430 = vector.broadcast %cst_98 : f32 to vector<216x256xf32>
    %431 = arith.select %427, %429, %430 : vector<216x256xi1>, vector<216x256xf32>
    %432 = arith.addf %425, %431 : vector<216x256xf32>
    %433 = vector.broadcast %344 : vector<1x256xi32> to vector<216x256xi32>
    %434 = arith.cmpi eq, %405, %433 : vector<216x256xi32>
    %cst_99 = arith.constant 0.000000e+00 : f32
    %435 = vector.shape_cast %338 : vector<1x256xf32> to vector<1x256xf32>
    %436 = vector.broadcast %435 : vector<1x256xf32> to vector<216x256xf32>
    %437 = vector.broadcast %cst_99 : f32 to vector<216x256xf32>
    %438 = arith.select %434, %436, %437 : vector<216x256xi1>, vector<216x256xf32>
    %439 = arith.addf %432, %438 : vector<216x256xf32>
    %440 = vector.broadcast %364 : vector<1x256xi32> to vector<216x256xi32>
    %441 = arith.cmpi eq, %405, %440 : vector<216x256xi32>
    %cst_100 = arith.constant 0.000000e+00 : f32
    %442 = vector.shape_cast %358 : vector<1x256xf32> to vector<1x256xf32>
    %443 = vector.broadcast %442 : vector<1x256xf32> to vector<216x256xf32>
    %444 = vector.broadcast %cst_100 : f32 to vector<216x256xf32>
    %445 = arith.select %441, %443, %444 : vector<216x256xi1>, vector<216x256xf32>
    %446 = arith.addf %439, %445 : vector<216x256xf32>
    %447 = vector.broadcast %384 : vector<1x256xi32> to vector<216x256xi32>
    %448 = arith.cmpi eq, %405, %447 : vector<216x256xi32>
    %cst_101 = arith.constant 0.000000e+00 : f32
    %449 = vector.shape_cast %378 : vector<1x256xf32> to vector<1x256xf32>
    %450 = vector.broadcast %449 : vector<1x256xf32> to vector<216x256xf32>
    %451 = vector.broadcast %cst_101 : f32 to vector<216x256xf32>
    %452 = arith.select %448, %450, %451 : vector<216x256xi1>, vector<216x256xf32>
    %453 = arith.addf %446, %452 : vector<216x256xf32>
    %454 = vector.broadcast %404 : vector<1x256xi32> to vector<216x256xi32>
    %455 = arith.cmpi eq, %405, %454 : vector<216x256xi32>
    %cst_102 = arith.constant 0.000000e+00 : f32
    %456 = vector.shape_cast %398 : vector<1x256xf32> to vector<1x256xf32>
    %457 = vector.broadcast %456 : vector<1x256xf32> to vector<216x256xf32>
    %458 = vector.broadcast %cst_102 : f32 to vector<216x256xf32>
    %459 = arith.select %455, %457, %458 : vector<216x256xi1>, vector<216x256xf32>
    %460 = arith.addf %453, %459 : vector<216x256xf32>
    %cst_103 = arith.constant dense<0.000000e+00> : vector<2x256xf32>
    %461 = tpu.matmul %233, %460, %cst_103 {dimension_numbers = #tpu.dot_dimension_numbers<[1], [0], [0], [1], [0, 0, 1, 1], [], []>} : vector<2x216xf32>, vector<216x256xf32>, vector<2x256xf32> -> vector<2x256xf32>
    %c0_104 = arith.constant 0 : index
    %c0_105 = arith.constant 0 : index
    %462 = vector.load %arg4[%c0_104, %c0_105] : memref<12x256xf32, #tpu.memory_space<vmem>>, vector<12x256xf32>
    %cst_106 = arith.constant 9.000000e+00 : f32
    %463 = vector.broadcast %cst_106 : f32 to vector<3x256xf32>
    %464 = arith.mulf %463, %0 : vector<3x256xf32>
    %cst_107 = arith.constant 0.000000e+00 : f32
    %cst_108 = arith.constant 7.999000e+00 : f32
    %465 = vector.broadcast %cst_107 : f32 to vector<3x256xf32>
    %466 = arith.maximumf %465, %464 : vector<3x256xf32>
    %467 = vector.broadcast %cst_108 : f32 to vector<3x256xf32>
    %468 = arith.minimumf %467, %466 : vector<3x256xf32>
    %469 = math.floor %468 : vector<3x256xf32>
    %470 = arith.subf %468, %469 : vector<3x256xf32>
    %cst_109 = arith.constant 1.000000e+00 : f32
    %471 = vector.broadcast %cst_109 : f32 to vector<3x256xf32>
    %472 = arith.subf %471, %470 : vector<3x256xf32>
    %473 = arith.fptosi %469 : vector<3x256xf32> to vector<3x256xi32>
    %474 = vector.extract_strided_slice %473 {offsets = [0, 0], sizes = [1, 256], strides = [1, 1]} : vector<3x256xi32> to vector<1x256xi32>
    %c0_i32_110 = arith.constant 0 : i32
    %475 = vector.broadcast %c0_i32_110 : i32 to vector<1x256xi32>
    %476 = arith.addi %474, %475 : vector<1x256xi32>
    %477 = vector.extract_strided_slice %473 {offsets = [1, 0], sizes = [1, 256], strides = [1, 1]} : vector<3x256xi32> to vector<1x256xi32>
    %c0_i32_111 = arith.constant 0 : i32
    %478 = vector.broadcast %c0_i32_111 : i32 to vector<1x256xi32>
    %479 = arith.addi %477, %478 : vector<1x256xi32>
    %480 = vector.extract_strided_slice %473 {offsets = [2, 0], sizes = [1, 256], strides = [1, 1]} : vector<3x256xi32> to vector<1x256xi32>
    %c0_i32_112 = arith.constant 0 : i32
    %481 = vector.broadcast %c0_i32_112 : i32 to vector<1x256xi32>
    %482 = arith.addi %480, %481 : vector<1x256xi32>
    %483 = vector.extract_strided_slice %472 {offsets = [0, 0], sizes = [1, 256], strides = [1, 1]} : vector<3x256xf32> to vector<1x256xf32>
    %484 = vector.extract_strided_slice %472 {offsets = [1, 0], sizes = [1, 256], strides = [1, 1]} : vector<3x256xf32> to vector<1x256xf32>
    %485 = vector.extract_strided_slice %472 {offsets = [2, 0], sizes = [1, 256], strides = [1, 1]} : vector<3x256xf32> to vector<1x256xf32>
    %486 = arith.mulf %483, %484 : vector<1x256xf32>
    %487 = arith.mulf %486, %485 : vector<1x256xf32>
    %c255_i32 = arith.constant 255 : i32
    %488 = vector.broadcast %c255_i32 : i32 to vector<1x256xi32>
    %489 = arith.andi %476, %488 : vector<1x256xi32>
    %c177_i32 = arith.constant 177 : i32
    %490 = vector.broadcast %c177_i32 : i32 to vector<1x256xi32>
    %491 = arith.muli %479, %490 : vector<1x256xi32>
    %c255_i32_113 = arith.constant 255 : i32
    %492 = vector.broadcast %c255_i32_113 : i32 to vector<1x256xi32>
    %493 = arith.andi %491, %492 : vector<1x256xi32>
    %494 = arith.xori %489, %493 : vector<1x256xi32>
    %c149_i32 = arith.constant 149 : i32
    %495 = vector.broadcast %c149_i32 : i32 to vector<1x256xi32>
    %496 = arith.muli %482, %495 : vector<1x256xi32>
    %c255_i32_114 = arith.constant 255 : i32
    %497 = vector.broadcast %c255_i32_114 : i32 to vector<1x256xi32>
    %498 = arith.andi %496, %497 : vector<1x256xi32>
    %499 = arith.xori %494, %498 : vector<1x256xi32>
    %c255_i32_115 = arith.constant 255 : i32
    %500 = vector.broadcast %c255_i32_115 : i32 to vector<1x256xi32>
    %501 = arith.andi %499, %500 : vector<1x256xi32>
    %502 = vector.extract_strided_slice %473 {offsets = [0, 0], sizes = [1, 256], strides = [1, 1]} : vector<3x256xi32> to vector<1x256xi32>
    %c0_i32_116 = arith.constant 0 : i32
    %503 = vector.broadcast %c0_i32_116 : i32 to vector<1x256xi32>
    %504 = arith.addi %502, %503 : vector<1x256xi32>
    %505 = vector.extract_strided_slice %473 {offsets = [1, 0], sizes = [1, 256], strides = [1, 1]} : vector<3x256xi32> to vector<1x256xi32>
    %c0_i32_117 = arith.constant 0 : i32
    %506 = vector.broadcast %c0_i32_117 : i32 to vector<1x256xi32>
    %507 = arith.addi %505, %506 : vector<1x256xi32>
    %508 = vector.extract_strided_slice %473 {offsets = [2, 0], sizes = [1, 256], strides = [1, 1]} : vector<3x256xi32> to vector<1x256xi32>
    %c1_i32_118 = arith.constant 1 : i32
    %509 = vector.broadcast %c1_i32_118 : i32 to vector<1x256xi32>
    %510 = arith.addi %508, %509 : vector<1x256xi32>
    %511 = vector.extract_strided_slice %472 {offsets = [0, 0], sizes = [1, 256], strides = [1, 1]} : vector<3x256xf32> to vector<1x256xf32>
    %512 = vector.extract_strided_slice %472 {offsets = [1, 0], sizes = [1, 256], strides = [1, 1]} : vector<3x256xf32> to vector<1x256xf32>
    %513 = vector.extract_strided_slice %470 {offsets = [2, 0], sizes = [1, 256], strides = [1, 1]} : vector<3x256xf32> to vector<1x256xf32>
    %514 = arith.mulf %511, %512 : vector<1x256xf32>
    %515 = arith.mulf %514, %513 : vector<1x256xf32>
    %c255_i32_119 = arith.constant 255 : i32
    %516 = vector.broadcast %c255_i32_119 : i32 to vector<1x256xi32>
    %517 = arith.andi %504, %516 : vector<1x256xi32>
    %c177_i32_120 = arith.constant 177 : i32
    %518 = vector.broadcast %c177_i32_120 : i32 to vector<1x256xi32>
    %519 = arith.muli %507, %518 : vector<1x256xi32>
    %c255_i32_121 = arith.constant 255 : i32
    %520 = vector.broadcast %c255_i32_121 : i32 to vector<1x256xi32>
    %521 = arith.andi %519, %520 : vector<1x256xi32>
    %522 = arith.xori %517, %521 : vector<1x256xi32>
    %c149_i32_122 = arith.constant 149 : i32
    %523 = vector.broadcast %c149_i32_122 : i32 to vector<1x256xi32>
    %524 = arith.muli %510, %523 : vector<1x256xi32>
    %c255_i32_123 = arith.constant 255 : i32
    %525 = vector.broadcast %c255_i32_123 : i32 to vector<1x256xi32>
    %526 = arith.andi %524, %525 : vector<1x256xi32>
    %527 = arith.xori %522, %526 : vector<1x256xi32>
    %c255_i32_124 = arith.constant 255 : i32
    %528 = vector.broadcast %c255_i32_124 : i32 to vector<1x256xi32>
    %529 = arith.andi %527, %528 : vector<1x256xi32>
    %530 = vector.extract_strided_slice %473 {offsets = [0, 0], sizes = [1, 256], strides = [1, 1]} : vector<3x256xi32> to vector<1x256xi32>
    %c0_i32_125 = arith.constant 0 : i32
    %531 = vector.broadcast %c0_i32_125 : i32 to vector<1x256xi32>
    %532 = arith.addi %530, %531 : vector<1x256xi32>
    %533 = vector.extract_strided_slice %473 {offsets = [1, 0], sizes = [1, 256], strides = [1, 1]} : vector<3x256xi32> to vector<1x256xi32>
    %c1_i32_126 = arith.constant 1 : i32
    %534 = vector.broadcast %c1_i32_126 : i32 to vector<1x256xi32>
    %535 = arith.addi %533, %534 : vector<1x256xi32>
    %536 = vector.extract_strided_slice %473 {offsets = [2, 0], sizes = [1, 256], strides = [1, 1]} : vector<3x256xi32> to vector<1x256xi32>
    %c0_i32_127 = arith.constant 0 : i32
    %537 = vector.broadcast %c0_i32_127 : i32 to vector<1x256xi32>
    %538 = arith.addi %536, %537 : vector<1x256xi32>
    %539 = vector.extract_strided_slice %472 {offsets = [0, 0], sizes = [1, 256], strides = [1, 1]} : vector<3x256xf32> to vector<1x256xf32>
    %540 = vector.extract_strided_slice %470 {offsets = [1, 0], sizes = [1, 256], strides = [1, 1]} : vector<3x256xf32> to vector<1x256xf32>
    %541 = vector.extract_strided_slice %472 {offsets = [2, 0], sizes = [1, 256], strides = [1, 1]} : vector<3x256xf32> to vector<1x256xf32>
    %542 = arith.mulf %539, %540 : vector<1x256xf32>
    %543 = arith.mulf %542, %541 : vector<1x256xf32>
    %c255_i32_128 = arith.constant 255 : i32
    %544 = vector.broadcast %c255_i32_128 : i32 to vector<1x256xi32>
    %545 = arith.andi %532, %544 : vector<1x256xi32>
    %c177_i32_129 = arith.constant 177 : i32
    %546 = vector.broadcast %c177_i32_129 : i32 to vector<1x256xi32>
    %547 = arith.muli %535, %546 : vector<1x256xi32>
    %c255_i32_130 = arith.constant 255 : i32
    %548 = vector.broadcast %c255_i32_130 : i32 to vector<1x256xi32>
    %549 = arith.andi %547, %548 : vector<1x256xi32>
    %550 = arith.xori %545, %549 : vector<1x256xi32>
    %c149_i32_131 = arith.constant 149 : i32
    %551 = vector.broadcast %c149_i32_131 : i32 to vector<1x256xi32>
    %552 = arith.muli %538, %551 : vector<1x256xi32>
    %c255_i32_132 = arith.constant 255 : i32
    %553 = vector.broadcast %c255_i32_132 : i32 to vector<1x256xi32>
    %554 = arith.andi %552, %553 : vector<1x256xi32>
    %555 = arith.xori %550, %554 : vector<1x256xi32>
    %c255_i32_133 = arith.constant 255 : i32
    %556 = vector.broadcast %c255_i32_133 : i32 to vector<1x256xi32>
    %557 = arith.andi %555, %556 : vector<1x256xi32>
    %558 = vector.extract_strided_slice %473 {offsets = [0, 0], sizes = [1, 256], strides = [1, 1]} : vector<3x256xi32> to vector<1x256xi32>
    %c0_i32_134 = arith.constant 0 : i32
    %559 = vector.broadcast %c0_i32_134 : i32 to vector<1x256xi32>
    %560 = arith.addi %558, %559 : vector<1x256xi32>
    %561 = vector.extract_strided_slice %473 {offsets = [1, 0], sizes = [1, 256], strides = [1, 1]} : vector<3x256xi32> to vector<1x256xi32>
    %c1_i32_135 = arith.constant 1 : i32
    %562 = vector.broadcast %c1_i32_135 : i32 to vector<1x256xi32>
    %563 = arith.addi %561, %562 : vector<1x256xi32>
    %564 = vector.extract_strided_slice %473 {offsets = [2, 0], sizes = [1, 256], strides = [1, 1]} : vector<3x256xi32> to vector<1x256xi32>
    %c1_i32_136 = arith.constant 1 : i32
    %565 = vector.broadcast %c1_i32_136 : i32 to vector<1x256xi32>
    %566 = arith.addi %564, %565 : vector<1x256xi32>
    %567 = vector.extract_strided_slice %472 {offsets = [0, 0], sizes = [1, 256], strides = [1, 1]} : vector<3x256xf32> to vector<1x256xf32>
    %568 = vector.extract_strided_slice %470 {offsets = [1, 0], sizes = [1, 256], strides = [1, 1]} : vector<3x256xf32> to vector<1x256xf32>
    %569 = vector.extract_strided_slice %470 {offsets = [2, 0], sizes = [1, 256], strides = [1, 1]} : vector<3x256xf32> to vector<1x256xf32>
    %570 = arith.mulf %567, %568 : vector<1x256xf32>
    %571 = arith.mulf %570, %569 : vector<1x256xf32>
    %c255_i32_137 = arith.constant 255 : i32
    %572 = vector.broadcast %c255_i32_137 : i32 to vector<1x256xi32>
    %573 = arith.andi %560, %572 : vector<1x256xi32>
    %c177_i32_138 = arith.constant 177 : i32
    %574 = vector.broadcast %c177_i32_138 : i32 to vector<1x256xi32>
    %575 = arith.muli %563, %574 : vector<1x256xi32>
    %c255_i32_139 = arith.constant 255 : i32
    %576 = vector.broadcast %c255_i32_139 : i32 to vector<1x256xi32>
    %577 = arith.andi %575, %576 : vector<1x256xi32>
    %578 = arith.xori %573, %577 : vector<1x256xi32>
    %c149_i32_140 = arith.constant 149 : i32
    %579 = vector.broadcast %c149_i32_140 : i32 to vector<1x256xi32>
    %580 = arith.muli %566, %579 : vector<1x256xi32>
    %c255_i32_141 = arith.constant 255 : i32
    %581 = vector.broadcast %c255_i32_141 : i32 to vector<1x256xi32>
    %582 = arith.andi %580, %581 : vector<1x256xi32>
    %583 = arith.xori %578, %582 : vector<1x256xi32>
    %c255_i32_142 = arith.constant 255 : i32
    %584 = vector.broadcast %c255_i32_142 : i32 to vector<1x256xi32>
    %585 = arith.andi %583, %584 : vector<1x256xi32>
    %586 = vector.extract_strided_slice %473 {offsets = [0, 0], sizes = [1, 256], strides = [1, 1]} : vector<3x256xi32> to vector<1x256xi32>
    %c1_i32_143 = arith.constant 1 : i32
    %587 = vector.broadcast %c1_i32_143 : i32 to vector<1x256xi32>
    %588 = arith.addi %586, %587 : vector<1x256xi32>
    %589 = vector.extract_strided_slice %473 {offsets = [1, 0], sizes = [1, 256], strides = [1, 1]} : vector<3x256xi32> to vector<1x256xi32>
    %c0_i32_144 = arith.constant 0 : i32
    %590 = vector.broadcast %c0_i32_144 : i32 to vector<1x256xi32>
    %591 = arith.addi %589, %590 : vector<1x256xi32>
    %592 = vector.extract_strided_slice %473 {offsets = [2, 0], sizes = [1, 256], strides = [1, 1]} : vector<3x256xi32> to vector<1x256xi32>
    %c0_i32_145 = arith.constant 0 : i32
    %593 = vector.broadcast %c0_i32_145 : i32 to vector<1x256xi32>
    %594 = arith.addi %592, %593 : vector<1x256xi32>
    %595 = vector.extract_strided_slice %470 {offsets = [0, 0], sizes = [1, 256], strides = [1, 1]} : vector<3x256xf32> to vector<1x256xf32>
    %596 = vector.extract_strided_slice %472 {offsets = [1, 0], sizes = [1, 256], strides = [1, 1]} : vector<3x256xf32> to vector<1x256xf32>
    %597 = vector.extract_strided_slice %472 {offsets = [2, 0], sizes = [1, 256], strides = [1, 1]} : vector<3x256xf32> to vector<1x256xf32>
    %598 = arith.mulf %595, %596 : vector<1x256xf32>
    %599 = arith.mulf %598, %597 : vector<1x256xf32>
    %c255_i32_146 = arith.constant 255 : i32
    %600 = vector.broadcast %c255_i32_146 : i32 to vector<1x256xi32>
    %601 = arith.andi %588, %600 : vector<1x256xi32>
    %c177_i32_147 = arith.constant 177 : i32
    %602 = vector.broadcast %c177_i32_147 : i32 to vector<1x256xi32>
    %603 = arith.muli %591, %602 : vector<1x256xi32>
    %c255_i32_148 = arith.constant 255 : i32
    %604 = vector.broadcast %c255_i32_148 : i32 to vector<1x256xi32>
    %605 = arith.andi %603, %604 : vector<1x256xi32>
    %606 = arith.xori %601, %605 : vector<1x256xi32>
    %c149_i32_149 = arith.constant 149 : i32
    %607 = vector.broadcast %c149_i32_149 : i32 to vector<1x256xi32>
    %608 = arith.muli %594, %607 : vector<1x256xi32>
    %c255_i32_150 = arith.constant 255 : i32
    %609 = vector.broadcast %c255_i32_150 : i32 to vector<1x256xi32>
    %610 = arith.andi %608, %609 : vector<1x256xi32>
    %611 = arith.xori %606, %610 : vector<1x256xi32>
    %c255_i32_151 = arith.constant 255 : i32
    %612 = vector.broadcast %c255_i32_151 : i32 to vector<1x256xi32>
    %613 = arith.andi %611, %612 : vector<1x256xi32>
    %614 = vector.extract_strided_slice %473 {offsets = [0, 0], sizes = [1, 256], strides = [1, 1]} : vector<3x256xi32> to vector<1x256xi32>
    %c1_i32_152 = arith.constant 1 : i32
    %615 = vector.broadcast %c1_i32_152 : i32 to vector<1x256xi32>
    %616 = arith.addi %614, %615 : vector<1x256xi32>
    %617 = vector.extract_strided_slice %473 {offsets = [1, 0], sizes = [1, 256], strides = [1, 1]} : vector<3x256xi32> to vector<1x256xi32>
    %c0_i32_153 = arith.constant 0 : i32
    %618 = vector.broadcast %c0_i32_153 : i32 to vector<1x256xi32>
    %619 = arith.addi %617, %618 : vector<1x256xi32>
    %620 = vector.extract_strided_slice %473 {offsets = [2, 0], sizes = [1, 256], strides = [1, 1]} : vector<3x256xi32> to vector<1x256xi32>
    %c1_i32_154 = arith.constant 1 : i32
    %621 = vector.broadcast %c1_i32_154 : i32 to vector<1x256xi32>
    %622 = arith.addi %620, %621 : vector<1x256xi32>
    %623 = vector.extract_strided_slice %470 {offsets = [0, 0], sizes = [1, 256], strides = [1, 1]} : vector<3x256xf32> to vector<1x256xf32>
    %624 = vector.extract_strided_slice %472 {offsets = [1, 0], sizes = [1, 256], strides = [1, 1]} : vector<3x256xf32> to vector<1x256xf32>
    %625 = vector.extract_strided_slice %470 {offsets = [2, 0], sizes = [1, 256], strides = [1, 1]} : vector<3x256xf32> to vector<1x256xf32>
    %626 = arith.mulf %623, %624 : vector<1x256xf32>
    %627 = arith.mulf %626, %625 : vector<1x256xf32>
    %c255_i32_155 = arith.constant 255 : i32
    %628 = vector.broadcast %c255_i32_155 : i32 to vector<1x256xi32>
    %629 = arith.andi %616, %628 : vector<1x256xi32>
    %c177_i32_156 = arith.constant 177 : i32
    %630 = vector.broadcast %c177_i32_156 : i32 to vector<1x256xi32>
    %631 = arith.muli %619, %630 : vector<1x256xi32>
    %c255_i32_157 = arith.constant 255 : i32
    %632 = vector.broadcast %c255_i32_157 : i32 to vector<1x256xi32>
    %633 = arith.andi %631, %632 : vector<1x256xi32>
    %634 = arith.xori %629, %633 : vector<1x256xi32>
    %c149_i32_158 = arith.constant 149 : i32
    %635 = vector.broadcast %c149_i32_158 : i32 to vector<1x256xi32>
    %636 = arith.muli %622, %635 : vector<1x256xi32>
    %c255_i32_159 = arith.constant 255 : i32
    %637 = vector.broadcast %c255_i32_159 : i32 to vector<1x256xi32>
    %638 = arith.andi %636, %637 : vector<1x256xi32>
    %639 = arith.xori %634, %638 : vector<1x256xi32>
    %c255_i32_160 = arith.constant 255 : i32
    %640 = vector.broadcast %c255_i32_160 : i32 to vector<1x256xi32>
    %641 = arith.andi %639, %640 : vector<1x256xi32>
    %642 = vector.extract_strided_slice %473 {offsets = [0, 0], sizes = [1, 256], strides = [1, 1]} : vector<3x256xi32> to vector<1x256xi32>
    %c1_i32_161 = arith.constant 1 : i32
    %643 = vector.broadcast %c1_i32_161 : i32 to vector<1x256xi32>
    %644 = arith.addi %642, %643 : vector<1x256xi32>
    %645 = vector.extract_strided_slice %473 {offsets = [1, 0], sizes = [1, 256], strides = [1, 1]} : vector<3x256xi32> to vector<1x256xi32>
    %c1_i32_162 = arith.constant 1 : i32
    %646 = vector.broadcast %c1_i32_162 : i32 to vector<1x256xi32>
    %647 = arith.addi %645, %646 : vector<1x256xi32>
    %648 = vector.extract_strided_slice %473 {offsets = [2, 0], sizes = [1, 256], strides = [1, 1]} : vector<3x256xi32> to vector<1x256xi32>
    %c0_i32_163 = arith.constant 0 : i32
    %649 = vector.broadcast %c0_i32_163 : i32 to vector<1x256xi32>
    %650 = arith.addi %648, %649 : vector<1x256xi32>
    %651 = vector.extract_strided_slice %470 {offsets = [0, 0], sizes = [1, 256], strides = [1, 1]} : vector<3x256xf32> to vector<1x256xf32>
    %652 = vector.extract_strided_slice %470 {offsets = [1, 0], sizes = [1, 256], strides = [1, 1]} : vector<3x256xf32> to vector<1x256xf32>
    %653 = vector.extract_strided_slice %472 {offsets = [2, 0], sizes = [1, 256], strides = [1, 1]} : vector<3x256xf32> to vector<1x256xf32>
    %654 = arith.mulf %651, %652 : vector<1x256xf32>
    %655 = arith.mulf %654, %653 : vector<1x256xf32>
    %c255_i32_164 = arith.constant 255 : i32
    %656 = vector.broadcast %c255_i32_164 : i32 to vector<1x256xi32>
    %657 = arith.andi %644, %656 : vector<1x256xi32>
    %c177_i32_165 = arith.constant 177 : i32
    %658 = vector.broadcast %c177_i32_165 : i32 to vector<1x256xi32>
    %659 = arith.muli %647, %658 : vector<1x256xi32>
    %c255_i32_166 = arith.constant 255 : i32
    %660 = vector.broadcast %c255_i32_166 : i32 to vector<1x256xi32>
    %661 = arith.andi %659, %660 : vector<1x256xi32>
    %662 = arith.xori %657, %661 : vector<1x256xi32>
    %c149_i32_167 = arith.constant 149 : i32
    %663 = vector.broadcast %c149_i32_167 : i32 to vector<1x256xi32>
    %664 = arith.muli %650, %663 : vector<1x256xi32>
    %c255_i32_168 = arith.constant 255 : i32
    %665 = vector.broadcast %c255_i32_168 : i32 to vector<1x256xi32>
    %666 = arith.andi %664, %665 : vector<1x256xi32>
    %667 = arith.xori %662, %666 : vector<1x256xi32>
    %c255_i32_169 = arith.constant 255 : i32
    %668 = vector.broadcast %c255_i32_169 : i32 to vector<1x256xi32>
    %669 = arith.andi %667, %668 : vector<1x256xi32>
    %670 = vector.extract_strided_slice %473 {offsets = [0, 0], sizes = [1, 256], strides = [1, 1]} : vector<3x256xi32> to vector<1x256xi32>
    %c1_i32_170 = arith.constant 1 : i32
    %671 = vector.broadcast %c1_i32_170 : i32 to vector<1x256xi32>
    %672 = arith.addi %670, %671 : vector<1x256xi32>
    %673 = vector.extract_strided_slice %473 {offsets = [1, 0], sizes = [1, 256], strides = [1, 1]} : vector<3x256xi32> to vector<1x256xi32>
    %c1_i32_171 = arith.constant 1 : i32
    %674 = vector.broadcast %c1_i32_171 : i32 to vector<1x256xi32>
    %675 = arith.addi %673, %674 : vector<1x256xi32>
    %676 = vector.extract_strided_slice %473 {offsets = [2, 0], sizes = [1, 256], strides = [1, 1]} : vector<3x256xi32> to vector<1x256xi32>
    %c1_i32_172 = arith.constant 1 : i32
    %677 = vector.broadcast %c1_i32_172 : i32 to vector<1x256xi32>
    %678 = arith.addi %676, %677 : vector<1x256xi32>
    %679 = vector.extract_strided_slice %470 {offsets = [0, 0], sizes = [1, 256], strides = [1, 1]} : vector<3x256xf32> to vector<1x256xf32>
    %680 = vector.extract_strided_slice %470 {offsets = [1, 0], sizes = [1, 256], strides = [1, 1]} : vector<3x256xf32> to vector<1x256xf32>
    %681 = vector.extract_strided_slice %470 {offsets = [2, 0], sizes = [1, 256], strides = [1, 1]} : vector<3x256xf32> to vector<1x256xf32>
    %682 = arith.mulf %679, %680 : vector<1x256xf32>
    %683 = arith.mulf %682, %681 : vector<1x256xf32>
    %c255_i32_173 = arith.constant 255 : i32
    %684 = vector.broadcast %c255_i32_173 : i32 to vector<1x256xi32>
    %685 = arith.andi %672, %684 : vector<1x256xi32>
    %c177_i32_174 = arith.constant 177 : i32
    %686 = vector.broadcast %c177_i32_174 : i32 to vector<1x256xi32>
    %687 = arith.muli %675, %686 : vector<1x256xi32>
    %c255_i32_175 = arith.constant 255 : i32
    %688 = vector.broadcast %c255_i32_175 : i32 to vector<1x256xi32>
    %689 = arith.andi %687, %688 : vector<1x256xi32>
    %690 = arith.xori %685, %689 : vector<1x256xi32>
    %c149_i32_176 = arith.constant 149 : i32
    %691 = vector.broadcast %c149_i32_176 : i32 to vector<1x256xi32>
    %692 = arith.muli %678, %691 : vector<1x256xi32>
    %c255_i32_177 = arith.constant 255 : i32
    %693 = vector.broadcast %c255_i32_177 : i32 to vector<1x256xi32>
    %694 = arith.andi %692, %693 : vector<1x256xi32>
    %695 = arith.xori %690, %694 : vector<1x256xi32>
    %c255_i32_178 = arith.constant 255 : i32
    %696 = vector.broadcast %c255_i32_178 : i32 to vector<1x256xi32>
    %697 = arith.andi %695, %696 : vector<1x256xi32>
    %698 = tpu.concatenate %501, %529, %557, %585, %613, %641, %669, %697 in 1 : vector<1x256xi32>, vector<1x256xi32>, vector<1x256xi32>, vector<1x256xi32>, vector<1x256xi32>, vector<1x256xi32>, vector<1x256xi32>, vector<1x256xi32> -> vector<1x2048xi32>
    %699 = tpu.concatenate %487, %515, %543, %571, %599, %627, %655, %683 in 1 : vector<1x256xf32>, vector<1x256xf32>, vector<1x256xf32>, vector<1x256xf32>, vector<1x256xf32>, vector<1x256xf32>, vector<1x256xf32>, vector<1x256xf32> -> vector<1x2048xf32>
    %700 = tpu.iota {dimensions = array<i32: 0>} : vector<256x2048xi32>
    %701 = vector.broadcast %698 : vector<1x2048xi32> to vector<256x2048xi32>
    %702 = arith.cmpi eq, %700, %701 : vector<256x2048xi32>
    %703 = arith.extui %702 : vector<256x2048xi1> to vector<256x2048xi32>
    %704 = arith.sitofp %703 : vector<256x2048xi32> to vector<256x2048xf32>
    %cst_179 = arith.constant dense<0.000000e+00> : vector<12x2048xf32>
    %705 = tpu.matmul %462, %704, %cst_179 {dimension_numbers = #tpu.dot_dimension_numbers<[1], [0], [0], [1], [0, 0, 1, 1], [], []>} : vector<12x256xf32>, vector<256x2048xf32>, vector<12x2048xf32> -> vector<12x2048xf32>
    %706 = vector.extract_strided_slice %705 {offsets = [0, 0], sizes = [2, 2048], strides = [1, 1]} : vector<12x2048xf32> to vector<2x2048xf32>
    %707 = vector.extract_strided_slice %705 {offsets = [2, 0], sizes = [2, 2048], strides = [1, 1]} : vector<12x2048xf32> to vector<2x2048xf32>
    %708 = vector.extract_strided_slice %705 {offsets = [4, 0], sizes = [2, 2048], strides = [1, 1]} : vector<12x2048xf32> to vector<2x2048xf32>
    %709 = vector.extract_strided_slice %705 {offsets = [6, 0], sizes = [2, 2048], strides = [1, 1]} : vector<12x2048xf32> to vector<2x2048xf32>
    %710 = math.absf %709 : vector<2x2048xf32>
    %711 = vector.extract_strided_slice %705 {offsets = [8, 0], sizes = [4, 2048], strides = [1, 1]} : vector<12x2048xf32> to vector<4x2048xf32>
    %712 = tpu.concatenate %1, %1, %1, %1, %1, %1, %1, %1 in 1 : vector<1x256xf32>, vector<1x256xf32>, vector<1x256xf32>, vector<1x256xf32>, vector<1x256xf32>, vector<1x256xf32>, vector<1x256xf32>, vector<1x256xf32> -> vector<1x2048xf32>
    %713 = tpu.concatenate %2, %2, %2, %2, %2, %2, %2, %2 in 1 : vector<1x256xf32>, vector<1x256xf32>, vector<1x256xf32>, vector<1x256xf32>, vector<1x256xf32>, vector<1x256xf32>, vector<1x256xf32>, vector<1x256xf32> -> vector<1x2048xf32>
    %714 = tpu.concatenate %3, %3, %3, %3, %3, %3, %3, %3 in 1 : vector<1x256xf32>, vector<1x256xf32>, vector<1x256xf32>, vector<1x256xf32>, vector<1x256xf32>, vector<1x256xf32>, vector<1x256xf32>, vector<1x256xf32> -> vector<1x2048xf32>
    %715 = vector.broadcast %712 : vector<1x2048xf32> to vector<2x2048xf32>
    %716 = arith.subf %715, %706 : vector<2x2048xf32>
    %717 = vector.broadcast %713 : vector<1x2048xf32> to vector<2x2048xf32>
    %718 = arith.subf %717, %707 : vector<2x2048xf32>
    %719 = vector.broadcast %714 : vector<1x2048xf32> to vector<2x2048xf32>
    %720 = arith.subf %719, %708 : vector<2x2048xf32>
    %721 = arith.mulf %716, %716 : vector<2x2048xf32>
    %722 = arith.mulf %718, %718 : vector<2x2048xf32>
    %723 = arith.addf %721, %722 : vector<2x2048xf32>
    %724 = arith.mulf %720, %720 : vector<2x2048xf32>
    %725 = arith.addf %723, %724 : vector<2x2048xf32>
    %cst_180 = arith.constant 2.000000e+00 : f32
    %726 = vector.broadcast %cst_180 : f32 to vector<2x2048xf32>
    %727 = arith.mulf %726, %710 : vector<2x2048xf32>
    %728 = arith.mulf %727, %710 : vector<2x2048xf32>
    %cst_181 = arith.constant 1.000000e-07 : f32
    %729 = vector.broadcast %cst_181 : f32 to vector<2x2048xf32>
    %730 = arith.addf %728, %729 : vector<2x2048xf32>
    %731 = arith.divf %725, %730 : vector<2x2048xf32>
    %cst_182 = arith.constant 0.000000e+00 : f32
    %732 = vector.broadcast %cst_182 : f32 to vector<2x2048xf32>
    %733 = arith.subf %732, %731 : vector<2x2048xf32>
    %734 = math.exp %733 : vector<2x2048xf32>
    %cst_183 = arith.constant 2.50662827 : f32
    %735 = vector.broadcast %cst_183 : f32 to vector<2x2048xf32>
    %736 = arith.mulf %735, %710 : vector<2x2048xf32>
    %cst_184 = arith.constant 1.000000e-07 : f32
    %737 = vector.broadcast %cst_184 : f32 to vector<2x2048xf32>
    %738 = arith.addf %736, %737 : vector<2x2048xf32>
    %739 = arith.divf %734, %738 : vector<2x2048xf32>
    %740 = arith.mulf %710, %710 : vector<2x2048xf32>
    %741 = arith.divf %725, %740 : vector<2x2048xf32>
    %cst_185 = arith.constant 5.000000e-01 : f32
    %742 = vector.broadcast %cst_185 : f32 to vector<2x2048xf32>
    %743 = arith.mulf %742, %741 : vector<2x2048xf32>
    %cst_186 = arith.constant 1.000000e-07 : f32
    %744 = vector.broadcast %cst_186 : f32 to vector<1x2048xf32>
    %745 = arith.addf %699, %744 : vector<1x2048xf32>
    %746 = math.log %745 : vector<1x2048xf32>
    %747 = vector.broadcast %746 : vector<1x2048xf32> to vector<2x2048xf32>
    %748 = arith.subf %743, %747 : vector<2x2048xf32>
    %cst_187 = arith.constant dense<0x7F800000> : vector<2048xf32>
    %749 = vector.multi_reduction <minimumf>, %748, %cst_187 [0] : vector<2x2048xf32> to vector<2048xf32>
    %750 = vector.shape_cast %749 : vector<2048xf32> to vector<1x2048xf32>
    %751 = vector.extract_strided_slice %750 {offsets = [0, 0], sizes = [1, 256], strides = [1, 1]} : vector<1x2048xf32> to vector<1x256xf32>
    %752 = vector.extract_strided_slice %750 {offsets = [0, 256], sizes = [1, 256], strides = [1, 1]} : vector<1x2048xf32> to vector<1x256xf32>
    %753 = arith.minimumf %751, %752 : vector<1x256xf32>
    %754 = vector.extract_strided_slice %750 {offsets = [0, 512], sizes = [1, 256], strides = [1, 1]} : vector<1x2048xf32> to vector<1x256xf32>
    %755 = arith.minimumf %753, %754 : vector<1x256xf32>
    %756 = vector.extract_strided_slice %750 {offsets = [0, 768], sizes = [1, 256], strides = [1, 1]} : vector<1x2048xf32> to vector<1x256xf32>
    %757 = arith.minimumf %755, %756 : vector<1x256xf32>
    %758 = vector.extract_strided_slice %750 {offsets = [0, 1024], sizes = [1, 256], strides = [1, 1]} : vector<1x2048xf32> to vector<1x256xf32>
    %759 = arith.minimumf %757, %758 : vector<1x256xf32>
    %760 = vector.extract_strided_slice %750 {offsets = [0, 1280], sizes = [1, 256], strides = [1, 1]} : vector<1x2048xf32> to vector<1x256xf32>
    %761 = arith.minimumf %759, %760 : vector<1x256xf32>
    %762 = vector.extract_strided_slice %750 {offsets = [0, 1536], sizes = [1, 256], strides = [1, 1]} : vector<1x2048xf32> to vector<1x256xf32>
    %763 = arith.minimumf %761, %762 : vector<1x256xf32>
    %764 = vector.extract_strided_slice %750 {offsets = [0, 1792], sizes = [1, 256], strides = [1, 1]} : vector<1x2048xf32> to vector<1x256xf32>
    %765 = arith.minimumf %763, %764 : vector<1x256xf32>
    %766 = vector.extract_strided_slice %711 {offsets = [0, 0], sizes = [2, 2048], strides = [1, 1]} : vector<4x2048xf32> to vector<2x2048xf32>
    %767 = arith.mulf %766, %739 : vector<2x2048xf32>
    %cst_188 = arith.constant dense<0.000000e+00> : vector<2048xf32>
    %768 = vector.multi_reduction <add>, %767, %cst_188 [0] : vector<2x2048xf32> to vector<2048xf32>
    %769 = vector.shape_cast %768 : vector<2048xf32> to vector<1x2048xf32>
    %770 = arith.mulf %769, %699 : vector<1x2048xf32>
    %771 = vector.extract_strided_slice %770 {offsets = [0, 0], sizes = [1, 256], strides = [1, 1]} : vector<1x2048xf32> to vector<1x256xf32>
    %772 = vector.extract_strided_slice %770 {offsets = [0, 256], sizes = [1, 256], strides = [1, 1]} : vector<1x2048xf32> to vector<1x256xf32>
    %773 = arith.addf %771, %772 : vector<1x256xf32>
    %774 = vector.extract_strided_slice %770 {offsets = [0, 512], sizes = [1, 256], strides = [1, 1]} : vector<1x2048xf32> to vector<1x256xf32>
    %775 = arith.addf %773, %774 : vector<1x256xf32>
    %776 = vector.extract_strided_slice %770 {offsets = [0, 768], sizes = [1, 256], strides = [1, 1]} : vector<1x2048xf32> to vector<1x256xf32>
    %777 = arith.addf %775, %776 : vector<1x256xf32>
    %778 = vector.extract_strided_slice %770 {offsets = [0, 1024], sizes = [1, 256], strides = [1, 1]} : vector<1x2048xf32> to vector<1x256xf32>
    %779 = arith.addf %777, %778 : vector<1x256xf32>
    %780 = vector.extract_strided_slice %770 {offsets = [0, 1280], sizes = [1, 256], strides = [1, 1]} : vector<1x2048xf32> to vector<1x256xf32>
    %781 = arith.addf %779, %780 : vector<1x256xf32>
    %782 = vector.extract_strided_slice %770 {offsets = [0, 1536], sizes = [1, 256], strides = [1, 1]} : vector<1x2048xf32> to vector<1x256xf32>
    %783 = arith.addf %781, %782 : vector<1x256xf32>
    %784 = vector.extract_strided_slice %770 {offsets = [0, 1792], sizes = [1, 256], strides = [1, 1]} : vector<1x2048xf32> to vector<1x256xf32>
    %785 = arith.addf %783, %784 : vector<1x256xf32>
    %786 = vector.extract_strided_slice %711 {offsets = [2, 0], sizes = [2, 2048], strides = [1, 1]} : vector<4x2048xf32> to vector<2x2048xf32>
    %787 = arith.mulf %786, %739 : vector<2x2048xf32>
    %cst_189 = arith.constant dense<0.000000e+00> : vector<2048xf32>
    %788 = vector.multi_reduction <add>, %787, %cst_189 [0] : vector<2x2048xf32> to vector<2048xf32>
    %789 = vector.shape_cast %788 : vector<2048xf32> to vector<1x2048xf32>
    %790 = arith.mulf %789, %699 : vector<1x2048xf32>
    %791 = vector.extract_strided_slice %790 {offsets = [0, 0], sizes = [1, 256], strides = [1, 1]} : vector<1x2048xf32> to vector<1x256xf32>
    %792 = vector.extract_strided_slice %790 {offsets = [0, 256], sizes = [1, 256], strides = [1, 1]} : vector<1x2048xf32> to vector<1x256xf32>
    %793 = arith.addf %791, %792 : vector<1x256xf32>
    %794 = vector.extract_strided_slice %790 {offsets = [0, 512], sizes = [1, 256], strides = [1, 1]} : vector<1x2048xf32> to vector<1x256xf32>
    %795 = arith.addf %793, %794 : vector<1x256xf32>
    %796 = vector.extract_strided_slice %790 {offsets = [0, 768], sizes = [1, 256], strides = [1, 1]} : vector<1x2048xf32> to vector<1x256xf32>
    %797 = arith.addf %795, %796 : vector<1x256xf32>
    %798 = vector.extract_strided_slice %790 {offsets = [0, 1024], sizes = [1, 256], strides = [1, 1]} : vector<1x2048xf32> to vector<1x256xf32>
    %799 = arith.addf %797, %798 : vector<1x256xf32>
    %800 = vector.extract_strided_slice %790 {offsets = [0, 1280], sizes = [1, 256], strides = [1, 1]} : vector<1x2048xf32> to vector<1x256xf32>
    %801 = arith.addf %799, %800 : vector<1x256xf32>
    %802 = vector.extract_strided_slice %790 {offsets = [0, 1536], sizes = [1, 256], strides = [1, 1]} : vector<1x2048xf32> to vector<1x256xf32>
    %803 = arith.addf %801, %802 : vector<1x256xf32>
    %804 = vector.extract_strided_slice %790 {offsets = [0, 1792], sizes = [1, 256], strides = [1, 1]} : vector<1x2048xf32> to vector<1x256xf32>
    %805 = arith.addf %803, %804 : vector<1x256xf32>
    %806 = tpu.concatenate %785, %805 in 0 : vector<1x256xf32>, vector<1x256xf32> -> vector<2x256xf32>
    %c0_190 = arith.constant 0 : index
    %c0_191 = arith.constant 0 : index
    %807 = vector.load %arg5[%c0_190, %c0_191] : memref<24x256xf32, #tpu.memory_space<vmem>>, vector<24x256xf32>
    %cst_192 = arith.constant 1.300000e+01 : f32
    %808 = vector.broadcast %cst_192 : f32 to vector<3x256xf32>
    %809 = arith.mulf %808, %0 : vector<3x256xf32>
    %cst_193 = arith.constant 0.000000e+00 : f32
    %cst_194 = arith.constant 1.199900e+01 : f32
    %810 = vector.broadcast %cst_193 : f32 to vector<3x256xf32>
    %811 = arith.maximumf %810, %809 : vector<3x256xf32>
    %812 = vector.broadcast %cst_194 : f32 to vector<3x256xf32>
    %813 = arith.minimumf %812, %811 : vector<3x256xf32>
    %814 = math.floor %813 : vector<3x256xf32>
    %815 = arith.subf %813, %814 : vector<3x256xf32>
    %cst_195 = arith.constant 1.000000e+00 : f32
    %816 = vector.broadcast %cst_195 : f32 to vector<3x256xf32>
    %817 = arith.subf %816, %815 : vector<3x256xf32>
    %818 = arith.fptosi %814 : vector<3x256xf32> to vector<3x256xi32>
    %819 = vector.extract_strided_slice %818 {offsets = [0, 0], sizes = [1, 256], strides = [1, 1]} : vector<3x256xi32> to vector<1x256xi32>
    %c0_i32_196 = arith.constant 0 : i32
    %820 = vector.broadcast %c0_i32_196 : i32 to vector<1x256xi32>
    %821 = arith.addi %819, %820 : vector<1x256xi32>
    %822 = vector.extract_strided_slice %818 {offsets = [1, 0], sizes = [1, 256], strides = [1, 1]} : vector<3x256xi32> to vector<1x256xi32>
    %c0_i32_197 = arith.constant 0 : i32
    %823 = vector.broadcast %c0_i32_197 : i32 to vector<1x256xi32>
    %824 = arith.addi %822, %823 : vector<1x256xi32>
    %825 = vector.extract_strided_slice %818 {offsets = [2, 0], sizes = [1, 256], strides = [1, 1]} : vector<3x256xi32> to vector<1x256xi32>
    %c0_i32_198 = arith.constant 0 : i32
    %826 = vector.broadcast %c0_i32_198 : i32 to vector<1x256xi32>
    %827 = arith.addi %825, %826 : vector<1x256xi32>
    %828 = vector.extract_strided_slice %817 {offsets = [0, 0], sizes = [1, 256], strides = [1, 1]} : vector<3x256xf32> to vector<1x256xf32>
    %829 = vector.extract_strided_slice %817 {offsets = [1, 0], sizes = [1, 256], strides = [1, 1]} : vector<3x256xf32> to vector<1x256xf32>
    %830 = vector.extract_strided_slice %817 {offsets = [2, 0], sizes = [1, 256], strides = [1, 1]} : vector<3x256xf32> to vector<1x256xf32>
    %831 = arith.mulf %828, %829 : vector<1x256xf32>
    %832 = arith.mulf %831, %830 : vector<1x256xf32>
    %c255_i32_199 = arith.constant 255 : i32
    %833 = vector.broadcast %c255_i32_199 : i32 to vector<1x256xi32>
    %834 = arith.andi %821, %833 : vector<1x256xi32>
    %c177_i32_200 = arith.constant 177 : i32
    %835 = vector.broadcast %c177_i32_200 : i32 to vector<1x256xi32>
    %836 = arith.muli %824, %835 : vector<1x256xi32>
    %c255_i32_201 = arith.constant 255 : i32
    %837 = vector.broadcast %c255_i32_201 : i32 to vector<1x256xi32>
    %838 = arith.andi %836, %837 : vector<1x256xi32>
    %839 = arith.xori %834, %838 : vector<1x256xi32>
    %c149_i32_202 = arith.constant 149 : i32
    %840 = vector.broadcast %c149_i32_202 : i32 to vector<1x256xi32>
    %841 = arith.muli %827, %840 : vector<1x256xi32>
    %c255_i32_203 = arith.constant 255 : i32
    %842 = vector.broadcast %c255_i32_203 : i32 to vector<1x256xi32>
    %843 = arith.andi %841, %842 : vector<1x256xi32>
    %844 = arith.xori %839, %843 : vector<1x256xi32>
    %c255_i32_204 = arith.constant 255 : i32
    %845 = vector.broadcast %c255_i32_204 : i32 to vector<1x256xi32>
    %846 = arith.andi %844, %845 : vector<1x256xi32>
    %847 = vector.extract_strided_slice %818 {offsets = [0, 0], sizes = [1, 256], strides = [1, 1]} : vector<3x256xi32> to vector<1x256xi32>
    %c0_i32_205 = arith.constant 0 : i32
    %848 = vector.broadcast %c0_i32_205 : i32 to vector<1x256xi32>
    %849 = arith.addi %847, %848 : vector<1x256xi32>
    %850 = vector.extract_strided_slice %818 {offsets = [1, 0], sizes = [1, 256], strides = [1, 1]} : vector<3x256xi32> to vector<1x256xi32>
    %c0_i32_206 = arith.constant 0 : i32
    %851 = vector.broadcast %c0_i32_206 : i32 to vector<1x256xi32>
    %852 = arith.addi %850, %851 : vector<1x256xi32>
    %853 = vector.extract_strided_slice %818 {offsets = [2, 0], sizes = [1, 256], strides = [1, 1]} : vector<3x256xi32> to vector<1x256xi32>
    %c1_i32_207 = arith.constant 1 : i32
    %854 = vector.broadcast %c1_i32_207 : i32 to vector<1x256xi32>
    %855 = arith.addi %853, %854 : vector<1x256xi32>
    %856 = vector.extract_strided_slice %817 {offsets = [0, 0], sizes = [1, 256], strides = [1, 1]} : vector<3x256xf32> to vector<1x256xf32>
    %857 = vector.extract_strided_slice %817 {offsets = [1, 0], sizes = [1, 256], strides = [1, 1]} : vector<3x256xf32> to vector<1x256xf32>
    %858 = vector.extract_strided_slice %815 {offsets = [2, 0], sizes = [1, 256], strides = [1, 1]} : vector<3x256xf32> to vector<1x256xf32>
    %859 = arith.mulf %856, %857 : vector<1x256xf32>
    %860 = arith.mulf %859, %858 : vector<1x256xf32>
    %c255_i32_208 = arith.constant 255 : i32
    %861 = vector.broadcast %c255_i32_208 : i32 to vector<1x256xi32>
    %862 = arith.andi %849, %861 : vector<1x256xi32>
    %c177_i32_209 = arith.constant 177 : i32
    %863 = vector.broadcast %c177_i32_209 : i32 to vector<1x256xi32>
    %864 = arith.muli %852, %863 : vector<1x256xi32>
    %c255_i32_210 = arith.constant 255 : i32
    %865 = vector.broadcast %c255_i32_210 : i32 to vector<1x256xi32>
    %866 = arith.andi %864, %865 : vector<1x256xi32>
    %867 = arith.xori %862, %866 : vector<1x256xi32>
    %c149_i32_211 = arith.constant 149 : i32
    %868 = vector.broadcast %c149_i32_211 : i32 to vector<1x256xi32>
    %869 = arith.muli %855, %868 : vector<1x256xi32>
    %c255_i32_212 = arith.constant 255 : i32
    %870 = vector.broadcast %c255_i32_212 : i32 to vector<1x256xi32>
    %871 = arith.andi %869, %870 : vector<1x256xi32>
    %872 = arith.xori %867, %871 : vector<1x256xi32>
    %c255_i32_213 = arith.constant 255 : i32
    %873 = vector.broadcast %c255_i32_213 : i32 to vector<1x256xi32>
    %874 = arith.andi %872, %873 : vector<1x256xi32>
    %875 = vector.extract_strided_slice %818 {offsets = [0, 0], sizes = [1, 256], strides = [1, 1]} : vector<3x256xi32> to vector<1x256xi32>
    %c0_i32_214 = arith.constant 0 : i32
    %876 = vector.broadcast %c0_i32_214 : i32 to vector<1x256xi32>
    %877 = arith.addi %875, %876 : vector<1x256xi32>
    %878 = vector.extract_strided_slice %818 {offsets = [1, 0], sizes = [1, 256], strides = [1, 1]} : vector<3x256xi32> to vector<1x256xi32>
    %c1_i32_215 = arith.constant 1 : i32
    %879 = vector.broadcast %c1_i32_215 : i32 to vector<1x256xi32>
    %880 = arith.addi %878, %879 : vector<1x256xi32>
    %881 = vector.extract_strided_slice %818 {offsets = [2, 0], sizes = [1, 256], strides = [1, 1]} : vector<3x256xi32> to vector<1x256xi32>
    %c0_i32_216 = arith.constant 0 : i32
    %882 = vector.broadcast %c0_i32_216 : i32 to vector<1x256xi32>
    %883 = arith.addi %881, %882 : vector<1x256xi32>
    %884 = vector.extract_strided_slice %817 {offsets = [0, 0], sizes = [1, 256], strides = [1, 1]} : vector<3x256xf32> to vector<1x256xf32>
    %885 = vector.extract_strided_slice %815 {offsets = [1, 0], sizes = [1, 256], strides = [1, 1]} : vector<3x256xf32> to vector<1x256xf32>
    %886 = vector.extract_strided_slice %817 {offsets = [2, 0], sizes = [1, 256], strides = [1, 1]} : vector<3x256xf32> to vector<1x256xf32>
    %887 = arith.mulf %884, %885 : vector<1x256xf32>
    %888 = arith.mulf %887, %886 : vector<1x256xf32>
    %c255_i32_217 = arith.constant 255 : i32
    %889 = vector.broadcast %c255_i32_217 : i32 to vector<1x256xi32>
    %890 = arith.andi %877, %889 : vector<1x256xi32>
    %c177_i32_218 = arith.constant 177 : i32
    %891 = vector.broadcast %c177_i32_218 : i32 to vector<1x256xi32>
    %892 = arith.muli %880, %891 : vector<1x256xi32>
    %c255_i32_219 = arith.constant 255 : i32
    %893 = vector.broadcast %c255_i32_219 : i32 to vector<1x256xi32>
    %894 = arith.andi %892, %893 : vector<1x256xi32>
    %895 = arith.xori %890, %894 : vector<1x256xi32>
    %c149_i32_220 = arith.constant 149 : i32
    %896 = vector.broadcast %c149_i32_220 : i32 to vector<1x256xi32>
    %897 = arith.muli %883, %896 : vector<1x256xi32>
    %c255_i32_221 = arith.constant 255 : i32
    %898 = vector.broadcast %c255_i32_221 : i32 to vector<1x256xi32>
    %899 = arith.andi %897, %898 : vector<1x256xi32>
    %900 = arith.xori %895, %899 : vector<1x256xi32>
    %c255_i32_222 = arith.constant 255 : i32
    %901 = vector.broadcast %c255_i32_222 : i32 to vector<1x256xi32>
    %902 = arith.andi %900, %901 : vector<1x256xi32>
    %903 = vector.extract_strided_slice %818 {offsets = [0, 0], sizes = [1, 256], strides = [1, 1]} : vector<3x256xi32> to vector<1x256xi32>
    %c0_i32_223 = arith.constant 0 : i32
    %904 = vector.broadcast %c0_i32_223 : i32 to vector<1x256xi32>
    %905 = arith.addi %903, %904 : vector<1x256xi32>
    %906 = vector.extract_strided_slice %818 {offsets = [1, 0], sizes = [1, 256], strides = [1, 1]} : vector<3x256xi32> to vector<1x256xi32>
    %c1_i32_224 = arith.constant 1 : i32
    %907 = vector.broadcast %c1_i32_224 : i32 to vector<1x256xi32>
    %908 = arith.addi %906, %907 : vector<1x256xi32>
    %909 = vector.extract_strided_slice %818 {offsets = [2, 0], sizes = [1, 256], strides = [1, 1]} : vector<3x256xi32> to vector<1x256xi32>
    %c1_i32_225 = arith.constant 1 : i32
    %910 = vector.broadcast %c1_i32_225 : i32 to vector<1x256xi32>
    %911 = arith.addi %909, %910 : vector<1x256xi32>
    %912 = vector.extract_strided_slice %817 {offsets = [0, 0], sizes = [1, 256], strides = [1, 1]} : vector<3x256xf32> to vector<1x256xf32>
    %913 = vector.extract_strided_slice %815 {offsets = [1, 0], sizes = [1, 256], strides = [1, 1]} : vector<3x256xf32> to vector<1x256xf32>
    %914 = vector.extract_strided_slice %815 {offsets = [2, 0], sizes = [1, 256], strides = [1, 1]} : vector<3x256xf32> to vector<1x256xf32>
    %915 = arith.mulf %912, %913 : vector<1x256xf32>
    %916 = arith.mulf %915, %914 : vector<1x256xf32>
    %c255_i32_226 = arith.constant 255 : i32
    %917 = vector.broadcast %c255_i32_226 : i32 to vector<1x256xi32>
    %918 = arith.andi %905, %917 : vector<1x256xi32>
    %c177_i32_227 = arith.constant 177 : i32
    %919 = vector.broadcast %c177_i32_227 : i32 to vector<1x256xi32>
    %920 = arith.muli %908, %919 : vector<1x256xi32>
    %c255_i32_228 = arith.constant 255 : i32
    %921 = vector.broadcast %c255_i32_228 : i32 to vector<1x256xi32>
    %922 = arith.andi %920, %921 : vector<1x256xi32>
    %923 = arith.xori %918, %922 : vector<1x256xi32>
    %c149_i32_229 = arith.constant 149 : i32
    %924 = vector.broadcast %c149_i32_229 : i32 to vector<1x256xi32>
    %925 = arith.muli %911, %924 : vector<1x256xi32>
    %c255_i32_230 = arith.constant 255 : i32
    %926 = vector.broadcast %c255_i32_230 : i32 to vector<1x256xi32>
    %927 = arith.andi %925, %926 : vector<1x256xi32>
    %928 = arith.xori %923, %927 : vector<1x256xi32>
    %c255_i32_231 = arith.constant 255 : i32
    %929 = vector.broadcast %c255_i32_231 : i32 to vector<1x256xi32>
    %930 = arith.andi %928, %929 : vector<1x256xi32>
    %931 = vector.extract_strided_slice %818 {offsets = [0, 0], sizes = [1, 256], strides = [1, 1]} : vector<3x256xi32> to vector<1x256xi32>
    %c1_i32_232 = arith.constant 1 : i32
    %932 = vector.broadcast %c1_i32_232 : i32 to vector<1x256xi32>
    %933 = arith.addi %931, %932 : vector<1x256xi32>
    %934 = vector.extract_strided_slice %818 {offsets = [1, 0], sizes = [1, 256], strides = [1, 1]} : vector<3x256xi32> to vector<1x256xi32>
    %c0_i32_233 = arith.constant 0 : i32
    %935 = vector.broadcast %c0_i32_233 : i32 to vector<1x256xi32>
    %936 = arith.addi %934, %935 : vector<1x256xi32>
    %937 = vector.extract_strided_slice %818 {offsets = [2, 0], sizes = [1, 256], strides = [1, 1]} : vector<3x256xi32> to vector<1x256xi32>
    %c0_i32_234 = arith.constant 0 : i32
    %938 = vector.broadcast %c0_i32_234 : i32 to vector<1x256xi32>
    %939 = arith.addi %937, %938 : vector<1x256xi32>
    %940 = vector.extract_strided_slice %815 {offsets = [0, 0], sizes = [1, 256], strides = [1, 1]} : vector<3x256xf32> to vector<1x256xf32>
    %941 = vector.extract_strided_slice %817 {offsets = [1, 0], sizes = [1, 256], strides = [1, 1]} : vector<3x256xf32> to vector<1x256xf32>
    %942 = vector.extract_strided_slice %817 {offsets = [2, 0], sizes = [1, 256], strides = [1, 1]} : vector<3x256xf32> to vector<1x256xf32>
    %943 = arith.mulf %940, %941 : vector<1x256xf32>
    %944 = arith.mulf %943, %942 : vector<1x256xf32>
    %c255_i32_235 = arith.constant 255 : i32
    %945 = vector.broadcast %c255_i32_235 : i32 to vector<1x256xi32>
    %946 = arith.andi %933, %945 : vector<1x256xi32>
    %c177_i32_236 = arith.constant 177 : i32
    %947 = vector.broadcast %c177_i32_236 : i32 to vector<1x256xi32>
    %948 = arith.muli %936, %947 : vector<1x256xi32>
    %c255_i32_237 = arith.constant 255 : i32
    %949 = vector.broadcast %c255_i32_237 : i32 to vector<1x256xi32>
    %950 = arith.andi %948, %949 : vector<1x256xi32>
    %951 = arith.xori %946, %950 : vector<1x256xi32>
    %c149_i32_238 = arith.constant 149 : i32
    %952 = vector.broadcast %c149_i32_238 : i32 to vector<1x256xi32>
    %953 = arith.muli %939, %952 : vector<1x256xi32>
    %c255_i32_239 = arith.constant 255 : i32
    %954 = vector.broadcast %c255_i32_239 : i32 to vector<1x256xi32>
    %955 = arith.andi %953, %954 : vector<1x256xi32>
    %956 = arith.xori %951, %955 : vector<1x256xi32>
    %c255_i32_240 = arith.constant 255 : i32
    %957 = vector.broadcast %c255_i32_240 : i32 to vector<1x256xi32>
    %958 = arith.andi %956, %957 : vector<1x256xi32>
    %959 = vector.extract_strided_slice %818 {offsets = [0, 0], sizes = [1, 256], strides = [1, 1]} : vector<3x256xi32> to vector<1x256xi32>
    %c1_i32_241 = arith.constant 1 : i32
    %960 = vector.broadcast %c1_i32_241 : i32 to vector<1x256xi32>
    %961 = arith.addi %959, %960 : vector<1x256xi32>
    %962 = vector.extract_strided_slice %818 {offsets = [1, 0], sizes = [1, 256], strides = [1, 1]} : vector<3x256xi32> to vector<1x256xi32>
    %c0_i32_242 = arith.constant 0 : i32
    %963 = vector.broadcast %c0_i32_242 : i32 to vector<1x256xi32>
    %964 = arith.addi %962, %963 : vector<1x256xi32>
    %965 = vector.extract_strided_slice %818 {offsets = [2, 0], sizes = [1, 256], strides = [1, 1]} : vector<3x256xi32> to vector<1x256xi32>
    %c1_i32_243 = arith.constant 1 : i32
    %966 = vector.broadcast %c1_i32_243 : i32 to vector<1x256xi32>
    %967 = arith.addi %965, %966 : vector<1x256xi32>
    %968 = vector.extract_strided_slice %815 {offsets = [0, 0], sizes = [1, 256], strides = [1, 1]} : vector<3x256xf32> to vector<1x256xf32>
    %969 = vector.extract_strided_slice %817 {offsets = [1, 0], sizes = [1, 256], strides = [1, 1]} : vector<3x256xf32> to vector<1x256xf32>
    %970 = vector.extract_strided_slice %815 {offsets = [2, 0], sizes = [1, 256], strides = [1, 1]} : vector<3x256xf32> to vector<1x256xf32>
    %971 = arith.mulf %968, %969 : vector<1x256xf32>
    %972 = arith.mulf %971, %970 : vector<1x256xf32>
    %c255_i32_244 = arith.constant 255 : i32
    %973 = vector.broadcast %c255_i32_244 : i32 to vector<1x256xi32>
    %974 = arith.andi %961, %973 : vector<1x256xi32>
    %c177_i32_245 = arith.constant 177 : i32
    %975 = vector.broadcast %c177_i32_245 : i32 to vector<1x256xi32>
    %976 = arith.muli %964, %975 : vector<1x256xi32>
    %c255_i32_246 = arith.constant 255 : i32
    %977 = vector.broadcast %c255_i32_246 : i32 to vector<1x256xi32>
    %978 = arith.andi %976, %977 : vector<1x256xi32>
    %979 = arith.xori %974, %978 : vector<1x256xi32>
    %c149_i32_247 = arith.constant 149 : i32
    %980 = vector.broadcast %c149_i32_247 : i32 to vector<1x256xi32>
    %981 = arith.muli %967, %980 : vector<1x256xi32>
    %c255_i32_248 = arith.constant 255 : i32
    %982 = vector.broadcast %c255_i32_248 : i32 to vector<1x256xi32>
    %983 = arith.andi %981, %982 : vector<1x256xi32>
    %984 = arith.xori %979, %983 : vector<1x256xi32>
    %c255_i32_249 = arith.constant 255 : i32
    %985 = vector.broadcast %c255_i32_249 : i32 to vector<1x256xi32>
    %986 = arith.andi %984, %985 : vector<1x256xi32>
    %987 = vector.extract_strided_slice %818 {offsets = [0, 0], sizes = [1, 256], strides = [1, 1]} : vector<3x256xi32> to vector<1x256xi32>
    %c1_i32_250 = arith.constant 1 : i32
    %988 = vector.broadcast %c1_i32_250 : i32 to vector<1x256xi32>
    %989 = arith.addi %987, %988 : vector<1x256xi32>
    %990 = vector.extract_strided_slice %818 {offsets = [1, 0], sizes = [1, 256], strides = [1, 1]} : vector<3x256xi32> to vector<1x256xi32>
    %c1_i32_251 = arith.constant 1 : i32
    %991 = vector.broadcast %c1_i32_251 : i32 to vector<1x256xi32>
    %992 = arith.addi %990, %991 : vector<1x256xi32>
    %993 = vector.extract_strided_slice %818 {offsets = [2, 0], sizes = [1, 256], strides = [1, 1]} : vector<3x256xi32> to vector<1x256xi32>
    %c0_i32_252 = arith.constant 0 : i32
    %994 = vector.broadcast %c0_i32_252 : i32 to vector<1x256xi32>
    %995 = arith.addi %993, %994 : vector<1x256xi32>
    %996 = vector.extract_strided_slice %815 {offsets = [0, 0], sizes = [1, 256], strides = [1, 1]} : vector<3x256xf32> to vector<1x256xf32>
    %997 = vector.extract_strided_slice %815 {offsets = [1, 0], sizes = [1, 256], strides = [1, 1]} : vector<3x256xf32> to vector<1x256xf32>
    %998 = vector.extract_strided_slice %817 {offsets = [2, 0], sizes = [1, 256], strides = [1, 1]} : vector<3x256xf32> to vector<1x256xf32>
    %999 = arith.mulf %996, %997 : vector<1x256xf32>
    %1000 = arith.mulf %999, %998 : vector<1x256xf32>
    %c255_i32_253 = arith.constant 255 : i32
    %1001 = vector.broadcast %c255_i32_253 : i32 to vector<1x256xi32>
    %1002 = arith.andi %989, %1001 : vector<1x256xi32>
    %c177_i32_254 = arith.constant 177 : i32
    %1003 = vector.broadcast %c177_i32_254 : i32 to vector<1x256xi32>
    %1004 = arith.muli %992, %1003 : vector<1x256xi32>
    %c255_i32_255 = arith.constant 255 : i32
    %1005 = vector.broadcast %c255_i32_255 : i32 to vector<1x256xi32>
    %1006 = arith.andi %1004, %1005 : vector<1x256xi32>
    %1007 = arith.xori %1002, %1006 : vector<1x256xi32>
    %c149_i32_256 = arith.constant 149 : i32
    %1008 = vector.broadcast %c149_i32_256 : i32 to vector<1x256xi32>
    %1009 = arith.muli %995, %1008 : vector<1x256xi32>
    %c255_i32_257 = arith.constant 255 : i32
    %1010 = vector.broadcast %c255_i32_257 : i32 to vector<1x256xi32>
    %1011 = arith.andi %1009, %1010 : vector<1x256xi32>
    %1012 = arith.xori %1007, %1011 : vector<1x256xi32>
    %c255_i32_258 = arith.constant 255 : i32
    %1013 = vector.broadcast %c255_i32_258 : i32 to vector<1x256xi32>
    %1014 = arith.andi %1012, %1013 : vector<1x256xi32>
    %1015 = vector.extract_strided_slice %818 {offsets = [0, 0], sizes = [1, 256], strides = [1, 1]} : vector<3x256xi32> to vector<1x256xi32>
    %c1_i32_259 = arith.constant 1 : i32
    %1016 = vector.broadcast %c1_i32_259 : i32 to vector<1x256xi32>
    %1017 = arith.addi %1015, %1016 : vector<1x256xi32>
    %1018 = vector.extract_strided_slice %818 {offsets = [1, 0], sizes = [1, 256], strides = [1, 1]} : vector<3x256xi32> to vector<1x256xi32>
    %c1_i32_260 = arith.constant 1 : i32
    %1019 = vector.broadcast %c1_i32_260 : i32 to vector<1x256xi32>
    %1020 = arith.addi %1018, %1019 : vector<1x256xi32>
    %1021 = vector.extract_strided_slice %818 {offsets = [2, 0], sizes = [1, 256], strides = [1, 1]} : vector<3x256xi32> to vector<1x256xi32>
    %c1_i32_261 = arith.constant 1 : i32
    %1022 = vector.broadcast %c1_i32_261 : i32 to vector<1x256xi32>
    %1023 = arith.addi %1021, %1022 : vector<1x256xi32>
    %1024 = vector.extract_strided_slice %815 {offsets = [0, 0], sizes = [1, 256], strides = [1, 1]} : vector<3x256xf32> to vector<1x256xf32>
    %1025 = vector.extract_strided_slice %815 {offsets = [1, 0], sizes = [1, 256], strides = [1, 1]} : vector<3x256xf32> to vector<1x256xf32>
    %1026 = vector.extract_strided_slice %815 {offsets = [2, 0], sizes = [1, 256], strides = [1, 1]} : vector<3x256xf32> to vector<1x256xf32>
    %1027 = arith.mulf %1024, %1025 : vector<1x256xf32>
    %1028 = arith.mulf %1027, %1026 : vector<1x256xf32>
    %c255_i32_262 = arith.constant 255 : i32
    %1029 = vector.broadcast %c255_i32_262 : i32 to vector<1x256xi32>
    %1030 = arith.andi %1017, %1029 : vector<1x256xi32>
    %c177_i32_263 = arith.constant 177 : i32
    %1031 = vector.broadcast %c177_i32_263 : i32 to vector<1x256xi32>
    %1032 = arith.muli %1020, %1031 : vector<1x256xi32>
    %c255_i32_264 = arith.constant 255 : i32
    %1033 = vector.broadcast %c255_i32_264 : i32 to vector<1x256xi32>
    %1034 = arith.andi %1032, %1033 : vector<1x256xi32>
    %1035 = arith.xori %1030, %1034 : vector<1x256xi32>
    %c149_i32_265 = arith.constant 149 : i32
    %1036 = vector.broadcast %c149_i32_265 : i32 to vector<1x256xi32>
    %1037 = arith.muli %1023, %1036 : vector<1x256xi32>
    %c255_i32_266 = arith.constant 255 : i32
    %1038 = vector.broadcast %c255_i32_266 : i32 to vector<1x256xi32>
    %1039 = arith.andi %1037, %1038 : vector<1x256xi32>
    %1040 = arith.xori %1035, %1039 : vector<1x256xi32>
    %c255_i32_267 = arith.constant 255 : i32
    %1041 = vector.broadcast %c255_i32_267 : i32 to vector<1x256xi32>
    %1042 = arith.andi %1040, %1041 : vector<1x256xi32>
    %1043 = tpu.concatenate %846, %874, %902, %930, %958, %986, %1014, %1042 in 1 : vector<1x256xi32>, vector<1x256xi32>, vector<1x256xi32>, vector<1x256xi32>, vector<1x256xi32>, vector<1x256xi32>, vector<1x256xi32>, vector<1x256xi32> -> vector<1x2048xi32>
    %1044 = tpu.concatenate %832, %860, %888, %916, %944, %972, %1000, %1028 in 1 : vector<1x256xf32>, vector<1x256xf32>, vector<1x256xf32>, vector<1x256xf32>, vector<1x256xf32>, vector<1x256xf32>, vector<1x256xf32>, vector<1x256xf32> -> vector<1x2048xf32>
    %1045 = tpu.iota {dimensions = array<i32: 0>} : vector<256x2048xi32>
    %1046 = vector.broadcast %1043 : vector<1x2048xi32> to vector<256x2048xi32>
    %1047 = arith.cmpi eq, %1045, %1046 : vector<256x2048xi32>
    %1048 = arith.extui %1047 : vector<256x2048xi1> to vector<256x2048xi32>
    %1049 = arith.sitofp %1048 : vector<256x2048xi32> to vector<256x2048xf32>
    %cst_268 = arith.constant dense<0.000000e+00> : vector<24x2048xf32>
    %1050 = tpu.matmul %807, %1049, %cst_268 {dimension_numbers = #tpu.dot_dimension_numbers<[1], [0], [0], [1], [0, 0, 1, 1], [], []>} : vector<24x256xf32>, vector<256x2048xf32>, vector<24x2048xf32> -> vector<24x2048xf32>
    %1051 = vector.extract_strided_slice %1050 {offsets = [0, 0], sizes = [4, 2048], strides = [1, 1]} : vector<24x2048xf32> to vector<4x2048xf32>
    %1052 = vector.extract_strided_slice %1050 {offsets = [4, 0], sizes = [4, 2048], strides = [1, 1]} : vector<24x2048xf32> to vector<4x2048xf32>
    %1053 = vector.extract_strided_slice %1050 {offsets = [8, 0], sizes = [4, 2048], strides = [1, 1]} : vector<24x2048xf32> to vector<4x2048xf32>
    %1054 = vector.extract_strided_slice %1050 {offsets = [12, 0], sizes = [4, 2048], strides = [1, 1]} : vector<24x2048xf32> to vector<4x2048xf32>
    %1055 = math.absf %1054 : vector<4x2048xf32>
    %1056 = vector.extract_strided_slice %1050 {offsets = [16, 0], sizes = [8, 2048], strides = [1, 1]} : vector<24x2048xf32> to vector<8x2048xf32>
    %1057 = tpu.concatenate %1, %1, %1, %1, %1, %1, %1, %1 in 1 : vector<1x256xf32>, vector<1x256xf32>, vector<1x256xf32>, vector<1x256xf32>, vector<1x256xf32>, vector<1x256xf32>, vector<1x256xf32>, vector<1x256xf32> -> vector<1x2048xf32>
    %1058 = tpu.concatenate %2, %2, %2, %2, %2, %2, %2, %2 in 1 : vector<1x256xf32>, vector<1x256xf32>, vector<1x256xf32>, vector<1x256xf32>, vector<1x256xf32>, vector<1x256xf32>, vector<1x256xf32>, vector<1x256xf32> -> vector<1x2048xf32>
    %1059 = tpu.concatenate %3, %3, %3, %3, %3, %3, %3, %3 in 1 : vector<1x256xf32>, vector<1x256xf32>, vector<1x256xf32>, vector<1x256xf32>, vector<1x256xf32>, vector<1x256xf32>, vector<1x256xf32>, vector<1x256xf32> -> vector<1x2048xf32>
    %1060 = vector.broadcast %1057 : vector<1x2048xf32> to vector<4x2048xf32>
    %1061 = arith.subf %1060, %1051 : vector<4x2048xf32>
    %1062 = vector.broadcast %1058 : vector<1x2048xf32> to vector<4x2048xf32>
    %1063 = arith.subf %1062, %1052 : vector<4x2048xf32>
    %1064 = vector.broadcast %1059 : vector<1x2048xf32> to vector<4x2048xf32>
    %1065 = arith.subf %1064, %1053 : vector<4x2048xf32>
    %1066 = arith.mulf %1061, %1061 : vector<4x2048xf32>
    %1067 = arith.mulf %1063, %1063 : vector<4x2048xf32>
    %1068 = arith.addf %1066, %1067 : vector<4x2048xf32>
    %1069 = arith.mulf %1065, %1065 : vector<4x2048xf32>
    %1070 = arith.addf %1068, %1069 : vector<4x2048xf32>
    %cst_269 = arith.constant 2.000000e+00 : f32
    %1071 = vector.broadcast %cst_269 : f32 to vector<4x2048xf32>
    %1072 = arith.mulf %1071, %1055 : vector<4x2048xf32>
    %1073 = arith.mulf %1072, %1055 : vector<4x2048xf32>
    %cst_270 = arith.constant 1.000000e-07 : f32
    %1074 = vector.broadcast %cst_270 : f32 to vector<4x2048xf32>
    %1075 = arith.addf %1073, %1074 : vector<4x2048xf32>
    %1076 = arith.divf %1070, %1075 : vector<4x2048xf32>
    %cst_271 = arith.constant 0.000000e+00 : f32
    %1077 = vector.broadcast %cst_271 : f32 to vector<4x2048xf32>
    %1078 = arith.subf %1077, %1076 : vector<4x2048xf32>
    %1079 = math.exp %1078 : vector<4x2048xf32>
    %cst_272 = arith.constant 2.50662827 : f32
    %1080 = vector.broadcast %cst_272 : f32 to vector<4x2048xf32>
    %1081 = arith.mulf %1080, %1055 : vector<4x2048xf32>
    %cst_273 = arith.constant 1.000000e-07 : f32
    %1082 = vector.broadcast %cst_273 : f32 to vector<4x2048xf32>
    %1083 = arith.addf %1081, %1082 : vector<4x2048xf32>
    %1084 = arith.divf %1079, %1083 : vector<4x2048xf32>
    %1085 = arith.mulf %1055, %1055 : vector<4x2048xf32>
    %1086 = arith.divf %1070, %1085 : vector<4x2048xf32>
    %cst_274 = arith.constant 5.000000e-01 : f32
    %1087 = vector.broadcast %cst_274 : f32 to vector<4x2048xf32>
    %1088 = arith.mulf %1087, %1086 : vector<4x2048xf32>
    %cst_275 = arith.constant 1.000000e-07 : f32
    %1089 = vector.broadcast %cst_275 : f32 to vector<1x2048xf32>
    %1090 = arith.addf %1044, %1089 : vector<1x2048xf32>
    %1091 = math.log %1090 : vector<1x2048xf32>
    %1092 = vector.broadcast %1091 : vector<1x2048xf32> to vector<4x2048xf32>
    %1093 = arith.subf %1088, %1092 : vector<4x2048xf32>
    %cst_276 = arith.constant dense<0x7F800000> : vector<2048xf32>
    %1094 = vector.multi_reduction <minimumf>, %1093, %cst_276 [0] : vector<4x2048xf32> to vector<2048xf32>
    %1095 = vector.shape_cast %1094 : vector<2048xf32> to vector<1x2048xf32>
    %1096 = vector.extract_strided_slice %1095 {offsets = [0, 0], sizes = [1, 256], strides = [1, 1]} : vector<1x2048xf32> to vector<1x256xf32>
    %1097 = vector.extract_strided_slice %1095 {offsets = [0, 256], sizes = [1, 256], strides = [1, 1]} : vector<1x2048xf32> to vector<1x256xf32>
    %1098 = arith.minimumf %1096, %1097 : vector<1x256xf32>
    %1099 = vector.extract_strided_slice %1095 {offsets = [0, 512], sizes = [1, 256], strides = [1, 1]} : vector<1x2048xf32> to vector<1x256xf32>
    %1100 = arith.minimumf %1098, %1099 : vector<1x256xf32>
    %1101 = vector.extract_strided_slice %1095 {offsets = [0, 768], sizes = [1, 256], strides = [1, 1]} : vector<1x2048xf32> to vector<1x256xf32>
    %1102 = arith.minimumf %1100, %1101 : vector<1x256xf32>
    %1103 = vector.extract_strided_slice %1095 {offsets = [0, 1024], sizes = [1, 256], strides = [1, 1]} : vector<1x2048xf32> to vector<1x256xf32>
    %1104 = arith.minimumf %1102, %1103 : vector<1x256xf32>
    %1105 = vector.extract_strided_slice %1095 {offsets = [0, 1280], sizes = [1, 256], strides = [1, 1]} : vector<1x2048xf32> to vector<1x256xf32>
    %1106 = arith.minimumf %1104, %1105 : vector<1x256xf32>
    %1107 = vector.extract_strided_slice %1095 {offsets = [0, 1536], sizes = [1, 256], strides = [1, 1]} : vector<1x2048xf32> to vector<1x256xf32>
    %1108 = arith.minimumf %1106, %1107 : vector<1x256xf32>
    %1109 = vector.extract_strided_slice %1095 {offsets = [0, 1792], sizes = [1, 256], strides = [1, 1]} : vector<1x2048xf32> to vector<1x256xf32>
    %1110 = arith.minimumf %1108, %1109 : vector<1x256xf32>
    %1111 = vector.extract_strided_slice %1056 {offsets = [0, 0], sizes = [4, 2048], strides = [1, 1]} : vector<8x2048xf32> to vector<4x2048xf32>
    %1112 = arith.mulf %1111, %1084 : vector<4x2048xf32>
    %cst_277 = arith.constant dense<0.000000e+00> : vector<2048xf32>
    %1113 = vector.multi_reduction <add>, %1112, %cst_277 [0] : vector<4x2048xf32> to vector<2048xf32>
    %1114 = vector.shape_cast %1113 : vector<2048xf32> to vector<1x2048xf32>
    %1115 = arith.mulf %1114, %1044 : vector<1x2048xf32>
    %1116 = vector.extract_strided_slice %1115 {offsets = [0, 0], sizes = [1, 256], strides = [1, 1]} : vector<1x2048xf32> to vector<1x256xf32>
    %1117 = vector.extract_strided_slice %1115 {offsets = [0, 256], sizes = [1, 256], strides = [1, 1]} : vector<1x2048xf32> to vector<1x256xf32>
    %1118 = arith.addf %1116, %1117 : vector<1x256xf32>
    %1119 = vector.extract_strided_slice %1115 {offsets = [0, 512], sizes = [1, 256], strides = [1, 1]} : vector<1x2048xf32> to vector<1x256xf32>
    %1120 = arith.addf %1118, %1119 : vector<1x256xf32>
    %1121 = vector.extract_strided_slice %1115 {offsets = [0, 768], sizes = [1, 256], strides = [1, 1]} : vector<1x2048xf32> to vector<1x256xf32>
    %1122 = arith.addf %1120, %1121 : vector<1x256xf32>
    %1123 = vector.extract_strided_slice %1115 {offsets = [0, 1024], sizes = [1, 256], strides = [1, 1]} : vector<1x2048xf32> to vector<1x256xf32>
    %1124 = arith.addf %1122, %1123 : vector<1x256xf32>
    %1125 = vector.extract_strided_slice %1115 {offsets = [0, 1280], sizes = [1, 256], strides = [1, 1]} : vector<1x2048xf32> to vector<1x256xf32>
    %1126 = arith.addf %1124, %1125 : vector<1x256xf32>
    %1127 = vector.extract_strided_slice %1115 {offsets = [0, 1536], sizes = [1, 256], strides = [1, 1]} : vector<1x2048xf32> to vector<1x256xf32>
    %1128 = arith.addf %1126, %1127 : vector<1x256xf32>
    %1129 = vector.extract_strided_slice %1115 {offsets = [0, 1792], sizes = [1, 256], strides = [1, 1]} : vector<1x2048xf32> to vector<1x256xf32>
    %1130 = arith.addf %1128, %1129 : vector<1x256xf32>
    %1131 = vector.extract_strided_slice %1056 {offsets = [4, 0], sizes = [4, 2048], strides = [1, 1]} : vector<8x2048xf32> to vector<4x2048xf32>
    %1132 = arith.mulf %1131, %1084 : vector<4x2048xf32>
    %cst_278 = arith.constant dense<0.000000e+00> : vector<2048xf32>
    %1133 = vector.multi_reduction <add>, %1132, %cst_278 [0] : vector<4x2048xf32> to vector<2048xf32>
    %1134 = vector.shape_cast %1133 : vector<2048xf32> to vector<1x2048xf32>
    %1135 = arith.mulf %1134, %1044 : vector<1x2048xf32>
    %1136 = vector.extract_strided_slice %1135 {offsets = [0, 0], sizes = [1, 256], strides = [1, 1]} : vector<1x2048xf32> to vector<1x256xf32>
    %1137 = vector.extract_strided_slice %1135 {offsets = [0, 256], sizes = [1, 256], strides = [1, 1]} : vector<1x2048xf32> to vector<1x256xf32>
    %1138 = arith.addf %1136, %1137 : vector<1x256xf32>
    %1139 = vector.extract_strided_slice %1135 {offsets = [0, 512], sizes = [1, 256], strides = [1, 1]} : vector<1x2048xf32> to vector<1x256xf32>
    %1140 = arith.addf %1138, %1139 : vector<1x256xf32>
    %1141 = vector.extract_strided_slice %1135 {offsets = [0, 768], sizes = [1, 256], strides = [1, 1]} : vector<1x2048xf32> to vector<1x256xf32>
    %1142 = arith.addf %1140, %1141 : vector<1x256xf32>
    %1143 = vector.extract_strided_slice %1135 {offsets = [0, 1024], sizes = [1, 256], strides = [1, 1]} : vector<1x2048xf32> to vector<1x256xf32>
    %1144 = arith.addf %1142, %1143 : vector<1x256xf32>
    %1145 = vector.extract_strided_slice %1135 {offsets = [0, 1280], sizes = [1, 256], strides = [1, 1]} : vector<1x2048xf32> to vector<1x256xf32>
    %1146 = arith.addf %1144, %1145 : vector<1x256xf32>
    %1147 = vector.extract_strided_slice %1135 {offsets = [0, 1536], sizes = [1, 256], strides = [1, 1]} : vector<1x2048xf32> to vector<1x256xf32>
    %1148 = arith.addf %1146, %1147 : vector<1x256xf32>
    %1149 = vector.extract_strided_slice %1135 {offsets = [0, 1792], sizes = [1, 256], strides = [1, 1]} : vector<1x2048xf32> to vector<1x256xf32>
    %1150 = arith.addf %1148, %1149 : vector<1x256xf32>
    %1151 = tpu.concatenate %1130, %1150 in 0 : vector<1x256xf32>, vector<1x256xf32> -> vector<2x256xf32>
    %1152 = tpu.concatenate %232, %461, %806, %1151 in 0 : vector<2x256xf32>, vector<2x256xf32>, vector<2x256xf32>, vector<2x256xf32> -> vector<8x256xf32>
    %c0_279 = arith.constant 0 : index
    %c0_280 = arith.constant 0 : index
    %1153 = vector.load %arg6[%c0_279, %c0_280] : memref<8x256xf32, #tpu.memory_space<vmem>>, vector<8x256xf32>
    tpu.vector_store %arg6[%c0_279, %c0_280], %1152 {strides = array<i32>} : memref<8x256xf32, #tpu.memory_space<vmem>>, vector<8x256xf32>,
    %1154 = tpu.concatenate %765, %1110 in 0 : vector<1x256xf32>, vector<1x256xf32> -> vector<2x256xf32>
    %c0_281 = arith.constant 0 : index
    %c0_282 = arith.constant 0 : index
    %1155 = vector.load %arg7[%c0_281, %c0_282] : memref<2x256xf32, #tpu.memory_space<vmem>>, vector<2x256xf32>
    tpu.vector_store %arg7[%c0_281, %c0_282], %1154 {strides = array<i32>} : memref<2x256xf32, #tpu.memory_space<vmem>>, vector<2x256xf32>,
    return
  }
  func.func @transform_0(%arg0: i32) -> (i32, i32) {
    %c0_i32 = arith.constant 0 : i32
    %c0_i32_0 = arith.constant 0 : i32
    return %c0_i32, %arg0 : i32, i32
  }
  func.func @transform_1(%arg0: i32) -> (i32, i32) {
    %c0_i32 = arith.constant 0 : i32
    %c0_i32_0 = arith.constant 0 : i32
    %c0_i32_1 = arith.constant 0 : i32
    return %c0_i32, %c0_i32_0 : i32, i32
  }
  func.func @transform_2(%arg0: i32) -> (i32, i32) {
    %c0_i32 = arith.constant 0 : i32
    %c0_i32_0 = arith.constant 0 : i32
    %c0_i32_1 = arith.constant 0 : i32
    return %c0_i32, %c0_i32_0 : i32, i32
  }
  func.func @transform_3(%arg0: i32) -> (i32, i32) {
    %c0_i32 = arith.constant 0 : i32
    %c0_i32_0 = arith.constant 0 : i32
    %c0_i32_1 = arith.constant 0 : i32
    return %c0_i32, %c0_i32_0 : i32, i32
  }
  func.func @transform_4(%arg0: i32) -> (i32, i32) {
    %c0_i32 = arith.constant 0 : i32
    %c0_i32_0 = arith.constant 0 : i32
    %c0_i32_1 = arith.constant 0 : i32
    return %c0_i32, %c0_i32_0 : i32, i32
  }
  func.func @transform_5(%arg0: i32) -> (i32, i32) {
    %c0_i32 = arith.constant 0 : i32
    %c0_i32_0 = arith.constant 0 : i32
    return %c0_i32, %arg0 : i32, i32
  }
  func.func @transform_6(%arg0: i32) -> (i32, i32) {
    %c0_i32 = arith.constant 0 : i32
    %c0_i32_0 = arith.constant 0 : i32
    return %c0_i32, %arg0 : i32, i32
  }
}

</mosaic_0001>

<llo_original>
// kernel: tpu_custom_call.1
$region0: #{tpu_custom_call.1}
  #allocation0 [shape = 'u32[]', space=smem, size = 0x4, offset = 0x4, fixed_abs, tag = 'smem constant byte address 0x4 - core index']
  #allocation1 [shape = 'u32[144,128]{1,0:T(1,128)}', space=vmem, size = 0x12000, scoped, tag = 'internal scratch']
  %s0 = inlined_call_operand.hbm [shape: f32[3,256], index: 0, kind: input, shape index: {}]
  %s1 = inlined_call_operand.hbm [shape: f32[2,64], index: 1, kind: input, shape index: {}]
  %s2 = inlined_call_operand.hbm [shape: f32[2,216], index: 2, kind: input, shape index: {}]
  %s3 = inlined_call_operand.hbm [shape: f32[12,256], index: 3, kind: input, shape index: {}]
  %s4 = inlined_call_operand.hbm [shape: f32[24,256], index: 4, kind: input, shape index: {}]
  %s5 = inlined_call_operand.hbm [shape: f32[8,256], index: 5, kind: output, shape index: {0}]
  %s6 = inlined_call_operand.hbm [shape: f32[2,256], index: 6, kind: output, shape index: {1}]
  %7 = xla_tuple %s5, %s6
  %s8 = sld [smem:[#allocation0]]
  $region58: #{tpu_custom_call.1} parent=0
    _
  %s10 = ssub.s32 1, %s8
  %s11 = scalar_select 0, %s10, %s8
  $region1: #{tpu_custom_call.1} parent=0
    #allocation2 [shape = 'u8[4096]{0}', space=vmem, size = 0x1000, scoped, tag = 'input window, operand 0, single buffered']
    #allocation3 [shape = 's32[1]{0}', space=sflag, size = 0x4, scoped, tag = 'scoped memory for tpu_custom_call.1']
    #allocation4 [shape = 's32[1]{0}', space=sflag, size = 0x4, scoped, tag = 'scoped memory for tpu_custom_call.1']
    #allocation5 [shape = 'u8[1024]{0}', space=vmem, size = 0x400, scoped, tag = 'input window, operand 1, single buffered']
    #allocation6 [shape = 's32[1]{0}', space=sflag, size = 0x4, scoped, tag = 'scoped memory for tpu_custom_call.1']
    #allocation7 [shape = 'u8[2048]{0}', space=vmem, size = 0x800, scoped, tag = 'input window, operand 2, single buffered']
    #allocation8 [shape = 'u8[16384]{0}', space=vmem, size = 0x4000, scoped, tag = 'input window, operand 3, single buffered']
    #allocation9 [shape = 's32[1]{0}', space=sflag, size = 0x4, scoped, tag = 'scoped memory for tpu_custom_call.1']
    #allocation10 [shape = 'u8[24576]{0}', space=vmem, size = 0x6000, scoped, tag = 'input window, operand 4, single buffered']
    #allocation11 [shape = 'u8[8192]{0}', space=vmem, size = 0x2000, scoped, tag = 'output window, operand 0, single buffered']
    #allocation12 [shape = 'u8[2048]{0}', space=vmem, size = 0x800, scoped, tag = 'output window, operand 1, single buffered']
    #allocation13 [shape = 's32[1]{0}', space=sflag, size = 0x4, scoped, tag = 'scoped memory for tpu_custom_call.1']
    %12 = vsyncpa [#allocation3], 0
    %13 = vsyncpa [#allocation6], 0
    %14 = vsyncpa [#allocation9], 0
    %15 = vsyncpa [#allocation4], 0
    %16 = vsyncpa [#allocation13], 0
    // Predicated region
    $region2: #{tpu_custom_call.1} parent=1 // pred_check
      _
    $region3: #{tpu_custom_call.1} parent=1 // pred_check_branch
      %18 = sbr.rel (0) target = $region5
    $region4: #{tpu_custom_call.1} parent=1 // pred_region
      %s20 = ssub.s32 128, 128
      %21 = vsyncadd [#allocation3], %s20
      %s23 = sshll.u32 [#allocation2], 4
      %s24 = int_to_ptr.vmem [resolvable:$true] %s23
      %26 = dma.hbm_to_vmem [thread:$0]  %s0, 128, %s24, [#allocation3]
    $region5: #{tpu_custom_call.1} parent=1 // pred_fallthru
      _
    // Predicated region
    $region6: #{tpu_custom_call.1} parent=1 // pred_check
      _
    $region7: #{tpu_custom_call.1} parent=1 // pred_check_branch
      %28 = sbr.rel (0) target = $region9
    $region8: #{tpu_custom_call.1} parent=1 // pred_region
      %s30 = ssub.s32 32, 32
      %31 = vsyncadd [#allocation6], %s30
      %s33 = sshll.u32 [#allocation5], 4
      %s34 = int_to_ptr.vmem [resolvable:$true] %s33
      %36 = dma.hbm_to_vmem [thread:$0]  %s1, 32, %s34, [#allocation6]
    $region9: #{tpu_custom_call.1} parent=1 // pred_fallthru
      _
    // Predicated region
    $region10: #{tpu_custom_call.1} parent=1 // pred_check
      _
    $region11: #{tpu_custom_call.1} parent=1 // pred_check_branch
      %38 = sbr.rel (0) target = $region13
    $region12: #{tpu_custom_call.1} parent=1 // pred_region
      %s40 = ssub.s32 64, 64
      %41 = vsyncadd [#allocation6], %s40
      %s43 = sshll.u32 [#allocation7], 4
      %s44 = int_to_ptr.vmem [resolvable:$true] %s43
      %46 = dma.hbm_to_vmem [thread:$0]  %s2, 64, %s44, [#allocation6]
    $region13: #{tpu_custom_call.1} parent=1 // pred_fallthru
      _
    // Predicated region
    $region14: #{tpu_custom_call.1} parent=1 // pred_check
      _
    $region15: #{tpu_custom_call.1} parent=1 // pred_check_branch
      %48 = sbr.rel (0) target = $region17
    $region16: #{tpu_custom_call.1} parent=1 // pred_region
      %s50 = ssub.s32 512, 512
      %51 = vsyncadd [#allocation9], %s50
      %s52 = sshll.u32 [#allocation8], 4
      %s53 = int_to_ptr.vmem [resolvable:$true] %s52
      %58 = dma.hbm_to_vmem [thread:$0]  %s3, 512, %s53, [#allocation9], 256, 256, 16
    $region17: #{tpu_custom_call.1} parent=1 // pred_fallthru
      _
    // Predicated region
    $region18: #{tpu_custom_call.1} parent=1 // pred_check
      _
    $region19: #{tpu_custom_call.1} parent=1 // pred_check_branch
      %60 = sbr.rel (0) target = $region21
    $region20: #{tpu_custom_call.1} parent=1 // pred_region
      %s62 = ssub.s32 768, 768
      %63 = vsyncadd [#allocation9], %s62
      %s64 = sshll.u32 [#allocation10], 4
      %s65 = int_to_ptr.vmem [resolvable:$true] %s64
      %70 = dma.hbm_to_vmem [thread:$0]  %s4, 768, %s65, [#allocation9], 256, 256, 16
    $region21: #{tpu_custom_call.1} parent=1 // pred_fallthru
      _
    // Predicated region
    $region22: #{tpu_custom_call.1} parent=1 // pred_check
      _
    $region23: #{tpu_custom_call.1} parent=1 // pred_check_branch
      %72 = sbr.rel (0) target = $region25
    $region24: #{tpu_custom_call.1} parent=1 // pred_region
      %73 = dma.done [#allocation3], 128
    $region25: #{tpu_custom_call.1} parent=1 // pred_fallthru
      _
    // Predicated region
    $region26: #{tpu_custom_call.1} parent=1 // pred_check
      _
    $region27: #{tpu_custom_call.1} parent=1 // pred_check_branch
      %75 = sbr.rel (0) target = $region29
    $region28: #{tpu_custom_call.1} parent=1 // pred_region
      %76 = dma.done [#allocation6], 32
    $region29: #{tpu_custom_call.1} parent=1 // pred_fallthru
      _
    // Predicated region
    $region30: #{tpu_custom_call.1} parent=1 // pred_check
      _
    $region31: #{tpu_custom_call.1} parent=1 // pred_check_branch
      %78 = sbr.rel (0) target = $region33
    $region32: #{tpu_custom_call.1} parent=1 // pred_region
      %79 = dma.done [#allocation6], 64
    $region33: #{tpu_custom_call.1} parent=1 // pred_fallthru
      _
    // Predicated region
    $region34: #{tpu_custom_call.1} parent=1 // pred_check
      _
    $region35: #{tpu_custom_call.1} parent=1 // pred_check_branch
      %81 = sbr.rel (0) target = $region37
    $region36: #{tpu_custom_call.1} parent=1 // pred_region
      %82 = dma.done [#allocation9], 512
    $region37: #{tpu_custom_call.1} parent=1 // pred_fallthru
      _
    // Predicated region
    $region38: #{tpu_custom_call.1} parent=1 // pred_check
      _
    $region39: #{tpu_custom_call.1} parent=1 // pred_check_branch
      %84 = sbr.rel (0) target = $region41
    $region40: #{tpu_custom_call.1} parent=1 // pred_region
      %85 = dma.done [#allocation9], 768
    $region41: #{tpu_custom_call.1} parent=1 // pred_fallthru
      _
    %v86 = vld [vmem:[#allocation2] sm:$0x77]
    %v87 = vld [vmem:[#allocation5] sm:$0x3]
    %v88 = vmul.f32 %v86, 4.0
    %v89 = vmax.f32 %v88, 0.0
    %v90 = vmin.f32 %v89, 2.999
    %v91 = vfloor.f32 %v90
    %v92 = vsub.f32 %v90, %v91
    %v93 = vsub.f32 1.0, %v92
    %v94 = vcvt.f32.s32.to.zero.pseudo %v91
    %v96 = vrot.slane %v93, 5
    %v97 = vrot.slane %v96, 4
    %v99 = vmul.f32 %v93, %v97
    %v100 = vrot.slane %v93, 6
    %v101 = vrot.slane %v100, 4
    %v103 = vmul.f32 %v99, %v101
    %v104 = vmul.u32 %v94, 4
    %v105 = vrot.slane %v104, 5
    %v106 = vrot.slane %v105, 4
    %v107 = vadd.s32 %v94, %v106
    %v108 = vmul.u32 %v94, 16
    %v109 = vrot.slane %v108, 6
    %v110 = vrot.slane %v109, 4
    %v111 = vadd.s32 %v107, %v110
    %v112 = vadd.s32 %v94, 1
    %v114 = vrot.slane %v92, 6
    %v115 = vrot.slane %v114, 4
    %v117 = vmul.f32 %v99, %v115
    %v118 = vmul.u32 %v112, 16
    %v119 = vrot.slane %v118, 6
    %v120 = vrot.slane %v119, 4
    %v121 = vadd.s32 %v107, %v120
    %v122 = vrot.slane %v92, 5
    %v123 = vrot.slane %v122, 4
    %v125 = vmul.f32 %v93, %v123
    %v126 = vmul.f32 %v125, %v101
    %v127 = vmul.u32 %v112, 4
    %v128 = vrot.slane %v127, 5
    %v129 = vrot.slane %v128, 4
    %v130 = vadd.s32 %v94, %v129
    %v131 = vadd.s32 %v130, %v110
    %v132 = vmul.f32 %v125, %v115
    %v133 = vadd.s32 %v130, %v120
    %v134 = vmul.f32 %v92, %v97
    %v135 = vmul.f32 %v134, %v101
    %v136 = vadd.s32 %v112, %v106
    %v137 = vadd.s32 %v136, %v110
    %v138 = vmul.f32 %v134, %v115
    %v139 = vadd.s32 %v136, %v120
    %v140 = vmul.f32 %v92, %v123
    %v141 = vmul.f32 %v140, %v101
    %v142 = vadd.s32 %v112, %v129
    %v143 = vadd.s32 %v142, %v110
    %v144 = vmul.f32 %v140, %v115
    %v145 = vadd.s32 %v142, %v120
    %v146 = vlaneseq
    %v147 = vshrl.u32 %v146, 7
    %v148 = vadd.s32 %v147, 8
    %v149 = vadd.s32 %v147, 16
    %v150 = vadd.s32 %v147, 24
    %v151 = vadd.s32 %v147, 32
    %v152 = vadd.s32 %v147, 40
    %v153 = vadd.s32 %v147, 48
    %v154 = vadd.s32 %v147, 56
    %v155 = vlaneseq
    %v156 = vshrl.u32 %v155, 7
    %v157 = vsub.s32 0, %v156
    %v158 = vrot.slane %v111, %v157
    %v159 = vlaneseq
    %v160 = vshrl.u32 %v159, 7
    %v161 = vsub.s32 4, %v160
    %v162 = vrot.slane %v111, %v161
    %v163 = vlaneseq
    %v164 = vshrl.u32 %v163, 7
    %v165 = vsub.s32 0, %v164
    %v166 = vrot.slane %v158, %v165
    %v167 = vlaneseq
    %v168 = vshrl.u32 %v167, 7
    %v169 = vsub.s32 0, %v168
    %v170 = vrot.slane %v162, %v169
    %vm171 = vcmp.eq.s32.totalorder %v147, %v166
    %vm172 = vcmp.eq.s32.totalorder %v147, %v170
    %vm173 = vcmp.eq.s32.totalorder %v148, %v166
    %vm174 = vcmp.eq.s32.totalorder %v148, %v170
    %vm175 = vcmp.eq.s32.totalorder %v149, %v166
    %vm176 = vcmp.eq.s32.totalorder %v149, %v170
    %vm177 = vcmp.eq.s32.totalorder %v150, %v166
    %vm178 = vcmp.eq.s32.totalorder %v150, %v170
    %vm179 = vcmp.eq.s32.totalorder %v151, %v166
    %vm180 = vcmp.eq.s32.totalorder %v151, %v170
    %vm181 = vcmp.eq.s32.totalorder %v152, %v166
    %vm182 = vcmp.eq.s32.totalorder %v152, %v170
    %vm183 = vcmp.eq.s32.totalorder %v153, %v166
    %vm184 = vcmp.eq.s32.totalorder %v153, %v170
    %vm185 = vcmp.eq.s32.totalorder %v154, %v166
    %vm186 = vcmp.eq.s32.totalorder %v154, %v170
    %v188 = vlaneseq
    %v189 = vshrl.u32 %v188, 7
    %v190 = vsub.s32 0, %v189
    %v191 = vrot.slane %v103, %v190
    %v192 = vlaneseq
    %v193 = vshrl.u32 %v192, 7
    %v194 = vsub.s32 4, %v193
    %v195 = vrot.slane %v103, %v194
    %v198 = vlaneseq
    %v199 = vshrl.u32 %v198, 7
    %v200 = vsub.s32 0, %v199
    %v201 = vrot.slane %v191, %v200
    %v202 = vlaneseq
    %v203 = vshrl.u32 %v202, 7
    %v204 = vsub.s32 0, %v203
    %v205 = vrot.slane %v195, %v204
    %v206 = vsel %vm171, %v201, 0.0
    %v207 = vsel %vm172, %v205, 0.0
    %v208 = vsel %vm173, %v201, 0.0
    %v209 = vsel %vm174, %v205, 0.0
    %v210 = vsel %vm175, %v201, 0.0
    %v211 = vsel %vm176, %v205, 0.0
    %v212 = vsel %vm177, %v201, 0.0
    %v213 = vsel %vm178, %v205, 0.0
    %v214 = vsel %vm179, %v201, 0.0
    %v215 = vsel %vm180, %v205, 0.0
    %v216 = vsel %vm181, %v201, 0.0
    %v217 = vsel %vm182, %v205, 0.0
    %v218 = vsel %vm183, %v201, 0.0
    %v219 = vsel %vm184, %v205, 0.0
    %v220 = vsel %vm185, %v201, 0.0
    %v221 = vsel %vm186, %v205, 0.0
    %v222 = vlaneseq
    %v223 = vshrl.u32 %v222, 7
    %v224 = vsub.s32 0, %v223
    %v225 = vrot.slane %v121, %v224
    %v226 = vlaneseq
    %v227 = vshrl.u32 %v226, 7
    %v228 = vsub.s32 4, %v227
    %v229 = vrot.slane %v121, %v228
    %v230 = vlaneseq
    %v231 = vshrl.u32 %v230, 7
    %v232 = vsub.s32 0, %v231
    %v233 = vrot.slane %v225, %v232
    %v234 = vlaneseq
    %v235 = vshrl.u32 %v234, 7
    %v236 = vsub.s32 0, %v235
    %v237 = vrot.slane %v229, %v236
    %vm238 = vcmp.eq.s32.totalorder %v147, %v233
    %vm239 = vcmp.eq.s32.totalorder %v147, %v237
    %vm240 = vcmp.eq.s32.totalorder %v148, %v233
    %vm241 = vcmp.eq.s32.totalorder %v148, %v237
    %vm242 = vcmp.eq.s32.totalorder %v149, %v233
    %vm243 = vcmp.eq.s32.totalorder %v149, %v237
    %vm244 = vcmp.eq.s32.totalorder %v150, %v233
    %vm245 = vcmp.eq.s32.totalorder %v150, %v237
    %vm246 = vcmp.eq.s32.totalorder %v151, %v233
    %vm247 = vcmp.eq.s32.totalorder %v151, %v237
    %vm248 = vcmp.eq.s32.totalorder %v152, %v233
    %vm249 = vcmp.eq.s32.totalorder %v152, %v237
    %vm250 = vcmp.eq.s32.totalorder %v153, %v233
    %vm251 = vcmp.eq.s32.totalorder %v153, %v237
    %vm252 = vcmp.eq.s32.totalorder %v154, %v233
    %vm253 = vcmp.eq.s32.totalorder %v154, %v237
    %v255 = vlaneseq
    %v256 = vshrl.u32 %v255, 7
    %v257 = vsub.s32 0, %v256
    %v258 = vrot.slane %v117, %v257
    %v259 = vlaneseq
    %v260 = vshrl.u32 %v259, 7
    %v261 = vsub.s32 4, %v260
    %v262 = vrot.slane %v117, %v261
    %v265 = vlaneseq
    %v266 = vshrl.u32 %v265, 7
    %v267 = vsub.s32 0, %v266
    %v268 = vrot.slane %v258, %v267
    %v269 = vlaneseq
    %v270 = vshrl.u32 %v269, 7
    %v271 = vsub.s32 0, %v270
    %v272 = vrot.slane %v262, %v271
    %v273 = vsel %vm238, %v268, 0.0
    %v274 = vsel %vm239, %v272, 0.0
    %v275 = vsel %vm240, %v268, 0.0
    %v276 = vsel %vm241, %v272, 0.0
    %v277 = vsel %vm242, %v268, 0.0
    %v278 = vsel %vm243, %v272, 0.0
    %v279 = vsel %vm244, %v268, 0.0
    %v280 = vsel %vm245, %v272, 0.0
    %v281 = vsel %vm246, %v268, 0.0
    %v282 = vsel %vm247, %v272, 0.0
    %v283 = vsel %vm248, %v268, 0.0
    %v284 = vsel %vm249, %v272, 0.0
    %v285 = vsel %vm250, %v268, 0.0
    %v286 = vsel %vm251, %v272, 0.0
    %v287 = vsel %vm252, %v268, 0.0
    %v288 = vsel %vm253, %v272, 0.0
    %v289 = vadd.f32 %v206, %v273
    %v290 = vadd.f32 %v207, %v274
    %v291 = vadd.f32 %v208, %v275
    %v292 = vadd.f32 %v209, %v276
    %v293 = vadd.f32 %v210, %v277
    %v294 = vadd.f32 %v211, %v278
    %v295 = vadd.f32 %v212, %v279
    %v296 = vadd.f32 %v213, %v280
    %v297 = vadd.f32 %v214, %v281
    %v298 = vadd.f32 %v215, %v282
    %v299 = vadd.f32 %v216, %v283
    %v300 = vadd.f32 %v217, %v284
    %v301 = vadd.f32 %v218, %v285
    %v302 = vadd.f32 %v219, %v286
    %v303 = vadd.f32 %v220, %v287
    %v304 = vadd.f32 %v221, %v288
    %v305 = vlaneseq
    %v306 = vshrl.u32 %v305, 7
    %v307 = vsub.s32 0, %v306
    %v308 = vrot.slane %v131, %v307
    %v309 = vlaneseq
    %v310 = vshrl.u32 %v309, 7
    %v311 = vsub.s32 4, %v310
    %v312 = vrot.slane %v131, %v311
    %v313 = vlaneseq
    %v314 = vshrl.u32 %v313, 7
    %v315 = vsub.s32 0, %v314
    %v316 = vrot.slane %v308, %v315
    %v317 = vlaneseq
    %v318 = vshrl.u32 %v317, 7
    %v319 = vsub.s32 0, %v318
    %v320 = vrot.slane %v312, %v319
    %vm321 = vcmp.eq.s32.totalorder %v147, %v316
    %vm322 = vcmp.eq.s32.totalorder %v147, %v320
    %vm323 = vcmp.eq.s32.totalorder %v148, %v316
    %vm324 = vcmp.eq.s32.totalorder %v148, %v320
    %vm325 = vcmp.eq.s32.totalorder %v149, %v316
    %vm326 = vcmp.eq.s32.totalorder %v149, %v320
    %vm327 = vcmp.eq.s32.totalorder %v150, %v316
    %vm328 = vcmp.eq.s32.totalorder %v150, %v320
    %vm329 = vcmp.eq.s32.totalorder %v151, %v316
    %vm330 = vcmp.eq.s32.totalorder %v151, %v320
    %vm331 = vcmp.eq.s32.totalorder %v152, %v316
    %vm332 = vcmp.eq.s32.totalorder %v152, %v320
    %vm333 = vcmp.eq.s32.totalorder %v153, %v316
    %vm334 = vcmp.eq.s32.totalorder %v153, %v320
    %vm335 = vcmp.eq.s32.totalorder %v154, %v316
    %vm336 = vcmp.eq.s32.totalorder %v154, %v320
    %v338 = vlaneseq
    %v339 = vshrl.u32 %v338, 7
    %v340 = vsub.s32 0, %v339
    %v341 = vrot.slane %v126, %v340
    %v342 = vlaneseq
    %v343 = vshrl.u32 %v342, 7
    %v344 = vsub.s32 4, %v343
    %v345 = vrot.slane %v126, %v344
    %v348 = vlaneseq
    %v349 = vshrl.u32 %v348, 7
    %v350 = vsub.s32 0, %v349
    %v351 = vrot.slane %v341, %v350
    %v352 = vlaneseq
    %v353 = vshrl.u32 %v352, 7
    %v354 = vsub.s32 0, %v353
    %v355 = vrot.slane %v345, %v354
    %v356 = vsel %vm321, %v351, 0.0
    %v357 = vsel %vm322, %v355, 0.0
    %v358 = vsel %vm323, %v351, 0.0
    %v359 = vsel %vm324, %v355, 0.0
    %v360 = vsel %vm325, %v351, 0.0
    %v361 = vsel %vm326, %v355, 0.0
    %v362 = vsel %vm327, %v351, 0.0
    %v363 = vsel %vm328, %v355, 0.0
    %v364 = vsel %vm329, %v351, 0.0
    %v365 = vsel %vm330, %v355, 0.0
    %v366 = vsel %vm331, %v351, 0.0
    %v367 = vsel %vm332, %v355, 0.0
    %v368 = vsel %vm333, %v351, 0.0
    %v369 = vsel %vm334, %v355, 0.0
    %v370 = vsel %vm335, %v351, 0.0
    %v371 = vsel %vm336, %v355, 0.0
    %v372 = vadd.f32 %v289, %v356
    %v373 = vadd.f32 %v290, %v357
    %v374 = vadd.f32 %v291, %v358
    %v375 = vadd.f32 %v292, %v359
    %v376 = vadd.f32 %v293, %v360
    %v377 = vadd.f32 %v294, %v361
    %v378 = vadd.f32 %v295, %v362
    %v379 = vadd.f32 %v296, %v363
    %v380 = vadd.f32 %v297, %v364
    %v381 = vadd.f32 %v298, %v365
    %v382 = vadd.f32 %v299, %v366
    %v383 = vadd.f32 %v300, %v367
    %v384 = vadd.f32 %v301, %v368
    %v385 = vadd.f32 %v302, %v369
    %v386 = vadd.f32 %v303, %v370
    %v387 = vadd.f32 %v304, %v371
    %v388 = vlaneseq
    %v389 = vshrl.u32 %v388, 7
    %v390 = vsub.s32 0, %v389
    %v391 = vrot.slane %v133, %v390
    %v392 = vlaneseq
    %v393 = vshrl.u32 %v392, 7
    %v394 = vsub.s32 4, %v393
    %v395 = vrot.slane %v133, %v394
    %v396 = vlaneseq
    %v397 = vshrl.u32 %v396, 7
    %v398 = vsub.s32 0, %v397
    %v399 = vrot.slane %v391, %v398
    %v400 = vlaneseq
    %v401 = vshrl.u32 %v400, 7
    %v402 = vsub.s32 0, %v401
    %v403 = vrot.slane %v395, %v402
    %vm404 = vcmp.eq.s32.totalorder %v147, %v399
    %vm405 = vcmp.eq.s32.totalorder %v147, %v403
    %vm406 = vcmp.eq.s32.totalorder %v148, %v399
    %vm407 = vcmp.eq.s32.totalorder %v148, %v403
    %vm408 = vcmp.eq.s32.totalorder %v149, %v399
    %vm409 = vcmp.eq.s32.totalorder %v149, %v403
    %vm410 = vcmp.eq.s32.totalorder %v150, %v399
    %vm411 = vcmp.eq.s32.totalorder %v150, %v403
    %vm412 = vcmp.eq.s32.totalorder %v151, %v399
    %vm413 = vcmp.eq.s32.totalorder %v151, %v403
    %vm414 = vcmp.eq.s32.totalorder %v152, %v399
    %vm415 = vcmp.eq.s32.totalorder %v152, %v403
    %vm416 = vcmp.eq.s32.totalorder %v153, %v399
    %vm417 = vcmp.eq.s32.totalorder %v153, %v403
    %vm418 = vcmp.eq.s32.totalorder %v154, %v399
    %vm419 = vcmp.eq.s32.totalorder %v154, %v403
    %v421 = vlaneseq
    %v422 = vshrl.u32 %v421, 7
    %v423 = vsub.s32 0, %v422
    %v424 = vrot.slane %v132, %v423
    %v425 = vlaneseq
    %v426 = vshrl.u32 %v425, 7
    %v427 = vsub.s32 4, %v426
    %v428 = vrot.slane %v132, %v427
    %v431 = vlaneseq
    %v432 = vshrl.u32 %v431, 7
    %v433 = vsub.s32 0, %v432
    %v434 = vrot.slane %v424, %v433
    %v435 = vlaneseq
    %v436 = vshrl.u32 %v435, 7
    %v437 = vsub.s32 0, %v436
    %v438 = vrot.slane %v428, %v437
    %v439 = vsel %vm404, %v434, 0.0
    %v440 = vsel %vm405, %v438, 0.0
    %v441 = vsel %vm406, %v434, 0.0
    %v442 = vsel %vm407, %v438, 0.0
    %v443 = vsel %vm408, %v434, 0.0
    %v444 = vsel %vm409, %v438, 0.0
    %v445 = vsel %vm410, %v434, 0.0
    %v446 = vsel %vm411, %v438, 0.0
    %v447 = vsel %vm412, %v434, 0.0
    %v448 = vsel %vm413, %v438, 0.0
    %v449 = vsel %vm414, %v434, 0.0
    %v450 = vsel %vm415, %v438, 0.0
    %v451 = vsel %vm416, %v434, 0.0
    %v452 = vsel %vm417, %v438, 0.0
    %v453 = vsel %vm418, %v434, 0.0
    %v454 = vsel %vm419, %v438, 0.0
    %v455 = vadd.f32 %v372, %v439
    %v456 = vadd.f32 %v373, %v440
    %v457 = vadd.f32 %v374, %v441
    %v458 = vadd.f32 %v375, %v442
    %v459 = vadd.f32 %v376, %v443
    %v460 = vadd.f32 %v377, %v444
    %v461 = vadd.f32 %v378, %v445
    %v462 = vadd.f32 %v379, %v446
    %v463 = vadd.f32 %v380, %v447
    %v464 = vadd.f32 %v381, %v448
    %v465 = vadd.f32 %v382, %v449
    %v466 = vadd.f32 %v383, %v450
    %v467 = vadd.f32 %v384, %v451
    %v468 = vadd.f32 %v385, %v452
    %v469 = vadd.f32 %v386, %v453
    %v470 = vadd.f32 %v387, %v454
    %v471 = vlaneseq
    %v472 = vshrl.u32 %v471, 7
    %v473 = vsub.s32 0, %v472
    %v474 = vrot.slane %v137, %v473
    %v475 = vlaneseq
    %v476 = vshrl.u32 %v475, 7
    %v477 = vsub.s32 4, %v476
    %v478 = vrot.slane %v137, %v477
    %v479 = vlaneseq
    %v480 = vshrl.u32 %v479, 7
    %v481 = vsub.s32 0, %v480
    %v482 = vrot.slane %v474, %v481
    %v483 = vlaneseq
    %v484 = vshrl.u32 %v483, 7
    %v485 = vsub.s32 0, %v484
    %v486 = vrot.slane %v478, %v485
    %vm487 = vcmp.eq.s32.totalorder %v147, %v482
    %vm488 = vcmp.eq.s32.totalorder %v147, %v486
    %vm489 = vcmp.eq.s32.totalorder %v148, %v482
    %vm490 = vcmp.eq.s32.totalorder %v148, %v486
    %vm491 = vcmp.eq.s32.totalorder %v149, %v482
    %vm492 = vcmp.eq.s32.totalorder %v149, %v486
    %vm493 = vcmp.eq.s32.totalorder %v150, %v482
    %vm494 = vcmp.eq.s32.totalorder %v150, %v486
    %vm495 = vcmp.eq.s32.totalorder %v151, %v482
    %vm496 = vcmp.eq.s32.totalorder %v151, %v486
    %vm497 = vcmp.eq.s32.totalorder %v152, %v482
    %vm498 = vcmp.eq.s32.totalorder %v152, %v486
    %vm499 = vcmp.eq.s32.totalorder %v153, %v482
    %vm500 = vcmp.eq.s32.totalorder %v153, %v486
    %vm501 = vcmp.eq.s32.totalorder %v154, %v482
    %vm502 = vcmp.eq.s32.totalorder %v154, %v486
    %v504 = vlaneseq
    %v505 = vshrl.u32 %v504, 7
    %v506 = vsub.s32 0, %v505
    %v507 = vrot.slane %v135, %v506
    %v508 = vlaneseq
    %v509 = vshrl.u32 %v508, 7
    %v510 = vsub.s32 4, %v509
    %v511 = vrot.slane %v135, %v510
    %v514 = vlaneseq
    %v515 = vshrl.u32 %v514, 7
    %v516 = vsub.s32 0, %v515
    %v517 = vrot.slane %v507, %v516
    %v518 = vlaneseq
    %v519 = vshrl.u32 %v518, 7
    %v520 = vsub.s32 0, %v519
    %v521 = vrot.slane %v511, %v520
    %v522 = vsel %vm487, %v517, 0.0
    %v523 = vsel %vm488, %v521, 0.0
    %v524 = vsel %vm489, %v517, 0.0
    %v525 = vsel %vm490, %v521, 0.0
    %v526 = vsel %vm491, %v517, 0.0
    %v527 = vsel %vm492, %v521, 0.0
    %v528 = vsel %vm493, %v517, 0.0
    %v529 = vsel %vm494, %v521, 0.0
    %v530 = vsel %vm495, %v517, 0.0
    %v531 = vsel %vm496, %v521, 0.0
    %v532 = vsel %vm497, %v517, 0.0
    %v533 = vsel %vm498, %v521, 0.0
    %v534 = vsel %vm499, %v517, 0.0
    %v535 = vsel %vm500, %v521, 0.0
    %v536 = vsel %vm501, %v517, 0.0
    %v537 = vsel %vm502, %v521, 0.0
    %v538 = vadd.f32 %v455, %v522
    %v539 = vadd.f32 %v456, %v523
    %v540 = vadd.f32 %v457, %v524
    %v541 = vadd.f32 %v458, %v525
    %v542 = vadd.f32 %v459, %v526
    %v543 = vadd.f32 %v460, %v527
    %v544 = vadd.f32 %v461, %v528
    %v545 = vadd.f32 %v462, %v529
    %v546 = vadd.f32 %v463, %v530
    %v547 = vadd.f32 %v464, %v531
    %v548 = vadd.f32 %v465, %v532
    %v549 = vadd.f32 %v466, %v533
    %v550 = vadd.f32 %v467, %v534
    %v551 = vadd.f32 %v468, %v535
    %v552 = vadd.f32 %v469, %v536
    %v553 = vadd.f32 %v470, %v537
    %v554 = vlaneseq
    %v555 = vshrl.u32 %v554, 7
    %v556 = vsub.s32 0, %v555
    %v557 = vrot.slane %v139, %v556
    %v558 = vlaneseq
    %v559 = vshrl.u32 %v558, 7
    %v560 = vsub.s32 4, %v559
    %v561 = vrot.slane %v139, %v560
    %v562 = vlaneseq
    %v563 = vshrl.u32 %v562, 7
    %v564 = vsub.s32 0, %v563
    %v565 = vrot.slane %v557, %v564
    %v566 = vlaneseq
    %v567 = vshrl.u32 %v566, 7
    %v568 = vsub.s32 0, %v567
    %v569 = vrot.slane %v561, %v568
    %vm570 = vcmp.eq.s32.totalorder %v147, %v565
    %vm571 = vcmp.eq.s32.totalorder %v147, %v569
    %vm572 = vcmp.eq.s32.totalorder %v148, %v565
    %vm573 = vcmp.eq.s32.totalorder %v148, %v569
    %vm574 = vcmp.eq.s32.totalorder %v149, %v565
    %vm575 = vcmp.eq.s32.totalorder %v149, %v569
    %vm576 = vcmp.eq.s32.totalorder %v150, %v565
    %vm577 = vcmp.eq.s32.totalorder %v150, %v569
    %vm578 = vcmp.eq.s32.totalorder %v151, %v565
    %vm579 = vcmp.eq.s32.totalorder %v151, %v569
    %vm580 = vcmp.eq.s32.totalorder %v152, %v565
    %vm581 = vcmp.eq.s32.totalorder %v152, %v569
    %vm582 = vcmp.eq.s32.totalorder %v153, %v565
    %vm583 = vcmp.eq.s32.totalorder %v153, %v569
    %vm584 = vcmp.eq.s32.totalorder %v154, %v565
    %vm585 = vcmp.eq.s32.totalorder %v154, %v569
    %v587 = vlaneseq
    %v588 = vshrl.u32 %v587, 7
    %v589 = vsub.s32 0, %v588
    %v590 = vrot.slane %v138, %v589
    %v591 = vlaneseq
    %v592 = vshrl.u32 %v591, 7
    %v593 = vsub.s32 4, %v592
    %v594 = vrot.slane %v138, %v593
    %v597 = vlaneseq
    %v598 = vshrl.u32 %v597, 7
    %v599 = vsub.s32 0, %v598
    %v600 = vrot.slane %v590, %v599
    %v601 = vlaneseq
    %v602 = vshrl.u32 %v601, 7
    %v603 = vsub.s32 0, %v602
    %v604 = vrot.slane %v594, %v603
    %v605 = vsel %vm570, %v600, 0.0
    %v606 = vsel %vm571, %v604, 0.0
    %v607 = vsel %vm572, %v600, 0.0
    %v608 = vsel %vm573, %v604, 0.0
    %v609 = vsel %vm574, %v600, 0.0
    %v610 = vsel %vm575, %v604, 0.0
    %v611 = vsel %vm576, %v600, 0.0
    %v612 = vsel %vm577, %v604, 0.0
    %v613 = vsel %vm578, %v600, 0.0
    %v614 = vsel %vm579, %v604, 0.0
    %v615 = vsel %vm580, %v600, 0.0
    %v616 = vsel %vm581, %v604, 0.0
    %v617 = vsel %vm582, %v600, 0.0
    %v618 = vsel %vm583, %v604, 0.0
    %v619 = vsel %vm584, %v600, 0.0
    %v620 = vsel %vm585, %v604, 0.0
    %v621 = vadd.f32 %v538, %v605
    %v622 = vadd.f32 %v539, %v606
    %v623 = vadd.f32 %v540, %v607
    %v624 = vadd.f32 %v541, %v608
    %v625 = vadd.f32 %v542, %v609
    %v626 = vadd.f32 %v543, %v610
    %v627 = vadd.f32 %v544, %v611
    %v628 = vadd.f32 %v545, %v612
    %v629 = vadd.f32 %v546, %v613
    %v630 = vadd.f32 %v547, %v614
    %v631 = vadd.f32 %v548, %v615
    %v632 = vadd.f32 %v549, %v616
    %v633 = vadd.f32 %v550, %v617
    %v634 = vadd.f32 %v551, %v618
    %v635 = vadd.f32 %v552, %v619
    %v636 = vadd.f32 %v553, %v620
    %v637 = vlaneseq
    %v638 = vshrl.u32 %v637, 7
    %v639 = vsub.s32 0, %v638
    %v640 = vrot.slane %v143, %v639
    %v641 = vlaneseq
    %v642 = vshrl.u32 %v641, 7
    %v643 = vsub.s32 4, %v642
    %v644 = vrot.slane %v143, %v643
    %v645 = vlaneseq
    %v646 = vshrl.u32 %v645, 7
    %v647 = vsub.s32 0, %v646
    %v648 = vrot.slane %v640, %v647
    %v649 = vlaneseq
    %v650 = vshrl.u32 %v649, 7
    %v651 = vsub.s32 0, %v650
    %v652 = vrot.slane %v644, %v651
    %vm653 = vcmp.eq.s32.totalorder %v147, %v648
    %vm654 = vcmp.eq.s32.totalorder %v147, %v652
    %vm655 = vcmp.eq.s32.totalorder %v148, %v648
    %vm656 = vcmp.eq.s32.totalorder %v148, %v652
    %vm657 = vcmp.eq.s32.totalorder %v149, %v648
    %vm658 = vcmp.eq.s32.totalorder %v149, %v652
    %vm659 = vcmp.eq.s32.totalorder %v150, %v648
    %vm660 = vcmp.eq.s32.totalorder %v150, %v652
    %vm661 = vcmp.eq.s32.totalorder %v151, %v648
    %vm662 = vcmp.eq.s32.totalorder %v151, %v652
    %vm663 = vcmp.eq.s32.totalorder %v152, %v648
    %vm664 = vcmp.eq.s32.totalorder %v152, %v652
    %vm665 = vcmp.eq.s32.totalorder %v153, %v648
    %vm666 = vcmp.eq.s32.totalorder %v153, %v652
    %vm667 = vcmp.eq.s32.totalorder %v154, %v648
    %vm668 = vcmp.eq.s32.totalorder %v154, %v652
    %v670 = vlaneseq
    %v671 = vshrl.u32 %v670, 7
    %v672 = vsub.s32 0, %v671
    %v673 = vrot.slane %v141, %v672
    %v674 = vlaneseq
    %v675 = vshrl.u32 %v674, 7
    %v676 = vsub.s32 4, %v675
    %v677 = vrot.slane %v141, %v676
    %v680 = vlaneseq
    %v681 = vshrl.u32 %v680, 7
    %v682 = vsub.s32 0, %v681
    %v683 = vrot.slane %v673, %v682
    %v684 = vlaneseq
    %v685 = vshrl.u32 %v684, 7
    %v686 = vsub.s32 0, %v685
    %v687 = vrot.slane %v677, %v686
    %v688 = vsel %vm653, %v683, 0.0
    %v689 = vsel %vm654, %v687, 0.0
    %v690 = vsel %vm655, %v683, 0.0
    %v691 = vsel %vm656, %v687, 0.0
    %v692 = vsel %vm657, %v683, 0.0
    %v693 = vsel %vm658, %v687, 0.0
    %v694 = vsel %vm659, %v683, 0.0
    %v695 = vsel %vm660, %v687, 0.0
    %v696 = vsel %vm661, %v683, 0.0
    %v697 = vsel %vm662, %v687, 0.0
    %v698 = vsel %vm663, %v683, 0.0
    %v699 = vsel %vm664, %v687, 0.0
    %v700 = vsel %vm665, %v683, 0.0
    %v701 = vsel %vm666, %v687, 0.0
    %v702 = vsel %vm667, %v683, 0.0
    %v703 = vsel %vm668, %v687, 0.0
    %v704 = vadd.f32 %v621, %v688
    %v705 = vadd.f32 %v622, %v689
    %v706 = vadd.f32 %v623, %v690
    %v707 = vadd.f32 %v624, %v691
    %v708 = vadd.f32 %v625, %v692
    %v709 = vadd.f32 %v626, %v693
    %v710 = vadd.f32 %v627, %v694
    %v711 = vadd.f32 %v628, %v695
    %v712 = vadd.f32 %v629, %v696
    %v713 = vadd.f32 %v630, %v697
    %v714 = vadd.f32 %v631, %v698
    %v715 = vadd.f32 %v632, %v699
    %v716 = vadd.f32 %v633, %v700
    %v717 = vadd.f32 %v634, %v701
    %v718 = vadd.f32 %v635, %v702
    %v719 = vadd.f32 %v636, %v703
    %v720 = vlaneseq
    %v721 = vshrl.u32 %v720, 7
    %v722 = vsub.s32 0, %v721
    %v723 = vrot.slane %v145, %v722
    %v724 = vlaneseq
    %v725 = vshrl.u32 %v724, 7
    %v726 = vsub.s32 4, %v725
    %v727 = vrot.slane %v145, %v726
    %v728 = vlaneseq
    %v729 = vshrl.u32 %v728, 7
    %v730 = vsub.s32 0, %v729
    %v731 = vrot.slane %v723, %v730
    %v732 = vlaneseq
    %v733 = vshrl.u32 %v732, 7
    %v734 = vsub.s32 0, %v733
    %v735 = vrot.slane %v727, %v734
    %vm736 = vcmp.eq.s32.totalorder %v147, %v731
    %vm737 = vcmp.eq.s32.totalorder %v147, %v735
    %vm738 = vcmp.eq.s32.totalorder %v148, %v731
    %vm739 = vcmp.eq.s32.totalorder %v148, %v735
    %vm740 = vcmp.eq.s32.totalorder %v149, %v731
    %vm741 = vcmp.eq.s32.totalorder %v149, %v735
    %vm742 = vcmp.eq.s32.totalorder %v150, %v731
    %vm743 = vcmp.eq.s32.totalorder %v150, %v735
    %vm744 = vcmp.eq.s32.totalorder %v151, %v731
    %vm745 = vcmp.eq.s32.totalorder %v151, %v735
    %vm746 = vcmp.eq.s32.totalorder %v152, %v731
    %vm747 = vcmp.eq.s32.totalorder %v152, %v735
    %vm748 = vcmp.eq.s32.totalorder %v153, %v731
    %vm749 = vcmp.eq.s32.totalorder %v153, %v735
    %vm750 = vcmp.eq.s32.totalorder %v154, %v731
    %vm751 = vcmp.eq.s32.totalorder %v154, %v735
    %v753 = vlaneseq
    %v754 = vshrl.u32 %v753, 7
    %v755 = vsub.s32 0, %v754
    %v756 = vrot.slane %v144, %v755
    %v757 = vlaneseq
    %v758 = vshrl.u32 %v757, 7
    %v759 = vsub.s32 4, %v758
    %v760 = vrot.slane %v144, %v759
    %v763 = vlaneseq
    %v764 = vshrl.u32 %v763, 7
    %v765 = vsub.s32 0, %v764
    %v766 = vrot.slane %v756, %v765
    %v767 = vlaneseq
    %v768 = vshrl.u32 %v767, 7
    %v769 = vsub.s32 0, %v768
    %v770 = vrot.slane %v760, %v769
    %v771 = vsel %vm736, %v766, 0.0
    %v772 = vsel %vm737, %v770, 0.0
    %v773 = vsel %vm738, %v766, 0.0
    %v774 = vsel %vm739, %v770, 0.0
    %v775 = vsel %vm740, %v766, 0.0
    %v776 = vsel %vm741, %v770, 0.0
    %v777 = vsel %vm742, %v766, 0.0
    %v778 = vsel %vm743, %v770, 0.0
    %v779 = vsel %vm744, %v766, 0.0
    %v780 = vsel %vm745, %v770, 0.0
    %v781 = vsel %vm746, %v766, 0.0
    %v782 = vsel %vm747, %v770, 0.0
    %v783 = vsel %vm748, %v766, 0.0
    %v784 = vsel %vm749, %v770, 0.0
    %v785 = vsel %vm750, %v766, 0.0
    %v786 = vsel %vm751, %v770, 0.0
    %v787 = vadd.f32 %v704, %v771
    %v788 = vadd.f32 %v705, %v772
    %v789 = vadd.f32 %v706, %v773
    %v790 = vadd.f32 %v707, %v774
    %v791 = vadd.f32 %v708, %v775
    %v792 = vadd.f32 %v709, %v776
    %v793 = vadd.f32 %v710, %v777
    %v794 = vadd.f32 %v711, %v778
    %v795 = vadd.f32 %v712, %v779
    %v796 = vadd.f32 %v713, %v780
    %v797 = vadd.f32 %v714, %v781
    %v798 = vadd.f32 %v715, %v782
    %v799 = vadd.f32 %v716, %v783
    %v800 = vadd.f32 %v717, %v784
    %v801 = vadd.f32 %v718, %v785
    %v802 = vadd.f32 %v719, %v786
    %vm803 = vcmask 523264
    %v805 = vsel %vm803, %v87, 0
    %807 = vmatprep.subr.mxu0 0.0
    %808 = vmatpush1.msra.mxu0 0.0
    %809 = vmatprep.subr.mxu0 0.0
    %810 = vmatpush1.msra.mxu0 0.0
    %811 = vmatprep.subr.mxu0 0.0
    %812 = vmatpush1.msra.mxu0 0.0
    %813 = vmatprep.subr.mxu0 0.0
    %814 = vmatpush1.msra.mxu0 0.0
    %815 = vmatprep.subr.mxu0 0.0
    %816 = vmatpush1.msra.mxu0 0.0
    %817 = vmatprep.subr.mxu0 0.0
    %818 = vmatpush1.msra.mxu0 0.0
    %819 = vmatprep.subr.mxu0 0.0
    %820 = vmatpush1.msra.mxu0 0.0
    %821 = vmatprep.subr.mxu0 0.0
    %822 = vmatpush1.msra.mxu0 0.0
    %823 = vmatprep.subr.mxu0 %v802
    %824 = vmatpush1.msra.mxu0 %v801
    %825 = vmatprep.subr.mxu0 %v800
    %826 = vmatpush1.msra.mxu0 %v799
    %827 = vmatprep.subr.mxu0 %v798
    %828 = vmatpush1.msra.mxu0 %v797
    %829 = vmatprep.subr.mxu0 %v796
    %830 = vmatpush1.msra.mxu0 %v795
    %831 = vmatprep.subr.mxu0 %v794
    %832 = vmatpush1.msra.mxu0 %v793
    %833 = vmatprep.subr.mxu0 %v792
    %834 = vmatpush1.msra.mxu0 %v791
    %835 = vmatprep.subr.mxu0 %v790
    %836 = vmatpush1.msra.mxu0 %v789
    %837 = vmatprep.subr.mxu0 %v788
    %838 = vmatpush1.msra.mxu0 %v787
    %839 = vmatprep.subr.mxu0 0.0
    %840 = vmatpush2.msra.mxu0 0.0
    %841 = vmatprep.subr.mxu0 0.0
    %842 = vmatpush2.msra.mxu0 0.0
    %843 = vmatprep.subr.mxu0 0.0
    %844 = vmatpush2.msra.mxu0 0.0
    %845 = vmatprep.subr.mxu0 0.0
    %846 = vmatpush2.msra.mxu0 0.0
    %847 = vmatprep.subr.mxu0 0.0
    %848 = vmatpush2.msra.mxu0 0.0
    %849 = vmatprep.subr.mxu0 0.0
    %850 = vmatpush2.msra.mxu0 0.0
    %851 = vmatprep.subr.mxu0 0.0
    %852 = vmatpush2.msra.mxu0 0.0
    %853 = vmatprep.subr.mxu0 0.0
    %854 = vmatpush2.msra.mxu0 0.0
    %855 = vmatprep.subr.mxu0 0.0
    %856 = vmatpush2.msra.mxu0 0.0
    %857 = vmatprep.subr.mxu0 0.0
    %858 = vmatpush2.msra.mxu0 0.0
    %859 = vmatprep.subr.mxu0 0.0
    %860 = vmatpush2.msra.mxu0 0.0
    %861 = vmatprep.subr.mxu0 0.0
    %862 = vmatpush2.msra.mxu0 0.0
    %863 = vmatprep.subr.mxu0 0.0
    %864 = vmatpush2.msra.mxu0 0.0
    %865 = vmatprep.subr.mxu0 0.0
    %866 = vmatpush2.msra.mxu0 0.0
    %867 = vmatprep.subr.mxu0 0.0
    %868 = vmatpush2.msra.mxu0 0.0
    %869 = vmatprep.subr.mxu0 0.0
    %870 = vmatpush2.msra.mxu0 0.0
    %871 = vmatprep.mubr.f32.mxu0 0.0
    %872 = vmatmul.mubr.f32.gmra.mxu0 %v805
    %v873 = vpop.f32.mrf.mxu0
    %v874 = vadd.f32 0.0, %v873
    %v875 = vpop.f32.mrf.mxu0
    %v876 = vadd.f32 0.0, %v875
    %877 = vdwg.mxu0
    %v878 = vld [vmem:[#allocation7] sm:$0xf]
    %v879 = vmul.f32 %v86, 6.0
    %v880 = vmax.f32 %v879, 0.0
    %v881 = vmin.f32 %v880, 4.999
    %v882 = vfloor.f32 %v881
    %v883 = vsub.f32 %v881, %v882
    %v884 = vsub.f32 1.0, %v883
    %v885 = vcvt.f32.s32.to.zero.pseudo %v882
    %v887 = vrot.slane %v884, 5
    %v888 = vrot.slane %v887, 4
    %v890 = vmul.f32 %v884, %v888
    %v891 = vrot.slane %v884, 6
    %v892 = vrot.slane %v891, 4
    %v894 = vmul.f32 %v890, %v892
    %v895 = vmul.u32 %v885, 6
    %v896 = vrot.slane %v895, 5
    %v897 = vrot.slane %v896, 4
    %v898 = vadd.s32 %v885, %v897
    %v899 = vmul.u32 %v885, 36
    %v900 = vrot.slane %v899, 6
    %v901 = vrot.slane %v900, 4
    %v902 = vadd.s32 %v898, %v901
    %v903 = vadd.s32 %v885, 1
    %v905 = vrot.slane %v883, 6
    %v906 = vrot.slane %v905, 4
    %v908 = vmul.f32 %v890, %v906
    %v909 = vmul.u32 %v903, 36
    %v910 = vrot.slane %v909, 6
    %v911 = vrot.slane %v910, 4
    %v912 = vadd.s32 %v898, %v911
    %v913 = vrot.slane %v883, 5
    %v914 = vrot.slane %v913, 4
    %v916 = vmul.f32 %v884, %v914
    %v917 = vmul.f32 %v916, %v892
    %v918 = vmul.u32 %v903, 6
    %v919 = vrot.slane %v918, 5
    %v920 = vrot.slane %v919, 4
    %v921 = vadd.s32 %v885, %v920
    %v922 = vadd.s32 %v921, %v901
    %v923 = vmul.f32 %v916, %v906
    %v924 = vadd.s32 %v921, %v911
    %v925 = vmul.f32 %v883, %v888
    %v926 = vmul.f32 %v925, %v892
    %v927 = vadd.s32 %v903, %v897
    %v928 = vadd.s32 %v927, %v901
    %v929 = vmul.f32 %v925, %v906
    %v930 = vadd.s32 %v927, %v911
    %v931 = vmul.f32 %v883, %v914
    %v932 = vmul.f32 %v931, %v892
    %v933 = vadd.s32 %v903, %v920
    %v934 = vadd.s32 %v933, %v901
    %v935 = vmul.f32 %v931, %v906
    %v936 = vadd.s32 %v933, %v911
    %v937 = vadd.s32 %v147, 64
    %v938 = vadd.s32 %v147, 72
    %v939 = vadd.s32 %v147, 80
    %v940 = vadd.s32 %v147, 88
    %v941 = vadd.s32 %v147, 96
    %v942 = vadd.s32 %v147, 104
    %v943 = vadd.s32 %v147, 112
    %v944 = vadd.s32 %v147, 120
    %v945 = vadd.s32 %v147, 128
    %v946 = vadd.s32 %v147, 136
    %v947 = vadd.s32 %v147, 144
    %v948 = vadd.s32 %v147, 152
    %v949 = vadd.s32 %v147, 160
    %v950 = vadd.s32 %v147, 168
    %v951 = vadd.s32 %v147, 176
    %v952 = vadd.s32 %v147, 184
    %v953 = vadd.s32 %v147, 192
    %v954 = vadd.s32 %v147, 200
    %v955 = vadd.s32 %v147, 208
    %v956 = vlaneseq
    %v957 = vshrl.u32 %v956, 7
    %v958 = vsub.s32 0, %v957
    %v959 = vrot.slane %v902, %v958
    %v960 = vlaneseq
    %v961 = vshrl.u32 %v960, 7
    %v962 = vsub.s32 4, %v961
    %v963 = vrot.slane %v902, %v962
    %v964 = vlaneseq
    %v965 = vshrl.u32 %v964, 7
    %v966 = vsub.s32 0, %v965
    %v967 = vrot.slane %v959, %v966
    %v968 = vlaneseq
    %v969 = vshrl.u32 %v968, 7
    %v970 = vsub.s32 0, %v969
    %v971 = vrot.slane %v963, %v970
    %vm972 = vcmp.eq.s32.totalorder %v147, %v967
    %vm973 = vcmp.eq.s32.totalorder %v147, %v971
    %vm974 = vcmp.eq.s32.totalorder %v148, %v967
    %vm975 = vcmp.eq.s32.totalorder %v148, %v971
    %vm976 = vcmp.eq.s32.totalorder %v149, %v967
    %vm977 = vcmp.eq.s32.totalorder %v149, %v971
    %vm978 = vcmp.eq.s32.totalorder %v150, %v967
    %vm979 = vcmp.eq.s32.totalorder %v150, %v971
    %vm980 = vcmp.eq.s32.totalorder %v151, %v967
    %vm981 = vcmp.eq.s32.totalorder %v151, %v971
    %vm982 = vcmp.eq.s32.totalorder %v152, %v967
    %vm983 = vcmp.eq.s32.totalorder %v152, %v971
    %vm984 = vcmp.eq.s32.totalorder %v153, %v967
    %vm985 = vcmp.eq.s32.totalorder %v153, %v971
    %vm986 = vcmp.eq.s32.totalorder %v154, %v967
    %vm987 = vcmp.eq.s32.totalorder %v154, %v971
    %vm988 = vcmp.eq.s32.totalorder %v937, %v967
    %vm989 = vcmp.eq.s32.totalorder %v937, %v971
    %vm990 = vcmp.eq.s32.totalorder %v938, %v967
    %vm991 = vcmp.eq.s32.totalorder %v938, %v971
    %vm992 = vcmp.eq.s32.totalorder %v939, %v967
    %vm993 = vcmp.eq.s32.totalorder %v939, %v971
    %vm994 = vcmp.eq.s32.totalorder %v940, %v967
    %vm995 = vcmp.eq.s32.totalorder %v940, %v971
    %vm996 = vcmp.eq.s32.totalorder %v941, %v967
    %vm997 = vcmp.eq.s32.totalorder %v941, %v971
    %vm998 = vcmp.eq.s32.totalorder %v942, %v967
    %vm999 = vcmp.eq.s32.totalorder %v942, %v971
    %vm1000 = vcmp.eq.s32.totalorder %v943, %v967
    %vm1001 = vcmp.eq.s32.totalorder %v943, %v971
    %vm1002 = vcmp.eq.s32.totalorder %v944, %v967
    %vm1003 = vcmp.eq.s32.totalorder %v944, %v971
    %vm1004 = vcmp.eq.s32.totalorder %v945, %v967
    %vm1005 = vcmp.eq.s32.totalorder %v945, %v971
    %vm1006 = vcmp.eq.s32.totalorder %v946, %v967
    %vm1007 = vcmp.eq.s32.totalorder %v946, %v971
    %vm1008 = vcmp.eq.s32.totalorder %v947, %v967
    %vm1009 = vcmp.eq.s32.totalorder %v947, %v971
    %vm1010 = vcmp.eq.s32.totalorder %v948, %v967
    %vm1011 = vcmp.eq.s32.totalorder %v948, %v971
    %vm1012 = vcmp.eq.s32.totalorder %v949, %v967
    %vm1013 = vcmp.eq.s32.totalorder %v949, %v971
    %vm1014 = vcmp.eq.s32.totalorder %v950, %v967
    %vm1015 = vcmp.eq.s32.totalorder %v950, %v971
    %vm1016 = vcmp.eq.s32.totalorder %v951, %v967
    %vm1017 = vcmp.eq.s32.totalorder %v951, %v971
    %vm1018 = vcmp.eq.s32.totalorder %v952, %v967
    %vm1019 = vcmp.eq.s32.totalorder %v952, %v971
    %vm1020 = vcmp.eq.s32.totalorder %v953, %v967
    %vm1021 = vcmp.eq.s32.totalorder %v953, %v971
    %vm1022 = vcmp.eq.s32.totalorder %v954, %v967
    %vm1023 = vcmp.eq.s32.totalorder %v954, %v971
    %vm1024 = vcmp.eq.s32.totalorder %v955, %v967
    %vm1025 = vcmp.eq.s32.totalorder %v955, %v971
    %v1027 = vlaneseq
    %v1028 = vshrl.u32 %v1027, 7
    %v1029 = vsub.s32 0, %v1028
    %v1030 = vrot.slane %v894, %v1029
    %v1031 = vlaneseq
    %v1032 = vshrl.u32 %v1031, 7
    %v1033 = vsub.s32 4, %v1032
    %v1034 = vrot.slane %v894, %v1033
    %v1037 = vlaneseq
    %v1038 = vshrl.u32 %v1037, 7
    %v1039 = vsub.s32 0, %v1038
    %v1040 = vrot.slane %v1030, %v1039
    %v1041 = vlaneseq
    %v1042 = vshrl.u32 %v1041, 7
    %v1043 = vsub.s32 0, %v1042
    %v1044 = vrot.slane %v1034, %v1043
    %v1045 = vsel %vm972, %v1040, 0.0
    %v1046 = vsel %vm973, %v1044, 0.0
    %v1047 = vsel %vm974, %v1040, 0.0
    %v1048 = vsel %vm975, %v1044, 0.0
    %v1049 = vsel %vm976, %v1040, 0.0
    %v1050 = vsel %vm977, %v1044, 0.0
    %v1051 = vsel %vm978, %v1040, 0.0
    %v1052 = vsel %vm979, %v1044, 0.0
    %v1053 = vsel %vm980, %v1040, 0.0
    %v1054 = vsel %vm981, %v1044, 0.0
    %v1055 = vsel %vm982, %v1040, 0.0
    %v1056 = vsel %vm983, %v1044, 0.0
    %v1057 = vsel %vm984, %v1040, 0.0
    %v1058 = vsel %vm985, %v1044, 0.0
    %v1059 = vsel %vm986, %v1040, 0.0
    %v1060 = vsel %vm987, %v1044, 0.0
    %v1061 = vsel %vm988, %v1040, 0.0
    %v1062 = vsel %vm989, %v1044, 0.0
    %v1063 = vsel %vm990, %v1040, 0.0
    %v1064 = vsel %vm991, %v1044, 0.0
    %v1065 = vsel %vm992, %v1040, 0.0
    %v1066 = vsel %vm993, %v1044, 0.0
    %v1067 = vsel %vm994, %v1040, 0.0
    %v1068 = vsel %vm995, %v1044, 0.0
    %v1069 = vsel %vm996, %v1040, 0.0
    %v1070 = vsel %vm997, %v1044, 0.0
    %v1071 = vsel %vm998, %v1040, 0.0
    %v1072 = vsel %vm999, %v1044, 0.0
    %v1073 = vsel %vm1000, %v1040, 0.0
    %v1074 = vsel %vm1001, %v1044, 0.0
    %v1075 = vsel %vm1002, %v1040, 0.0
    %v1076 = vsel %vm1003, %v1044, 0.0
    %v1077 = vsel %vm1004, %v1040, 0.0
    %v1078 = vsel %vm1005, %v1044, 0.0
    %v1079 = vsel %vm1006, %v1040, 0.0
    %v1080 = vsel %vm1007, %v1044, 0.0
    %v1081 = vsel %vm1008, %v1040, 0.0
    %v1082 = vsel %vm1009, %v1044, 0.0
    %v1083 = vsel %vm1010, %v1040, 0.0
    %v1084 = vsel %vm1011, %v1044, 0.0
    %v1085 = vsel %vm1012, %v1040, 0.0
    %v1086 = vsel %vm1013, %v1044, 0.0
    %v1087 = vsel %vm1014, %v1040, 0.0
    %v1088 = vsel %vm1015, %v1044, 0.0
    %v1089 = vsel %vm1016, %v1040, 0.0
    %v1090 = vsel %vm1017, %v1044, 0.0
    %v1091 = vsel %vm1018, %v1040, 0.0
    %v1092 = vsel %vm1019, %v1044, 0.0
    %v1093 = vsel %vm1020, %v1040, 0.0
    %v1094 = vsel %vm1021, %v1044, 0.0
    %v1095 = vsel %vm1022, %v1040, 0.0
    %v1096 = vsel %vm1023, %v1044, 0.0
    %v1097 = vsel %vm1024, %v1040, 0.0
    %v1098 = vsel %vm1025, %v1044, 0.0
    %v1099 = vlaneseq
    %v1100 = vshrl.u32 %v1099, 7
    %v1101 = vsub.s32 0, %v1100
    %v1102 = vrot.slane %v912, %v1101
    %v1103 = vlaneseq
    %v1104 = vshrl.u32 %v1103, 7
    %v1105 = vsub.s32 4, %v1104
    %v1106 = vrot.slane %v912, %v1105
    %v1107 = vlaneseq
    %v1108 = vshrl.u32 %v1107, 7
    %v1109 = vsub.s32 0, %v1108
    %v1110 = vrot.slane %v1102, %v1109
    %v1111 = vlaneseq
    %v1112 = vshrl.u32 %v1111, 7
    %v1113 = vsub.s32 0, %v1112
    %v1114 = vrot.slane %v1106, %v1113
    %vm1115 = vcmp.eq.s32.totalorder %v147, %v1110
    %vm1116 = vcmp.eq.s32.totalorder %v147, %v1114
    %vm1117 = vcmp.eq.s32.totalorder %v148, %v1110
    %vm1118 = vcmp.eq.s32.totalorder %v148, %v1114
    %vm1119 = vcmp.eq.s32.totalorder %v149, %v1110
    %vm1120 = vcmp.eq.s32.totalorder %v149, %v1114
    %vm1121 = vcmp.eq.s32.totalorder %v150, %v1110
    %vm1122 = vcmp.eq.s32.totalorder %v150, %v1114
    %vm1123 = vcmp.eq.s32.totalorder %v151, %v1110
    %vm1124 = vcmp.eq.s32.totalorder %v151, %v1114
    %vm1125 = vcmp.eq.s32.totalorder %v152, %v1110
    %vm1126 = vcmp.eq.s32.totalorder %v152, %v1114
    %vm1127 = vcmp.eq.s32.totalorder %v153, %v1110
    %vm1128 = vcmp.eq.s32.totalorder %v153, %v1114
    %vm1129 = vcmp.eq.s32.totalorder %v154, %v1110
    %vm1130 = vcmp.eq.s32.totalorder %v154, %v1114
    %vm1131 = vcmp.eq.s32.totalorder %v937, %v1110
    %vm1132 = vcmp.eq.s32.totalorder %v937, %v1114
    %vm1133 = vcmp.eq.s32.totalorder %v938, %v1110
    %vm1134 = vcmp.eq.s32.totalorder %v938, %v1114
    %vm1135 = vcmp.eq.s32.totalorder %v939, %v1110
    %vm1136 = vcmp.eq.s32.totalorder %v939, %v1114
    %vm1137 = vcmp.eq.s32.totalorder %v940, %v1110
    %vm1138 = vcmp.eq.s32.totalorder %v940, %v1114
    %vm1139 = vcmp.eq.s32.totalorder %v941, %v1110
    %vm1140 = vcmp.eq.s32.totalorder %v941, %v1114
    %vm1141 = vcmp.eq.s32.totalorder %v942, %v1110
    %vm1142 = vcmp.eq.s32.totalorder %v942, %v1114
    %vm1143 = vcmp.eq.s32.totalorder %v943, %v1110
    %vm1144 = vcmp.eq.s32.totalorder %v943, %v1114
    %vm1145 = vcmp.eq.s32.totalorder %v944, %v1110
    %vm1146 = vcmp.eq.s32.totalorder %v944, %v1114
    %vm1147 = vcmp.eq.s32.totalorder %v945, %v1110
    %vm1148 = vcmp.eq.s32.totalorder %v945, %v1114
    %vm1149 = vcmp.eq.s32.totalorder %v946, %v1110
    %vm1150 = vcmp.eq.s32.totalorder %v946, %v1114
    %vm1151 = vcmp.eq.s32.totalorder %v947, %v1110
    %vm1152 = vcmp.eq.s32.totalorder %v947, %v1114
    %vm1153 = vcmp.eq.s32.totalorder %v948, %v1110
    %vm1154 = vcmp.eq.s32.totalorder %v948, %v1114
    %vm1155 = vcmp.eq.s32.totalorder %v949, %v1110
    %vm1156 = vcmp.eq.s32.totalorder %v949, %v1114
    %vm1157 = vcmp.eq.s32.totalorder %v950, %v1110
    %vm1158 = vcmp.eq.s32.totalorder %v950, %v1114
    %vm1159 = vcmp.eq.s32.totalorder %v951, %v1110
    %vm1160 = vcmp.eq.s32.totalorder %v951, %v1114
    %vm1161 = vcmp.eq.s32.totalorder %v952, %v1110
    %vm1162 = vcmp.eq.s32.totalorder %v952, %v1114
    %vm1163 = vcmp.eq.s32.totalorder %v953, %v1110
    %vm1164 = vcmp.eq.s32.totalorder %v953, %v1114
    %vm1165 = vcmp.eq.s32.totalorder %v954, %v1110
    %vm1166 = vcmp.eq.s32.totalorder %v954, %v1114
    %vm1167 = vcmp.eq.s32.totalorder %v955, %v1110
    %vm1168 = vcmp.eq.s32.totalorder %v955, %v1114
    %v1170 = vlaneseq
    %v1171 = vshrl.u32 %v1170, 7
    %v1172 = vsub.s32 0, %v1171
    %v1173 = vrot.slane %v908, %v1172
    %v1174 = vlaneseq
    %v1175 = vshrl.u32 %v1174, 7
    %v1176 = vsub.s32 4, %v1175
    %v1177 = vrot.slane %v908, %v1176
    %v1180 = vlaneseq
    %v1181 = vshrl.u32 %v1180, 7
    %v1182 = vsub.s32 0, %v1181
    %v1183 = vrot.slane %v1173, %v1182
    %v1184 = vlaneseq
    %v1185 = vshrl.u32 %v1184, 7
    %v1186 = vsub.s32 0, %v1185
    %v1187 = vrot.slane %v1177, %v1186
    %v1188 = vsel %vm1115, %v1183, 0.0
    %v1189 = vsel %vm1116, %v1187, 0.0
    %v1190 = vsel %vm1117, %v1183, 0.0
    %v1191 = vsel %vm1118, %v1187, 0.0
    %v1192 = vsel %vm1119, %v1183, 0.0
    %v1193 = vsel %vm1120, %v1187, 0.0
    %v1194 = vsel %vm1121, %v1183, 0.0
    %v1195 = vsel %vm1122, %v1187, 0.0
    %v1196 = vsel %vm1123, %v1183, 0.0
    %v1197 = vsel %vm1124, %v1187, 0.0
    %v1198 = vsel %vm1125, %v1183, 0.0
    %v1199 = vsel %vm1126, %v1187, 0.0
    %v1200 = vsel %vm1127, %v1183, 0.0
    %v1201 = vsel %vm1128, %v1187, 0.0
    %v1202 = vsel %vm1129, %v1183, 0.0
    %v1203 = vsel %vm1130, %v1187, 0.0
    %v1204 = vsel %vm1131, %v1183, 0.0
    %v1205 = vsel %vm1132, %v1187, 0.0
    %v1206 = vsel %vm1133, %v1183, 0.0
    %v1207 = vsel %vm1134, %v1187, 0.0
    %v1208 = vsel %vm1135, %v1183, 0.0
    %v1209 = vsel %vm1136, %v1187, 0.0
    %v1210 = vsel %vm1137, %v1183, 0.0
    %v1211 = vsel %vm1138, %v1187, 0.0
    %v1212 = vsel %vm1139, %v1183, 0.0
    %v1213 = vsel %vm1140, %v1187, 0.0
    %v1214 = vsel %vm1141, %v1183, 0.0
    %v1215 = vsel %vm1142, %v1187, 0.0
    %v1216 = vsel %vm1143, %v1183, 0.0
    %v1217 = vsel %vm1144, %v1187, 0.0
    %v1218 = vsel %vm1145, %v1183, 0.0
    %v1219 = vsel %vm1146, %v1187, 0.0
    %v1220 = vsel %vm1147, %v1183, 0.0
    %v1221 = vsel %vm1148, %v1187, 0.0
    %v1222 = vsel %vm1149, %v1183, 0.0
    %v1223 = vsel %vm1150, %v1187, 0.0
    %v1224 = vsel %vm1151, %v1183, 0.0
    %v1225 = vsel %vm1152, %v1187, 0.0
    %v1226 = vsel %vm1153, %v1183, 0.0
    %v1227 = vsel %vm1154, %v1187, 0.0
    %v1228 = vsel %vm1155, %v1183, 0.0
    %v1229 = vsel %vm1156, %v1187, 0.0
    %v1230 = vsel %vm1157, %v1183, 0.0
    %v1231 = vsel %vm1158, %v1187, 0.0
    %v1232 = vsel %vm1159, %v1183, 0.0
    %v1233 = vsel %vm1160, %v1187, 0.0
    %v1234 = vsel %vm1161, %v1183, 0.0
    %v1235 = vsel %vm1162, %v1187, 0.0
    %v1236 = vsel %vm1163, %v1183, 0.0
    %v1237 = vsel %vm1164, %v1187, 0.0
    %v1238 = vsel %vm1165, %v1183, 0.0
    %v1239 = vsel %vm1166, %v1187, 0.0
    %v1240 = vsel %vm1167, %v1183, 0.0
    %v1241 = vsel %vm1168, %v1187, 0.0
    %v1242 = vadd.f32 %v1045, %v1188
    %v1243 = vadd.f32 %v1046, %v1189
    %v1244 = vadd.f32 %v1047, %v1190
    %v1245 = vadd.f32 %v1048, %v1191
    %v1246 = vadd.f32 %v1049, %v1192
    %v1247 = vadd.f32 %v1050, %v1193
    %v1248 = vadd.f32 %v1051, %v1194
    %v1249 = vadd.f32 %v1052, %v1195
    %v1250 = vadd.f32 %v1053, %v1196
    %v1251 = vadd.f32 %v1054, %v1197
    %v1252 = vadd.f32 %v1055, %v1198
    %v1253 = vadd.f32 %v1056, %v1199
    %v1254 = vadd.f32 %v1057, %v1200
    %v1255 = vadd.f32 %v1058, %v1201
    %v1256 = vadd.f32 %v1059, %v1202
    %v1257 = vadd.f32 %v1060, %v1203
    %v1258 = vadd.f32 %v1061, %v1204
    %v1259 = vadd.f32 %v1062, %v1205
    %v1260 = vadd.f32 %v1063, %v1206
    %v1261 = vadd.f32 %v1064, %v1207
    %v1262 = vadd.f32 %v1065, %v1208
    %v1263 = vadd.f32 %v1066, %v1209
    %v1264 = vadd.f32 %v1067, %v1210
    %v1265 = vadd.f32 %v1068, %v1211
    %v1266 = vadd.f32 %v1069, %v1212
    %v1267 = vadd.f32 %v1070, %v1213
    %v1268 = vadd.f32 %v1071, %v1214
    %v1269 = vadd.f32 %v1072, %v1215
    %v1270 = vadd.f32 %v1073, %v1216
    %v1271 = vadd.f32 %v1074, %v1217
    %v1272 = vadd.f32 %v1075, %v1218
    %v1273 = vadd.f32 %v1076, %v1219
    %v1274 = vadd.f32 %v1077, %v1220
    %v1275 = vadd.f32 %v1078, %v1221
    %v1276 = vadd.f32 %v1079, %v1222
    %v1277 = vadd.f32 %v1080, %v1223
    %v1278 = vadd.f32 %v1081, %v1224
    %v1279 = vadd.f32 %v1082, %v1225
    %v1280 = vadd.f32 %v1083, %v1226
    %v1281 = vadd.f32 %v1084, %v1227
    %v1282 = vadd.f32 %v1085, %v1228
    %v1283 = vadd.f32 %v1086, %v1229
    %v1284 = vadd.f32 %v1087, %v1230
    %v1285 = vadd.f32 %v1088, %v1231
    %v1286 = vadd.f32 %v1089, %v1232
    %v1287 = vadd.f32 %v1090, %v1233
    %v1288 = vadd.f32 %v1091, %v1234
    %v1289 = vadd.f32 %v1092, %v1235
    %v1290 = vadd.f32 %v1093, %v1236
    %v1291 = vadd.f32 %v1094, %v1237
    %v1292 = vadd.f32 %v1095, %v1238
    %v1293 = vadd.f32 %v1096, %v1239
    %v1294 = vadd.f32 %v1097, %v1240
    %v1295 = vadd.f32 %v1098, %v1241
    %v1296 = vlaneseq
    %v1297 = vshrl.u32 %v1296, 7
    %v1298 = vsub.s32 0, %v1297
    %v1299 = vrot.slane %v922, %v1298
    %v1300 = vlaneseq
    %v1301 = vshrl.u32 %v1300, 7
    %v1302 = vsub.s32 4, %v1301
    %v1303 = vrot.slane %v922, %v1302
    %v1304 = vlaneseq
    %v1305 = vshrl.u32 %v1304, 7
    %v1306 = vsub.s32 0, %v1305
    %v1307 = vrot.slane %v1299, %v1306
    %v1308 = vlaneseq
    %v1309 = vshrl.u32 %v1308, 7
    %v1310 = vsub.s32 0, %v1309
    %v1311 = vrot.slane %v1303, %v1310
    %vm1312 = vcmp.eq.s32.totalorder %v147, %v1307
    %vm1313 = vcmp.eq.s32.totalorder %v147, %v1311
    %vm1314 = vcmp.eq.s32.totalorder %v148, %v1307
    %vm1315 = vcmp.eq.s32.totalorder %v148, %v1311
    %vm1316 = vcmp.eq.s32.totalorder %v149, %v1307
    %vm1317 = vcmp.eq.s32.totalorder %v149, %v1311
    %vm1318 = vcmp.eq.s32.totalorder %v150, %v1307
    %vm1319 = vcmp.eq.s32.totalorder %v150, %v1311
    %vm1320 = vcmp.eq.s32.totalorder %v151, %v1307
    %vm1321 = vcmp.eq.s32.totalorder %v151, %v1311
    %vm1322 = vcmp.eq.s32.totalorder %v152, %v1307
    %vm1323 = vcmp.eq.s32.totalorder %v152, %v1311
    %vm1324 = vcmp.eq.s32.totalorder %v153, %v1307
    %vm1325 = vcmp.eq.s32.totalorder %v153, %v1311
    %vm1326 = vcmp.eq.s32.totalorder %v154, %v1307
    %vm1327 = vcmp.eq.s32.totalorder %v154, %v1311
    %vm1328 = vcmp.eq.s32.totalorder %v937, %v1307
    %vm1329 = vcmp.eq.s32.totalorder %v937, %v1311
    %vm1330 = vcmp.eq.s32.totalorder %v938, %v1307
    %vm1331 = vcmp.eq.s32.totalorder %v938, %v1311
    %vm1332 = vcmp.eq.s32.totalorder %v939, %v1307
    %vm1333 = vcmp.eq.s32.totalorder %v939, %v1311
    %vm1334 = vcmp.eq.s32.totalorder %v940, %v1307
    %vm1335 = vcmp.eq.s32.totalorder %v940, %v1311
    %vm1336 = vcmp.eq.s32.totalorder %v941, %v1307
    %vm1337 = vcmp.eq.s32.totalorder %v941, %v1311
    %vm1338 = vcmp.eq.s32.totalorder %v942, %v1307
    %vm1339 = vcmp.eq.s32.totalorder %v942, %v1311
    %vm1340 = vcmp.eq.s32.totalorder %v943, %v1307
    %vm1341 = vcmp.eq.s32.totalorder %v943, %v1311
    %vm1342 = vcmp.eq.s32.totalorder %v944, %v1307
    %vm1343 = vcmp.eq.s32.totalorder %v944, %v1311
    %vm1344 = vcmp.eq.s32.totalorder %v945, %v1307
    %vm1345 = vcmp.eq.s32.totalorder %v945, %v1311
    %vm1346 = vcmp.eq.s32.totalorder %v946, %v1307
    %vm1347 = vcmp.eq.s32.totalorder %v946, %v1311
    %vm1348 = vcmp.eq.s32.totalorder %v947, %v1307
    %vm1349 = vcmp.eq.s32.totalorder %v947, %v1311
    %vm1350 = vcmp.eq.s32.totalorder %v948, %v1307
    %vm1351 = vcmp.eq.s32.totalorder %v948, %v1311
    %vm1352 = vcmp.eq.s32.totalorder %v949, %v1307
    %vm1353 = vcmp.eq.s32.totalorder %v949, %v1311
    %vm1354 = vcmp.eq.s32.totalorder %v950, %v1307
    %vm1355 = vcmp.eq.s32.totalorder %v950, %v1311
    %vm1356 = vcmp.eq.s32.totalorder %v951, %v1307
    %vm1357 = vcmp.eq.s32.totalorder %v951, %v1311
    %vm1358 = vcmp.eq.s32.totalorder %v952, %v1307
    %vm1359 = vcmp.eq.s32.totalorder %v952, %v1311
    %vm1360 = vcmp.eq.s32.totalorder %v953, %v1307
    %vm1361 = vcmp.eq.s32.totalorder %v953, %v1311
    %vm1362 = vcmp.eq.s32.totalorder %v954, %v1307
    %vm1363 = vcmp.eq.s32.totalorder %v954, %v1311
    %vm1364 = vcmp.eq.s32.totalorder %v955, %v1307
    %vm1365 = vcmp.eq.s32.totalorder %v955, %v1311
    %v1367 = vlaneseq
    %v1368 = vshrl.u32 %v1367, 7
    %v1369 = vsub.s32 0, %v1368
    %v1370 = vrot.slane %v917, %v1369
    %v1371 = vlaneseq
    %v1372 = vshrl.u32 %v1371, 7
    %v1373 = vsub.s32 4, %v1372
    %v1374 = vrot.slane %v917, %v1373
    %v1377 = vlaneseq
    %v1378 = vshrl.u32 %v1377, 7
    %v1379 = vsub.s32 0, %v1378
    %v1380 = vrot.slane %v1370, %v1379
    %v1381 = vlaneseq
    %v1382 = vshrl.u32 %v1381, 7
    %v1383 = vsub.s32 0, %v1382
    %v1384 = vrot.slane %v1374, %v1383
    %v1385 = vsel %vm1312, %v1380, 0.0
    %v1386 = vsel %vm1313, %v1384, 0.0
    %v1387 = vsel %vm1314, %v1380, 0.0
    %v1388 = vsel %vm1315, %v1384, 0.0
    %v1389 = vsel %vm1316, %v1380, 0.0
    %v1390 = vsel %vm1317, %v1384, 0.0
    %v1391 = vsel %vm1318, %v1380, 0.0
    %v1392 = vsel %vm1319, %v1384, 0.0
    %v1393 = vsel %vm1320, %v1380, 0.0
    %v1394 = vsel %vm1321, %v1384, 0.0
    %v1395 = vsel %vm1322, %v1380, 0.0
    %v1396 = vsel %vm1323, %v1384, 0.0
    %v1397 = vsel %vm1324, %v1380, 0.0
    %v1398 = vsel %vm1325, %v1384, 0.0
    %v1399 = vsel %vm1326, %v1380, 0.0
    %v1400 = vsel %vm1327, %v1384, 0.0
    %v1401 = vsel %vm1328, %v1380, 0.0
    %v1402 = vsel %vm1329, %v1384, 0.0
    %v1403 = vsel %vm1330, %v1380, 0.0
    %v1404 = vsel %vm1331, %v1384, 0.0
    %v1405 = vsel %vm1332, %v1380, 0.0
    %v1406 = vsel %vm1333, %v1384, 0.0
    %v1407 = vsel %vm1334, %v1380, 0.0
    %v1408 = vsel %vm1335, %v1384, 0.0
    %v1409 = vsel %vm1336, %v1380, 0.0
    %v1410 = vsel %vm1337, %v1384, 0.0
    %v1411 = vsel %vm1338, %v1380, 0.0
    %v1412 = vsel %vm1339, %v1384, 0.0
    %v1413 = vsel %vm1340, %v1380, 0.0
    %v1414 = vsel %vm1341, %v1384, 0.0
    %v1415 = vsel %vm1342, %v1380, 0.0
    %v1416 = vsel %vm1343, %v1384, 0.0
    %v1417 = vsel %vm1344, %v1380, 0.0
    %v1418 = vsel %vm1345, %v1384, 0.0
    %v1419 = vsel %vm1346, %v1380, 0.0
    %v1420 = vsel %vm1347, %v1384, 0.0
    %v1421 = vsel %vm1348, %v1380, 0.0
    %v1422 = vsel %vm1349, %v1384, 0.0
    %v1423 = vsel %vm1350, %v1380, 0.0
    %v1424 = vsel %vm1351, %v1384, 0.0
    %v1425 = vsel %vm1352, %v1380, 0.0
    %v1426 = vsel %vm1353, %v1384, 0.0
    %v1427 = vsel %vm1354, %v1380, 0.0
    %v1428 = vsel %vm1355, %v1384, 0.0
    %v1429 = vsel %vm1356, %v1380, 0.0
    %v1430 = vsel %vm1357, %v1384, 0.0
    %v1431 = vsel %vm1358, %v1380, 0.0
    %v1432 = vsel %vm1359, %v1384, 0.0
    %v1433 = vsel %vm1360, %v1380, 0.0
    %v1434 = vsel %vm1361, %v1384, 0.0
    %v1435 = vsel %vm1362, %v1380, 0.0
    %v1436 = vsel %vm1363, %v1384, 0.0
    %v1437 = vsel %vm1364, %v1380, 0.0
    %v1438 = vsel %vm1365, %v1384, 0.0
    %v1439 = vadd.f32 %v1242, %v1385
    %v1440 = vadd.f32 %v1243, %v1386
    %v1441 = vadd.f32 %v1244, %v1387
    %v1442 = vadd.f32 %v1245, %v1388
    %v1443 = vadd.f32 %v1246, %v1389
    %v1444 = vadd.f32 %v1247, %v1390
    %v1445 = vadd.f32 %v1248, %v1391
    %v1446 = vadd.f32 %v1249, %v1392
    %v1447 = vadd.f32 %v1250, %v1393
    %v1448 = vadd.f32 %v1251, %v1394
    %v1449 = vadd.f32 %v1252, %v1395
    %v1450 = vadd.f32 %v1253, %v1396
    %v1451 = vadd.f32 %v1254, %v1397
    %v1452 = vadd.f32 %v1255, %v1398
    %v1453 = vadd.f32 %v1256, %v1399
    %v1454 = vadd.f32 %v1257, %v1400
    %v1455 = vadd.f32 %v1258, %v1401
    %v1456 = vadd.f32 %v1259, %v1402
    %v1457 = vadd.f32 %v1260, %v1403
    %v1458 = vadd.f32 %v1261, %v1404
    %v1459 = vadd.f32 %v1262, %v1405
    %v1460 = vadd.f32 %v1263, %v1406
    %v1461 = vadd.f32 %v1264, %v1407
    %v1462 = vadd.f32 %v1265, %v1408
    %v1463 = vadd.f32 %v1266, %v1409
    %v1464 = vadd.f32 %v1267, %v1410
    %v1465 = vadd.f32 %v1268, %v1411
    %v1466 = vadd.f32 %v1269, %v1412
    %v1467 = vadd.f32 %v1270, %v1413
    %v1468 = vadd.f32 %v1271, %v1414
    %v1469 = vadd.f32 %v1272, %v1415
    %v1470 = vadd.f32 %v1273, %v1416
    %v1471 = vadd.f32 %v1274, %v1417
    %v1472 = vadd.f32 %v1275, %v1418
    %v1473 = vadd.f32 %v1276, %v1419
    %v1474 = vadd.f32 %v1277, %v1420
    %v1475 = vadd.f32 %v1278, %v1421
    %v1476 = vadd.f32 %v1279, %v1422
    %v1477 = vadd.f32 %v1280, %v1423
    %v1478 = vadd.f32 %v1281, %v1424
    %v1479 = vadd.f32 %v1282, %v1425
    %v1480 = vadd.f32 %v1283, %v1426
    %v1481 = vadd.f32 %v1284, %v1427
    %v1482 = vadd.f32 %v1285, %v1428
    %v1483 = vadd.f32 %v1286, %v1429
    %v1484 = vadd.f32 %v1287, %v1430
    %v1485 = vadd.f32 %v1288, %v1431
    %v1486 = vadd.f32 %v1289, %v1432
    %v1487 = vadd.f32 %v1290, %v1433
    %v1488 = vadd.f32 %v1291, %v1434
    %v1489 = vadd.f32 %v1292, %v1435
    %v1490 = vadd.f32 %v1293, %v1436
    %v1491 = vadd.f32 %v1294, %v1437
    %v1492 = vadd.f32 %v1295, %v1438
    %v1493 = vlaneseq
    %v1494 = vshrl.u32 %v1493, 7
    %v1495 = vsub.s32 0, %v1494
    %v1496 = vrot.slane %v924, %v1495
    %v1497 = vlaneseq
    %v1498 = vshrl.u32 %v1497, 7
    %v1499 = vsub.s32 4, %v1498
    %v1500 = vrot.slane %v924, %v1499
    %v1501 = vlaneseq
    %v1502 = vshrl.u32 %v1501, 7
    %v1503 = vsub.s32 0, %v1502
    %v1504 = vrot.slane %v1496, %v1503
    %v1505 = vlaneseq
    %v1506 = vshrl.u32 %v1505, 7
    %v1507 = vsub.s32 0, %v1506
    %v1508 = vrot.slane %v1500, %v1507
    %vm1509 = vcmp.eq.s32.totalorder %v147, %v1504
    %vm1510 = vcmp.eq.s32.totalorder %v147, %v1508
    %vm1511 = vcmp.eq.s32.totalorder %v148, %v1504
    %vm1512 = vcmp.eq.s32.totalorder %v148, %v1508
    %vm1513 = vcmp.eq.s32.totalorder %v149, %v1504
    %vm1514 = vcmp.eq.s32.totalorder %v149, %v1508
    %vm1515 = vcmp.eq.s32.totalorder %v150, %v1504
    %vm1516 = vcmp.eq.s32.totalorder %v150, %v1508
    %vm1517 = vcmp.eq.s32.totalorder %v151, %v1504
    %vm1518 = vcmp.eq.s32.totalorder %v151, %v1508
    %vm1519 = vcmp.eq.s32.totalorder %v152, %v1504
    %vm1520 = vcmp.eq.s32.totalorder %v152, %v1508
    %vm1521 = vcmp.eq.s32.totalorder %v153, %v1504
    %vm1522 = vcmp.eq.s32.totalorder %v153, %v1508
    %vm1523 = vcmp.eq.s32.totalorder %v154, %v1504
    %vm1524 = vcmp.eq.s32.totalorder %v154, %v1508
    %vm1525 = vcmp.eq.s32.totalorder %v937, %v1504
    %vm1526 = vcmp.eq.s32.totalorder %v937, %v1508
    %vm1527 = vcmp.eq.s32.totalorder %v938, %v1504
    %vm1528 = vcmp.eq.s32.totalorder %v938, %v1508
    %vm1529 = vcmp.eq.s32.totalorder %v939, %v1504
    %vm1530 = vcmp.eq.s32.totalorder %v939, %v1508
    %vm1531 = vcmp.eq.s32.totalorder %v940, %v1504
    %vm1532 = vcmp.eq.s32.totalorder %v940, %v1508
    %vm1533 = vcmp.eq.s32.totalorder %v941, %v1504
    %vm1534 = vcmp.eq.s32.totalorder %v941, %v1508
    %vm1535 = vcmp.eq.s32.totalorder %v942, %v1504
    %vm1536 = vcmp.eq.s32.totalorder %v942, %v1508
    %vm1537 = vcmp.eq.s32.totalorder %v943, %v1504
    %vm1538 = vcmp.eq.s32.totalorder %v943, %v1508
    %vm1539 = vcmp.eq.s32.totalorder %v944, %v1504
    %vm1540 = vcmp.eq.s32.totalorder %v944, %v1508
    %vm1541 = vcmp.eq.s32.totalorder %v945, %v1504
    %vm1542 = vcmp.eq.s32.totalorder %v945, %v1508
    %vm1543 = vcmp.eq.s32.totalorder %v946, %v1504
    %vm1544 = vcmp.eq.s32.totalorder %v946, %v1508
    %vm1545 = vcmp.eq.s32.totalorder %v947, %v1504
    %vm1546 = vcmp.eq.s32.totalorder %v947, %v1508
    %vm1547 = vcmp.eq.s32.totalorder %v948, %v1504
    %vm1548 = vcmp.eq.s32.totalorder %v948, %v1508
    %vm1549 = vcmp.eq.s32.totalorder %v949, %v1504
    %vm1550 = vcmp.eq.s32.totalorder %v949, %v1508
    %vm1551 = vcmp.eq.s32.totalorder %v950, %v1504
    %vm1552 = vcmp.eq.s32.totalorder %v950, %v1508
    %vm1553 = vcmp.eq.s32.totalorder %v951, %v1504
    %vm1554 = vcmp.eq.s32.totalorder %v951, %v1508
    %vm1555 = vcmp.eq.s32.totalorder %v952, %v1504
    %vm1556 = vcmp.eq.s32.totalorder %v952, %v1508
    %vm1557 = vcmp.eq.s32.totalorder %v953, %v1504
    %vm1558 = vcmp.eq.s32.totalorder %v953, %v1508
    %vm1559 = vcmp.eq.s32.totalorder %v954, %v1504
    %vm1560 = vcmp.eq.s32.totalorder %v954, %v1508
    %vm1561 = vcmp.eq.s32.totalorder %v955, %v1504
    %vm1562 = vcmp.eq.s32.totalorder %v955, %v1508
    %v1564 = vlaneseq
    %v1565 = vshrl.u32 %v1564, 7
    %v1566 = vsub.s32 0, %v1565
    %v1567 = vrot.slane %v923, %v1566
    %v1568 = vlaneseq
    %v1569 = vshrl.u32 %v1568, 7
    %v1570 = vsub.s32 4, %v1569
    %v1571 = vrot.slane %v923, %v1570
    %v1574 = vlaneseq
    %v1575 = vshrl.u32 %v1574, 7
    %v1576 = vsub.s32 0, %v1575
    %v1577 = vrot.slane %v1567, %v1576
    %v1578 = vlaneseq
    %v1579 = vshrl.u32 %v1578, 7
    %v1580 = vsub.s32 0, %v1579
    %v1581 = vrot.slane %v1571, %v1580
    %v1582 = vsel %vm1509, %v1577, 0.0
    %v1583 = vsel %vm1510, %v1581, 0.0
    %v1584 = vsel %vm1511, %v1577, 0.0
    %v1585 = vsel %vm1512, %v1581, 0.0
    %v1586 = vsel %vm1513, %v1577, 0.0
    %v1587 = vsel %vm1514, %v1581, 0.0
    %v1588 = vsel %vm1515, %v1577, 0.0
    %v1589 = vsel %vm1516, %v1581, 0.0
    %v1590 = vsel %vm1517, %v1577, 0.0
    %v1591 = vsel %vm1518, %v1581, 0.0
    %v1592 = vsel %vm1519, %v1577, 0.0
    %v1593 = vsel %vm1520, %v1581, 0.0
    %v1594 = vsel %vm1521, %v1577, 0.0
    %v1595 = vsel %vm1522, %v1581, 0.0
    %v1596 = vsel %vm1523, %v1577, 0.0
    %v1597 = vsel %vm1524, %v1581, 0.0
    %v1598 = vsel %vm1525, %v1577, 0.0
    %v1599 = vsel %vm1526, %v1581, 0.0
    %v1600 = vsel %vm1527, %v1577, 0.0
    %v1601 = vsel %vm1528, %v1581, 0.0
    %v1602 = vsel %vm1529, %v1577, 0.0
    %v1603 = vsel %vm1530, %v1581, 0.0
    %v1604 = vsel %vm1531, %v1577, 0.0
    %v1605 = vsel %vm1532, %v1581, 0.0
    %v1606 = vsel %vm1533, %v1577, 0.0
    %v1607 = vsel %vm1534, %v1581, 0.0
    %v1608 = vsel %vm1535, %v1577, 0.0
    %v1609 = vsel %vm1536, %v1581, 0.0
    %v1610 = vsel %vm1537, %v1577, 0.0
    %v1611 = vsel %vm1538, %v1581, 0.0
    %v1612 = vsel %vm1539, %v1577, 0.0
    %v1613 = vsel %vm1540, %v1581, 0.0
    %v1614 = vsel %vm1541, %v1577, 0.0
    %v1615 = vsel %vm1542, %v1581, 0.0
    %v1616 = vsel %vm1543, %v1577, 0.0
    %v1617 = vsel %vm1544, %v1581, 0.0
    %v1618 = vsel %vm1545, %v1577, 0.0
    %v1619 = vsel %vm1546, %v1581, 0.0
    %v1620 = vsel %vm1547, %v1577, 0.0
    %v1621 = vsel %vm1548, %v1581, 0.0
    %v1622 = vsel %vm1549, %v1577, 0.0
    %v1623 = vsel %vm1550, %v1581, 0.0
    %v1624 = vsel %vm1551, %v1577, 0.0
    %v1625 = vsel %vm1552, %v1581, 0.0
    %v1626 = vsel %vm1553, %v1577, 0.0
    %v1627 = vsel %vm1554, %v1581, 0.0
    %v1628 = vsel %vm1555, %v1577, 0.0
    %v1629 = vsel %vm1556, %v1581, 0.0
    %v1630 = vsel %vm1557, %v1577, 0.0
    %v1631 = vsel %vm1558, %v1581, 0.0
    %v1632 = vsel %vm1559, %v1577, 0.0
    %v1633 = vsel %vm1560, %v1581, 0.0
    %v1634 = vsel %vm1561, %v1577, 0.0
    %v1635 = vsel %vm1562, %v1581, 0.0
    %v1636 = vadd.f32 %v1439, %v1582
    %v1637 = vadd.f32 %v1440, %v1583
    %v1638 = vadd.f32 %v1441, %v1584
    %v1639 = vadd.f32 %v1442, %v1585
    %v1640 = vadd.f32 %v1443, %v1586
    %v1641 = vadd.f32 %v1444, %v1587
    %v1642 = vadd.f32 %v1445, %v1588
    %v1643 = vadd.f32 %v1446, %v1589
    %v1644 = vadd.f32 %v1447, %v1590
    %v1645 = vadd.f32 %v1448, %v1591
    %v1646 = vadd.f32 %v1449, %v1592
    %v1647 = vadd.f32 %v1450, %v1593
    %v1648 = vadd.f32 %v1451, %v1594
    %v1649 = vadd.f32 %v1452, %v1595
    %v1650 = vadd.f32 %v1453, %v1596
    %v1651 = vadd.f32 %v1454, %v1597
    %v1652 = vadd.f32 %v1455, %v1598
    %v1653 = vadd.f32 %v1456, %v1599
    %v1654 = vadd.f32 %v1457, %v1600
    %v1655 = vadd.f32 %v1458, %v1601
    %v1656 = vadd.f32 %v1459, %v1602
    %v1657 = vadd.f32 %v1460, %v1603
    %v1658 = vadd.f32 %v1461, %v1604
    %v1659 = vadd.f32 %v1462, %v1605
    %v1660 = vadd.f32 %v1463, %v1606
    %v1661 = vadd.f32 %v1464, %v1607
    %v1662 = vadd.f32 %v1465, %v1608
    %v1663 = vadd.f32 %v1466, %v1609
    %v1664 = vadd.f32 %v1467, %v1610
    %v1665 = vadd.f32 %v1468, %v1611
    %v1666 = vadd.f32 %v1469, %v1612
    %v1667 = vadd.f32 %v1470, %v1613
    %v1668 = vadd.f32 %v1471, %v1614
    %v1669 = vadd.f32 %v1472, %v1615
    %v1670 = vadd.f32 %v1473, %v1616
    %v1671 = vadd.f32 %v1474, %v1617
    %v1672 = vadd.f32 %v1475, %v1618
    %v1673 = vadd.f32 %v1476, %v1619
    %v1674 = vadd.f32 %v1477, %v1620
    %v1675 = vadd.f32 %v1478, %v1621
    %v1676 = vadd.f32 %v1479, %v1622
    %v1677 = vadd.f32 %v1480, %v1623
    %v1678 = vadd.f32 %v1481, %v1624
    %v1679 = vadd.f32 %v1482, %v1625
    %v1680 = vadd.f32 %v1483, %v1626
    %v1681 = vadd.f32 %v1484, %v1627
    %v1682 = vadd.f32 %v1485, %v1628
    %v1683 = vadd.f32 %v1486, %v1629
    %v1684 = vadd.f32 %v1487, %v1630
    %v1685 = vadd.f32 %v1488, %v1631
    %v1686 = vadd.f32 %v1489, %v1632
    %v1687 = vadd.f32 %v1490, %v1633
    %v1688 = vadd.f32 %v1491, %v1634
    %v1689 = vadd.f32 %v1492, %v1635
    %v1690 = vlaneseq
    %v1691 = vshrl.u32 %v1690, 7
    %v1692 = vsub.s32 0, %v1691
    %v1693 = vrot.slane %v928, %v1692
    %v1694 = vlaneseq
    %v1695 = vshrl.u32 %v1694, 7
    %v1696 = vsub.s32 4, %v1695
    %v1697 = vrot.slane %v928, %v1696
    %v1698 = vlaneseq
    %v1699 = vshrl.u32 %v1698, 7
    %v1700 = vsub.s32 0, %v1699
    %v1701 = vrot.slane %v1693, %v1700
    %v1702 = vlaneseq
    %v1703 = vshrl.u32 %v1702, 7
    %v1704 = vsub.s32 0, %v1703
    %v1705 = vrot.slane %v1697, %v1704
    %vm1706 = vcmp.eq.s32.totalorder %v147, %v1701
    %vm1707 = vcmp.eq.s32.totalorder %v147, %v1705
    %vm1708 = vcmp.eq.s32.totalorder %v148, %v1701
    %vm1709 = vcmp.eq.s32.totalorder %v148, %v1705
    %vm1710 = vcmp.eq.s32.totalorder %v149, %v1701
    %vm1711 = vcmp.eq.s32.totalorder %v149, %v1705
    %vm1712 = vcmp.eq.s32.totalorder %v150, %v1701
    %vm1713 = vcmp.eq.s32.totalorder %v150, %v1705
    %vm1714 = vcmp.eq.s32.totalorder %v151, %v1701
    %vm1715 = vcmp.eq.s32.totalorder %v151, %v1705
    %vm1716 = vcmp.eq.s32.totalorder %v152, %v1701
    %vm1717 = vcmp.eq.s32.totalorder %v152, %v1705
    %vm1718 = vcmp.eq.s32.totalorder %v153, %v1701
    %vm1719 = vcmp.eq.s32.totalorder %v153, %v1705
    %vm1720 = vcmp.eq.s32.totalorder %v154, %v1701
    %vm1721 = vcmp.eq.s32.totalorder %v154, %v1705
    %vm1722 = vcmp.eq.s32.totalorder %v937, %v1701
    %vm1723 = vcmp.eq.s32.totalorder %v937, %v1705
    %vm1724 = vcmp.eq.s32.totalorder %v938, %v1701
    %vm1725 = vcmp.eq.s32.totalorder %v938, %v1705
    %vm1726 = vcmp.eq.s32.totalorder %v939, %v1701
    %vm1727 = vcmp.eq.s32.totalorder %v939, %v1705
    %vm1728 = vcmp.eq.s32.totalorder %v940, %v1701
    %vm1729 = vcmp.eq.s32.totalorder %v940, %v1705
    %vm1730 = vcmp.eq.s32.totalorder %v941, %v1701
    %vm1731 = vcmp.eq.s32.totalorder %v941, %v1705
    %vm1732 = vcmp.eq.s32.totalorder %v942, %v1701
    %vm1733 = vcmp.eq.s32.totalorder %v942, %v1705
    %vm1734 = vcmp.eq.s32.totalorder %v943, %v1701
    %vm1735 = vcmp.eq.s32.totalorder %v943, %v1705
    %vm1736 = vcmp.eq.s32.totalorder %v944, %v1701
    %vm1737 = vcmp.eq.s32.totalorder %v944, %v1705
    %vm1738 = vcmp.eq.s32.totalorder %v945, %v1701
    %vm1739 = vcmp.eq.s32.totalorder %v945, %v1705
    %vm1740 = vcmp.eq.s32.totalorder %v946, %v1701
    %vm1741 = vcmp.eq.s32.totalorder %v946, %v1705
    %vm1742 = vcmp.eq.s32.totalorder %v947, %v1701
    %vm1743 = vcmp.eq.s32.totalorder %v947, %v1705
    %vm1744 = vcmp.eq.s32.totalorder %v948, %v1701
    %vm1745 = vcmp.eq.s32.totalorder %v948, %v1705
    %vm1746 = vcmp.eq.s32.totalorder %v949, %v1701
    %vm1747 = vcmp.eq.s32.totalorder %v949, %v1705
    %vm1748 = vcmp.eq.s32.totalorder %v950, %v1701
    %vm1749 = vcmp.eq.s32.totalorder %v950, %v1705
    %vm1750 = vcmp.eq.s32.totalorder %v951, %v1701
    %vm1751 = vcmp.eq.s32.totalorder %v951, %v1705
    %vm1752 = vcmp.eq.s32.totalorder %v952, %v1701
    %vm1753 = vcmp.eq.s32.totalorder %v952, %v1705
    %vm1754 = vcmp.eq.s32.totalorder %v953, %v1701
    %vm1755 = vcmp.eq.s32.totalorder %v953, %v1705
    %vm1756 = vcmp.eq.s32.totalorder %v954, %v1701
    %vm1757 = vcmp.eq.s32.totalorder %v954, %v1705
    %vm1758 = vcmp.eq.s32.totalorder %v955, %v1701
    %vm1759 = vcmp.eq.s32.totalorder %v955, %v1705
    %v1761 = vlaneseq
    %v1762 = vshrl.u32 %v1761, 7
    %v1763 = vsub.s32 0, %v1762
    %v1764 = vrot.slane %v926, %v1763
    %v1765 = vlaneseq
    %v1766 = vshrl.u32 %v1765, 7
    %v1767 = vsub.s32 4, %v1766
    %v1768 = vrot.slane %v926, %v1767
    %v1771 = vlaneseq
    %v1772 = vshrl.u32 %v1771, 7
    %v1773 = vsub.s32 0, %v1772
    %v1774 = vrot.slane %v1764, %v1773
    %v1775 = vlaneseq
    %v1776 = vshrl.u32 %v1775, 7
    %v1777 = vsub.s32 0, %v1776
    %v1778 = vrot.slane %v1768, %v1777
    %v1779 = vsel %vm1706, %v1774, 0.0
    %v1780 = vsel %vm1707, %v1778, 0.0
    %v1781 = vsel %vm1708, %v1774, 0.0
    %v1782 = vsel %vm1709, %v1778, 0.0
    %v1783 = vsel %vm1710, %v1774, 0.0
    %v1784 = vsel %vm1711, %v1778, 0.0
    %v1785 = vsel %vm1712, %v1774, 0.0
    %v1786 = vsel %vm1713, %v1778, 0.0
    %v1787 = vsel %vm1714, %v1774, 0.0
    %v1788 = vsel %vm1715, %v1778, 0.0
    %v1789 = vsel %vm1716, %v1774, 0.0
    %v1790 = vsel %vm1717, %v1778, 0.0
    %v1791 = vsel %vm1718, %v1774, 0.0
    %v1792 = vsel %vm1719, %v1778, 0.0
    %v1793 = vsel %vm1720, %v1774, 0.0
    %v1794 = vsel %vm1721, %v1778, 0.0
    %v1795 = vsel %vm1722, %v1774, 0.0
    %v1796 = vsel %vm1723, %v1778, 0.0
    %v1797 = vsel %vm1724, %v1774, 0.0
    %v1798 = vsel %vm1725, %v1778, 0.0
    %v1799 = vsel %vm1726, %v1774, 0.0
    %v1800 = vsel %vm1727, %v1778, 0.0
    %v1801 = vsel %vm1728, %v1774, 0.0
    %v1802 = vsel %vm1729, %v1778, 0.0
    %v1803 = vsel %vm1730, %v1774, 0.0
    %v1804 = vsel %vm1731, %v1778, 0.0
    %v1805 = vsel %vm1732, %v1774, 0.0
    %v1806 = vsel %vm1733, %v1778, 0.0
    %v1807 = vsel %vm1734, %v1774, 0.0
    %v1808 = vsel %vm1735, %v1778, 0.0
    %v1809 = vsel %vm1736, %v1774, 0.0
    %v1810 = vsel %vm1737, %v1778, 0.0
    %v1811 = vsel %vm1738, %v1774, 0.0
    %v1812 = vsel %vm1739, %v1778, 0.0
    %v1813 = vsel %vm1740, %v1774, 0.0
    %v1814 = vsel %vm1741, %v1778, 0.0
    %v1815 = vsel %vm1742, %v1774, 0.0
    %v1816 = vsel %vm1743, %v1778, 0.0
    %v1817 = vsel %vm1744, %v1774, 0.0
    %v1818 = vsel %vm1745, %v1778, 0.0
    %v1819 = vsel %vm1746, %v1774, 0.0
    %v1820 = vsel %vm1747, %v1778, 0.0
    %v1821 = vsel %vm1748, %v1774, 0.0
    %v1822 = vsel %vm1749, %v1778, 0.0
    %v1823 = vsel %vm1750, %v1774, 0.0
    %v1824 = vsel %vm1751, %v1778, 0.0
    %v1825 = vsel %vm1752, %v1774, 0.0
    %v1826 = vsel %vm1753, %v1778, 0.0
    %v1827 = vsel %vm1754, %v1774, 0.0
    %v1828 = vsel %vm1755, %v1778, 0.0
    %v1829 = vsel %vm1756, %v1774, 0.0
    %v1830 = vsel %vm1757, %v1778, 0.0
    %v1831 = vsel %vm1758, %v1774, 0.0
    %v1832 = vsel %vm1759, %v1778, 0.0
    %v1833 = vadd.f32 %v1636, %v1779
    %v1834 = vadd.f32 %v1637, %v1780
    %v1835 = vadd.f32 %v1638, %v1781
    %v1836 = vadd.f32 %v1639, %v1782
    %v1837 = vadd.f32 %v1640, %v1783
    %v1838 = vadd.f32 %v1641, %v1784
    %v1839 = vadd.f32 %v1642, %v1785
    %v1840 = vadd.f32 %v1643, %v1786
    %v1841 = vadd.f32 %v1644, %v1787
    %v1842 = vadd.f32 %v1645, %v1788
    %v1843 = vadd.f32 %v1646, %v1789
    %v1844 = vadd.f32 %v1647, %v1790
    %v1845 = vadd.f32 %v1648, %v1791
    %v1846 = vadd.f32 %v1649, %v1792
    %v1847 = vadd.f32 %v1650, %v1793
    %v1848 = vadd.f32 %v1651, %v1794
    %v1849 = vadd.f32 %v1652, %v1795
    %v1850 = vadd.f32 %v1653, %v1796
    %v1851 = vadd.f32 %v1654, %v1797
    %v1852 = vadd.f32 %v1655, %v1798
    %v1853 = vadd.f32 %v1656, %v1799
    %v1854 = vadd.f32 %v1657, %v1800
    %v1855 = vadd.f32 %v1658, %v1801
    %v1856 = vadd.f32 %v1659, %v1802
    %v1857 = vadd.f32 %v1660, %v1803
    %v1858 = vadd.f32 %v1661, %v1804
    %v1859 = vadd.f32 %v1662, %v1805
    %v1860 = vadd.f32 %v1663, %v1806
    %v1861 = vadd.f32 %v1664, %v1807
    %v1862 = vadd.f32 %v1665, %v1808
    %v1863 = vadd.f32 %v1666, %v1809
    %v1864 = vadd.f32 %v1667, %v1810
    %v1865 = vadd.f32 %v1668, %v1811
    %v1866 = vadd.f32 %v1669, %v1812
    %v1867 = vadd.f32 %v1670, %v1813
    %v1868 = vadd.f32 %v1671, %v1814
    %v1869 = vadd.f32 %v1672, %v1815
    %v1870 = vadd.f32 %v1673, %v1816
    %v1871 = vadd.f32 %v1674, %v1817
    %v1872 = vadd.f32 %v1675, %v1818
    %v1873 = vadd.f32 %v1676, %v1819
    %v1874 = vadd.f32 %v1677, %v1820
    %v1875 = vadd.f32 %v1678, %v1821
    %v1876 = vadd.f32 %v1679, %v1822
    %v1877 = vadd.f32 %v1680, %v1823
    %v1878 = vadd.f32 %v1681, %v1824
    %v1879 = vadd.f32 %v1682, %v1825
    %v1880 = vadd.f32 %v1683, %v1826
    %v1881 = vadd.f32 %v1684, %v1827
    %v1882 = vadd.f32 %v1685, %v1828
    %v1883 = vadd.f32 %v1686, %v1829
    %v1884 = vadd.f32 %v1687, %v1830
    %v1885 = vadd.f32 %v1688, %v1831
    %v1886 = vadd.f32 %v1689, %v1832
    %v1887 = vlaneseq
    %v1888 = vshrl.u32 %v1887, 7
    %v1889 = vsub.s32 0, %v1888
    %v1890 = vrot.slane %v930, %v1889
    %v1891 = vlaneseq
    %v1892 = vshrl.u32 %v1891, 7
    %v1893 = vsub.s32 4, %v1892
    %v1894 = vrot.slane %v930, %v1893
    %v1895 = vlaneseq
    %v1896 = vshrl.u32 %v1895, 7
    %v1897 = vsub.s32 0, %v1896
    %v1898 = vrot.slane %v1890, %v1897
    %v1899 = vlaneseq
    %v1900 = vshrl.u32 %v1899, 7
    %v1901 = vsub.s32 0, %v1900
    %v1902 = vrot.slane %v1894, %v1901
    %vm1903 = vcmp.eq.s32.totalorder %v147, %v1898
    %vm1904 = vcmp.eq.s32.totalorder %v147, %v1902
    %vm1905 = vcmp.eq.s32.totalorder %v148, %v1898
    %vm1906 = vcmp.eq.s32.totalorder %v148, %v1902
    %vm1907 = vcmp.eq.s32.totalorder %v149, %v1898
    %vm1908 = vcmp.eq.s32.totalorder %v149, %v1902
    %vm1909 = vcmp.eq.s32.totalorder %v150, %v1898
    %vm1910 = vcmp.eq.s32.totalorder %v150, %v1902
    %vm1911 = vcmp.eq.s32.totalorder %v151, %v1898
    %vm1912 = vcmp.eq.s32.totalorder %v151, %v1902
    %vm1913 = vcmp.eq.s32.totalorder %v152, %v1898
    %vm1914 = vcmp.eq.s32.totalorder %v152, %v1902
    %vm1915 = vcmp.eq.s32.totalorder %v153, %v1898
    %vm1916 = vcmp.eq.s32.totalorder %v153, %v1902
    %vm1917 = vcmp.eq.s32.totalorder %v154, %v1898
    %vm1918 = vcmp.eq.s32.totalorder %v154, %v1902
    %vm1919 = vcmp.eq.s32.totalorder %v937, %v1898
    %vm1920 = vcmp.eq.s32.totalorder %v937, %v1902
    %vm1921 = vcmp.eq.s32.totalorder %v938, %v1898
    %vm1922 = vcmp.eq.s32.totalorder %v938, %v1902
    %vm1923 = vcmp.eq.s32.totalorder %v939, %v1898
    %vm1924 = vcmp.eq.s32.totalorder %v939, %v1902
    %vm1925 = vcmp.eq.s32.totalorder %v940, %v1898
    %vm1926 = vcmp.eq.s32.totalorder %v940, %v1902
    %vm1927 = vcmp.eq.s32.totalorder %v941, %v1898
    %vm1928 = vcmp.eq.s32.totalorder %v941, %v1902
    %vm1929 = vcmp.eq.s32.totalorder %v942, %v1898
    %vm1930 = vcmp.eq.s32.totalorder %v942, %v1902
    %vm1931 = vcmp.eq.s32.totalorder %v943, %v1898
    %vm1932 = vcmp.eq.s32.totalorder %v943, %v1902
    %vm1933 = vcmp.eq.s32.totalorder %v944, %v1898
    %vm1934 = vcmp.eq.s32.totalorder %v944, %v1902
    %vm1935 = vcmp.eq.s32.totalorder %v945, %v1898
    %vm1936 = vcmp.eq.s32.totalorder %v945, %v1902
    %vm1937 = vcmp.eq.s32.totalorder %v946, %v1898
    %vm1938 = vcmp.eq.s32.totalorder %v946, %v1902
    %vm1939 = vcmp.eq.s32.totalorder %v947, %v1898
    %vm1940 = vcmp.eq.s32.totalorder %v947, %v1902
    %vm1941 = vcmp.eq.s32.totalorder %v948, %v1898
    %vm1942 = vcmp.eq.s32.totalorder %v948, %v1902
    %vm1943 = vcmp.eq.s32.totalorder %v949, %v1898
    %vm1944 = vcmp.eq.s32.totalorder %v949, %v1902
    %vm1945 = vcmp.eq.s32.totalorder %v950, %v1898
    %vm1946 = vcmp.eq.s32.totalorder %v950, %v1902
    %vm1947 = vcmp.eq.s32.totalorder %v951, %v1898
    %vm1948 = vcmp.eq.s32.totalorder %v951, %v1902
    %vm1949 = vcmp.eq.s32.totalorder %v952, %v1898
    %vm1950 = vcmp.eq.s32.totalorder %v952, %v1902
    %vm1951 = vcmp.eq.s32.totalorder %v953, %v1898
    %vm1952 = vcmp.eq.s32.totalorder %v953, %v1902
    %vm1953 = vcmp.eq.s32.totalorder %v954, %v1898
    %vm1954 = vcmp.eq.s32.totalorder %v954, %v1902
    %vm1955 = vcmp.eq.s32.totalorder %v955, %v1898
    %vm1956 = vcmp.eq.s32.totalorder %v955, %v1902
    %v1958 = vlaneseq
    %v1959 = vshrl.u32 %v1958, 7
    %v1960 = vsub.s32 0, %v1959
    %v1961 = vrot.slane %v929, %v1960
    %v1962 = vlaneseq
    %v1963 = vshrl.u32 %v1962, 7
    %v1964 = vsub.s32 4, %v1963
    %v1965 = vrot.slane %v929, %v1964
    %v1968 = vlaneseq
    %v1969 = vshrl.u32 %v1968, 7
    %v1970 = vsub.s32 0, %v1969
    %v1971 = vrot.slane %v1961, %v1970
    %v1972 = vlaneseq
    %v1973 = vshrl.u32 %v1972, 7
    %v1974 = vsub.s32 0, %v1973
    %v1975 = vrot.slane %v1965, %v1974
    %v1976 = vsel %vm1903, %v1971, 0.0
    %v1977 = vsel %vm1904, %v1975, 0.0
    %v1978 = vsel %vm1905, %v1971, 0.0
    %v1979 = vsel %vm1906, %v1975, 0.0
    %v1980 = vsel %vm1907, %v1971, 0.0
    %v1981 = vsel %vm1908, %v1975, 0.0
    %v1982 = vsel %vm1909, %v1971, 0.0
    %v1983 = vsel %vm1910, %v1975, 0.0
    %v1984 = vsel %vm1911, %v1971, 0.0
    %v1985 = vsel %vm1912, %v1975, 0.0
    %v1986 = vsel %vm1913, %v1971, 0.0
    %v1987 = vsel %vm1914, %v1975, 0.0
    %v1988 = vsel %vm1915, %v1971, 0.0
    %v1989 = vsel %vm1916, %v1975, 0.0
    %v1990 = vsel %vm1917, %v1971, 0.0
    %v1991 = vsel %vm1918, %v1975, 0.0
    %v1992 = vsel %vm1919, %v1971, 0.0
    %v1993 = vsel %vm1920, %v1975, 0.0
    %v1994 = vsel %vm1921, %v1971, 0.0
    %v1995 = vsel %vm1922, %v1975, 0.0
    %v1996 = vsel %vm1923, %v1971, 0.0
    %v1997 = vsel %vm1924, %v1975, 0.0
    %v1998 = vsel %vm1925, %v1971, 0.0
    %v1999 = vsel %vm1926, %v1975, 0.0
    %v2000 = vsel %vm1927, %v1971, 0.0
    %v2001 = vsel %vm1928, %v1975, 0.0
    %v2002 = vsel %vm1929, %v1971, 0.0
    %v2003 = vsel %vm1930, %v1975, 0.0
    %v2004 = vsel %vm1931, %v1971, 0.0
    %v2005 = vsel %vm1932, %v1975, 0.0
    %v2006 = vsel %vm1933, %v1971, 0.0
    %v2007 = vsel %vm1934, %v1975, 0.0
    %v2008 = vsel %vm1935, %v1971, 0.0
    %v2009 = vsel %vm1936, %v1975, 0.0
    %v2010 = vsel %vm1937, %v1971, 0.0
    %v2011 = vsel %vm1938, %v1975, 0.0
    %v2012 = vsel %vm1939, %v1971, 0.0
    %v2013 = vsel %vm1940, %v1975, 0.0
    %v2014 = vsel %vm1941, %v1971, 0.0
    %v2015 = vsel %vm1942, %v1975, 0.0
    %v2016 = vsel %vm1943, %v1971, 0.0
    %v2017 = vsel %vm1944, %v1975, 0.0
    %v2018 = vsel %vm1945, %v1971, 0.0
    %v2019 = vsel %vm1946, %v1975, 0.0
    %v2020 = vsel %vm1947, %v1971, 0.0
    %v2021 = vsel %vm1948, %v1975, 0.0
    %v2022 = vsel %vm1949, %v1971, 0.0
    %v2023 = vsel %vm1950, %v1975, 0.0
    %v2024 = vsel %vm1951, %v1971, 0.0
    %v2025 = vsel %vm1952, %v1975, 0.0
    %v2026 = vsel %vm1953, %v1971, 0.0
    %v2027 = vsel %vm1954, %v1975, 0.0
    %v2028 = vsel %vm1955, %v1971, 0.0
    %v2029 = vsel %vm1956, %v1975, 0.0
    %v2030 = vadd.f32 %v1833, %v1976
    %v2031 = vadd.f32 %v1834, %v1977
    %v2032 = vadd.f32 %v1835, %v1978
    %v2033 = vadd.f32 %v1836, %v1979
    %v2034 = vadd.f32 %v1837, %v1980
    %v2035 = vadd.f32 %v1838, %v1981
    %v2036 = vadd.f32 %v1839, %v1982
    %v2037 = vadd.f32 %v1840, %v1983
    %v2038 = vadd.f32 %v1841, %v1984
    %v2039 = vadd.f32 %v1842, %v1985
    %v2040 = vadd.f32 %v1843, %v1986
    %v2041 = vadd.f32 %v1844, %v1987
    %v2042 = vadd.f32 %v1845, %v1988
    %v2043 = vadd.f32 %v1846, %v1989
    %v2044 = vadd.f32 %v1847, %v1990
    %v2045 = vadd.f32 %v1848, %v1991
    %v2046 = vadd.f32 %v1849, %v1992
    %v2047 = vadd.f32 %v1850, %v1993
    %v2048 = vadd.f32 %v1851, %v1994
    %v2049 = vadd.f32 %v1852, %v1995
    %v2050 = vadd.f32 %v1853, %v1996
    %v2051 = vadd.f32 %v1854, %v1997
    %v2052 = vadd.f32 %v1855, %v1998
    %v2053 = vadd.f32 %v1856, %v1999
    %v2054 = vadd.f32 %v1857, %v2000
    %v2055 = vadd.f32 %v1858, %v2001
    %v2056 = vadd.f32 %v1859, %v2002
    %v2057 = vadd.f32 %v1860, %v2003
    %v2058 = vadd.f32 %v1861, %v2004
    %v2059 = vadd.f32 %v1862, %v2005
    %v2060 = vadd.f32 %v1863, %v2006
    %v2061 = vadd.f32 %v1864, %v2007
    %v2062 = vadd.f32 %v1865, %v2008
    %v2063 = vadd.f32 %v1866, %v2009
    %v2064 = vadd.f32 %v1867, %v2010
    %v2065 = vadd.f32 %v1868, %v2011
    %v2066 = vadd.f32 %v1869, %v2012
    %v2067 = vadd.f32 %v1870, %v2013
    %v2068 = vadd.f32 %v1871, %v2014
    %v2069 = vadd.f32 %v1872, %v2015
    %v2070 = vadd.f32 %v1873, %v2016
    %v2071 = vadd.f32 %v1874, %v2017
    %v2072 = vadd.f32 %v1875, %v2018
    %v2073 = vadd.f32 %v1876, %v2019
    %v2074 = vadd.f32 %v1877, %v2020
    %v2075 = vadd.f32 %v1878, %v2021
    %v2076 = vadd.f32 %v1879, %v2022
    %v2077 = vadd.f32 %v1880, %v2023
    %v2078 = vadd.f32 %v1881, %v2024
    %v2079 = vadd.f32 %v1882, %v2025
    %v2080 = vadd.f32 %v1883, %v2026
    %v2081 = vadd.f32 %v1884, %v2027
    %v2082 = vadd.f32 %v1885, %v2028
    %v2083 = vadd.f32 %v1886, %v2029
    %v2084 = vlaneseq
    %v2085 = vshrl.u32 %v2084, 7
    %v2086 = vsub.s32 0, %v2085
    %v2087 = vrot.slane %v934, %v2086
    %v2088 = vlaneseq
    %v2089 = vshrl.u32 %v2088, 7
    %v2090 = vsub.s32 4, %v2089
    %v2091 = vrot.slane %v934, %v2090
    %v2092 = vlaneseq
    %v2093 = vshrl.u32 %v2092, 7
    %v2094 = vsub.s32 0, %v2093
    %v2095 = vrot.slane %v2087, %v2094
    %v2096 = vlaneseq
    %v2097 = vshrl.u32 %v2096, 7
    %v2098 = vsub.s32 0, %v2097
    %v2099 = vrot.slane %v2091, %v2098
    %vm2100 = vcmp.eq.s32.totalorder %v147, %v2095
    %vm2101 = vcmp.eq.s32.totalorder %v147, %v2099
    %vm2102 = vcmp.eq.s32.totalorder %v148, %v2095
    %vm2103 = vcmp.eq.s32.totalorder %v148, %v2099
    %vm2104 = vcmp.eq.s32.totalorder %v149, %v2095
    %vm2105 = vcmp.eq.s32.totalorder %v149, %v2099
    %vm2106 = vcmp.eq.s32.totalorder %v150, %v2095
    %vm2107 = vcmp.eq.s32.totalorder %v150, %v2099
    %vm2108 = vcmp.eq.s32.totalorder %v151, %v2095
    %vm2109 = vcmp.eq.s32.totalorder %v151, %v2099
    %vm2110 = vcmp.eq.s32.totalorder %v152, %v2095
    %vm2111 = vcmp.eq.s32.totalorder %v152, %v2099
    %vm2112 = vcmp.eq.s32.totalorder %v153, %v2095
    %vm2113 = vcmp.eq.s32.totalorder %v153, %v2099
    %vm2114 = vcmp.eq.s32.totalorder %v154, %v2095
    %vm2115 = vcmp.eq.s32.totalorder %v154, %v2099
    %vm2116 = vcmp.eq.s32.totalorder %v937, %v2095
    %vm2117 = vcmp.eq.s32.totalorder %v937, %v2099
    %vm2118 = vcmp.eq.s32.totalorder %v938, %v2095
    %vm2119 = vcmp.eq.s32.totalorder %v938, %v2099
    %vm2120 = vcmp.eq.s32.totalorder %v939, %v2095
    %vm2121 = vcmp.eq.s32.totalorder %v939, %v2099
    %vm2122 = vcmp.eq.s32.totalorder %v940, %v2095
    %vm2123 = vcmp.eq.s32.totalorder %v940, %v2099
    %vm2124 = vcmp.eq.s32.totalorder %v941, %v2095
    %vm2125 = vcmp.eq.s32.totalorder %v941, %v2099
    %vm2126 = vcmp.eq.s32.totalorder %v942, %v2095
    %vm2127 = vcmp.eq.s32.totalorder %v942, %v2099
    %vm2128 = vcmp.eq.s32.totalorder %v943, %v2095
    %vm2129 = vcmp.eq.s32.totalorder %v943, %v2099
    %vm2130 = vcmp.eq.s32.totalorder %v944, %v2095
    %vm2131 = vcmp.eq.s32.totalorder %v944, %v2099
    %vm2132 = vcmp.eq.s32.totalorder %v945, %v2095
    %vm2133 = vcmp.eq.s32.totalorder %v945, %v2099
    %vm2134 = vcmp.eq.s32.totalorder %v946, %v2095
    %vm2135 = vcmp.eq.s32.totalorder %v946, %v2099
    %vm2136 = vcmp.eq.s32.totalorder %v947, %v2095
    %vm2137 = vcmp.eq.s32.totalorder %v947, %v2099
    %vm2138 = vcmp.eq.s32.totalorder %v948, %v2095
    %vm2139 = vcmp.eq.s32.totalorder %v948, %v2099
    %vm2140 = vcmp.eq.s32.totalorder %v949, %v2095
    %vm2141 = vcmp.eq.s32.totalorder %v949, %v2099
    %vm2142 = vcmp.eq.s32.totalorder %v950, %v2095
    %vm2143 = vcmp.eq.s32.totalorder %v950, %v2099
    %vm2144 = vcmp.eq.s32.totalorder %v951, %v2095
    %vm2145 = vcmp.eq.s32.totalorder %v951, %v2099
    %vm2146 = vcmp.eq.s32.totalorder %v952, %v2095
    %vm2147 = vcmp.eq.s32.totalorder %v952, %v2099
    %vm2148 = vcmp.eq.s32.totalorder %v953, %v2095
    %vm2149 = vcmp.eq.s32.totalorder %v953, %v2099
    %vm2150 = vcmp.eq.s32.totalorder %v954, %v2095
    %vm2151 = vcmp.eq.s32.totalorder %v954, %v2099
    %vm2152 = vcmp.eq.s32.totalorder %v955, %v2095
    %vm2153 = vcmp.eq.s32.totalorder %v955, %v2099
    %v2155 = vlaneseq
    %v2156 = vshrl.u32 %v2155, 7
    %v2157 = vsub.s32 0, %v2156
    %v2158 = vrot.slane %v932, %v2157
    %v2159 = vlaneseq
    %v2160 = vshrl.u32 %v2159, 7
    %v2161 = vsub.s32 4, %v2160
    %v2162 = vrot.slane %v932, %v2161
    %v2165 = vlaneseq
    %v2166 = vshrl.u32 %v2165, 7
    %v2167 = vsub.s32 0, %v2166
    %v2168 = vrot.slane %v2158, %v2167
    %v2169 = vlaneseq
    %v2170 = vshrl.u32 %v2169, 7
    %v2171 = vsub.s32 0, %v2170
    %v2172 = vrot.slane %v2162, %v2171
    %v2173 = vsel %vm2100, %v2168, 0.0
    %v2174 = vsel %vm2101, %v2172, 0.0
    %v2175 = vsel %vm2102, %v2168, 0.0
    %v2176 = vsel %vm2103, %v2172, 0.0
    %v2177 = vsel %vm2104, %v2168, 0.0
    %v2178 = vsel %vm2105, %v2172, 0.0
    %v2179 = vsel %vm2106, %v2168, 0.0
    %v2180 = vsel %vm2107, %v2172, 0.0
    %v2181 = vsel %vm2108, %v2168, 0.0
    %v2182 = vsel %vm2109, %v2172, 0.0
    %v2183 = vsel %vm2110, %v2168, 0.0
    %v2184 = vsel %vm2111, %v2172, 0.0
    %v2185 = vsel %vm2112, %v2168, 0.0
    %v2186 = vsel %vm2113, %v2172, 0.0
    %v2187 = vsel %vm2114, %v2168, 0.0
    %v2188 = vsel %vm2115, %v2172, 0.0
    %v2189 = vsel %vm2116, %v2168, 0.0
    %v2190 = vsel %vm2117, %v2172, 0.0
    %v2191 = vsel %vm2118, %v2168, 0.0
    %v2192 = vsel %vm2119, %v2172, 0.0
    %v2193 = vsel %vm2120, %v2168, 0.0
    %v2194 = vsel %vm2121, %v2172, 0.0
    %v2195 = vsel %vm2122, %v2168, 0.0
    %v2196 = vsel %vm2123, %v2172, 0.0
    %v2197 = vsel %vm2124, %v2168, 0.0
    %v2198 = vsel %vm2125, %v2172, 0.0
    %v2199 = vsel %vm2126, %v2168, 0.0
    %v2200 = vsel %vm2127, %v2172, 0.0
    %v2201 = vsel %vm2128, %v2168, 0.0
    %v2202 = vsel %vm2129, %v2172, 0.0
    %v2203 = vsel %vm2130, %v2168, 0.0
    %v2204 = vsel %vm2131, %v2172, 0.0
    %v2205 = vsel %vm2132, %v2168, 0.0
    %v2206 = vsel %vm2133, %v2172, 0.0
    %v2207 = vsel %vm2134, %v2168, 0.0
    %v2208 = vsel %vm2135, %v2172, 0.0
    %v2209 = vsel %vm2136, %v2168, 0.0
    %v2210 = vsel %vm2137, %v2172, 0.0
    %v2211 = vsel %vm2138, %v2168, 0.0
    %v2212 = vsel %vm2139, %v2172, 0.0
    %v2213 = vsel %vm2140, %v2168, 0.0
    %v2214 = vsel %vm2141, %v2172, 0.0
    %v2215 = vsel %vm2142, %v2168, 0.0
    %v2216 = vsel %vm2143, %v2172, 0.0
    %v2217 = vsel %vm2144, %v2168, 0.0
    %v2218 = vsel %vm2145, %v2172, 0.0
    %v2219 = vsel %vm2146, %v2168, 0.0
    %v2220 = vsel %vm2147, %v2172, 0.0
    %v2221 = vsel %vm2148, %v2168, 0.0
    %v2222 = vsel %vm2149, %v2172, 0.0
    %v2223 = vsel %vm2150, %v2168, 0.0
    %v2224 = vsel %vm2151, %v2172, 0.0
    %v2225 = vsel %vm2152, %v2168, 0.0
    %v2226 = vsel %vm2153, %v2172, 0.0
    %v2227 = vadd.f32 %v2030, %v2173
    %v2228 = vadd.f32 %v2031, %v2174
    %v2229 = vadd.f32 %v2032, %v2175
    %v2230 = vadd.f32 %v2033, %v2176
    %v2231 = vadd.f32 %v2034, %v2177
    %v2232 = vadd.f32 %v2035, %v2178
    %v2233 = vadd.f32 %v2036, %v2179
    %v2234 = vadd.f32 %v2037, %v2180
    %v2235 = vadd.f32 %v2038, %v2181
    %v2236 = vadd.f32 %v2039, %v2182
    %v2237 = vadd.f32 %v2040, %v2183
    %v2238 = vadd.f32 %v2041, %v2184
    %v2239 = vadd.f32 %v2042, %v2185
    %v2240 = vadd.f32 %v2043, %v2186
    %v2241 = vadd.f32 %v2044, %v2187
    %v2242 = vadd.f32 %v2045, %v2188
    %v2243 = vadd.f32 %v2046, %v2189
    %v2244 = vadd.f32 %v2047, %v2190
    %v2245 = vadd.f32 %v2048, %v2191
    %v2246 = vadd.f32 %v2049, %v2192
    %v2247 = vadd.f32 %v2050, %v2193
    %v2248 = vadd.f32 %v2051, %v2194
    %v2249 = vadd.f32 %v2052, %v2195
    %v2250 = vadd.f32 %v2053, %v2196
    %v2251 = vadd.f32 %v2054, %v2197
    %v2252 = vadd.f32 %v2055, %v2198
    %v2253 = vadd.f32 %v2056, %v2199
    %v2254 = vadd.f32 %v2057, %v2200
    %v2255 = vadd.f32 %v2058, %v2201
    %v2256 = vadd.f32 %v2059, %v2202
    %v2257 = vadd.f32 %v2060, %v2203
    %v2258 = vadd.f32 %v2061, %v2204
    %v2259 = vadd.f32 %v2062, %v2205
    %v2260 = vadd.f32 %v2063, %v2206
    %v2261 = vadd.f32 %v2064, %v2207
    %v2262 = vadd.f32 %v2065, %v2208
    %v2263 = vadd.f32 %v2066, %v2209
    %v2264 = vadd.f32 %v2067, %v2210
    %v2265 = vadd.f32 %v2068, %v2211
    %v2266 = vadd.f32 %v2069, %v2212
    %v2267 = vadd.f32 %v2070, %v2213
    %v2268 = vadd.f32 %v2071, %v2214
    %v2269 = vadd.f32 %v2072, %v2215
    %v2270 = vadd.f32 %v2073, %v2216
    %v2271 = vadd.f32 %v2074, %v2217
    %v2272 = vadd.f32 %v2075, %v2218
    %v2273 = vadd.f32 %v2076, %v2219
    %v2274 = vadd.f32 %v2077, %v2220
    %v2275 = vadd.f32 %v2078, %v2221
    %v2276 = vadd.f32 %v2079, %v2222
    %v2277 = vadd.f32 %v2080, %v2223
    %v2278 = vadd.f32 %v2081, %v2224
    %v2279 = vadd.f32 %v2082, %v2225
    %v2280 = vadd.f32 %v2083, %v2226
    %v2281 = vlaneseq
    %v2282 = vshrl.u32 %v2281, 7
    %v2283 = vsub.s32 0, %v2282
    %v2284 = vrot.slane %v936, %v2283
    %v2285 = vlaneseq
    %v2286 = vshrl.u32 %v2285, 7
    %v2287 = vsub.s32 4, %v2286
    %v2288 = vrot.slane %v936, %v2287
    %v2289 = vlaneseq
    %v2290 = vshrl.u32 %v2289, 7
    %v2291 = vsub.s32 0, %v2290
    %v2292 = vrot.slane %v2284, %v2291
    %v2293 = vlaneseq
    %v2294 = vshrl.u32 %v2293, 7
    %v2295 = vsub.s32 0, %v2294
    %v2296 = vrot.slane %v2288, %v2295
    %vm2297 = vcmp.eq.s32.totalorder %v147, %v2292
    %vm2298 = vcmp.eq.s32.totalorder %v147, %v2296
    %vm2299 = vcmp.eq.s32.totalorder %v148, %v2292
    %vm2300 = vcmp.eq.s32.totalorder %v148, %v2296
    %vm2301 = vcmp.eq.s32.totalorder %v149, %v2292
    %vm2302 = vcmp.eq.s32.totalorder %v149, %v2296
    %vm2303 = vcmp.eq.s32.totalorder %v150, %v2292
    %vm2304 = vcmp.eq.s32.totalorder %v150, %v2296
    %vm2305 = vcmp.eq.s32.totalorder %v151, %v2292
    %vm2306 = vcmp.eq.s32.totalorder %v151, %v2296
    %vm2307 = vcmp.eq.s32.totalorder %v152, %v2292
    %vm2308 = vcmp.eq.s32.totalorder %v152, %v2296
    %vm2309 = vcmp.eq.s32.totalorder %v153, %v2292
    %vm2310 = vcmp.eq.s32.totalorder %v153, %v2296
    %vm2311 = vcmp.eq.s32.totalorder %v154, %v2292
    %vm2312 = vcmp.eq.s32.totalorder %v154, %v2296
    %vm2313 = vcmp.eq.s32.totalorder %v937, %v2292
    %vm2314 = vcmp.eq.s32.totalorder %v937, %v2296
    %vm2315 = vcmp.eq.s32.totalorder %v938, %v2292
    %vm2316 = vcmp.eq.s32.totalorder %v938, %v2296
    %vm2317 = vcmp.eq.s32.totalorder %v939, %v2292
    %vm2318 = vcmp.eq.s32.totalorder %v939, %v2296
    %vm2319 = vcmp.eq.s32.totalorder %v940, %v2292
    %vm2320 = vcmp.eq.s32.totalorder %v940, %v2296
    %vm2321 = vcmp.eq.s32.totalorder %v941, %v2292
    %vm2322 = vcmp.eq.s32.totalorder %v941, %v2296
    %vm2323 = vcmp.eq.s32.totalorder %v942, %v2292
    %vm2324 = vcmp.eq.s32.totalorder %v942, %v2296
    %vm2325 = vcmp.eq.s32.totalorder %v943, %v2292
    %vm2326 = vcmp.eq.s32.totalorder %v943, %v2296
    %vm2327 = vcmp.eq.s32.totalorder %v944, %v2292
    %vm2328 = vcmp.eq.s32.totalorder %v944, %v2296
    %vm2329 = vcmp.eq.s32.totalorder %v945, %v2292
    %vm2330 = vcmp.eq.s32.totalorder %v945, %v2296
    %vm2331 = vcmp.eq.s32.totalorder %v946, %v2292
    %vm2332 = vcmp.eq.s32.totalorder %v946, %v2296
    %vm2333 = vcmp.eq.s32.totalorder %v947, %v2292
    %vm2334 = vcmp.eq.s32.totalorder %v947, %v2296
    %vm2335 = vcmp.eq.s32.totalorder %v948, %v2292
    %vm2336 = vcmp.eq.s32.totalorder %v948, %v2296
    %vm2337 = vcmp.eq.s32.totalorder %v949, %v2292
    %vm2338 = vcmp.eq.s32.totalorder %v949, %v2296
    %vm2339 = vcmp.eq.s32.totalorder %v950, %v2292
    %vm2340 = vcmp.eq.s32.totalorder %v950, %v2296
    %vm2341 = vcmp.eq.s32.totalorder %v951, %v2292
    %vm2342 = vcmp.eq.s32.totalorder %v951, %v2296
    %vm2343 = vcmp.eq.s32.totalorder %v952, %v2292
    %vm2344 = vcmp.eq.s32.totalorder %v952, %v2296
    %vm2345 = vcmp.eq.s32.totalorder %v953, %v2292
    %vm2346 = vcmp.eq.s32.totalorder %v953, %v2296
    %vm2347 = vcmp.eq.s32.totalorder %v954, %v2292
    %vm2348 = vcmp.eq.s32.totalorder %v954, %v2296
    %vm2349 = vcmp.eq.s32.totalorder %v955, %v2292
    %vm2350 = vcmp.eq.s32.totalorder %v955, %v2296
    %v2352 = vlaneseq
    %v2353 = vshrl.u32 %v2352, 7
    %v2354 = vsub.s32 0, %v2353
    %v2355 = vrot.slane %v935, %v2354
    %v2356 = vlaneseq
    %v2357 = vshrl.u32 %v2356, 7
    %v2358 = vsub.s32 4, %v2357
    %v2359 = vrot.slane %v935, %v2358
    %v2362 = vlaneseq
    %v2363 = vshrl.u32 %v2362, 7
    %v2364 = vsub.s32 0, %v2363
    %v2365 = vrot.slane %v2355, %v2364
    %v2366 = vlaneseq
    %v2367 = vshrl.u32 %v2366, 7
    %v2368 = vsub.s32 0, %v2367
    %v2369 = vrot.slane %v2359, %v2368
    %v2370 = vsel %vm2297, %v2365, 0.0
    %v2371 = vsel %vm2298, %v2369, 0.0
    %v2372 = vsel %vm2299, %v2365, 0.0
    %v2373 = vsel %vm2300, %v2369, 0.0
    %v2374 = vsel %vm2301, %v2365, 0.0
    %v2375 = vsel %vm2302, %v2369, 0.0
    %v2376 = vsel %vm2303, %v2365, 0.0
    %v2377 = vsel %vm2304, %v2369, 0.0
    %v2378 = vsel %vm2305, %v2365, 0.0
    %v2379 = vsel %vm2306, %v2369, 0.0
    %v2380 = vsel %vm2307, %v2365, 0.0
    %v2381 = vsel %vm2308, %v2369, 0.0
    %v2382 = vsel %vm2309, %v2365, 0.0
    %v2383 = vsel %vm2310, %v2369, 0.0
    %v2384 = vsel %vm2311, %v2365, 0.0
    %v2385 = vsel %vm2312, %v2369, 0.0
    %v2386 = vsel %vm2313, %v2365, 0.0
    %v2387 = vsel %vm2314, %v2369, 0.0
    %v2388 = vsel %vm2315, %v2365, 0.0
    %v2389 = vsel %vm2316, %v2369, 0.0
    %v2390 = vsel %vm2317, %v2365, 0.0
    %v2391 = vsel %vm2318, %v2369, 0.0
    %v2392 = vsel %vm2319, %v2365, 0.0
    %v2393 = vsel %vm2320, %v2369, 0.0
    %v2394 = vsel %vm2321, %v2365, 0.0
    %v2395 = vsel %vm2322, %v2369, 0.0
    %v2396 = vsel %vm2323, %v2365, 0.0
    %v2397 = vsel %vm2324, %v2369, 0.0
    %v2398 = vsel %vm2325, %v2365, 0.0
    %v2399 = vsel %vm2326, %v2369, 0.0
    %v2400 = vsel %vm2327, %v2365, 0.0
    %v2401 = vsel %vm2328, %v2369, 0.0
    %v2402 = vsel %vm2329, %v2365, 0.0
    %v2403 = vsel %vm2330, %v2369, 0.0
    %v2404 = vsel %vm2331, %v2365, 0.0
    %v2405 = vsel %vm2332, %v2369, 0.0
    %v2406 = vsel %vm2333, %v2365, 0.0
    %v2407 = vsel %vm2334, %v2369, 0.0
    %v2408 = vsel %vm2335, %v2365, 0.0
    %v2409 = vsel %vm2336, %v2369, 0.0
    %v2410 = vsel %vm2337, %v2365, 0.0
    %v2411 = vsel %vm2338, %v2369, 0.0
    %v2412 = vsel %vm2339, %v2365, 0.0
    %v2413 = vsel %vm2340, %v2369, 0.0
    %v2414 = vsel %vm2341, %v2365, 0.0
    %v2415 = vsel %vm2342, %v2369, 0.0
    %v2416 = vsel %vm2343, %v2365, 0.0
    %v2417 = vsel %vm2344, %v2369, 0.0
    %v2418 = vsel %vm2345, %v2365, 0.0
    %v2419 = vsel %vm2346, %v2369, 0.0
    %v2420 = vsel %vm2347, %v2365, 0.0
    %v2421 = vsel %vm2348, %v2369, 0.0
    %v2422 = vsel %vm2349, %v2365, 0.0
    %v2423 = vsel %vm2350, %v2369, 0.0
    %v2424 = vadd.f32 %v2227, %v2370
    %v2425 = vadd.f32 %v2228, %v2371
    %v2426 = vadd.f32 %v2229, %v2372
    %v2427 = vadd.f32 %v2230, %v2373
    %v2428 = vadd.f32 %v2231, %v2374
    %v2429 = vadd.f32 %v2232, %v2375
    %v2430 = vadd.f32 %v2233, %v2376
    %v2431 = vadd.f32 %v2234, %v2377
    %v2432 = vadd.f32 %v2235, %v2378
    %v2433 = vadd.f32 %v2236, %v2379
    %v2434 = vadd.f32 %v2237, %v2380
    %v2435 = vadd.f32 %v2238, %v2381
    %v2436 = vadd.f32 %v2239, %v2382
    %v2437 = vadd.f32 %v2240, %v2383
    %v2438 = vadd.f32 %v2241, %v2384
    %v2439 = vadd.f32 %v2242, %v2385
    %v2440 = vadd.f32 %v2243, %v2386
    %v2441 = vadd.f32 %v2244, %v2387
    %v2442 = vadd.f32 %v2245, %v2388
    %v2443 = vadd.f32 %v2246, %v2389
    %v2444 = vadd.f32 %v2247, %v2390
    %v2445 = vadd.f32 %v2248, %v2391
    %v2446 = vadd.f32 %v2249, %v2392
    %v2447 = vadd.f32 %v2250, %v2393
    %v2448 = vadd.f32 %v2251, %v2394
    %v2449 = vadd.f32 %v2252, %v2395
    %v2450 = vadd.f32 %v2253, %v2396
    %v2451 = vadd.f32 %v2254, %v2397
    %v2452 = vadd.f32 %v2255, %v2398
    %v2453 = vadd.f32 %v2256, %v2399
    %v2454 = vadd.f32 %v2257, %v2400
    %v2455 = vadd.f32 %v2258, %v2401
    %v2456 = vadd.f32 %v2259, %v2402
    %v2457 = vadd.f32 %v2260, %v2403
    %v2458 = vadd.f32 %v2261, %v2404
    %v2459 = vadd.f32 %v2262, %v2405
    %v2460 = vadd.f32 %v2263, %v2406
    %v2461 = vadd.f32 %v2264, %v2407
    %v2462 = vadd.f32 %v2265, %v2408
    %v2463 = vadd.f32 %v2266, %v2409
    %v2464 = vadd.f32 %v2267, %v2410
    %v2465 = vadd.f32 %v2268, %v2411
    %v2466 = vadd.f32 %v2269, %v2412
    %v2467 = vadd.f32 %v2270, %v2413
    %v2468 = vadd.f32 %v2271, %v2414
    %v2469 = vadd.f32 %v2272, %v2415
    %v2470 = vadd.f32 %v2273, %v2416
    %v2471 = vadd.f32 %v2274, %v2417
    %v2472 = vadd.f32 %v2275, %v2418
    %v2473 = vadd.f32 %v2276, %v2419
    %v2474 = vadd.f32 %v2277, %v2420
    %v2475 = vadd.f32 %v2278, %v2421
    %v2476 = vadd.f32 %v2279, %v2422
    %v2477 = vadd.f32 %v2280, %v2423
    %v2480 = vunpack.c.l.s4 1983009808
    %v2481 = vunpack.c.0.s8 %v2480
    %v2482 = vlaneseq
    %v2483 = vshrl.u32 %v2482, 7
    %v2484 = vsub.s32 %v2481, %v2483
    %v2485 = vrot.slane %v878, %v2484
    %v2486 = vcombine.high %v2485, %v2485
    %vm2488 = vcmask 719872
    %v2489 = vsel %vm2488, %v2486, 0
    %2491 = vmatprep.subr.mxu0 %v2455
    %2492 = vmatpush1.msra.mxu0 %v2454
    %2493 = vmatprep.subr.mxu0 %v2453
    %2494 = vmatpush1.msra.mxu0 %v2452
    %2495 = vmatprep.subr.mxu0 %v2451
    %2496 = vmatpush1.msra.mxu0 %v2450
    %2497 = vmatprep.subr.mxu0 %v2449
    %2498 = vmatpush1.msra.mxu0 %v2448
    %2499 = vmatprep.subr.mxu0 %v2447
    %2500 = vmatpush1.msra.mxu0 %v2446
    %2501 = vmatprep.subr.mxu0 %v2445
    %2502 = vmatpush1.msra.mxu0 %v2444
    %2503 = vmatprep.subr.mxu0 %v2443
    %2504 = vmatpush1.msra.mxu0 %v2442
    %2505 = vmatprep.subr.mxu0 %v2441
    %2506 = vmatpush1.msra.mxu0 %v2440
    %2507 = vmatprep.subr.mxu0 %v2439
    %2508 = vmatpush1.msra.mxu0 %v2438
    %2509 = vmatprep.subr.mxu0 %v2437
    %2510 = vmatpush1.msra.mxu0 %v2436
    %2511 = vmatprep.subr.mxu0 %v2435
    %2512 = vmatpush1.msra.mxu0 %v2434
    %2513 = vmatprep.subr.mxu0 %v2433
    %2514 = vmatpush1.msra.mxu0 %v2432
    %2515 = vmatprep.subr.mxu0 %v2431
    %2516 = vmatpush1.msra.mxu0 %v2430
    %2517 = vmatprep.subr.mxu0 %v2429
    %2518 = vmatpush1.msra.mxu0 %v2428
    %2519 = vmatprep.subr.mxu0 %v2427
    %2520 = vmatpush1.msra.mxu0 %v2426
    %2521 = vmatprep.subr.mxu0 %v2425
    %2522 = vmatpush1.msra.mxu0 %v2424
    %2523 = vmatprep.subr.mxu0 0.0
    %2524 = vmatpush2.msra.mxu0 0.0
    %2525 = vmatprep.subr.mxu0 0.0
    %2526 = vmatpush2.msra.mxu0 0.0
    %2527 = vmatprep.subr.mxu0 0.0
    %2528 = vmatpush2.msra.mxu0 0.0
    %2529 = vmatprep.subr.mxu0 0.0
    %2530 = vmatpush2.msra.mxu0 0.0
    %2531 = vmatprep.subr.mxu0 0.0
    %2532 = vmatpush2.msra.mxu0 0.0
    %2533 = vmatprep.subr.mxu0 %v2477
    %2534 = vmatpush2.msra.mxu0 %v2476
    %2535 = vmatprep.subr.mxu0 %v2475
    %2536 = vmatpush2.msra.mxu0 %v2474
    %2537 = vmatprep.subr.mxu0 %v2473
    %2538 = vmatpush2.msra.mxu0 %v2472
    %2539 = vmatprep.subr.mxu0 %v2471
    %2540 = vmatpush2.msra.mxu0 %v2470
    %2541 = vmatprep.subr.mxu0 %v2469
    %2542 = vmatpush2.msra.mxu0 %v2468
    %2543 = vmatprep.subr.mxu0 %v2467
    %2544 = vmatpush2.msra.mxu0 %v2466
    %2545 = vmatprep.subr.mxu0 %v2465
    %2546 = vmatpush2.msra.mxu0 %v2464
    %2547 = vmatprep.subr.mxu0 %v2463
    %2548 = vmatpush2.msra.mxu0 %v2462
    %2549 = vmatprep.subr.mxu0 %v2461
    %2550 = vmatpush2.msra.mxu0 %v2460
    %2551 = vmatprep.subr.mxu0 %v2459
    %2552 = vmatpush2.msra.mxu0 %v2458
    %2553 = vmatprep.subr.mxu0 %v2457
    %2554 = vmatpush2.msra.mxu0 %v2456
    %2555 = vmatprep.mubr.f32.mxu0 %v2489
    %2556 = vmatmul.mubr.f32.gmra.mxu0 %v2485
    %v2557 = vpop.f32.mrf.mxu0
    %v2558 = vadd.f32 0.0, %v2557
    %v2559 = vpop.f32.mrf.mxu0
    %v2560 = vadd.f32 0.0, %v2559
    %2561 = vdwg.mxu0
    %v2562 = vld [vmem:[#allocation8] sm:$0xff]
    %v2563 = vld [vmem:[#allocation8 + $0x8] sm:$0xff]
    %v2564 = vld [vmem:[#allocation8 + $0x10] sm:$0xf]
    %v2565 = vld [vmem:[#allocation8 + $0x18] sm:$0xf]
    %v2566 = vmul.f32 %v86, 9.0
    %v2567 = vmax.f32 %v2566, 0.0
    %v2568 = vmin.f32 %v2567, 7.999
    %v2569 = vfloor.f32 %v2568
    %v2570 = vsub.f32 %v2568, %v2569
    %v2571 = vsub.f32 1.0, %v2570
    %v2572 = vcvt.f32.s32.to.zero.pseudo %v2569
    %v2574 = vrot.slane %v2571, 5
    %v2575 = vrot.slane %v2574, 4
    %v2577 = vmul.f32 %v2571, %v2575
    %v2578 = vrot.slane %v2571, 6
    %v2579 = vrot.slane %v2578, 4
    %v2581 = vmul.f32 %v2577, %v2579
    %v2582 = vand.u32 %v2572, 255
    %v2583 = vmul.u32 %v2572, 177
    %v2584 = vand.u32 %v2583, 255
    %v2585 = vrot.slane %v2584, 5
    %v2586 = vrot.slane %v2585, 4
    %v2587 = vxor.u32 %v2582, %v2586
    %v2588 = vmul.u32 %v2572, 149
    %v2589 = vand.u32 %v2588, 255
    %v2590 = vrot.slane %v2589, 6
    %v2591 = vrot.slane %v2590, 4
    %v2592 = vxor.u32 %v2587, %v2591
    %v2593 = vand.u32 %v2592, 255
    %v2594 = vadd.s32 %v2572, 1
    %v2596 = vrot.slane %v2570, 6
    %v2597 = vrot.slane %v2596, 4
    %v2599 = vmul.f32 %v2577, %v2597
    %v2600 = vmul.u32 %v2594, 149
    %v2601 = vand.u32 %v2600, 255
    %v2602 = vrot.slane %v2601, 6
    %v2603 = vrot.slane %v2602, 4
    %v2604 = vxor.u32 %v2587, %v2603
    %v2605 = vand.u32 %v2604, 255
    %v2606 = vrot.slane %v2570, 5
    %v2607 = vrot.slane %v2606, 4
    %v2609 = vmul.f32 %v2571, %v2607
    %v2610 = vmul.f32 %v2609, %v2579
    %v2611 = vmul.u32 %v2594, 177
    %v2612 = vand.u32 %v2611, 255
    %v2613 = vrot.slane %v2612, 5
    %v2614 = vrot.slane %v2613, 4
    %v2615 = vxor.u32 %v2582, %v2614
    %v2616 = vxor.u32 %v2615, %v2591
    %v2617 = vand.u32 %v2616, 255
    %v2618 = vmul.f32 %v2609, %v2597
    %v2619 = vxor.u32 %v2615, %v2603
    %v2620 = vand.u32 %v2619, 255
    %v2621 = vmul.f32 %v2570, %v2575
    %v2622 = vmul.f32 %v2621, %v2579
    %v2623 = vand.u32 %v2594, 255
    %v2624 = vxor.u32 %v2623, %v2586
    %v2625 = vxor.u32 %v2624, %v2591
    %v2626 = vand.u32 %v2625, 255
    %v2627 = vmul.f32 %v2621, %v2597
    %v2628 = vxor.u32 %v2624, %v2603
    %v2629 = vand.u32 %v2628, 255
    %v2630 = vmul.f32 %v2570, %v2607
    %v2631 = vmul.f32 %v2630, %v2579
    %v2632 = vxor.u32 %v2623, %v2614
    %v2633 = vxor.u32 %v2632, %v2591
    %v2634 = vand.u32 %v2633, 255
    %v2635 = vmul.f32 %v2630, %v2597
    %v2636 = vxor.u32 %v2632, %v2603
    %v2637 = vand.u32 %v2636, 255
    %v2638 = vlaneseq
    %v2639 = vshrl.u32 %v2638, 7
    %v2640 = vsub.s32 0, %v2639
    %v2641 = vrot.slane %v2593, %v2640
    %v2642 = vlaneseq
    %v2643 = vshrl.u32 %v2642, 7
    %v2644 = vsub.s32 4, %v2643
    %v2645 = vrot.slane %v2593, %v2644
    %v2646 = vlaneseq
    %v2647 = vshrl.u32 %v2646, 7
    %v2648 = vsub.s32 0, %v2647
    %v2649 = vrot.slane %v2605, %v2648
    %v2650 = vlaneseq
    %v2651 = vshrl.u32 %v2650, 7
    %v2652 = vsub.s32 4, %v2651
    %v2653 = vrot.slane %v2605, %v2652
    %v2654 = vlaneseq
    %v2655 = vshrl.u32 %v2654, 7
    %v2656 = vsub.s32 0, %v2655
    %v2657 = vrot.slane %v2617, %v2656
    %v2658 = vlaneseq
    %v2659 = vshrl.u32 %v2658, 7
    %v2660 = vsub.s32 4, %v2659
    %v2661 = vrot.slane %v2617, %v2660
    %v2662 = vlaneseq
    %v2663 = vshrl.u32 %v2662, 7
    %v2664 = vsub.s32 0, %v2663
    %v2665 = vrot.slane %v2620, %v2664
    %v2666 = vlaneseq
    %v2667 = vshrl.u32 %v2666, 7
    %v2668 = vsub.s32 4, %v2667
    %v2669 = vrot.slane %v2620, %v2668
    %v2670 = vlaneseq
    %v2671 = vshrl.u32 %v2670, 7
    %v2672 = vsub.s32 0, %v2671
    %v2673 = vrot.slane %v2626, %v2672
    %v2674 = vlaneseq
    %v2675 = vshrl.u32 %v2674, 7
    %v2676 = vsub.s32 4, %v2675
    %v2677 = vrot.slane %v2626, %v2676
    %v2678 = vlaneseq
    %v2679 = vshrl.u32 %v2678, 7
    %v2680 = vsub.s32 0, %v2679
    %v2681 = vrot.slane %v2629, %v2680
    %v2682 = vlaneseq
    %v2683 = vshrl.u32 %v2682, 7
    %v2684 = vsub.s32 4, %v2683
    %v2685 = vrot.slane %v2629, %v2684
    %v2686 = vlaneseq
    %v2687 = vshrl.u32 %v2686, 7
    %v2688 = vsub.s32 0, %v2687
    %v2689 = vrot.slane %v2634, %v2688
    %v2690 = vlaneseq
    %v2691 = vshrl.u32 %v2690, 7
    %v2692 = vsub.s32 4, %v2691
    %v2693 = vrot.slane %v2634, %v2692
    %v2694 = vlaneseq
    %v2695 = vshrl.u32 %v2694, 7
    %v2696 = vsub.s32 0, %v2695
    %v2697 = vrot.slane %v2637, %v2696
    %v2698 = vlaneseq
    %v2699 = vshrl.u32 %v2698, 7
    %v2700 = vsub.s32 4, %v2699
    %v2701 = vrot.slane %v2637, %v2700
    %v2703 = vlaneseq
    %v2704 = vshrl.u32 %v2703, 7
    %v2705 = vsub.s32 0, %v2704
    %v2706 = vrot.slane %v2581, %v2705
    %v2707 = vlaneseq
    %v2708 = vshrl.u32 %v2707, 7
    %v2709 = vsub.s32 4, %v2708
    %v2710 = vrot.slane %v2581, %v2709
    %v2714 = vlaneseq
    %v2715 = vshrl.u32 %v2714, 7
    %v2716 = vsub.s32 0, %v2715
    %v2717 = vrot.slane %v2599, %v2716
    %v2718 = vlaneseq
    %v2719 = vshrl.u32 %v2718, 7
    %v2720 = vsub.s32 4, %v2719
    %v2721 = vrot.slane %v2599, %v2720
    %v2725 = vlaneseq
    %v2726 = vshrl.u32 %v2725, 7
    %v2727 = vsub.s32 0, %v2726
    %v2728 = vrot.slane %v2610, %v2727
    %v2729 = vlaneseq
    %v2730 = vshrl.u32 %v2729, 7
    %v2731 = vsub.s32 4, %v2730
    %v2732 = vrot.slane %v2610, %v2731
    %v2736 = vlaneseq
    %v2737 = vshrl.u32 %v2736, 7
    %v2738 = vsub.s32 0, %v2737
    %v2739 = vrot.slane %v2618, %v2738
    %v2740 = vlaneseq
    %v2741 = vshrl.u32 %v2740, 7
    %v2742 = vsub.s32 4, %v2741
    %v2743 = vrot.slane %v2618, %v2742
    %v2747 = vlaneseq
    %v2748 = vshrl.u32 %v2747, 7
    %v2749 = vsub.s32 0, %v2748
    %v2750 = vrot.slane %v2622, %v2749
    %v2751 = vlaneseq
    %v2752 = vshrl.u32 %v2751, 7
    %v2753 = vsub.s32 4, %v2752
    %v2754 = vrot.slane %v2622, %v2753
    %v2758 = vlaneseq
    %v2759 = vshrl.u32 %v2758, 7
    %v2760 = vsub.s32 0, %v2759
    %v2761 = vrot.slane %v2627, %v2760
    %v2762 = vlaneseq
    %v2763 = vshrl.u32 %v2762, 7
    %v2764 = vsub.s32 4, %v2763
    %v2765 = vrot.slane %v2627, %v2764
    %v2769 = vlaneseq
    %v2770 = vshrl.u32 %v2769, 7
    %v2771 = vsub.s32 0, %v2770
    %v2772 = vrot.slane %v2631, %v2771
    %v2773 = vlaneseq
    %v2774 = vshrl.u32 %v2773, 7
    %v2775 = vsub.s32 4, %v2774
    %v2776 = vrot.slane %v2631, %v2775
    %v2780 = vlaneseq
    %v2781 = vshrl.u32 %v2780, 7
    %v2782 = vsub.s32 0, %v2781
    %v2783 = vrot.slane %v2635, %v2782
    %v2784 = vlaneseq
    %v2785 = vshrl.u32 %v2784, 7
    %v2786 = vsub.s32 4, %v2785
    %v2787 = vrot.slane %v2635, %v2786
    %v2790 = vadd.s32 %v147, 216
    %v2791 = vadd.s32 %v147, 224
    %v2792 = vadd.s32 %v147, 232
    %v2793 = vadd.s32 %v147, 240
    %v2794 = vadd.s32 %v147, 248
    %v2795 = vlaneseq
    %v2796 = vshrl.u32 %v2795, 7
    %v2797 = vsub.s32 0, %v2796
    %v2798 = vrot.slane %v2641, %v2797
    %v2799 = vlaneseq
    %v2800 = vshrl.u32 %v2799, 7
    %v2801 = vsub.s32 0, %v2800
    %v2802 = vrot.slane %v2645, %v2801
    %v2803 = vlaneseq
    %v2804 = vshrl.u32 %v2803, 7
    %v2805 = vsub.s32 0, %v2804
    %v2806 = vrot.slane %v2649, %v2805
    %v2807 = vlaneseq
    %v2808 = vshrl.u32 %v2807, 7
    %v2809 = vsub.s32 0, %v2808
    %v2810 = vrot.slane %v2653, %v2809
    %v2811 = vlaneseq
    %v2812 = vshrl.u32 %v2811, 7
    %v2813 = vsub.s32 0, %v2812
    %v2814 = vrot.slane %v2657, %v2813
    %v2815 = vlaneseq
    %v2816 = vshrl.u32 %v2815, 7
    %v2817 = vsub.s32 0, %v2816
    %v2818 = vrot.slane %v2661, %v2817
    %v2819 = vlaneseq
    %v2820 = vshrl.u32 %v2819, 7
    %v2821 = vsub.s32 0, %v2820
    %v2822 = vrot.slane %v2665, %v2821
    %v2823 = vlaneseq
    %v2824 = vshrl.u32 %v2823, 7
    %v2825 = vsub.s32 0, %v2824
    %v2826 = vrot.slane %v2669, %v2825
    %v2827 = vlaneseq
    %v2828 = vshrl.u32 %v2827, 7
    %v2829 = vsub.s32 0, %v2828
    %v2830 = vrot.slane %v2673, %v2829
    %v2831 = vlaneseq
    %v2832 = vshrl.u32 %v2831, 7
    %v2833 = vsub.s32 0, %v2832
    %v2834 = vrot.slane %v2677, %v2833
    %v2835 = vlaneseq
    %v2836 = vshrl.u32 %v2835, 7
    %v2837 = vsub.s32 0, %v2836
    %v2838 = vrot.slane %v2681, %v2837
    %v2839 = vlaneseq
    %v2840 = vshrl.u32 %v2839, 7
    %v2841 = vsub.s32 0, %v2840
    %v2842 = vrot.slane %v2685, %v2841
    %v2843 = vlaneseq
    %v2844 = vshrl.u32 %v2843, 7
    %v2845 = vsub.s32 0, %v2844
    %v2846 = vrot.slane %v2689, %v2845
    %v2847 = vlaneseq
    %v2848 = vshrl.u32 %v2847, 7
    %v2849 = vsub.s32 0, %v2848
    %v2850 = vrot.slane %v2693, %v2849
    %v2851 = vlaneseq
    %v2852 = vshrl.u32 %v2851, 7
    %v2853 = vsub.s32 0, %v2852
    %v2854 = vrot.slane %v2697, %v2853
    %v2855 = vlaneseq
    %v2856 = vshrl.u32 %v2855, 7
    %v2857 = vsub.s32 0, %v2856
    %v2858 = vrot.slane %v2701, %v2857
    %vm2859 = vcmp.eq.s32.totalorder %v147, %v2798
    %vm2860 = vcmp.eq.s32.totalorder %v147, %v2802
    %vm2861 = vcmp.eq.s32.totalorder %v147, %v2806
    %vm2862 = vcmp.eq.s32.totalorder %v147, %v2810
    %vm2863 = vcmp.eq.s32.totalorder %v147, %v2814
    %vm2864 = vcmp.eq.s32.totalorder %v147, %v2818
    %vm2865 = vcmp.eq.s32.totalorder %v147, %v2822
    %vm2866 = vcmp.eq.s32.totalorder %v147, %v2826
    %vm2867 = vcmp.eq.s32.totalorder %v147, %v2830
    %vm2868 = vcmp.eq.s32.totalorder %v147, %v2834
    %vm2869 = vcmp.eq.s32.totalorder %v147, %v2838
    %vm2870 = vcmp.eq.s32.totalorder %v147, %v2842
    %vm2871 = vcmp.eq.s32.totalorder %v147, %v2846
    %vm2872 = vcmp.eq.s32.totalorder %v147, %v2850
    %vm2873 = vcmp.eq.s32.totalorder %v147, %v2854
    %vm2874 = vcmp.eq.s32.totalorder %v147, %v2858
    %vm2875 = vcmp.eq.s32.totalorder %v148, %v2798
    %vm2876 = vcmp.eq.s32.totalorder %v148, %v2802
    %vm2877 = vcmp.eq.s32.totalorder %v148, %v2806
    %vm2878 = vcmp.eq.s32.totalorder %v148, %v2810
    %vm2879 = vcmp.eq.s32.totalorder %v148, %v2814
    %vm2880 = vcmp.eq.s32.totalorder %v148, %v2818
    %vm2881 = vcmp.eq.s32.totalorder %v148, %v2822
    %vm2882 = vcmp.eq.s32.totalorder %v148, %v2826
    %vm2883 = vcmp.eq.s32.totalorder %v148, %v2830
    %vm2884 = vcmp.eq.s32.totalorder %v148, %v2834
    %vm2885 = vcmp.eq.s32.totalorder %v148, %v2838
    %vm2886 = vcmp.eq.s32.totalorder %v148, %v2842
    %vm2887 = vcmp.eq.s32.totalorder %v148, %v2846
    %vm2888 = vcmp.eq.s32.totalorder %v148, %v2850
    %vm2889 = vcmp.eq.s32.totalorder %v148, %v2854
    %vm2890 = vcmp.eq.s32.totalorder %v148, %v2858
    %vm2891 = vcmp.eq.s32.totalorder %v149, %v2798
    %vm2892 = vcmp.eq.s32.totalorder %v149, %v2802
    %vm2893 = vcmp.eq.s32.totalorder %v149, %v2806
    %vm2894 = vcmp.eq.s32.totalorder %v149, %v2810
    %vm2895 = vcmp.eq.s32.totalorder %v149, %v2814
    %vm2896 = vcmp.eq.s32.totalorder %v149, %v2818
    %vm2897 = vcmp.eq.s32.totalorder %v149, %v2822
    %vm2898 = vcmp.eq.s32.totalorder %v149, %v2826
    %vm2899 = vcmp.eq.s32.totalorder %v149, %v2830
    %vm2900 = vcmp.eq.s32.totalorder %v149, %v2834
    %vm2901 = vcmp.eq.s32.totalorder %v149, %v2838
    %vm2902 = vcmp.eq.s32.totalorder %v149, %v2842
    %vm2903 = vcmp.eq.s32.totalorder %v149, %v2846
    %vm2904 = vcmp.eq.s32.totalorder %v149, %v2850
    %vm2905 = vcmp.eq.s32.totalorder %v149, %v2854
    %vm2906 = vcmp.eq.s32.totalorder %v149, %v2858
    %vm2907 = vcmp.eq.s32.totalorder %v150, %v2798
    %vm2908 = vcmp.eq.s32.totalorder %v150, %v2802
    %vm2909 = vcmp.eq.s32.totalorder %v150, %v2806
    %vm2910 = vcmp.eq.s32.totalorder %v150, %v2810
    %vm2911 = vcmp.eq.s32.totalorder %v150, %v2814
    %vm2912 = vcmp.eq.s32.totalorder %v150, %v2818
    %vm2913 = vcmp.eq.s32.totalorder %v150, %v2822
    %vm2914 = vcmp.eq.s32.totalorder %v150, %v2826
    %vm2915 = vcmp.eq.s32.totalorder %v150, %v2830
    %vm2916 = vcmp.eq.s32.totalorder %v150, %v2834
    %vm2917 = vcmp.eq.s32.totalorder %v150, %v2838
    %vm2918 = vcmp.eq.s32.totalorder %v150, %v2842
    %vm2919 = vcmp.eq.s32.totalorder %v150, %v2846
    %vm2920 = vcmp.eq.s32.totalorder %v150, %v2850
    %vm2921 = vcmp.eq.s32.totalorder %v150, %v2854
    %vm2922 = vcmp.eq.s32.totalorder %v150, %v2858
    %vm2923 = vcmp.eq.s32.totalorder %v151, %v2798
    %vm2924 = vcmp.eq.s32.totalorder %v151, %v2802
    %vm2925 = vcmp.eq.s32.totalorder %v151, %v2806
    %vm2926 = vcmp.eq.s32.totalorder %v151, %v2810
    %vm2927 = vcmp.eq.s32.totalorder %v151, %v2814
    %vm2928 = vcmp.eq.s32.totalorder %v151, %v2818
    %vm2929 = vcmp.eq.s32.totalorder %v151, %v2822
    %vm2930 = vcmp.eq.s32.totalorder %v151, %v2826
    %vm2931 = vcmp.eq.s32.totalorder %v151, %v2830
    %vm2932 = vcmp.eq.s32.totalorder %v151, %v2834
    %vm2933 = vcmp.eq.s32.totalorder %v151, %v2838
    %vm2934 = vcmp.eq.s32.totalorder %v151, %v2842
    %vm2935 = vcmp.eq.s32.totalorder %v151, %v2846
    %vm2936 = vcmp.eq.s32.totalorder %v151, %v2850
    %vm2937 = vcmp.eq.s32.totalorder %v151, %v2854
    %vm2938 = vcmp.eq.s32.totalorder %v151, %v2858
    %vm2939 = vcmp.eq.s32.totalorder %v152, %v2798
    %vm2940 = vcmp.eq.s32.totalorder %v152, %v2802
    %vm2941 = vcmp.eq.s32.totalorder %v152, %v2806
    %vm2942 = vcmp.eq.s32.totalorder %v152, %v2810
    %vm2943 = vcmp.eq.s32.totalorder %v152, %v2814
    %vm2944 = vcmp.eq.s32.totalorder %v152, %v2818
    %vm2945 = vcmp.eq.s32.totalorder %v152, %v2822
    %vm2946 = vcmp.eq.s32.totalorder %v152, %v2826
    %vm2947 = vcmp.eq.s32.totalorder %v152, %v2830
    %vm2948 = vcmp.eq.s32.totalorder %v152, %v2834
    %vm2949 = vcmp.eq.s32.totalorder %v152, %v2838
    %vm2950 = vcmp.eq.s32.totalorder %v152, %v2842
    %vm2951 = vcmp.eq.s32.totalorder %v152, %v2846
    %vm2952 = vcmp.eq.s32.totalorder %v152, %v2850
    %vm2953 = vcmp.eq.s32.totalorder %v152, %v2854
    %vm2954 = vcmp.eq.s32.totalorder %v152, %v2858
    %vm2955 = vcmp.eq.s32.totalorder %v153, %v2798
    %vm2956 = vcmp.eq.s32.totalorder %v153, %v2802
    %vm2957 = vcmp.eq.s32.totalorder %v153, %v2806
    %vm2958 = vcmp.eq.s32.totalorder %v153, %v2810
    %vm2959 = vcmp.eq.s32.totalorder %v153, %v2814
    %vm2960 = vcmp.eq.s32.totalorder %v153, %v2818
    %vm2961 = vcmp.eq.s32.totalorder %v153, %v2822
    %vm2962 = vcmp.eq.s32.totalorder %v153, %v2826
    %vm2963 = vcmp.eq.s32.totalorder %v153, %v2830
    %vm2964 = vcmp.eq.s32.totalorder %v153, %v2834
    %vm2965 = vcmp.eq.s32.totalorder %v153, %v2838
    %vm2966 = vcmp.eq.s32.totalorder %v153, %v2842
    %vm2967 = vcmp.eq.s32.totalorder %v153, %v2846
    %vm2968 = vcmp.eq.s32.totalorder %v153, %v2850
    %vm2969 = vcmp.eq.s32.totalorder %v153, %v2854
    %vm2970 = vcmp.eq.s32.totalorder %v153, %v2858
    %vm2971 = vcmp.eq.s32.totalorder %v154, %v2798
    %vm2972 = vcmp.eq.s32.totalorder %v154, %v2802
    %vm2973 = vcmp.eq.s32.totalorder %v154, %v2806
    %vm2974 = vcmp.eq.s32.totalorder %v154, %v2810
    %vm2975 = vcmp.eq.s32.totalorder %v154, %v2814
    %vm2976 = vcmp.eq.s32.totalorder %v154, %v2818
    %vm2977 = vcmp.eq.s32.totalorder %v154, %v2822
    %vm2978 = vcmp.eq.s32.totalorder %v154, %v2826
    %vm2979 = vcmp.eq.s32.totalorder %v154, %v2830
    %vm2980 = vcmp.eq.s32.totalorder %v154, %v2834
    %vm2981 = vcmp.eq.s32.totalorder %v154, %v2838
    %vm2982 = vcmp.eq.s32.totalorder %v154, %v2842
    %vm2983 = vcmp.eq.s32.totalorder %v154, %v2846
    %vm2984 = vcmp.eq.s32.totalorder %v154, %v2850
    %vm2985 = vcmp.eq.s32.totalorder %v154, %v2854
    %vm2986 = vcmp.eq.s32.totalorder %v154, %v2858
    %vm2987 = vcmp.eq.s32.totalorder %v937, %v2798
    %vm2988 = vcmp.eq.s32.totalorder %v937, %v2802
    %vm2989 = vcmp.eq.s32.totalorder %v937, %v2806
    %vm2990 = vcmp.eq.s32.totalorder %v937, %v2810
    %vm2991 = vcmp.eq.s32.totalorder %v937, %v2814
    %vm2992 = vcmp.eq.s32.totalorder %v937, %v2818
    %vm2993 = vcmp.eq.s32.totalorder %v937, %v2822
    %vm2994 = vcmp.eq.s32.totalorder %v937, %v2826
    %vm2995 = vcmp.eq.s32.totalorder %v937, %v2830
    %vm2996 = vcmp.eq.s32.totalorder %v937, %v2834
    %vm2997 = vcmp.eq.s32.totalorder %v937, %v2838
    %vm2998 = vcmp.eq.s32.totalorder %v937, %v2842
    %vm2999 = vcmp.eq.s32.totalorder %v937, %v2846
    %vm3000 = vcmp.eq.s32.totalorder %v937, %v2850
    %vm3001 = vcmp.eq.s32.totalorder %v937, %v2854
    %vm3002 = vcmp.eq.s32.totalorder %v937, %v2858
    %vm3003 = vcmp.eq.s32.totalorder %v938, %v2798
    %vm3004 = vcmp.eq.s32.totalorder %v938, %v2802
    %vm3005 = vcmp.eq.s32.totalorder %v938, %v2806
    %vm3006 = vcmp.eq.s32.totalorder %v938, %v2810
    %vm3007 = vcmp.eq.s32.totalorder %v938, %v2814
    %vm3008 = vcmp.eq.s32.totalorder %v938, %v2818
    %vm3009 = vcmp.eq.s32.totalorder %v938, %v2822
    %vm3010 = vcmp.eq.s32.totalorder %v938, %v2826
    %vm3011 = vcmp.eq.s32.totalorder %v938, %v2830
    %vm3012 = vcmp.eq.s32.totalorder %v938, %v2834
    %vm3013 = vcmp.eq.s32.totalorder %v938, %v2838
    %vm3014 = vcmp.eq.s32.totalorder %v938, %v2842
    %vm3015 = vcmp.eq.s32.totalorder %v938, %v2846
    %vm3016 = vcmp.eq.s32.totalorder %v938, %v2850
    %vm3017 = vcmp.eq.s32.totalorder %v938, %v2854
    %vm3018 = vcmp.eq.s32.totalorder %v938, %v2858
    %vm3019 = vcmp.eq.s32.totalorder %v939, %v2798
    %vm3020 = vcmp.eq.s32.totalorder %v939, %v2802
    %vm3021 = vcmp.eq.s32.totalorder %v939, %v2806
    %vm3022 = vcmp.eq.s32.totalorder %v939, %v2810
    %vm3023 = vcmp.eq.s32.totalorder %v939, %v2814
    %vm3024 = vcmp.eq.s32.totalorder %v939, %v2818
    %vm3025 = vcmp.eq.s32.totalorder %v939, %v2822
    %vm3026 = vcmp.eq.s32.totalorder %v939, %v2826
    %vm3027 = vcmp.eq.s32.totalorder %v939, %v2830
    %vm3028 = vcmp.eq.s32.totalorder %v939, %v2834
    %vm3029 = vcmp.eq.s32.totalorder %v939, %v2838
    %vm3030 = vcmp.eq.s32.totalorder %v939, %v2842
    %vm3031 = vcmp.eq.s32.totalorder %v939, %v2846
    %vm3032 = vcmp.eq.s32.totalorder %v939, %v2850
    %vm3033 = vcmp.eq.s32.totalorder %v939, %v2854
    %vm3034 = vcmp.eq.s32.totalorder %v939, %v2858
    %vm3035 = vcmp.eq.s32.totalorder %v940, %v2798
    %vm3036 = vcmp.eq.s32.totalorder %v940, %v2802
    %vm3037 = vcmp.eq.s32.totalorder %v940, %v2806
    %vm3038 = vcmp.eq.s32.totalorder %v940, %v2810
    %vm3039 = vcmp.eq.s32.totalorder %v940, %v2814
    %vm3040 = vcmp.eq.s32.totalorder %v940, %v2818
    %vm3041 = vcmp.eq.s32.totalorder %v940, %v2822
    %vm3042 = vcmp.eq.s32.totalorder %v940, %v2826
    %vm3043 = vcmp.eq.s32.totalorder %v940, %v2830
    %vm3044 = vcmp.eq.s32.totalorder %v940, %v2834
    %vm3045 = vcmp.eq.s32.totalorder %v940, %v2838
    %vm3046 = vcmp.eq.s32.totalorder %v940, %v2842
    %vm3047 = vcmp.eq.s32.totalorder %v940, %v2846
    %vm3048 = vcmp.eq.s32.totalorder %v940, %v2850
    %vm3049 = vcmp.eq.s32.totalorder %v940, %v2854
    %vm3050 = vcmp.eq.s32.totalorder %v940, %v2858
    %vm3051 = vcmp.eq.s32.totalorder %v941, %v2798
    %vm3052 = vcmp.eq.s32.totalorder %v941, %v2802
    %vm3053 = vcmp.eq.s32.totalorder %v941, %v2806
    %vm3054 = vcmp.eq.s32.totalorder %v941, %v2810
    %vm3055 = vcmp.eq.s32.totalorder %v941, %v2814
    %vm3056 = vcmp.eq.s32.totalorder %v941, %v2818
    %vm3057 = vcmp.eq.s32.totalorder %v941, %v2822
    %vm3058 = vcmp.eq.s32.totalorder %v941, %v2826
    %vm3059 = vcmp.eq.s32.totalorder %v941, %v2830
    %vm3060 = vcmp.eq.s32.totalorder %v941, %v2834
    %vm3061 = vcmp.eq.s32.totalorder %v941, %v2838
    %vm3062 = vcmp.eq.s32.totalorder %v941, %v2842
    %vm3063 = vcmp.eq.s32.totalorder %v941, %v2846
    %vm3064 = vcmp.eq.s32.totalorder %v941, %v2850
    %vm3065 = vcmp.eq.s32.totalorder %v941, %v2854
    %vm3066 = vcmp.eq.s32.totalorder %v941, %v2858
    %vm3067 = vcmp.eq.s32.totalorder %v942, %v2798
    %vm3068 = vcmp.eq.s32.totalorder %v942, %v2802
    %vm3069 = vcmp.eq.s32.totalorder %v942, %v2806
    %vm3070 = vcmp.eq.s32.totalorder %v942, %v2810
    %vm3071 = vcmp.eq.s32.totalorder %v942, %v2814
    %vm3072 = vcmp.eq.s32.totalorder %v942, %v2818
    %vm3073 = vcmp.eq.s32.totalorder %v942, %v2822
    %vm3074 = vcmp.eq.s32.totalorder %v942, %v2826
    %vm3075 = vcmp.eq.s32.totalorder %v942, %v2830
    %vm3076 = vcmp.eq.s32.totalorder %v942, %v2834
    %vm3077 = vcmp.eq.s32.totalorder %v942, %v2838
    %vm3078 = vcmp.eq.s32.totalorder %v942, %v2842
    %vm3079 = vcmp.eq.s32.totalorder %v942, %v2846
    %vm3080 = vcmp.eq.s32.totalorder %v942, %v2850
    %vm3081 = vcmp.eq.s32.totalorder %v942, %v2854
    %vm3082 = vcmp.eq.s32.totalorder %v942, %v2858
    %vm3083 = vcmp.eq.s32.totalorder %v943, %v2798
    %vm3084 = vcmp.eq.s32.totalorder %v943, %v2802
    %vm3085 = vcmp.eq.s32.totalorder %v943, %v2806
    %vm3086 = vcmp.eq.s32.totalorder %v943, %v2810
    %vm3087 = vcmp.eq.s32.totalorder %v943, %v2814
    %vm3088 = vcmp.eq.s32.totalorder %v943, %v2818
    %vm3089 = vcmp.eq.s32.totalorder %v943, %v2822
    %vm3090 = vcmp.eq.s32.totalorder %v943, %v2826
    %vm3091 = vcmp.eq.s32.totalorder %v943, %v2830
    %vm3092 = vcmp.eq.s32.totalorder %v943, %v2834
    %vm3093 = vcmp.eq.s32.totalorder %v943, %v2838
    %vm3094 = vcmp.eq.s32.totalorder %v943, %v2842
    %vm3095 = vcmp.eq.s32.totalorder %v943, %v2846
    %vm3096 = vcmp.eq.s32.totalorder %v943, %v2850
    %vm3097 = vcmp.eq.s32.totalorder %v943, %v2854
    %vm3098 = vcmp.eq.s32.totalorder %v943, %v2858
    %vm3099 = vcmp.eq.s32.totalorder %v944, %v2798
    %vm3100 = vcmp.eq.s32.totalorder %v944, %v2802
    %vm3101 = vcmp.eq.s32.totalorder %v944, %v2806
    %vm3102 = vcmp.eq.s32.totalorder %v944, %v2810
    %vm3103 = vcmp.eq.s32.totalorder %v944, %v2814
    %vm3104 = vcmp.eq.s32.totalorder %v944, %v2818
    %vm3105 = vcmp.eq.s32.totalorder %v944, %v2822
    %vm3106 = vcmp.eq.s32.totalorder %v944, %v2826
    %vm3107 = vcmp.eq.s32.totalorder %v944, %v2830
    %vm3108 = vcmp.eq.s32.totalorder %v944, %v2834
    %vm3109 = vcmp.eq.s32.totalorder %v944, %v2838
    %vm3110 = vcmp.eq.s32.totalorder %v944, %v2842
    %vm3111 = vcmp.eq.s32.totalorder %v944, %v2846
    %vm3112 = vcmp.eq.s32.totalorder %v944, %v2850
    %vm3113 = vcmp.eq.s32.totalorder %v944, %v2854
    %vm3114 = vcmp.eq.s32.totalorder %v944, %v2858
    %vm3115 = vcmp.eq.s32.totalorder %v945, %v2798
    %vm3116 = vcmp.eq.s32.totalorder %v945, %v2802
    %vm3117 = vcmp.eq.s32.totalorder %v945, %v2806
    %vm3118 = vcmp.eq.s32.totalorder %v945, %v2810
    %vm3119 = vcmp.eq.s32.totalorder %v945, %v2814
    %vm3120 = vcmp.eq.s32.totalorder %v945, %v2818
    %vm3121 = vcmp.eq.s32.totalorder %v945, %v2822
    %vm3122 = vcmp.eq.s32.totalorder %v945, %v2826
    %vm3123 = vcmp.eq.s32.totalorder %v945, %v2830
    %vm3124 = vcmp.eq.s32.totalorder %v945, %v2834
    %vm3125 = vcmp.eq.s32.totalorder %v945, %v2838
    %vm3126 = vcmp.eq.s32.totalorder %v945, %v2842
    %vm3127 = vcmp.eq.s32.totalorder %v945, %v2846
    %vm3128 = vcmp.eq.s32.totalorder %v945, %v2850
    %vm3129 = vcmp.eq.s32.totalorder %v945, %v2854
    %vm3130 = vcmp.eq.s32.totalorder %v945, %v2858
    %vm3131 = vcmp.eq.s32.totalorder %v946, %v2798
    %vm3132 = vcmp.eq.s32.totalorder %v946, %v2802
    %vm3133 = vcmp.eq.s32.totalorder %v946, %v2806
    %vm3134 = vcmp.eq.s32.totalorder %v946, %v2810
    %vm3135 = vcmp.eq.s32.totalorder %v946, %v2814
    %vm3136 = vcmp.eq.s32.totalorder %v946, %v2818
    %vm3137 = vcmp.eq.s32.totalorder %v946, %v2822
    %vm3138 = vcmp.eq.s32.totalorder %v946, %v2826
    %vm3139 = vcmp.eq.s32.totalorder %v946, %v2830
    %vm3140 = vcmp.eq.s32.totalorder %v946, %v2834
    %vm3141 = vcmp.eq.s32.totalorder %v946, %v2838
    %vm3142 = vcmp.eq.s32.totalorder %v946, %v2842
    %vm3143 = vcmp.eq.s32.totalorder %v946, %v2846
    %vm3144 = vcmp.eq.s32.totalorder %v946, %v2850
    %vm3145 = vcmp.eq.s32.totalorder %v946, %v2854
    %vm3146 = vcmp.eq.s32.totalorder %v946, %v2858
    %vm3147 = vcmp.eq.s32.totalorder %v947, %v2798
    %vm3148 = vcmp.eq.s32.totalorder %v947, %v2802
    %vm3149 = vcmp.eq.s32.totalorder %v947, %v2806
    %vm3150 = vcmp.eq.s32.totalorder %v947, %v2810
    %vm3151 = vcmp.eq.s32.totalorder %v947, %v2814
    %vm3152 = vcmp.eq.s32.totalorder %v947, %v2818
    %vm3153 = vcmp.eq.s32.totalorder %v947, %v2822
    %vm3154 = vcmp.eq.s32.totalorder %v947, %v2826
    %vm3155 = vcmp.eq.s32.totalorder %v947, %v2830
    %vm3156 = vcmp.eq.s32.totalorder %v947, %v2834
    %vm3157 = vcmp.eq.s32.totalorder %v947, %v2838
    %vm3158 = vcmp.eq.s32.totalorder %v947, %v2842
    %vm3159 = vcmp.eq.s32.totalorder %v947, %v2846
    %vm3160 = vcmp.eq.s32.totalorder %v947, %v2850
    %vm3161 = vcmp.eq.s32.totalorder %v947, %v2854
    %vm3162 = vcmp.eq.s32.totalorder %v947, %v2858
    %vm3163 = vcmp.eq.s32.totalorder %v948, %v2798
    %vm3164 = vcmp.eq.s32.totalorder %v948, %v2802
    %vm3165 = vcmp.eq.s32.totalorder %v948, %v2806
    %vm3166 = vcmp.eq.s32.totalorder %v948, %v2810
    %vm3167 = vcmp.eq.s32.totalorder %v948, %v2814
    %vm3168 = vcmp.eq.s32.totalorder %v948, %v2818
    %vm3169 = vcmp.eq.s32.totalorder %v948, %v2822
    %vm3170 = vcmp.eq.s32.totalorder %v948, %v2826
    %vm3171 = vcmp.eq.s32.totalorder %v948, %v2830
    %vm3172 = vcmp.eq.s32.totalorder %v948, %v2834
    %vm3173 = vcmp.eq.s32.totalorder %v948, %v2838
    %vm3174 = vcmp.eq.s32.totalorder %v948, %v2842
    %vm3175 = vcmp.eq.s32.totalorder %v948, %v2846
    %vm3176 = vcmp.eq.s32.totalorder %v948, %v2850
    %vm3177 = vcmp.eq.s32.totalorder %v948, %v2854
    %vm3178 = vcmp.eq.s32.totalorder %v948, %v2858
    %vm3179 = vcmp.eq.s32.totalorder %v949, %v2798
    %vm3180 = vcmp.eq.s32.totalorder %v949, %v2802
    %vm3181 = vcmp.eq.s32.totalorder %v949, %v2806
    %vm3182 = vcmp.eq.s32.totalorder %v949, %v2810
    %vm3183 = vcmp.eq.s32.totalorder %v949, %v2814
    %vm3184 = vcmp.eq.s32.totalorder %v949, %v2818
    %vm3185 = vcmp.eq.s32.totalorder %v949, %v2822
    %vm3186 = vcmp.eq.s32.totalorder %v949, %v2826
    %vm3187 = vcmp.eq.s32.totalorder %v949, %v2830
    %vm3188 = vcmp.eq.s32.totalorder %v949, %v2834
    %vm3189 = vcmp.eq.s32.totalorder %v949, %v2838
    %vm3190 = vcmp.eq.s32.totalorder %v949, %v2842
    %vm3191 = vcmp.eq.s32.totalorder %v949, %v2846
    %vm3192 = vcmp.eq.s32.totalorder %v949, %v2850
    %vm3193 = vcmp.eq.s32.totalorder %v949, %v2854
    %vm3194 = vcmp.eq.s32.totalorder %v949, %v2858
    %vm3195 = vcmp.eq.s32.totalorder %v950, %v2798
    %vm3196 = vcmp.eq.s32.totalorder %v950, %v2802
    %vm3197 = vcmp.eq.s32.totalorder %v950, %v2806
    %vm3198 = vcmp.eq.s32.totalorder %v950, %v2810
    %vm3199 = vcmp.eq.s32.totalorder %v950, %v2814
    %vm3200 = vcmp.eq.s32.totalorder %v950, %v2818
    %vm3201 = vcmp.eq.s32.totalorder %v950, %v2822
    %vm3202 = vcmp.eq.s32.totalorder %v950, %v2826
    %vm3203 = vcmp.eq.s32.totalorder %v950, %v2830
    %vm3204 = vcmp.eq.s32.totalorder %v950, %v2834
    %vm3205 = vcmp.eq.s32.totalorder %v950, %v2838
    %vm3206 = vcmp.eq.s32.totalorder %v950, %v2842
    %vm3207 = vcmp.eq.s32.totalorder %v950, %v2846
    %vm3208 = vcmp.eq.s32.totalorder %v950, %v2850
    %vm3209 = vcmp.eq.s32.totalorder %v950, %v2854
    %vm3210 = vcmp.eq.s32.totalorder %v950, %v2858
    %vm3211 = vcmp.eq.s32.totalorder %v951, %v2798
    %vm3212 = vcmp.eq.s32.totalorder %v951, %v2802
    %vm3213 = vcmp.eq.s32.totalorder %v951, %v2806
    %vm3214 = vcmp.eq.s32.totalorder %v951, %v2810
    %vm3215 = vcmp.eq.s32.totalorder %v951, %v2814
    %vm3216 = vcmp.eq.s32.totalorder %v951, %v2818
    %vm3217 = vcmp.eq.s32.totalorder %v951, %v2822
    %vm3218 = vcmp.eq.s32.totalorder %v951, %v2826
    %vm3219 = vcmp.eq.s32.totalorder %v951, %v2830
    %vm3220 = vcmp.eq.s32.totalorder %v951, %v2834
    %vm3221 = vcmp.eq.s32.totalorder %v951, %v2838
    %vm3222 = vcmp.eq.s32.totalorder %v951, %v2842
    %vm3223 = vcmp.eq.s32.totalorder %v951, %v2846
    %vm3224 = vcmp.eq.s32.totalorder %v951, %v2850
    %vm3225 = vcmp.eq.s32.totalorder %v951, %v2854
    %vm3226 = vcmp.eq.s32.totalorder %v951, %v2858
    %vm3227 = vcmp.eq.s32.totalorder %v952, %v2798
    %vm3228 = vcmp.eq.s32.totalorder %v952, %v2802
    %vm3229 = vcmp.eq.s32.totalorder %v952, %v2806
    %vm3230 = vcmp.eq.s32.totalorder %v952, %v2810
    %vm3231 = vcmp.eq.s32.totalorder %v952, %v2814
    %vm3232 = vcmp.eq.s32.totalorder %v952, %v2818
    %vm3233 = vcmp.eq.s32.totalorder %v952, %v2822
    %vm3234 = vcmp.eq.s32.totalorder %v952, %v2826
    %vm3235 = vcmp.eq.s32.totalorder %v952, %v2830
    %vm3236 = vcmp.eq.s32.totalorder %v952, %v2834
    %vm3237 = vcmp.eq.s32.totalorder %v952, %v2838
    %vm3238 = vcmp.eq.s32.totalorder %v952, %v2842
    %vm3239 = vcmp.eq.s32.totalorder %v952, %v2846
    %vm3240 = vcmp.eq.s32.totalorder %v952, %v2850
    %vm3241 = vcmp.eq.s32.totalorder %v952, %v2854
    %vm3242 = vcmp.eq.s32.totalorder %v952, %v2858
    %vm3243 = vcmp.eq.s32.totalorder %v953, %v2798
    %vm3244 = vcmp.eq.s32.totalorder %v953, %v2802
    %vm3245 = vcmp.eq.s32.totalorder %v953, %v2806
    %vm3246 = vcmp.eq.s32.totalorder %v953, %v2810
    %vm3247 = vcmp.eq.s32.totalorder %v953, %v2814
    %vm3248 = vcmp.eq.s32.totalorder %v953, %v2818
    %vm3249 = vcmp.eq.s32.totalorder %v953, %v2822
    %vm3250 = vcmp.eq.s32.totalorder %v953, %v2826
    %vm3251 = vcmp.eq.s32.totalorder %v953, %v2830
    %vm3252 = vcmp.eq.s32.totalorder %v953, %v2834
    %vm3253 = vcmp.eq.s32.totalorder %v953, %v2838
    %vm3254 = vcmp.eq.s32.totalorder %v953, %v2842
    %vm3255 = vcmp.eq.s32.totalorder %v953, %v2846
    %vm3256 = vcmp.eq.s32.totalorder %v953, %v2850
    %vm3257 = vcmp.eq.s32.totalorder %v953, %v2854
    %vm3258 = vcmp.eq.s32.totalorder %v953, %v2858
    %vm3259 = vcmp.eq.s32.totalorder %v954, %v2798
    %vm3260 = vcmp.eq.s32.totalorder %v954, %v2802
    %vm3261 = vcmp.eq.s32.totalorder %v954, %v2806
    %vm3262 = vcmp.eq.s32.totalorder %v954, %v2810
    %vm3263 = vcmp.eq.s32.totalorder %v954, %v2814
    %vm3264 = vcmp.eq.s32.totalorder %v954, %v2818
    %vm3265 = vcmp.eq.s32.totalorder %v954, %v2822
    %vm3266 = vcmp.eq.s32.totalorder %v954, %v2826
    %vm3267 = vcmp.eq.s32.totalorder %v954, %v2830
    %vm3268 = vcmp.eq.s32.totalorder %v954, %v2834
    %vm3269 = vcmp.eq.s32.totalorder %v954, %v2838
    %vm3270 = vcmp.eq.s32.totalorder %v954, %v2842
    %vm3271 = vcmp.eq.s32.totalorder %v954, %v2846
    %vm3272 = vcmp.eq.s32.totalorder %v954, %v2850
    %vm3273 = vcmp.eq.s32.totalorder %v954, %v2854
    %vm3274 = vcmp.eq.s32.totalorder %v954, %v2858
    %vm3275 = vcmp.eq.s32.totalorder %v955, %v2798
    %vm3276 = vcmp.eq.s32.totalorder %v955, %v2802
    %vm3277 = vcmp.eq.s32.totalorder %v955, %v2806
    %vm3278 = vcmp.eq.s32.totalorder %v955, %v2810
    %vm3279 = vcmp.eq.s32.totalorder %v955, %v2814
    %vm3280 = vcmp.eq.s32.totalorder %v955, %v2818
    %vm3281 = vcmp.eq.s32.totalorder %v955, %v2822
    %vm3282 = vcmp.eq.s32.totalorder %v955, %v2826
    %vm3283 = vcmp.eq.s32.totalorder %v955, %v2830
    %vm3284 = vcmp.eq.s32.totalorder %v955, %v2834
    %vm3285 = vcmp.eq.s32.totalorder %v955, %v2838
    %vm3286 = vcmp.eq.s32.totalorder %v955, %v2842
    %vm3287 = vcmp.eq.s32.totalorder %v955, %v2846
    %vm3288 = vcmp.eq.s32.totalorder %v955, %v2850
    %vm3289 = vcmp.eq.s32.totalorder %v955, %v2854
    %vm3290 = vcmp.eq.s32.totalorder %v955, %v2858
    %vm3291 = vcmp.eq.s32.totalorder %v2790, %v2798
    %vm3292 = vcmp.eq.s32.totalorder %v2790, %v2802
    %vm3293 = vcmp.eq.s32.totalorder %v2790, %v2806
    %vm3294 = vcmp.eq.s32.totalorder %v2790, %v2810
    %vm3295 = vcmp.eq.s32.totalorder %v2790, %v2814
    %vm3296 = vcmp.eq.s32.totalorder %v2790, %v2818
    %vm3297 = vcmp.eq.s32.totalorder %v2790, %v2822
    %vm3298 = vcmp.eq.s32.totalorder %v2790, %v2826
    %vm3299 = vcmp.eq.s32.totalorder %v2790, %v2830
    %vm3300 = vcmp.eq.s32.totalorder %v2790, %v2834
    %vm3301 = vcmp.eq.s32.totalorder %v2790, %v2838
    %vm3302 = vcmp.eq.s32.totalorder %v2790, %v2842
    %vm3303 = vcmp.eq.s32.totalorder %v2790, %v2846
    %vm3304 = vcmp.eq.s32.totalorder %v2790, %v2850
    %vm3305 = vcmp.eq.s32.totalorder %v2790, %v2854
    %vm3306 = vcmp.eq.s32.totalorder %v2790, %v2858
    %vm3307 = vcmp.eq.s32.totalorder %v2791, %v2798
    %vm3308 = vcmp.eq.s32.totalorder %v2791, %v2802
    %vm3309 = vcmp.eq.s32.totalorder %v2791, %v2806
    %vm3310 = vcmp.eq.s32.totalorder %v2791, %v2810
    %vm3311 = vcmp.eq.s32.totalorder %v2791, %v2814
    %vm3312 = vcmp.eq.s32.totalorder %v2791, %v2818
    %vm3313 = vcmp.eq.s32.totalorder %v2791, %v2822
    %vm3314 = vcmp.eq.s32.totalorder %v2791, %v2826
    %vm3315 = vcmp.eq.s32.totalorder %v2791, %v2830
    %vm3316 = vcmp.eq.s32.totalorder %v2791, %v2834
    %vm3317 = vcmp.eq.s32.totalorder %v2791, %v2838
    %vm3318 = vcmp.eq.s32.totalorder %v2791, %v2842
    %vm3319 = vcmp.eq.s32.totalorder %v2791, %v2846
    %vm3320 = vcmp.eq.s32.totalorder %v2791, %v2850
    %vm3321 = vcmp.eq.s32.totalorder %v2791, %v2854
    %vm3322 = vcmp.eq.s32.totalorder %v2791, %v2858
    %vm3323 = vcmp.eq.s32.totalorder %v2792, %v2798
    %vm3324 = vcmp.eq.s32.totalorder %v2792, %v2802
    %vm3325 = vcmp.eq.s32.totalorder %v2792, %v2806
    %vm3326 = vcmp.eq.s32.totalorder %v2792, %v2810
    %vm3327 = vcmp.eq.s32.totalorder %v2792, %v2814
    %vm3328 = vcmp.eq.s32.totalorder %v2792, %v2818
    %vm3329 = vcmp.eq.s32.totalorder %v2792, %v2822
    %vm3330 = vcmp.eq.s32.totalorder %v2792, %v2826
    %vm3331 = vcmp.eq.s32.totalorder %v2792, %v2830
    %vm3332 = vcmp.eq.s32.totalorder %v2792, %v2834
    %vm3333 = vcmp.eq.s32.totalorder %v2792, %v2838
    %vm3334 = vcmp.eq.s32.totalorder %v2792, %v2842
    %vm3335 = vcmp.eq.s32.totalorder %v2792, %v2846
    %vm3336 = vcmp.eq.s32.totalorder %v2792, %v2850
    %vm3337 = vcmp.eq.s32.totalorder %v2792, %v2854
    %vm3338 = vcmp.eq.s32.totalorder %v2792, %v2858
    %vm3339 = vcmp.eq.s32.totalorder %v2793, %v2798
    %vm3340 = vcmp.eq.s32.totalorder %v2793, %v2802
    %vm3341 = vcmp.eq.s32.totalorder %v2793, %v2806
    %vm3342 = vcmp.eq.s32.totalorder %v2793, %v2810
    %vm3343 = vcmp.eq.s32.totalorder %v2793, %v2814
    %vm3344 = vcmp.eq.s32.totalorder %v2793, %v2818
    %vm3345 = vcmp.eq.s32.totalorder %v2793, %v2822
    %vm3346 = vcmp.eq.s32.totalorder %v2793, %v2826
    %vm3347 = vcmp.eq.s32.totalorder %v2793, %v2830
    %vm3348 = vcmp.eq.s32.totalorder %v2793, %v2834
    %vm3349 = vcmp.eq.s32.totalorder %v2793, %v2838
    %vm3350 = vcmp.eq.s32.totalorder %v2793, %v2842
    %vm3351 = vcmp.eq.s32.totalorder %v2793, %v2846
    %vm3352 = vcmp.eq.s32.totalorder %v2793, %v2850
    %vm3353 = vcmp.eq.s32.totalorder %v2793, %v2854
    %vm3354 = vcmp.eq.s32.totalorder %v2793, %v2858
    %vm3355 = vcmp.eq.s32.totalorder %v2794, %v2798
    %vm3356 = vcmp.eq.s32.totalorder %v2794, %v2802
    %vm3357 = vcmp.eq.s32.totalorder %v2794, %v2806
    %vm3358 = vcmp.eq.s32.totalorder %v2794, %v2810
    %vm3359 = vcmp.eq.s32.totalorder %v2794, %v2814
    %vm3360 = vcmp.eq.s32.totalorder %v2794, %v2818
    %vm3361 = vcmp.eq.s32.totalorder %v2794, %v2822
    %vm3362 = vcmp.eq.s32.totalorder %v2794, %v2826
    %vm3363 = vcmp.eq.s32.totalorder %v2794, %v2830
    %vm3364 = vcmp.eq.s32.totalorder %v2794, %v2834
    %vm3365 = vcmp.eq.s32.totalorder %v2794, %v2838
    %vm3366 = vcmp.eq.s32.totalorder %v2794, %v2842
    %vm3367 = vcmp.eq.s32.totalorder %v2794, %v2846
    %vm3368 = vcmp.eq.s32.totalorder %v2794, %v2850
    %vm3369 = vcmp.eq.s32.totalorder %v2794, %v2854
    %vm3370 = vcmp.eq.s32.totalorder %v2794, %v2858
    %v3371 = vsel %vm2859, 1, 0
    %v3372 = vsel %vm2860, 1, 0
    %v3373 = vsel %vm2861, 1, 0
    %v3374 = vsel %vm2862, 1, 0
    %v3375 = vsel %vm2863, 1, 0
    %v3376 = vsel %vm2864, 1, 0
    %v3377 = vsel %vm2865, 1, 0
    %v3378 = vsel %vm2866, 1, 0
    %v3379 = vsel %vm2867, 1, 0
    %v3380 = vsel %vm2868, 1, 0
    %v3381 = vsel %vm2869, 1, 0
    %v3382 = vsel %vm2870, 1, 0
    %v3383 = vsel %vm2871, 1, 0
    %v3384 = vsel %vm2872, 1, 0
    %v3385 = vsel %vm2873, 1, 0
    %v3386 = vsel %vm2874, 1, 0
    %v3387 = vsel %vm2875, 1, 0
    %v3388 = vsel %vm2876, 1, 0
    %v3389 = vsel %vm2877, 1, 0
    %v3390 = vsel %vm2878, 1, 0
    %v3391 = vsel %vm2879, 1, 0
    %v3392 = vsel %vm2880, 1, 0
    %v3393 = vsel %vm2881, 1, 0
    %v3394 = vsel %vm2882, 1, 0
    %v3395 = vsel %vm2883, 1, 0
    %v3396 = vsel %vm2884, 1, 0
    %v3397 = vsel %vm2885, 1, 0
    %v3398 = vsel %vm2886, 1, 0
    %v3399 = vsel %vm2887, 1, 0
    %v3400 = vsel %vm2888, 1, 0
    %v3401 = vsel %vm2889, 1, 0
    %v3402 = vsel %vm2890, 1, 0
    %v3403 = vsel %vm2891, 1, 0
    %v3404 = vsel %vm2892, 1, 0
    %v3405 = vsel %vm2893, 1, 0
    %v3406 = vsel %vm2894, 1, 0
    %v3407 = vsel %vm2895, 1, 0
    %v3408 = vsel %vm2896, 1, 0
    %v3409 = vsel %vm2897, 1, 0
    %v3410 = vsel %vm2898, 1, 0
    %v3411 = vsel %vm2899, 1, 0
    %v3412 = vsel %vm2900, 1, 0
    %v3413 = vsel %vm2901, 1, 0
    %v3414 = vsel %vm2902, 1, 0
    %v3415 = vsel %vm2903, 1, 0
    %v3416 = vsel %vm2904, 1, 0
    %v3417 = vsel %vm2905, 1, 0
    %v3418 = vsel %vm2906, 1, 0
    %v3419 = vsel %vm2907, 1, 0
    %v3420 = vsel %vm2908, 1, 0
    %v3421 = vsel %vm2909, 1, 0
    %v3422 = vsel %vm2910, 1, 0
    %v3423 = vsel %vm2911, 1, 0
    %v3424 = vsel %vm2912, 1, 0
    %v3425 = vsel %vm2913, 1, 0
    %v3426 = vsel %vm2914, 1, 0
    %v3427 = vsel %vm2915, 1, 0
    %v3428 = vsel %vm2916, 1, 0
    %v3429 = vsel %vm2917, 1, 0
    %v3430 = vsel %vm2918, 1, 0
    %v3431 = vsel %vm2919, 1, 0
    %v3432 = vsel %vm2920, 1, 0
    %v3433 = vsel %vm2921, 1, 0
    %v3434 = vsel %vm2922, 1, 0
    %v3435 = vsel %vm2923, 1, 0
    %v3436 = vsel %vm2924, 1, 0
    %v3437 = vsel %vm2925, 1, 0
    %v3438 = vsel %vm2926, 1, 0
    %v3439 = vsel %vm2927, 1, 0
    %v3440 = vsel %vm2928, 1, 0
    %v3441 = vsel %vm2929, 1, 0
    %v3442 = vsel %vm2930, 1, 0
    %v3443 = vsel %vm2931, 1, 0
    %v3444 = vsel %vm2932, 1, 0
    %v3445 = vsel %vm2933, 1, 0
    %v3446 = vsel %vm2934, 1, 0
    %v3447 = vsel %vm2935, 1, 0
    %v3448 = vsel %vm2936, 1, 0
    %v3449 = vsel %vm2937, 1, 0
    %v3450 = vsel %vm2938, 1, 0
    %v3451 = vsel %vm2939, 1, 0
    %v3452 = vsel %vm2940, 1, 0
    %v3453 = vsel %vm2941, 1, 0
    %v3454 = vsel %vm2942, 1, 0
    %v3455 = vsel %vm2943, 1, 0
    %v3456 = vsel %vm2944, 1, 0
    %v3457 = vsel %vm2945, 1, 0
    %v3458 = vsel %vm2946, 1, 0
    %v3459 = vsel %vm2947, 1, 0
    %v3460 = vsel %vm2948, 1, 0
    %v3461 = vsel %vm2949, 1, 0
    %v3462 = vsel %vm2950, 1, 0
    %v3463 = vsel %vm2951, 1, 0
    %v3464 = vsel %vm2952, 1, 0
    %v3465 = vsel %vm2953, 1, 0
    %v3466 = vsel %vm2954, 1, 0
    %v3467 = vsel %vm2955, 1, 0
    %v3468 = vsel %vm2956, 1, 0
    %v3469 = vsel %vm2957, 1, 0
    %v3470 = vsel %vm2958, 1, 0
    %v3471 = vsel %vm2959, 1, 0
    %v3472 = vsel %vm2960, 1, 0
    %v3473 = vsel %vm2961, 1, 0
    %v3474 = vsel %vm2962, 1, 0
    %v3475 = vsel %vm2963, 1, 0
    %v3476 = vsel %vm2964, 1, 0
    %v3477 = vsel %vm2965, 1, 0
    %v3478 = vsel %vm2966, 1, 0
    %v3479 = vsel %vm2967, 1, 0
    %v3480 = vsel %vm2968, 1, 0
    %v3481 = vsel %vm2969, 1, 0
    %v3482 = vsel %vm2970, 1, 0
    %v3483 = vsel %vm2971, 1, 0
    %v3484 = vsel %vm2972, 1, 0
    %v3485 = vsel %vm2973, 1, 0
    %v3486 = vsel %vm2974, 1, 0
    %v3487 = vsel %vm2975, 1, 0
    %v3488 = vsel %vm2976, 1, 0
    %v3489 = vsel %vm2977, 1, 0
    %v3490 = vsel %vm2978, 1, 0
    %v3491 = vsel %vm2979, 1, 0
    %v3492 = vsel %vm2980, 1, 0
    %v3493 = vsel %vm2981, 1, 0
    %v3494 = vsel %vm2982, 1, 0
    %v3495 = vsel %vm2983, 1, 0
    %v3496 = vsel %vm2984, 1, 0
    %v3497 = vsel %vm2985, 1, 0
    %v3498 = vsel %vm2986, 1, 0
    %v3499 = vsel %vm2987, 1, 0
    %v3500 = vsel %vm2988, 1, 0
    %v3501 = vsel %vm2989, 1, 0
    %v3502 = vsel %vm2990, 1, 0
    %v3503 = vsel %vm2991, 1, 0
    %v3504 = vsel %vm2992, 1, 0
    %v3505 = vsel %vm2993, 1, 0
    %v3506 = vsel %vm2994, 1, 0
    %v3507 = vsel %vm2995, 1, 0
    %v3508 = vsel %vm2996, 1, 0
    %v3509 = vsel %vm2997, 1, 0
    %v3510 = vsel %vm2998, 1, 0
    %v3511 = vsel %vm2999, 1, 0
    %v3512 = vsel %vm3000, 1, 0
    %v3513 = vsel %vm3001, 1, 0
    %v3514 = vsel %vm3002, 1, 0
    %v3515 = vsel %vm3003, 1, 0
    %v3516 = vsel %vm3004, 1, 0
    %v3517 = vsel %vm3005, 1, 0
    %v3518 = vsel %vm3006, 1, 0
    %v3519 = vsel %vm3007, 1, 0
    %v3520 = vsel %vm3008, 1, 0
    %v3521 = vsel %vm3009, 1, 0
    %v3522 = vsel %vm3010, 1, 0
    %v3523 = vsel %vm3011, 1, 0
    %v3524 = vsel %vm3012, 1, 0
    %v3525 = vsel %vm3013, 1, 0
    %v3526 = vsel %vm3014, 1, 0
    %v3527 = vsel %vm3015, 1, 0
    %v3528 = vsel %vm3016, 1, 0
    %v3529 = vsel %vm3017, 1, 0
    %v3530 = vsel %vm3018, 1, 0
    %v3531 = vsel %vm3019, 1, 0
    %v3532 = vsel %vm3020, 1, 0
    %v3533 = vsel %vm3021, 1, 0
    %v3534 = vsel %vm3022, 1, 0
    %v3535 = vsel %vm3023, 1, 0
    %v3536 = vsel %vm3024, 1, 0
    %v3537 = vsel %vm3025, 1, 0
    %v3538 = vsel %vm3026, 1, 0
    %v3539 = vsel %vm3027, 1, 0
    %v3540 = vsel %vm3028, 1, 0
    %v3541 = vsel %vm3029, 1, 0
    %v3542 = vsel %vm3030, 1, 0
    %v3543 = vsel %vm3031, 1, 0
    %v3544 = vsel %vm3032, 1, 0
    %v3545 = vsel %vm3033, 1, 0
    %v3546 = vsel %vm3034, 1, 0
    %v3547 = vsel %vm3035, 1, 0
    %v3548 = vsel %vm3036, 1, 0
    %v3549 = vsel %vm3037, 1, 0
    %v3550 = vsel %vm3038, 1, 0
    %v3551 = vsel %vm3039, 1, 0
    %v3552 = vsel %vm3040, 1, 0
    %v3553 = vsel %vm3041, 1, 0
    %v3554 = vsel %vm3042, 1, 0
    %v3555 = vsel %vm3043, 1, 0
    %v3556 = vsel %vm3044, 1, 0
    %v3557 = vsel %vm3045, 1, 0
    %v3558 = vsel %vm3046, 1, 0
    %v3559 = vsel %vm3047, 1, 0
    %v3560 = vsel %vm3048, 1, 0
    %v3561 = vsel %vm3049, 1, 0
    %v3562 = vsel %vm3050, 1, 0
    %v3563 = vsel %vm3051, 1, 0
    %v3564 = vsel %vm3052, 1, 0
    %v3565 = vsel %vm3053, 1, 0
    %v3566 = vsel %vm3054, 1, 0
    %v3567 = vsel %vm3055, 1, 0
    %v3568 = vsel %vm3056, 1, 0
    %v3569 = vsel %vm3057, 1, 0
    %v3570 = vsel %vm3058, 1, 0
    %v3571 = vsel %vm3059, 1, 0
    %v3572 = vsel %vm3060, 1, 0
    %v3573 = vsel %vm3061, 1, 0
    %v3574 = vsel %vm3062, 1, 0
    %v3575 = vsel %vm3063, 1, 0
    %v3576 = vsel %vm3064, 1, 0
    %v3577 = vsel %vm3065, 1, 0
    %v3578 = vsel %vm3066, 1, 0
    %v3579 = vsel %vm3067, 1, 0
    %v3580 = vsel %vm3068, 1, 0
    %v3581 = vsel %vm3069, 1, 0
    %v3582 = vsel %vm3070, 1, 0
    %v3583 = vsel %vm3071, 1, 0
    %v3584 = vsel %vm3072, 1, 0
    %v3585 = vsel %vm3073, 1, 0
    %v3586 = vsel %vm3074, 1, 0
    %v3587 = vsel %vm3075, 1, 0
    %v3588 = vsel %vm3076, 1, 0
    %v3589 = vsel %vm3077, 1, 0
    %v3590 = vsel %vm3078, 1, 0
    %v3591 = vsel %vm3079, 1, 0
    %v3592 = vsel %vm3080, 1, 0
    %v3593 = vsel %vm3081, 1, 0
    %v3594 = vsel %vm3082, 1, 0
    %v3595 = vsel %vm3083, 1, 0
    %v3596 = vsel %vm3084, 1, 0
    %v3597 = vsel %vm3085, 1, 0
    %v3598 = vsel %vm3086, 1, 0
    %v3599 = vsel %vm3087, 1, 0
    %v3600 = vsel %vm3088, 1, 0
    %v3601 = vsel %vm3089, 1, 0
    %v3602 = vsel %vm3090, 1, 0
    %v3603 = vsel %vm3091, 1, 0
    %v3604 = vsel %vm3092, 1, 0
    %v3605 = vsel %vm3093, 1, 0
    %v3606 = vsel %vm3094, 1, 0
    %v3607 = vsel %vm3095, 1, 0
    %v3608 = vsel %vm3096, 1, 0
    %v3609 = vsel %vm3097, 1, 0
    %v3610 = vsel %vm3098, 1, 0
    %v3611 = vsel %vm3099, 1, 0
    %v3612 = vsel %vm3100, 1, 0
    %v3613 = vsel %vm3101, 1, 0
    %v3614 = vsel %vm3102, 1, 0
    %v3615 = vsel %vm3103, 1, 0
    %v3616 = vsel %vm3104, 1, 0
    %v3617 = vsel %vm3105, 1, 0
    %v3618 = vsel %vm3106, 1, 0
    %v3619 = vsel %vm3107, 1, 0
    %v3620 = vsel %vm3108, 1, 0
    %v3621 = vsel %vm3109, 1, 0
    %v3622 = vsel %vm3110, 1, 0
    %v3623 = vsel %vm3111, 1, 0
    %v3624 = vsel %vm3112, 1, 0
    %v3625 = vsel %vm3113, 1, 0
    %v3626 = vsel %vm3114, 1, 0
    %v3627 = vsel %vm3115, 1, 0
    %v3628 = vsel %vm3116, 1, 0
    %v3629 = vsel %vm3117, 1, 0
    %v3630 = vsel %vm3118, 1, 0
    %v3631 = vsel %vm3119, 1, 0
    %v3632 = vsel %vm3120, 1, 0
    %v3633 = vsel %vm3121, 1, 0
    %v3634 = vsel %vm3122, 1, 0
    %v3635 = vsel %vm3123, 1, 0
    %v3636 = vsel %vm3124, 1, 0
    %v3637 = vsel %vm3125, 1, 0
    %v3638 = vsel %vm3126, 1, 0
    %v3639 = vsel %vm3127, 1, 0
    %v3640 = vsel %vm3128, 1, 0
    %v3641 = vsel %vm3129, 1, 0
    %v3642 = vsel %vm3130, 1, 0
    %v3643 = vsel %vm3131, 1, 0
    %v3644 = vsel %vm3132, 1, 0
    %v3645 = vsel %vm3133, 1, 0
    %v3646 = vsel %vm3134, 1, 0
    %v3647 = vsel %vm3135, 1, 0
    %v3648 = vsel %vm3136, 1, 0
    %v3649 = vsel %vm3137, 1, 0
    %v3650 = vsel %vm3138, 1, 0
    %v3651 = vsel %vm3139, 1, 0
    %v3652 = vsel %vm3140, 1, 0
    %v3653 = vsel %vm3141, 1, 0
    %v3654 = vsel %vm3142, 1, 0
    %v3655 = vsel %vm3143, 1, 0
    %v3656 = vsel %vm3144, 1, 0
    %v3657 = vsel %vm3145, 1, 0
    %v3658 = vsel %vm3146, 1, 0
    %v3659 = vsel %vm3147, 1, 0
    %v3660 = vsel %vm3148, 1, 0
    %v3661 = vsel %vm3149, 1, 0
    %v3662 = vsel %vm3150, 1, 0
    %v3663 = vsel %vm3151, 1, 0
    %v3664 = vsel %vm3152, 1, 0
    %v3665 = vsel %vm3153, 1, 0
    %v3666 = vsel %vm3154, 1, 0
    %v3667 = vsel %vm3155, 1, 0
    %v3668 = vsel %vm3156, 1, 0
    %v3669 = vsel %vm3157, 1, 0
    %v3670 = vsel %vm3158, 1, 0
    %v3671 = vsel %vm3159, 1, 0
    %v3672 = vsel %vm3160, 1, 0
    %v3673 = vsel %vm3161, 1, 0
    %v3674 = vsel %vm3162, 1, 0
    %v3675 = vsel %vm3163, 1, 0
    %v3676 = vsel %vm3164, 1, 0
    %v3677 = vsel %vm3165, 1, 0
    %v3678 = vsel %vm3166, 1, 0
    %v3679 = vsel %vm3167, 1, 0
    %v3680 = vsel %vm3168, 1, 0
    %v3681 = vsel %vm3169, 1, 0
    %v3682 = vsel %vm3170, 1, 0
    %v3683 = vsel %vm3171, 1, 0
    %v3684 = vsel %vm3172, 1, 0
    %v3685 = vsel %vm3173, 1, 0
    %v3686 = vsel %vm3174, 1, 0
    %v3687 = vsel %vm3175, 1, 0
    %v3688 = vsel %vm3176, 1, 0
    %v3689 = vsel %vm3177, 1, 0
    %v3690 = vsel %vm3178, 1, 0
    %v3691 = vsel %vm3179, 1, 0
    %v3692 = vsel %vm3180, 1, 0
    %v3693 = vsel %vm3181, 1, 0
    %v3694 = vsel %vm3182, 1, 0
    %v3695 = vsel %vm3183, 1, 0
    %v3696 = vsel %vm3184, 1, 0
    %v3697 = vsel %vm3185, 1, 0
    %v3698 = vsel %vm3186, 1, 0
    %v3699 = vsel %vm3187, 1, 0
    %v3700 = vsel %vm3188, 1, 0
    %v3701 = vsel %vm3189, 1, 0
    %v3702 = vsel %vm3190, 1, 0
    %v3703 = vsel %vm3191, 1, 0
    %v3704 = vsel %vm3192, 1, 0
    %v3705 = vsel %vm3193, 1, 0
    %v3706 = vsel %vm3194, 1, 0
    %v3707 = vsel %vm3195, 1, 0
    %v3708 = vsel %vm3196, 1, 0
    %v3709 = vsel %vm3197, 1, 0
    %v3710 = vsel %vm3198, 1, 0
    %v3711 = vsel %vm3199, 1, 0
    %v3712 = vsel %vm3200, 1, 0
    %v3713 = vsel %vm3201, 1, 0
    %v3714 = vsel %vm3202, 1, 0
    %v3715 = vsel %vm3203, 1, 0
    %v3716 = vsel %vm3204, 1, 0
    %v3717 = vsel %vm3205, 1, 0
    %v3718 = vsel %vm3206, 1, 0
    %v3719 = vsel %vm3207, 1, 0
    %v3720 = vsel %vm3208, 1, 0
    %v3721 = vsel %vm3209, 1, 0
    %v3722 = vsel %vm3210, 1, 0
    %v3723 = vsel %vm3211, 1, 0
    %v3724 = vsel %vm3212, 1, 0
    %v3725 = vsel %vm3213, 1, 0
    %v3726 = vsel %vm3214, 1, 0
    %v3727 = vsel %vm3215, 1, 0
    %v3728 = vsel %vm3216, 1, 0
    %v3729 = vsel %vm3217, 1, 0
    %v3730 = vsel %vm3218, 1, 0
    %v3731 = vsel %vm3219, 1, 0
    %v3732 = vsel %vm3220, 1, 0
    %v3733 = vsel %vm3221, 1, 0
    %v3734 = vsel %vm3222, 1, 0
    %v3735 = vsel %vm3223, 1, 0
    %v3736 = vsel %vm3224, 1, 0
    %v3737 = vsel %vm3225, 1, 0
    %v3738 = vsel %vm3226, 1, 0
    %v3739 = vsel %vm3227, 1, 0
    %v3740 = vsel %vm3228, 1, 0
    %v3741 = vsel %vm3229, 1, 0
    %v3742 = vsel %vm3230, 1, 0
    %v3743 = vsel %vm3231, 1, 0
    %v3744 = vsel %vm3232, 1, 0
    %v3745 = vsel %vm3233, 1, 0
    %v3746 = vsel %vm3234, 1, 0
    %v3747 = vsel %vm3235, 1, 0
    %v3748 = vsel %vm3236, 1, 0
    %v3749 = vsel %vm3237, 1, 0
    %v3750 = vsel %vm3238, 1, 0
    %v3751 = vsel %vm3239, 1, 0
    %v3752 = vsel %vm3240, 1, 0
    %v3753 = vsel %vm3241, 1, 0
    %v3754 = vsel %vm3242, 1, 0
    %v3755 = vsel %vm3243, 1, 0
    %v3756 = vsel %vm3244, 1, 0
    %v3757 = vsel %vm3245, 1, 0
    %v3758 = vsel %vm3246, 1, 0
    %v3759 = vsel %vm3247, 1, 0
    %v3760 = vsel %vm3248, 1, 0
    %v3761 = vsel %vm3249, 1, 0
    %v3762 = vsel %vm3250, 1, 0
    %v3763 = vsel %vm3251, 1, 0
    %v3764 = vsel %vm3252, 1, 0
    %v3765 = vsel %vm3253, 1, 0
    %v3766 = vsel %vm3254, 1, 0
    %v3767 = vsel %vm3255, 1, 0
    %v3768 = vsel %vm3256, 1, 0
    %v3769 = vsel %vm3257, 1, 0
    %v3770 = vsel %vm3258, 1, 0
    %v3771 = vsel %vm3259, 1, 0
    %v3772 = vsel %vm3260, 1, 0
    %v3773 = vsel %vm3261, 1, 0
    %v3774 = vsel %vm3262, 1, 0
    %v3775 = vsel %vm3263, 1, 0
    %v3776 = vsel %vm3264, 1, 0
    %v3777 = vsel %vm3265, 1, 0
    %v3778 = vsel %vm3266, 1, 0
    %v3779 = vsel %vm3267, 1, 0
    %v3780 = vsel %vm3268, 1, 0
    %v3781 = vsel %vm3269, 1, 0
    %v3782 = vsel %vm3270, 1, 0
    %v3783 = vsel %vm3271, 1, 0
    %v3784 = vsel %vm3272, 1, 0
    %v3785 = vsel %vm3273, 1, 0
    %v3786 = vsel %vm3274, 1, 0
    %v3787 = vsel %vm3275, 1, 0
    %v3788 = vsel %vm3276, 1, 0
    %v3789 = vsel %vm3277, 1, 0
    %v3790 = vsel %vm3278, 1, 0
    %v3791 = vsel %vm3279, 1, 0
    %v3792 = vsel %vm3280, 1, 0
    %v3793 = vsel %vm3281, 1, 0
    %v3794 = vsel %vm3282, 1, 0
    %v3795 = vsel %vm3283, 1, 0
    %v3796 = vsel %vm3284, 1, 0
    %v3797 = vsel %vm3285, 1, 0
    %v3798 = vsel %vm3286, 1, 0
    %v3799 = vsel %vm3287, 1, 0
    %v3800 = vsel %vm3288, 1, 0
    %v3801 = vsel %vm3289, 1, 0
    %v3802 = vsel %vm3290, 1, 0
    %v3803 = vsel %vm3291, 1, 0
    %v3804 = vsel %vm3292, 1, 0
    %v3805 = vsel %vm3293, 1, 0
    %v3806 = vsel %vm3294, 1, 0
    %v3807 = vsel %vm3295, 1, 0
    %v3808 = vsel %vm3296, 1, 0
    %v3809 = vsel %vm3297, 1, 0
    %v3810 = vsel %vm3298, 1, 0
    %v3811 = vsel %vm3299, 1, 0
    %v3812 = vsel %vm3300, 1, 0
    %v3813 = vsel %vm3301, 1, 0
    %v3814 = vsel %vm3302, 1, 0
    %v3815 = vsel %vm3303, 1, 0
    %v3816 = vsel %vm3304, 1, 0
    %v3817 = vsel %vm3305, 1, 0
    %v3818 = vsel %vm3306, 1, 0
    %v3819 = vsel %vm3307, 1, 0
    %v3820 = vsel %vm3308, 1, 0
    %v3821 = vsel %vm3309, 1, 0
    %v3822 = vsel %vm3310, 1, 0
    %v3823 = vsel %vm3311, 1, 0
    %v3824 = vsel %vm3312, 1, 0
    %v3825 = vsel %vm3313, 1, 0
    %v3826 = vsel %vm3314, 1, 0
    %v3827 = vsel %vm3315, 1, 0
    %v3828 = vsel %vm3316, 1, 0
    %v3829 = vsel %vm3317, 1, 0
    %v3830 = vsel %vm3318, 1, 0
    %v3831 = vsel %vm3319, 1, 0
    %v3832 = vsel %vm3320, 1, 0
    %v3833 = vsel %vm3321, 1, 0
    %v3834 = vsel %vm3322, 1, 0
    %v3835 = vsel %vm3323, 1, 0
    %v3836 = vsel %vm3324, 1, 0
    %v3837 = vsel %vm3325, 1, 0
    %v3838 = vsel %vm3326, 1, 0
    %v3839 = vsel %vm3327, 1, 0
    %v3840 = vsel %vm3328, 1, 0
    %v3841 = vsel %vm3329, 1, 0
    %v3842 = vsel %vm3330, 1, 0
    %v3843 = vsel %vm3331, 1, 0
    %v3844 = vsel %vm3332, 1, 0
    %v3845 = vsel %vm3333, 1, 0
    %v3846 = vsel %vm3334, 1, 0
    %v3847 = vsel %vm3335, 1, 0
    %v3848 = vsel %vm3336, 1, 0
    %v3849 = vsel %vm3337, 1, 0
    %v3850 = vsel %vm3338, 1, 0
    %v3851 = vsel %vm3339, 1, 0
    %v3852 = vsel %vm3340, 1, 0
    %v3853 = vsel %vm3341, 1, 0
    %v3854 = vsel %vm3342, 1, 0
    %v3855 = vsel %vm3343, 1, 0
    %v3856 = vsel %vm3344, 1, 0
    %v3857 = vsel %vm3345, 1, 0
    %v3858 = vsel %vm3346, 1, 0
    %v3859 = vsel %vm3347, 1, 0
    %v3860 = vsel %vm3348, 1, 0
    %v3861 = vsel %vm3349, 1, 0
    %v3862 = vsel %vm3350, 1, 0
    %v3863 = vsel %vm3351, 1, 0
    %v3864 = vsel %vm3352, 1, 0
    %v3865 = vsel %vm3353, 1, 0
    %v3866 = vsel %vm3354, 1, 0
    %v3867 = vsel %vm3355, 1, 0
    %v3868 = vsel %vm3356, 1, 0
    %v3869 = vsel %vm3357, 1, 0
    %v3870 = vsel %vm3358, 1, 0
    %v3871 = vsel %vm3359, 1, 0
    %v3872 = vsel %vm3360, 1, 0
    %v3873 = vsel %vm3361, 1, 0
    %v3874 = vsel %vm3362, 1, 0
    %v3875 = vsel %vm3363, 1, 0
    %v3876 = vsel %vm3364, 1, 0
    %v3877 = vsel %vm3365, 1, 0
    %v3878 = vsel %vm3366, 1, 0
    %v3879 = vsel %vm3367, 1, 0
    %v3880 = vsel %vm3368, 1, 0
    %v3881 = vsel %vm3369, 1, 0
    %v3882 = vsel %vm3370, 1, 0
    %v3883 = vcvt.s32.f32 %v3371
    %v3884 = vcvt.s32.f32 %v3372
    %v3885 = vcvt.s32.f32 %v3373
    %v3886 = vcvt.s32.f32 %v3374
    %v3887 = vcvt.s32.f32 %v3375
    %v3888 = vcvt.s32.f32 %v3376
    %v3889 = vcvt.s32.f32 %v3377
    %v3890 = vcvt.s32.f32 %v3378
    %v3891 = vcvt.s32.f32 %v3379
    %v3892 = vcvt.s32.f32 %v3380
    %v3893 = vcvt.s32.f32 %v3381
    %v3894 = vcvt.s32.f32 %v3382
    %v3895 = vcvt.s32.f32 %v3383
    %v3896 = vcvt.s32.f32 %v3384
    %v3897 = vcvt.s32.f32 %v3385
    %v3898 = vcvt.s32.f32 %v3386
    %v3899 = vcvt.s32.f32 %v3387
    %v3900 = vcvt.s32.f32 %v3388
    %v3901 = vcvt.s32.f32 %v3389
    %v3902 = vcvt.s32.f32 %v3390
    %v3903 = vcvt.s32.f32 %v3391
    %v3904 = vcvt.s32.f32 %v3392
    %v3905 = vcvt.s32.f32 %v3393
    %v3906 = vcvt.s32.f32 %v3394
    %v3907 = vcvt.s32.f32 %v3395
    %v3908 = vcvt.s32.f32 %v3396
    %v3909 = vcvt.s32.f32 %v3397
    %v3910 = vcvt.s32.f32 %v3398
    %v3911 = vcvt.s32.f32 %v3399
    %v3912 = vcvt.s32.f32 %v3400
    %v3913 = vcvt.s32.f32 %v3401
    %v3914 = vcvt.s32.f32 %v3402
    %v3915 = vcvt.s32.f32 %v3403
    %v3916 = vcvt.s32.f32 %v3404
    %v3917 = vcvt.s32.f32 %v3405
    %v3918 = vcvt.s32.f32 %v3406
    %v3919 = vcvt.s32.f32 %v3407
    %v3920 = vcvt.s32.f32 %v3408
    %v3921 = vcvt.s32.f32 %v3409
    %v3922 = vcvt.s32.f32 %v3410
    %v3923 = vcvt.s32.f32 %v3411
    %v3924 = vcvt.s32.f32 %v3412
    %v3925 = vcvt.s32.f32 %v3413
    %v3926 = vcvt.s32.f32 %v3414
    %v3927 = vcvt.s32.f32 %v3415
    %v3928 = vcvt.s32.f32 %v3416
    %v3929 = vcvt.s32.f32 %v3417
    %v3930 = vcvt.s32.f32 %v3418
    %v3931 = vcvt.s32.f32 %v3419
    %v3932 = vcvt.s32.f32 %v3420
    %v3933 = vcvt.s32.f32 %v3421
    %v3934 = vcvt.s32.f32 %v3422
    %v3935 = vcvt.s32.f32 %v3423
    %v3936 = vcvt.s32.f32 %v3424
    %v3937 = vcvt.s32.f32 %v3425
    %v3938 = vcvt.s32.f32 %v3426
    %v3939 = vcvt.s32.f32 %v3427
    %v3940 = vcvt.s32.f32 %v3428
    %v3941 = vcvt.s32.f32 %v3429
    %v3942 = vcvt.s32.f32 %v3430
    %v3943 = vcvt.s32.f32 %v3431
    %v3944 = vcvt.s32.f32 %v3432
    %v3945 = vcvt.s32.f32 %v3433
    %v3946 = vcvt.s32.f32 %v3434
    %v3947 = vcvt.s32.f32 %v3435
    %v3948 = vcvt.s32.f32 %v3436
    %v3949 = vcvt.s32.f32 %v3437
    %v3950 = vcvt.s32.f32 %v3438
    %v3951 = vcvt.s32.f32 %v3439
    %v3952 = vcvt.s32.f32 %v3440
    %v3953 = vcvt.s32.f32 %v3441
    %v3954 = vcvt.s32.f32 %v3442
    %v3955 = vcvt.s32.f32 %v3443
    %v3956 = vcvt.s32.f32 %v3444
    %v3957 = vcvt.s32.f32 %v3445
    %v3958 = vcvt.s32.f32 %v3446
    %v3959 = vcvt.s32.f32 %v3447
    %v3960 = vcvt.s32.f32 %v3448
    %v3961 = vcvt.s32.f32 %v3449
    %v3962 = vcvt.s32.f32 %v3450
    %v3963 = vcvt.s32.f32 %v3451
    %v3964 = vcvt.s32.f32 %v3452
    %v3965 = vcvt.s32.f32 %v3453
    %v3966 = vcvt.s32.f32 %v3454
    %v3967 = vcvt.s32.f32 %v3455
    %v3968 = vcvt.s32.f32 %v3456
    %v3969 = vcvt.s32.f32 %v3457
    %v3970 = vcvt.s32.f32 %v3458
    %v3971 = vcvt.s32.f32 %v3459
    %v3972 = vcvt.s32.f32 %v3460
    %v3973 = vcvt.s32.f32 %v3461
    %v3974 = vcvt.s32.f32 %v3462
    %v3975 = vcvt.s32.f32 %v3463
    %v3976 = vcvt.s32.f32 %v3464
    %v3977 = vcvt.s32.f32 %v3465
    %v3978 = vcvt.s32.f32 %v3466
    %v3979 = vcvt.s32.f32 %v3467
    %v3980 = vcvt.s32.f32 %v3468
    %v3981 = vcvt.s32.f32 %v3469
    %v3982 = vcvt.s32.f32 %v3470
    %v3983 = vcvt.s32.f32 %v3471
    %v3984 = vcvt.s32.f32 %v3472
    %v3985 = vcvt.s32.f32 %v3473
    %v3986 = vcvt.s32.f32 %v3474
    %v3987 = vcvt.s32.f32 %v3475
    %v3988 = vcvt.s32.f32 %v3476
    %v3989 = vcvt.s32.f32 %v3477
    %v3990 = vcvt.s32.f32 %v3478
    %v3991 = vcvt.s32.f32 %v3479
    %v3992 = vcvt.s32.f32 %v3480
    %v3993 = vcvt.s32.f32 %v3481
    %v3994 = vcvt.s32.f32 %v3482
    %v3995 = vcvt.s32.f32 %v3483
    %v3996 = vcvt.s32.f32 %v3484
    %v3997 = vcvt.s32.f32 %v3485
    %v3998 = vcvt.s32.f32 %v3486
    %v3999 = vcvt.s32.f32 %v3487
    %v4000 = vcvt.s32.f32 %v3488
    %v4001 = vcvt.s32.f32 %v3489
    %v4002 = vcvt.s32.f32 %v3490
    %v4003 = vcvt.s32.f32 %v3491
    %v4004 = vcvt.s32.f32 %v3492
    %v4005 = vcvt.s32.f32 %v3493
    %v4006 = vcvt.s32.f32 %v3494
    %v4007 = vcvt.s32.f32 %v3495
    %v4008 = vcvt.s32.f32 %v3496
    %v4009 = vcvt.s32.f32 %v3497
    %v4010 = vcvt.s32.f32 %v3498
    %v4011 = vcvt.s32.f32 %v3499
    %v4012 = vcvt.s32.f32 %v3500
    %v4013 = vcvt.s32.f32 %v3501
    %v4014 = vcvt.s32.f32 %v3502
    %v4015 = vcvt.s32.f32 %v3503
    %v4016 = vcvt.s32.f32 %v3504
    %v4017 = vcvt.s32.f32 %v3505
    %v4018 = vcvt.s32.f32 %v3506
    %v4019 = vcvt.s32.f32 %v3507
    %v4020 = vcvt.s32.f32 %v3508
    %v4021 = vcvt.s32.f32 %v3509
    %v4022 = vcvt.s32.f32 %v3510
    %v4023 = vcvt.s32.f32 %v3511
    %v4024 = vcvt.s32.f32 %v3512
    %v4025 = vcvt.s32.f32 %v3513
    %v4026 = vcvt.s32.f32 %v3514
    %v4027 = vcvt.s32.f32 %v3515
    %v4028 = vcvt.s32.f32 %v3516
    %v4029 = vcvt.s32.f32 %v3517
    %v4030 = vcvt.s32.f32 %v3518
    %v4031 = vcvt.s32.f32 %v3519
    %v4032 = vcvt.s32.f32 %v3520
    %v4033 = vcvt.s32.f32 %v3521
    %v4034 = vcvt.s32.f32 %v3522
    %v4035 = vcvt.s32.f32 %v3523
    %v4036 = vcvt.s32.f32 %v3524
    %v4037 = vcvt.s32.f32 %v3525
    %v4038 = vcvt.s32.f32 %v3526
    %v4039 = vcvt.s32.f32 %v3527
    %v4040 = vcvt.s32.f32 %v3528
    %v4041 = vcvt.s32.f32 %v3529
    %v4042 = vcvt.s32.f32 %v3530
    %v4043 = vcvt.s32.f32 %v3531
    %v4044 = vcvt.s32.f32 %v3532
    %v4045 = vcvt.s32.f32 %v3533
    %v4046 = vcvt.s32.f32 %v3534
    %v4047 = vcvt.s32.f32 %v3535
    %v4048 = vcvt.s32.f32 %v3536
    %v4049 = vcvt.s32.f32 %v3537
    %v4050 = vcvt.s32.f32 %v3538
    %v4051 = vcvt.s32.f32 %v3539
    %v4052 = vcvt.s32.f32 %v3540
    %v4053 = vcvt.s32.f32 %v3541
    %v4054 = vcvt.s32.f32 %v3542
    %v4055 = vcvt.s32.f32 %v3543
    %v4056 = vcvt.s32.f32 %v3544
    %v4057 = vcvt.s32.f32 %v3545
    %v4058 = vcvt.s32.f32 %v3546
    %v4059 = vcvt.s32.f32 %v3547
    %v4060 = vcvt.s32.f32 %v3548
    %v4061 = vcvt.s32.f32 %v3549
    %v4062 = vcvt.s32.f32 %v3550
    %v4063 = vcvt.s32.f32 %v3551
    %v4064 = vcvt.s32.f32 %v3552
    %v4065 = vcvt.s32.f32 %v3553
    %v4066 = vcvt.s32.f32 %v3554
    %v4067 = vcvt.s32.f32 %v3555
    %v4068 = vcvt.s32.f32 %v3556
    %v4069 = vcvt.s32.f32 %v3557
    %v4070 = vcvt.s32.f32 %v3558
    %v4071 = vcvt.s32.f32 %v3559
    %v4072 = vcvt.s32.f32 %v3560
    %v4073 = vcvt.s32.f32 %v3561
    %v4074 = vcvt.s32.f32 %v3562
    %v4075 = vcvt.s32.f32 %v3563
    %v4076 = vcvt.s32.f32 %v3564
    %v4077 = vcvt.s32.f32 %v3565
    %v4078 = vcvt.s32.f32 %v3566
    %v4079 = vcvt.s32.f32 %v3567
    %v4080 = vcvt.s32.f32 %v3568
    %v4081 = vcvt.s32.f32 %v3569
    %v4082 = vcvt.s32.f32 %v3570
    %v4083 = vcvt.s32.f32 %v3571
    %v4084 = vcvt.s32.f32 %v3572
    %v4085 = vcvt.s32.f32 %v3573
    %v4086 = vcvt.s32.f32 %v3574
    %v4087 = vcvt.s32.f32 %v3575
    %v4088 = vcvt.s32.f32 %v3576
    %v4089 = vcvt.s32.f32 %v3577
    %v4090 = vcvt.s32.f32 %v3578
    %v4091 = vcvt.s32.f32 %v3579
    %v4092 = vcvt.s32.f32 %v3580
    %v4093 = vcvt.s32.f32 %v3581
    %v4094 = vcvt.s32.f32 %v3582
    %v4095 = vcvt.s32.f32 %v3583
    %v4096 = vcvt.s32.f32 %v3584
    %v4097 = vcvt.s32.f32 %v3585
    %v4098 = vcvt.s32.f32 %v3586
    %v4099 = vcvt.s32.f32 %v3587
    %v4100 = vcvt.s32.f32 %v3588
    %v4101 = vcvt.s32.f32 %v3589
    %v4102 = vcvt.s32.f32 %v3590
    %v4103 = vcvt.s32.f32 %v3591
    %v4104 = vcvt.s32.f32 %v3592
    %v4105 = vcvt.s32.f32 %v3593
    %v4106 = vcvt.s32.f32 %v3594
    %v4107 = vcvt.s32.f32 %v3595
    %v4108 = vcvt.s32.f32 %v3596
    %v4109 = vcvt.s32.f32 %v3597
    %v4110 = vcvt.s32.f32 %v3598
    %v4111 = vcvt.s32.f32 %v3599
    %v4112 = vcvt.s32.f32 %v3600
    %v4113 = vcvt.s32.f32 %v3601
    %v4114 = vcvt.s32.f32 %v3602
    %v4115 = vcvt.s32.f32 %v3603
    %v4116 = vcvt.s32.f32 %v3604
    %v4117 = vcvt.s32.f32 %v3605
    %v4118 = vcvt.s32.f32 %v3606
    %v4119 = vcvt.s32.f32 %v3607
    %v4120 = vcvt.s32.f32 %v3608
    %v4121 = vcvt.s32.f32 %v3609
    %v4122 = vcvt.s32.f32 %v3610
    %v4123 = vcvt.s32.f32 %v3611
    %v4124 = vcvt.s32.f32 %v3612
    %v4125 = vcvt.s32.f32 %v3613
    %v4126 = vcvt.s32.f32 %v3614
    %v4127 = vcvt.s32.f32 %v3615
    %v4128 = vcvt.s32.f32 %v3616
    %v4129 = vcvt.s32.f32 %v3617
    %v4130 = vcvt.s32.f32 %v3618
    %v4131 = vcvt.s32.f32 %v3619
    %v4132 = vcvt.s32.f32 %v3620
    %v4133 = vcvt.s32.f32 %v3621
    %v4134 = vcvt.s32.f32 %v3622
    %v4135 = vcvt.s32.f32 %v3623
    %v4136 = vcvt.s32.f32 %v3624
    %v4137 = vcvt.s32.f32 %v3625
    %v4138 = vcvt.s32.f32 %v3626
    %v4139 = vcvt.s32.f32 %v3627
    %v4140 = vcvt.s32.f32 %v3628
    %v4141 = vcvt.s32.f32 %v3629
    %v4142 = vcvt.s32.f32 %v3630
    %v4143 = vcvt.s32.f32 %v3631
    %v4144 = vcvt.s32.f32 %v3632
    %v4145 = vcvt.s32.f32 %v3633
    %v4146 = vcvt.s32.f32 %v3634
    %v4147 = vcvt.s32.f32 %v3635
    %v4148 = vcvt.s32.f32 %v3636
    %v4149 = vcvt.s32.f32 %v3637
    %v4150 = vcvt.s32.f32 %v3638
    %v4151 = vcvt.s32.f32 %v3639
    %v4152 = vcvt.s32.f32 %v3640
    %v4153 = vcvt.s32.f32 %v3641
    %v4154 = vcvt.s32.f32 %v3642
    %v4155 = vcvt.s32.f32 %v3643
    %v4156 = vcvt.s32.f32 %v3644
    %v4157 = vcvt.s32.f32 %v3645
    %v4158 = vcvt.s32.f32 %v3646
    %v4159 = vcvt.s32.f32 %v3647
    %v4160 = vcvt.s32.f32 %v3648
    %v4161 = vcvt.s32.f32 %v3649
    %v4162 = vcvt.s32.f32 %v3650
    %v4163 = vcvt.s32.f32 %v3651
    %v4164 = vcvt.s32.f32 %v3652
    %v4165 = vcvt.s32.f32 %v3653
    %v4166 = vcvt.s32.f32 %v3654
    %v4167 = vcvt.s32.f32 %v3655
    %v4168 = vcvt.s32.f32 %v3656
    %v4169 = vcvt.s32.f32 %v3657
    %v4170 = vcvt.s32.f32 %v3658
    %v4171 = vcvt.s32.f32 %v3659
    %v4172 = vcvt.s32.f32 %v3660
    %v4173 = vcvt.s32.f32 %v3661
    %v4174 = vcvt.s32.f32 %v3662
    %v4175 = vcvt.s32.f32 %v3663
    %v4176 = vcvt.s32.f32 %v3664
    %v4177 = vcvt.s32.f32 %v3665
    %v4178 = vcvt.s32.f32 %v3666
    %v4179 = vcvt.s32.f32 %v3667
    %v4180 = vcvt.s32.f32 %v3668
    %v4181 = vcvt.s32.f32 %v3669
    %v4182 = vcvt.s32.f32 %v3670
    %v4183 = vcvt.s32.f32 %v3671
    %v4184 = vcvt.s32.f32 %v3672
    %v4185 = vcvt.s32.f32 %v3673
    %v4186 = vcvt.s32.f32 %v3674
    %v4187 = vcvt.s32.f32 %v3675
    %v4188 = vcvt.s32.f32 %v3676
    %v4189 = vcvt.s32.f32 %v3677
    %v4190 = vcvt.s32.f32 %v3678
    %v4191 = vcvt.s32.f32 %v3679
    %v4192 = vcvt.s32.f32 %v3680
    %v4193 = vcvt.s32.f32 %v3681
    %v4194 = vcvt.s32.f32 %v3682
    %v4195 = vcvt.s32.f32 %v3683
    %v4196 = vcvt.s32.f32 %v3684
    %v4197 = vcvt.s32.f32 %v3685
    %v4198 = vcvt.s32.f32 %v3686
    %v4199 = vcvt.s32.f32 %v3687
    %v4200 = vcvt.s32.f32 %v3688
    %v4201 = vcvt.s32.f32 %v3689
    %v4202 = vcvt.s32.f32 %v3690
    %v4203 = vcvt.s32.f32 %v3691
    %v4204 = vcvt.s32.f32 %v3692
    %v4205 = vcvt.s32.f32 %v3693
    %v4206 = vcvt.s32.f32 %v3694
    %v4207 = vcvt.s32.f32 %v3695
    %v4208 = vcvt.s32.f32 %v3696
    %v4209 = vcvt.s32.f32 %v3697
    %v4210 = vcvt.s32.f32 %v3698
    %v4211 = vcvt.s32.f32 %v3699
    %v4212 = vcvt.s32.f32 %v3700
    %v4213 = vcvt.s32.f32 %v3701
    %v4214 = vcvt.s32.f32 %v3702
    %v4215 = vcvt.s32.f32 %v3703
    %v4216 = vcvt.s32.f32 %v3704
    %v4217 = vcvt.s32.f32 %v3705
    %v4218 = vcvt.s32.f32 %v3706
    %v4219 = vcvt.s32.f32 %v3707
    %v4220 = vcvt.s32.f32 %v3708
    %v4221 = vcvt.s32.f32 %v3709
    %v4222 = vcvt.s32.f32 %v3710
    %v4223 = vcvt.s32.f32 %v3711
    %v4224 = vcvt.s32.f32 %v3712
    %v4225 = vcvt.s32.f32 %v3713
    %v4226 = vcvt.s32.f32 %v3714
    %v4227 = vcvt.s32.f32 %v3715
    %v4228 = vcvt.s32.f32 %v3716
    %v4229 = vcvt.s32.f32 %v3717
    %v4230 = vcvt.s32.f32 %v3718
    %v4231 = vcvt.s32.f32 %v3719
    %v4232 = vcvt.s32.f32 %v3720
    %v4233 = vcvt.s32.f32 %v3721
    %v4234 = vcvt.s32.f32 %v3722
    %v4235 = vcvt.s32.f32 %v3723
    %v4236 = vcvt.s32.f32 %v3724
    %v4237 = vcvt.s32.f32 %v3725
    %v4238 = vcvt.s32.f32 %v3726
    %v4239 = vcvt.s32.f32 %v3727
    %v4240 = vcvt.s32.f32 %v3728
    %v4241 = vcvt.s32.f32 %v3729
    %v4242 = vcvt.s32.f32 %v3730
    %v4243 = vcvt.s32.f32 %v3731
    %v4244 = vcvt.s32.f32 %v3732
    %v4245 = vcvt.s32.f32 %v3733
    %v4246 = vcvt.s32.f32 %v3734
    %v4247 = vcvt.s32.f32 %v3735
    %v4248 = vcvt.s32.f32 %v3736
    %v4249 = vcvt.s32.f32 %v3737
    %v4250 = vcvt.s32.f32 %v3738
    %v4251 = vcvt.s32.f32 %v3739
    %v4252 = vcvt.s32.f32 %v3740
    %v4253 = vcvt.s32.f32 %v3741
    %v4254 = vcvt.s32.f32 %v3742
    %v4255 = vcvt.s32.f32 %v3743
    %v4256 = vcvt.s32.f32 %v3744
    %v4257 = vcvt.s32.f32 %v3745
    %v4258 = vcvt.s32.f32 %v3746
    %v4259 = vcvt.s32.f32 %v3747
    %v4260 = vcvt.s32.f32 %v3748
    %v4261 = vcvt.s32.f32 %v3749
    %v4262 = vcvt.s32.f32 %v3750
    %v4263 = vcvt.s32.f32 %v3751
    %v4264 = vcvt.s32.f32 %v3752
    %v4265 = vcvt.s32.f32 %v3753
    %v4266 = vcvt.s32.f32 %v3754
    %v4267 = vcvt.s32.f32 %v3755
    %v4268 = vcvt.s32.f32 %v3756
    %v4269 = vcvt.s32.f32 %v3757
    %v4270 = vcvt.s32.f32 %v3758
    %v4271 = vcvt.s32.f32 %v3759
    %v4272 = vcvt.s32.f32 %v3760
    %v4273 = vcvt.s32.f32 %v3761
    %v4274 = vcvt.s32.f32 %v3762
    %v4275 = vcvt.s32.f32 %v3763
    %v4276 = vcvt.s32.f32 %v3764
    %v4277 = vcvt.s32.f32 %v3765
    %v4278 = vcvt.s32.f32 %v3766
    %v4279 = vcvt.s32.f32 %v3767
    %v4280 = vcvt.s32.f32 %v3768
    %v4281 = vcvt.s32.f32 %v3769
    %v4282 = vcvt.s32.f32 %v3770
    %v4283 = vcvt.s32.f32 %v3771
    %v4284 = vcvt.s32.f32 %v3772
    %v4285 = vcvt.s32.f32 %v3773
    %v4286 = vcvt.s32.f32 %v3774
    %v4287 = vcvt.s32.f32 %v3775
    %v4288 = vcvt.s32.f32 %v3776
    %v4289 = vcvt.s32.f32 %v3777
    %v4290 = vcvt.s32.f32 %v3778
    %v4291 = vcvt.s32.f32 %v3779
    %v4292 = vcvt.s32.f32 %v3780
    %v4293 = vcvt.s32.f32 %v3781
    %v4294 = vcvt.s32.f32 %v3782
    %v4295 = vcvt.s32.f32 %v3783
    %v4296 = vcvt.s32.f32 %v3784
    %v4297 = vcvt.s32.f32 %v3785
    %v4298 = vcvt.s32.f32 %v3786
    %v4299 = vcvt.s32.f32 %v3787
    %v4300 = vcvt.s32.f32 %v3788
    %v4301 = vcvt.s32.f32 %v3789
    %v4302 = vcvt.s32.f32 %v3790
    %v4303 = vcvt.s32.f32 %v3791
    %v4304 = vcvt.s32.f32 %v3792
    %v4305 = vcvt.s32.f32 %v3793
    %v4306 = vcvt.s32.f32 %v3794
    %v4307 = vcvt.s32.f32 %v3795
    %v4308 = vcvt.s32.f32 %v3796
    %v4309 = vcvt.s32.f32 %v3797
    %v4310 = vcvt.s32.f32 %v3798
    %v4311 = vcvt.s32.f32 %v3799
    %v4312 = vcvt.s32.f32 %v3800
    %v4313 = vcvt.s32.f32 %v3801
    %v4314 = vcvt.s32.f32 %v3802
    %v4315 = vcvt.s32.f32 %v3803
    %v4316 = vcvt.s32.f32 %v3804
    %v4317 = vcvt.s32.f32 %v3805
    %v4318 = vcvt.s32.f32 %v3806
    %v4319 = vcvt.s32.f32 %v3807
    %v4320 = vcvt.s32.f32 %v3808
    %v4321 = vcvt.s32.f32 %v3809
    %v4322 = vcvt.s32.f32 %v3810
    %v4323 = vcvt.s32.f32 %v3811
    %v4324 = vcvt.s32.f32 %v3812
    %v4325 = vcvt.s32.f32 %v3813
    %v4326 = vcvt.s32.f32 %v3814
    %v4327 = vcvt.s32.f32 %v3815
    %v4328 = vcvt.s32.f32 %v3816
    %v4329 = vcvt.s32.f32 %v3817
    %v4330 = vcvt.s32.f32 %v3818
    %v4331 = vcvt.s32.f32 %v3819
    %v4332 = vcvt.s32.f32 %v3820
    %v4333 = vcvt.s32.f32 %v3821
    %v4334 = vcvt.s32.f32 %v3822
    %v4335 = vcvt.s32.f32 %v3823
    %v4336 = vcvt.s32.f32 %v3824
    %v4337 = vcvt.s32.f32 %v3825
    %v4338 = vcvt.s32.f32 %v3826
    %v4339 = vcvt.s32.f32 %v3827
    %v4340 = vcvt.s32.f32 %v3828
    %v4341 = vcvt.s32.f32 %v3829
    %v4342 = vcvt.s32.f32 %v3830
    %v4343 = vcvt.s32.f32 %v3831
    %v4344 = vcvt.s32.f32 %v3832
    %v4345 = vcvt.s32.f32 %v3833
    %v4346 = vcvt.s32.f32 %v3834
    %v4347 = vcvt.s32.f32 %v3835
    %v4348 = vcvt.s32.f32 %v3836
    %v4349 = vcvt.s32.f32 %v3837
    %v4350 = vcvt.s32.f32 %v3838
    %v4351 = vcvt.s32.f32 %v3839
    %v4352 = vcvt.s32.f32 %v3840
    %v4353 = vcvt.s32.f32 %v3841
    %v4354 = vcvt.s32.f32 %v3842
    %v4355 = vcvt.s32.f32 %v3843
    %v4356 = vcvt.s32.f32 %v3844
    %v4357 = vcvt.s32.f32 %v3845
    %v4358 = vcvt.s32.f32 %v3846
    %v4359 = vcvt.s32.f32 %v3847
    %v4360 = vcvt.s32.f32 %v3848
    %v4361 = vcvt.s32.f32 %v3849
    %v4362 = vcvt.s32.f32 %v3850
    %v4363 = vcvt.s32.f32 %v3851
    %v4364 = vcvt.s32.f32 %v3852
    %v4365 = vcvt.s32.f32 %v3853
    %v4366 = vcvt.s32.f32 %v3854
    %v4367 = vcvt.s32.f32 %v3855
    %v4368 = vcvt.s32.f32 %v3856
    %v4369 = vcvt.s32.f32 %v3857
    %v4370 = vcvt.s32.f32 %v3858
    %v4371 = vcvt.s32.f32 %v3859
    %v4372 = vcvt.s32.f32 %v3860
    %v4373 = vcvt.s32.f32 %v3861
    %v4374 = vcvt.s32.f32 %v3862
    %v4375 = vcvt.s32.f32 %v3863
    %v4376 = vcvt.s32.f32 %v3864
    %v4377 = vcvt.s32.f32 %v3865
    %v4378 = vcvt.s32.f32 %v3866
    %v4379 = vcvt.s32.f32 %v3867
    %v4380 = vcvt.s32.f32 %v3868
    %v4381 = vcvt.s32.f32 %v3869
    %v4382 = vcvt.s32.f32 %v3870
    %v4383 = vcvt.s32.f32 %v3871
    %v4384 = vcvt.s32.f32 %v3872
    %v4385 = vcvt.s32.f32 %v3873
    %v4386 = vcvt.s32.f32 %v3874
    %v4387 = vcvt.s32.f32 %v3875
    %v4388 = vcvt.s32.f32 %v3876
    %v4389 = vcvt.s32.f32 %v3877
    %v4390 = vcvt.s32.f32 %v3878
    %v4391 = vcvt.s32.f32 %v3879
    %v4392 = vcvt.s32.f32 %v3880
    %v4393 = vcvt.s32.f32 %v3881
    %v4394 = vcvt.s32.f32 %v3882
    %4395 = vmatprep.subr.mxu0 %v4124
    %4396 = vmatpush1.msra.mxu0 %v4123
    %4397 = vmatprep.subr.mxu0 %v4108
    %4398 = vmatpush1.msra.mxu0 %v4107
    %4399 = vmatprep.subr.mxu0 %v4092
    %4400 = vmatpush1.msra.mxu0 %v4091
    %4401 = vmatprep.subr.mxu0 %v4076
    %4402 = vmatpush1.msra.mxu0 %v4075
    %4403 = vmatprep.subr.mxu0 %v4060
    %4404 = vmatpush1.msra.mxu0 %v4059
    %4405 = vmatprep.subr.mxu0 %v4044
    %4406 = vmatpush1.msra.mxu0 %v4043
    %4407 = vmatprep.subr.mxu0 %v4028
    %4408 = vmatpush1.msra.mxu0 %v4027
    %4409 = vmatprep.subr.mxu0 %v4012
    %4410 = vmatpush1.msra.mxu0 %v4011
    %4411 = vmatprep.subr.mxu0 %v3996
    %4412 = vmatpush1.msra.mxu0 %v3995
    %4413 = vmatprep.subr.mxu0 %v3980
    %4414 = vmatpush1.msra.mxu0 %v3979
    %4415 = vmatprep.subr.mxu0 %v3964
    %4416 = vmatpush1.msra.mxu0 %v3963
    %4417 = vmatprep.subr.mxu0 %v3948
    %4418 = vmatpush1.msra.mxu0 %v3947
    %4419 = vmatprep.subr.mxu0 %v3932
    %4420 = vmatpush1.msra.mxu0 %v3931
    %4421 = vmatprep.subr.mxu0 %v3916
    %4422 = vmatpush1.msra.mxu0 %v3915
    %4423 = vmatprep.subr.mxu0 %v3900
    %4424 = vmatpush1.msra.mxu0 %v3899
    %4425 = vmatprep.subr.mxu0 %v3884
    %4426 = vmatpush1.msra.mxu0 %v3883
    %4427 = vmatprep.subr.mxu0 %v4380
    %4428 = vmatpush2.msra.mxu0 %v4379
    %4429 = vmatprep.subr.mxu0 %v4364
    %4430 = vmatpush2.msra.mxu0 %v4363
    %4431 = vmatprep.subr.mxu0 %v4348
    %4432 = vmatpush2.msra.mxu0 %v4347
    %4433 = vmatprep.subr.mxu0 %v4332
    %4434 = vmatpush2.msra.mxu0 %v4331
    %4435 = vmatprep.subr.mxu0 %v4316
    %4436 = vmatpush2.msra.mxu0 %v4315
    %4437 = vmatprep.subr.mxu0 %v4300
    %4438 = vmatpush2.msra.mxu0 %v4299
    %4439 = vmatprep.subr.mxu0 %v4284
    %4440 = vmatpush2.msra.mxu0 %v4283
    %4441 = vmatprep.subr.mxu0 %v4268
    %4442 = vmatpush2.msra.mxu0 %v4267
    %4443 = vmatprep.subr.mxu0 %v4252
    %4444 = vmatpush2.msra.mxu0 %v4251
    %4445 = vmatprep.subr.mxu0 %v4236
    %4446 = vmatpush2.msra.mxu0 %v4235
    %4447 = vmatprep.subr.mxu0 %v4220
    %4448 = vmatpush2.msra.mxu0 %v4219
    %4449 = vmatprep.subr.mxu0 %v4204
    %4450 = vmatpush2.msra.mxu0 %v4203
    %4451 = vmatprep.subr.mxu0 %v4188
    %4452 = vmatpush2.msra.mxu0 %v4187
    %4453 = vmatprep.subr.mxu0 %v4172
    %4454 = vmatpush2.msra.mxu0 %v4171
    %4455 = vmatprep.subr.mxu0 %v4156
    %4456 = vmatpush2.msra.mxu0 %v4155
    %4457 = vmatprep.subr.mxu0 %v4140
    %4458 = vmatpush2.msra.mxu0 %v4139
    %4459 = vmatprep.mubr.f32.mxu0 %v2563
    %4460 = vmatmul.mubr.f32.gmra.mxu0 %v2562
    %v4461 = vpop.f32.mrf.mxu0
    %v4462 = vadd.f32 0.0, %v4461
    %v4463 = vpop.f32.mrf.mxu0
    %v4464 = vadd.f32 0.0, %v4463
    %4465 = vmatprep.mubr.f32.mxu0 %v2565
    %4466 = vmatmul.mubr.f32.gmra.mxu0 %v2564
    %v4467 = vpop.f32.mrf.mxu0
    %v4468 = vadd.f32 0.0, %v4467
    %v4469 = vpop.f32.mrf.mxu0
    %v4470 = vadd.f32 0.0, %v4469
    %4471 = vdwg.mxu0
    %4472 = vmatprep.subr.mxu0 %v4126
    %4473 = vmatpush1.msra.mxu0 %v4125
    %4474 = vmatprep.subr.mxu0 %v4110
    %4475 = vmatpush1.msra.mxu0 %v4109
    %4476 = vmatprep.subr.mxu0 %v4094
    %4477 = vmatpush1.msra.mxu0 %v4093
    %4478 = vmatprep.subr.mxu0 %v4078
    %4479 = vmatpush1.msra.mxu0 %v4077
    %4480 = vmatprep.subr.mxu0 %v4062
    %4481 = vmatpush1.msra.mxu0 %v4061
    %4482 = vmatprep.subr.mxu0 %v4046
    %4483 = vmatpush1.msra.mxu0 %v4045
    %4484 = vmatprep.subr.mxu0 %v4030
    %4485 = vmatpush1.msra.mxu0 %v4029
    %4486 = vmatprep.subr.mxu0 %v4014
    %4487 = vmatpush1.msra.mxu0 %v4013
    %4488 = vmatprep.subr.mxu0 %v3998
    %4489 = vmatpush1.msra.mxu0 %v3997
    %4490 = vmatprep.subr.mxu0 %v3982
    %4491 = vmatpush1.msra.mxu0 %v3981
    %4492 = vmatprep.subr.mxu0 %v3966
    %4493 = vmatpush1.msra.mxu0 %v3965
    %4494 = vmatprep.subr.mxu0 %v3950
    %4495 = vmatpush1.msra.mxu0 %v3949
    %4496 = vmatprep.subr.mxu0 %v3934
    %4497 = vmatpush1.msra.mxu0 %v3933
    %4498 = vmatprep.subr.mxu0 %v3918
    %4499 = vmatpush1.msra.mxu0 %v3917
    %4500 = vmatprep.subr.mxu0 %v3902
    %4501 = vmatpush1.msra.mxu0 %v3901
    %4502 = vmatprep.subr.mxu0 %v3886
    %4503 = vmatpush1.msra.mxu0 %v3885
    %4504 = vmatprep.subr.mxu0 %v4382
    %4505 = vmatpush2.msra.mxu0 %v4381
    %4506 = vmatprep.subr.mxu0 %v4366
    %4507 = vmatpush2.msra.mxu0 %v4365
    %4508 = vmatprep.subr.mxu0 %v4350
    %4509 = vmatpush2.msra.mxu0 %v4349
    %4510 = vmatprep.subr.mxu0 %v4334
    %4511 = vmatpush2.msra.mxu0 %v4333
    %4512 = vmatprep.subr.mxu0 %v4318
    %4513 = vmatpush2.msra.mxu0 %v4317
    %4514 = vmatprep.subr.mxu0 %v4302
    %4515 = vmatpush2.msra.mxu0 %v4301
    %4516 = vmatprep.subr.mxu0 %v4286
    %4517 = vmatpush2.msra.mxu0 %v4285
    %4518 = vmatprep.subr.mxu0 %v4270
    %4519 = vmatpush2.msra.mxu0 %v4269
    %4520 = vmatprep.subr.mxu0 %v4254
    %4521 = vmatpush2.msra.mxu0 %v4253
    %4522 = vmatprep.subr.mxu0 %v4238
    %4523 = vmatpush2.msra.mxu0 %v4237
    %4524 = vmatprep.subr.mxu0 %v4222
    %4525 = vmatpush2.msra.mxu0 %v4221
    %4526 = vmatprep.subr.mxu0 %v4206
    %4527 = vmatpush2.msra.mxu0 %v4205
    %4528 = vmatprep.subr.mxu0 %v4190
    %4529 = vmatpush2.msra.mxu0 %v4189
    %4530 = vmatprep.subr.mxu0 %v4174
    %4531 = vmatpush2.msra.mxu0 %v4173
    %4532 = vmatprep.subr.mxu0 %v4158
    %4533 = vmatpush2.msra.mxu0 %v4157
    %4534 = vmatprep.subr.mxu0 %v4142
    %4535 = vmatpush2.msra.mxu0 %v4141
    %4536 = vmatprep.mubr.f32.mxu0 %v2563
    %4537 = vmatmul.mubr.f32.gmra.mxu0 %v2562
    %v4538 = vpop.f32.mrf.mxu0
    %v4539 = vadd.f32 0.0, %v4538
    %v4540 = vpop.f32.mrf.mxu0
    %v4541 = vadd.f32 0.0, %v4540
    %4542 = vmatprep.mubr.f32.mxu0 %v2565
    %4543 = vmatmul.mubr.f32.gmra.mxu0 %v2564
    %v4544 = vpop.f32.mrf.mxu0
    %v4545 = vadd.f32 0.0, %v4544
    %v4546 = vpop.f32.mrf.mxu0
    %v4547 = vadd.f32 0.0, %v4546
    %4548 = vdwg.mxu0
    %4549 = vmatprep.subr.mxu0 %v4128
    %4550 = vmatpush1.msra.mxu0 %v4127
    %4551 = vmatprep.subr.mxu0 %v4112
    %4552 = vmatpush1.msra.mxu0 %v4111
    %4553 = vmatprep.subr.mxu0 %v4096
    %4554 = vmatpush1.msra.mxu0 %v4095
    %4555 = vmatprep.subr.mxu0 %v4080
    %4556 = vmatpush1.msra.mxu0 %v4079
    %4557 = vmatprep.subr.mxu0 %v4064
    %4558 = vmatpush1.msra.mxu0 %v4063
    %4559 = vmatprep.subr.mxu0 %v4048
    %4560 = vmatpush1.msra.mxu0 %v4047
    %4561 = vmatprep.subr.mxu0 %v4032
    %4562 = vmatpush1.msra.mxu0 %v4031
    %4563 = vmatprep.subr.mxu0 %v4016
    %4564 = vmatpush1.msra.mxu0 %v4015
    %4565 = vmatprep.subr.mxu0 %v4000
    %4566 = vmatpush1.msra.mxu0 %v3999
    %4567 = vmatprep.subr.mxu0 %v3984
    %4568 = vmatpush1.msra.mxu0 %v3983
    %4569 = vmatprep.subr.mxu0 %v3968
    %4570 = vmatpush1.msra.mxu0 %v3967
    %4571 = vmatprep.subr.mxu0 %v3952
    %4572 = vmatpush1.msra.mxu0 %v3951
    %4573 = vmatprep.subr.mxu0 %v3936
    %4574 = vmatpush1.msra.mxu0 %v3935
    %4575 = vmatprep.subr.mxu0 %v3920
    %4576 = vmatpush1.msra.mxu0 %v3919
    %4577 = vmatprep.subr.mxu0 %v3904
    %4578 = vmatpush1.msra.mxu0 %v3903
    %4579 = vmatprep.subr.mxu0 %v3888
    %4580 = vmatpush1.msra.mxu0 %v3887
    %4581 = vmatprep.subr.mxu0 %v4384
    %4582 = vmatpush2.msra.mxu0 %v4383
    %4583 = vmatprep.subr.mxu0 %v4368
    %4584 = vmatpush2.msra.mxu0 %v4367
    %4585 = vmatprep.subr.mxu0 %v4352
    %4586 = vmatpush2.msra.mxu0 %v4351
    %4587 = vmatprep.subr.mxu0 %v4336
    %4588 = vmatpush2.msra.mxu0 %v4335
    %4589 = vmatprep.subr.mxu0 %v4320
    %4590 = vmatpush2.msra.mxu0 %v4319
    %4591 = vmatprep.subr.mxu0 %v4304
    %4592 = vmatpush2.msra.mxu0 %v4303
    %4593 = vmatprep.subr.mxu0 %v4288
    %4594 = vmatpush2.msra.mxu0 %v4287
    %4595 = vmatprep.subr.mxu0 %v4272
    %4596 = vmatpush2.msra.mxu0 %v4271
    %4597 = vmatprep.subr.mxu0 %v4256
    %4598 = vmatpush2.msra.mxu0 %v4255
    %4599 = vmatprep.subr.mxu0 %v4240
    %4600 = vmatpush2.msra.mxu0 %v4239
    %4601 = vmatprep.subr.mxu0 %v4224
    %4602 = vmatpush2.msra.mxu0 %v4223
    %4603 = vmatprep.subr.mxu0 %v4208
    %4604 = vmatpush2.msra.mxu0 %v4207
    %4605 = vmatprep.subr.mxu0 %v4192
    %4606 = vmatpush2.msra.mxu0 %v4191
    %4607 = vmatprep.subr.mxu0 %v4176
    %4608 = vmatpush2.msra.mxu0 %v4175
    %4609 = vmatprep.subr.mxu0 %v4160
    %4610 = vmatpush2.msra.mxu0 %v4159
    %4611 = vmatprep.subr.mxu0 %v4144
    %4612 = vmatpush2.msra.mxu0 %v4143
    %4613 = vmatprep.mubr.f32.mxu0 %v2563
    %4614 = vmatmul.mubr.f32.gmra.mxu0 %v2562
    %v4615 = vpop.f32.mrf.mxu0
    %v4616 = vadd.f32 0.0, %v4615
    %v4617 = vpop.f32.mrf.mxu0
    %v4618 = vadd.f32 0.0, %v4617
    %4619 = vmatprep.mubr.f32.mxu0 %v2565
    %4620 = vmatmul.mubr.f32.gmra.mxu0 %v2564
    %v4621 = vpop.f32.mrf.mxu0
    %v4622 = vadd.f32 0.0, %v4621
    %v4623 = vpop.f32.mrf.mxu0
    %v4624 = vadd.f32 0.0, %v4623
    %4625 = vdwg.mxu0
    %4626 = vmatprep.subr.mxu0 %v4130
    %4627 = vmatpush1.msra.mxu0 %v4129
    %4628 = vmatprep.subr.mxu0 %v4114
    %4629 = vmatpush1.msra.mxu0 %v4113
    %4630 = vmatprep.subr.mxu0 %v4098
    %4631 = vmatpush1.msra.mxu0 %v4097
    %4632 = vmatprep.subr.mxu0 %v4082
    %4633 = vmatpush1.msra.mxu0 %v4081
    %4634 = vmatprep.subr.mxu0 %v4066
    %4635 = vmatpush1.msra.mxu0 %v4065
    %4636 = vmatprep.subr.mxu0 %v4050
    %4637 = vmatpush1.msra.mxu0 %v4049
    %4638 = vmatprep.subr.mxu0 %v4034
    %4639 = vmatpush1.msra.mxu0 %v4033
    %4640 = vmatprep.subr.mxu0 %v4018
    %4641 = vmatpush1.msra.mxu0 %v4017
    %4642 = vmatprep.subr.mxu0 %v4002
    %4643 = vmatpush1.msra.mxu0 %v4001
    %4644 = vmatprep.subr.mxu0 %v3986
    %4645 = vmatpush1.msra.mxu0 %v3985
    %4646 = vmatprep.subr.mxu0 %v3970
    %4647 = vmatpush1.msra.mxu0 %v3969
    %4648 = vmatprep.subr.mxu0 %v3954
    %4649 = vmatpush1.msra.mxu0 %v3953
    %4650 = vmatprep.subr.mxu0 %v3938
    %4651 = vmatpush1.msra.mxu0 %v3937
    %4652 = vmatprep.subr.mxu0 %v3922
    %4653 = vmatpush1.msra.mxu0 %v3921
    %4654 = vmatprep.subr.mxu0 %v3906
    %4655 = vmatpush1.msra.mxu0 %v3905
    %4656 = vmatprep.subr.mxu0 %v3890
    %4657 = vmatpush1.msra.mxu0 %v3889
    %4658 = vmatprep.subr.mxu0 %v4386
    %4659 = vmatpush2.msra.mxu0 %v4385
    %4660 = vmatprep.subr.mxu0 %v4370
    %4661 = vmatpush2.msra.mxu0 %v4369
    %4662 = vmatprep.subr.mxu0 %v4354
    %4663 = vmatpush2.msra.mxu0 %v4353
    %4664 = vmatprep.subr.mxu0 %v4338
    %4665 = vmatpush2.msra.mxu0 %v4337
    %4666 = vmatprep.subr.mxu0 %v4322
    %4667 = vmatpush2.msra.mxu0 %v4321
    %4668 = vmatprep.subr.mxu0 %v4306
    %4669 = vmatpush2.msra.mxu0 %v4305
    %4670 = vmatprep.subr.mxu0 %v4290
    %4671 = vmatpush2.msra.mxu0 %v4289
    %4672 = vmatprep.subr.mxu0 %v4274
    %4673 = vmatpush2.msra.mxu0 %v4273
    %4674 = vmatprep.subr.mxu0 %v4258
    %4675 = vmatpush2.msra.mxu0 %v4257
    %4676 = vmatprep.subr.mxu0 %v4242
    %4677 = vmatpush2.msra.mxu0 %v4241
    %4678 = vmatprep.subr.mxu0 %v4226
    %4679 = vmatpush2.msra.mxu0 %v4225
    %4680 = vmatprep.subr.mxu0 %v4210
    %4681 = vmatpush2.msra.mxu0 %v4209
    %4682 = vmatprep.subr.mxu0 %v4194
    %4683 = vmatpush2.msra.mxu0 %v4193
    %4684 = vmatprep.subr.mxu0 %v4178
    %4685 = vmatpush2.msra.mxu0 %v4177
    %4686 = vmatprep.subr.mxu0 %v4162
    %4687 = vmatpush2.msra.mxu0 %v4161
    %4688 = vmatprep.subr.mxu0 %v4146
    %4689 = vmatpush2.msra.mxu0 %v4145
    %4690 = vmatprep.mubr.f32.mxu0 %v2563
    %4691 = vmatmul.mubr.f32.gmra.mxu0 %v2562
    %v4692 = vpop.f32.mrf.mxu0
    %v4693 = vadd.f32 0.0, %v4692
    %v4694 = vpop.f32.mrf.mxu0
    %v4695 = vadd.f32 0.0, %v4694
    %4696 = vmatprep.mubr.f32.mxu0 %v2565
    %4697 = vmatmul.mubr.f32.gmra.mxu0 %v2564
    %v4698 = vpop.f32.mrf.mxu0
    %v4699 = vadd.f32 0.0, %v4698
    %v4700 = vpop.f32.mrf.mxu0
    %v4701 = vadd.f32 0.0, %v4700
    %4702 = vdwg.mxu0
    %4703 = vmatprep.subr.mxu0 %v4132
    %4704 = vmatpush1.msra.mxu0 %v4131
    %4705 = vmatprep.subr.mxu0 %v4116
    %4706 = vmatpush1.msra.mxu0 %v4115
    %4707 = vmatprep.subr.mxu0 %v4100
    %4708 = vmatpush1.msra.mxu0 %v4099
    %4709 = vmatprep.subr.mxu0 %v4084
    %4710 = vmatpush1.msra.mxu0 %v4083
    %4711 = vmatprep.subr.mxu0 %v4068
    %4712 = vmatpush1.msra.mxu0 %v4067
    %4713 = vmatprep.subr.mxu0 %v4052
    %4714 = vmatpush1.msra.mxu0 %v4051
    %4715 = vmatprep.subr.mxu0 %v4036
    %4716 = vmatpush1.msra.mxu0 %v4035
    %4717 = vmatprep.subr.mxu0 %v4020
    %4718 = vmatpush1.msra.mxu0 %v4019
    %4719 = vmatprep.subr.mxu0 %v4004
    %4720 = vmatpush1.msra.mxu0 %v4003
    %4721 = vmatprep.subr.mxu0 %v3988
    %4722 = vmatpush1.msra.mxu0 %v3987
    %4723 = vmatprep.subr.mxu0 %v3972
    %4724 = vmatpush1.msra.mxu0 %v3971
    %4725 = vmatprep.subr.mxu0 %v3956
    %4726 = vmatpush1.msra.mxu0 %v3955
    %4727 = vmatprep.subr.mxu0 %v3940
    %4728 = vmatpush1.msra.mxu0 %v3939
    %4729 = vmatprep.subr.mxu0 %v3924
    %4730 = vmatpush1.msra.mxu0 %v3923
    %4731 = vmatprep.subr.mxu0 %v3908
    %4732 = vmatpush1.msra.mxu0 %v3907
    %4733 = vmatprep.subr.mxu0 %v3892
    %4734 = vmatpush1.msra.mxu0 %v3891
    %4735 = vmatprep.subr.mxu0 %v4388
    %4736 = vmatpush2.msra.mxu0 %v4387
    %4737 = vmatprep.subr.mxu0 %v4372
    %4738 = vmatpush2.msra.mxu0 %v4371
    %4739 = vmatprep.subr.mxu0 %v4356
    %4740 = vmatpush2.msra.mxu0 %v4355
    %4741 = vmatprep.subr.mxu0 %v4340
    %4742 = vmatpush2.msra.mxu0 %v4339
    %4743 = vmatprep.subr.mxu0 %v4324
    %4744 = vmatpush2.msra.mxu0 %v4323
    %4745 = vmatprep.subr.mxu0 %v4308
    %4746 = vmatpush2.msra.mxu0 %v4307
    %4747 = vmatprep.subr.mxu0 %v4292
    %4748 = vmatpush2.msra.mxu0 %v4291
    %4749 = vmatprep.subr.mxu0 %v4276
    %4750 = vmatpush2.msra.mxu0 %v4275
    %4751 = vmatprep.subr.mxu0 %v4260
    %4752 = vmatpush2.msra.mxu0 %v4259
    %4753 = vmatprep.subr.mxu0 %v4244
    %4754 = vmatpush2.msra.mxu0 %v4243
    %4755 = vmatprep.subr.mxu0 %v4228
    %4756 = vmatpush2.msra.mxu0 %v4227
    %4757 = vmatprep.subr.mxu0 %v4212
    %4758 = vmatpush2.msra.mxu0 %v4211
    %4759 = vmatprep.subr.mxu0 %v4196
    %4760 = vmatpush2.msra.mxu0 %v4195
    %4761 = vmatprep.subr.mxu0 %v4180
    %4762 = vmatpush2.msra.mxu0 %v4179
    %4763 = vmatprep.subr.mxu0 %v4164
    %4764 = vmatpush2.msra.mxu0 %v4163
    %4765 = vmatprep.subr.mxu0 %v4148
    %4766 = vmatpush2.msra.mxu0 %v4147
    %4767 = vmatprep.mubr.f32.mxu0 %v2563
    %4768 = vmatmul.mubr.f32.gmra.mxu0 %v2562
    %v4769 = vpop.f32.mrf.mxu0
    %v4770 = vadd.f32 0.0, %v4769
    %v4771 = vpop.f32.mrf.mxu0
    %v4772 = vadd.f32 0.0, %v4771
    %4773 = vmatprep.mubr.f32.mxu0 %v2565
    %4774 = vmatmul.mubr.f32.gmra.mxu0 %v2564
    %v4775 = vpop.f32.mrf.mxu0
    %v4776 = vadd.f32 0.0, %v4775
    %v4777 = vpop.f32.mrf.mxu0
    %v4778 = vadd.f32 0.0, %v4777
    %4779 = vdwg.mxu0
    %4780 = vmatprep.subr.mxu0 %v4134
    %4781 = vmatpush1.msra.mxu0 %v4133
    %4782 = vmatprep.subr.mxu0 %v4118
    %4783 = vmatpush1.msra.mxu0 %v4117
    %4784 = vmatprep.subr.mxu0 %v4102
    %4785 = vmatpush1.msra.mxu0 %v4101
    %4786 = vmatprep.subr.mxu0 %v4086
    %4787 = vmatpush1.msra.mxu0 %v4085
    %4788 = vmatprep.subr.mxu0 %v4070
    %4789 = vmatpush1.msra.mxu0 %v4069
    %4790 = vmatprep.subr.mxu0 %v4054
    %4791 = vmatpush1.msra.mxu0 %v4053
    %4792 = vmatprep.subr.mxu0 %v4038
    %4793 = vmatpush1.msra.mxu0 %v4037
    %4794 = vmatprep.subr.mxu0 %v4022
    %4795 = vmatpush1.msra.mxu0 %v4021
    %4796 = vmatprep.subr.mxu0 %v4006
    %4797 = vmatpush1.msra.mxu0 %v4005
    %4798 = vmatprep.subr.mxu0 %v3990
    %4799 = vmatpush1.msra.mxu0 %v3989
    %4800 = vmatprep.subr.mxu0 %v3974
    %4801 = vmatpush1.msra.mxu0 %v3973
    %4802 = vmatprep.subr.mxu0 %v3958
    %4803 = vmatpush1.msra.mxu0 %v3957
    %4804 = vmatprep.subr.mxu0 %v3942
    %4805 = vmatpush1.msra.mxu0 %v3941
    %4806 = vmatprep.subr.mxu0 %v3926
    %4807 = vmatpush1.msra.mxu0 %v3925
    %4808 = vmatprep.subr.mxu0 %v3910
    %4809 = vmatpush1.msra.mxu0 %v3909
    %4810 = vmatprep.subr.mxu0 %v3894
    %4811 = vmatpush1.msra.mxu0 %v3893
    %4812 = vmatprep.subr.mxu0 %v4390
    %4813 = vmatpush2.msra.mxu0 %v4389
    %4814 = vmatprep.subr.mxu0 %v4374
    %4815 = vmatpush2.msra.mxu0 %v4373
    %4816 = vmatprep.subr.mxu0 %v4358
    %4817 = vmatpush2.msra.mxu0 %v4357
    %4818 = vmatprep.subr.mxu0 %v4342
    %4819 = vmatpush2.msra.mxu0 %v4341
    %4820 = vmatprep.subr.mxu0 %v4326
    %4821 = vmatpush2.msra.mxu0 %v4325
    %4822 = vmatprep.subr.mxu0 %v4310
    %4823 = vmatpush2.msra.mxu0 %v4309
    %4824 = vmatprep.subr.mxu0 %v4294
    %4825 = vmatpush2.msra.mxu0 %v4293
    %4826 = vmatprep.subr.mxu0 %v4278
    %4827 = vmatpush2.msra.mxu0 %v4277
    %4828 = vmatprep.subr.mxu0 %v4262
    %4829 = vmatpush2.msra.mxu0 %v4261
    %4830 = vmatprep.subr.mxu0 %v4246
    %4831 = vmatpush2.msra.mxu0 %v4245
    %4832 = vmatprep.subr.mxu0 %v4230
    %4833 = vmatpush2.msra.mxu0 %v4229
    %4834 = vmatprep.subr.mxu0 %v4214
    %4835 = vmatpush2.msra.mxu0 %v4213
    %4836 = vmatprep.subr.mxu0 %v4198
    %4837 = vmatpush2.msra.mxu0 %v4197
    %4838 = vmatprep.subr.mxu0 %v4182
    %4839 = vmatpush2.msra.mxu0 %v4181
    %4840 = vmatprep.subr.mxu0 %v4166
    %4841 = vmatpush2.msra.mxu0 %v4165
    %4842 = vmatprep.subr.mxu0 %v4150
    %4843 = vmatpush2.msra.mxu0 %v4149
    %4844 = vmatprep.mubr.f32.mxu0 %v2563
    %4845 = vmatmul.mubr.f32.gmra.mxu0 %v2562
    %v4846 = vpop.f32.mrf.mxu0
    %v4847 = vadd.f32 0.0, %v4846
    %v4848 = vpop.f32.mrf.mxu0
    %v4849 = vadd.f32 0.0, %v4848
    %4850 = vmatprep.mubr.f32.mxu0 %v2565
    %4851 = vmatmul.mubr.f32.gmra.mxu0 %v2564
    %v4852 = vpop.f32.mrf.mxu0
    %v4853 = vadd.f32 0.0, %v4852
    %v4854 = vpop.f32.mrf.mxu0
    %v4855 = vadd.f32 0.0, %v4854
    %4856 = vdwg.mxu0
    %4857 = vmatprep.subr.mxu0 %v4136
    %4858 = vmatpush1.msra.mxu0 %v4135
    %4859 = vmatprep.subr.mxu0 %v4120
    %4860 = vmatpush1.msra.mxu0 %v4119
    %4861 = vmatprep.subr.mxu0 %v4104
    %4862 = vmatpush1.msra.mxu0 %v4103
    %4863 = vmatprep.subr.mxu0 %v4088
    %4864 = vmatpush1.msra.mxu0 %v4087
    %4865 = vmatprep.subr.mxu0 %v4072
    %4866 = vmatpush1.msra.mxu0 %v4071
    %4867 = vmatprep.subr.mxu0 %v4056
    %4868 = vmatpush1.msra.mxu0 %v4055
    %4869 = vmatprep.subr.mxu0 %v4040
    %4870 = vmatpush1.msra.mxu0 %v4039
    %4871 = vmatprep.subr.mxu0 %v4024
    %4872 = vmatpush1.msra.mxu0 %v4023
    %4873 = vmatprep.subr.mxu0 %v4008
    %4874 = vmatpush1.msra.mxu0 %v4007
    %4875 = vmatprep.subr.mxu0 %v3992
    %4876 = vmatpush1.msra.mxu0 %v3991
    %4877 = vmatprep.subr.mxu0 %v3976
    %4878 = vmatpush1.msra.mxu0 %v3975
    %4879 = vmatprep.subr.mxu0 %v3960
    %4880 = vmatpush1.msra.mxu0 %v3959
    %4881 = vmatprep.subr.mxu0 %v3944
    %4882 = vmatpush1.msra.mxu0 %v3943
    %4883 = vmatprep.subr.mxu0 %v3928
    %4884 = vmatpush1.msra.mxu0 %v3927
    %4885 = vmatprep.subr.mxu0 %v3912
    %4886 = vmatpush1.msra.mxu0 %v3911
    %4887 = vmatprep.subr.mxu0 %v3896
    %4888 = vmatpush1.msra.mxu0 %v3895
    %4889 = vmatprep.subr.mxu0 %v4392
    %4890 = vmatpush2.msra.mxu0 %v4391
    %4891 = vmatprep.subr.mxu0 %v4376
    %4892 = vmatpush2.msra.mxu0 %v4375
    %4893 = vmatprep.subr.mxu0 %v4360
    %4894 = vmatpush2.msra.mxu0 %v4359
    %4895 = vmatprep.subr.mxu0 %v4344
    %4896 = vmatpush2.msra.mxu0 %v4343
    %4897 = vmatprep.subr.mxu0 %v4328
    %4898 = vmatpush2.msra.mxu0 %v4327
    %4899 = vmatprep.subr.mxu0 %v4312
    %4900 = vmatpush2.msra.mxu0 %v4311
    %4901 = vmatprep.subr.mxu0 %v4296
    %4902 = vmatpush2.msra.mxu0 %v4295
    %4903 = vmatprep.subr.mxu0 %v4280
    %4904 = vmatpush2.msra.mxu0 %v4279
    %4905 = vmatprep.subr.mxu0 %v4264
    %4906 = vmatpush2.msra.mxu0 %v4263
    %4907 = vmatprep.subr.mxu0 %v4248
    %4908 = vmatpush2.msra.mxu0 %v4247
    %4909 = vmatprep.subr.mxu0 %v4232
    %4910 = vmatpush2.msra.mxu0 %v4231
    %4911 = vmatprep.subr.mxu0 %v4216
    %4912 = vmatpush2.msra.mxu0 %v4215
    %4913 = vmatprep.subr.mxu0 %v4200
    %4914 = vmatpush2.msra.mxu0 %v4199
    %4915 = vmatprep.subr.mxu0 %v4184
    %4916 = vmatpush2.msra.mxu0 %v4183
    %4917 = vmatprep.subr.mxu0 %v4168
    %4918 = vmatpush2.msra.mxu0 %v4167
    %4919 = vmatprep.subr.mxu0 %v4152
    %4920 = vmatpush2.msra.mxu0 %v4151
    %4921 = vmatprep.mubr.f32.mxu0 %v2563
    %4922 = vmatmul.mubr.f32.gmra.mxu0 %v2562
    %v4923 = vpop.f32.mrf.mxu0
    %v4924 = vadd.f32 0.0, %v4923
    %v4925 = vpop.f32.mrf.mxu0
    %v4926 = vadd.f32 0.0, %v4925
    %4927 = vmatprep.mubr.f32.mxu0 %v2565
    %4928 = vmatmul.mubr.f32.gmra.mxu0 %v2564
    %v4929 = vpop.f32.mrf.mxu0
    %v4930 = vadd.f32 0.0, %v4929
    %v4931 = vpop.f32.mrf.mxu0
    %v4932 = vadd.f32 0.0, %v4931
    %4933 = vdwg.mxu0
    %4934 = vmatprep.subr.mxu0 %v4138
    %4935 = vmatpush1.msra.mxu0 %v4137
    %4936 = vmatprep.subr.mxu0 %v4122
    %4937 = vmatpush1.msra.mxu0 %v4121
    %4938 = vmatprep.subr.mxu0 %v4106
    %4939 = vmatpush1.msra.mxu0 %v4105
    %4940 = vmatprep.subr.mxu0 %v4090
    %4941 = vmatpush1.msra.mxu0 %v4089
    %4942 = vmatprep.subr.mxu0 %v4074
    %4943 = vmatpush1.msra.mxu0 %v4073
    %4944 = vmatprep.subr.mxu0 %v4058
    %4945 = vmatpush1.msra.mxu0 %v4057
    %4946 = vmatprep.subr.mxu0 %v4042
    %4947 = vmatpush1.msra.mxu0 %v4041
    %4948 = vmatprep.subr.mxu0 %v4026
    %4949 = vmatpush1.msra.mxu0 %v4025
    %4950 = vmatprep.subr.mxu0 %v4010
    %4951 = vmatpush1.msra.mxu0 %v4009
    %4952 = vmatprep.subr.mxu0 %v3994
    %4953 = vmatpush1.msra.mxu0 %v3993
    %4954 = vmatprep.subr.mxu0 %v3978
    %4955 = vmatpush1.msra.mxu0 %v3977
    %4956 = vmatprep.subr.mxu0 %v3962
    %4957 = vmatpush1.msra.mxu0 %v3961
    %4958 = vmatprep.subr.mxu0 %v3946
    %4959 = vmatpush1.msra.mxu0 %v3945
    %4960 = vmatprep.subr.mxu0 %v3930
    %4961 = vmatpush1.msra.mxu0 %v3929
    %4962 = vmatprep.subr.mxu0 %v3914
    %4963 = vmatpush1.msra.mxu0 %v3913
    %4964 = vmatprep.subr.mxu0 %v3898
    %4965 = vmatpush1.msra.mxu0 %v3897
    %4966 = vmatprep.subr.mxu0 %v4394
    %4967 = vmatpush2.msra.mxu0 %v4393
    %4968 = vmatprep.subr.mxu0 %v4378
    %4969 = vmatpush2.msra.mxu0 %v4377
    %4970 = vmatprep.subr.mxu0 %v4362
    %4971 = vmatpush2.msra.mxu0 %v4361
    %4972 = vmatprep.subr.mxu0 %v4346
    %4973 = vmatpush2.msra.mxu0 %v4345
    %4974 = vmatprep.subr.mxu0 %v4330
    %4975 = vmatpush2.msra.mxu0 %v4329
    %4976 = vmatprep.subr.mxu0 %v4314
    %4977 = vmatpush2.msra.mxu0 %v4313
    %4978 = vmatprep.subr.mxu0 %v4298
    %4979 = vmatpush2.msra.mxu0 %v4297
    %4980 = vmatprep.subr.mxu0 %v4282
    %4981 = vmatpush2.msra.mxu0 %v4281
    %4982 = vmatprep.subr.mxu0 %v4266
    %4983 = vmatpush2.msra.mxu0 %v4265
    %4984 = vmatprep.subr.mxu0 %v4250
    %4985 = vmatpush2.msra.mxu0 %v4249
    %4986 = vmatprep.subr.mxu0 %v4234
    %4987 = vmatpush2.msra.mxu0 %v4233
    %4988 = vmatprep.subr.mxu0 %v4218
    %4989 = vmatpush2.msra.mxu0 %v4217
    %4990 = vmatprep.subr.mxu0 %v4202
    %4991 = vmatpush2.msra.mxu0 %v4201
    %4992 = vmatprep.subr.mxu0 %v4186
    %4993 = vmatpush2.msra.mxu0 %v4185
    %4994 = vmatprep.subr.mxu0 %v4170
    %4995 = vmatpush2.msra.mxu0 %v4169
    %4996 = vmatprep.subr.mxu0 %v4154
    %4997 = vmatpush2.msra.mxu0 %v4153
    %4998 = vmatprep.mubr.f32.mxu0 %v2563
    %4999 = vmatmul.mubr.f32.gmra.mxu0 %v2562
    %v5000 = vpop.f32.mrf.mxu0
    %v5001 = vadd.f32 0.0, %v5000
    %v5002 = vpop.f32.mrf.mxu0
    %v5003 = vadd.f32 0.0, %v5002
    %5004 = vmatprep.mubr.f32.mxu0 %v2565
    %5005 = vmatmul.mubr.f32.gmra.mxu0 %v2564
    %v5006 = vpop.f32.mrf.mxu0
    %v5007 = vadd.f32 0.0, %v5006
    %v5008 = vpop.f32.mrf.mxu0
    %v5009 = vadd.f32 0.0, %v5008
    %5010 = vdwg.mxu0
    %v5011 = vand.u32 2147483647, %v4462
    %v5012 = vand.u32 2147483647, %v4464
    %v5013 = vand.u32 2147483647, %v4539
    %v5014 = vand.u32 2147483647, %v4541
    %v5015 = vand.u32 2147483647, %v4616
    %v5016 = vand.u32 2147483647, %v4618
    %v5017 = vand.u32 2147483647, %v4693
    %v5018 = vand.u32 2147483647, %v4695
    %v5019 = vand.u32 2147483647, %v4770
    %v5020 = vand.u32 2147483647, %v4772
    %v5021 = vand.u32 2147483647, %v4847
    %v5022 = vand.u32 2147483647, %v4849
    %v5023 = vand.u32 2147483647, %v4924
    %v5024 = vand.u32 2147483647, %v4926
    %v5025 = vand.u32 2147483647, %v5001
    %v5026 = vand.u32 2147483647, %v5003
    %v5028 = vlaneseq
    %v5029 = vshrl.u32 %v5028, 7
    %v5030 = vsub.s32 0, %v5029
    %v5031 = vrot.slane %v86, %v5030
    %v5032 = vlaneseq
    %v5033 = vshrl.u32 %v5032, 7
    %v5034 = vsub.s32 4, %v5033
    %v5035 = vrot.slane %v86, %v5034
    %v5038 = vlaneseq
    %v5039 = vshrl.u32 %v5038, 7
    %v5040 = vsub.s32 1, %v5039
    %v5041 = vrot.slane %v86, %v5040
    %v5042 = vlaneseq
    %v5043 = vshrl.u32 %v5042, 7
    %v5044 = vsub.s32 5, %v5043
    %v5045 = vrot.slane %v86, %v5044
    %v5048 = vlaneseq
    %v5049 = vshrl.u32 %v5048, 7
    %v5050 = vsub.s32 2, %v5049
    %v5051 = vrot.slane %v86, %v5050
    %v5052 = vlaneseq
    %v5053 = vshrl.u32 %v5052, 7
    %v5054 = vsub.s32 6, %v5053
    %v5055 = vrot.slane %v86, %v5054
    %v5058 = vlaneseq
    %v5059 = vshrl.u32 %v5058, 7
    %v5060 = vsub.s32 0, %v5059
    %v5061 = vrot.slane %v5031, %v5060
    %v5062 = vlaneseq
    %v5063 = vshrl.u32 %v5062, 7
    %v5064 = vsub.s32 0, %v5063
    %v5065 = vrot.slane %v5035, %v5064
    %v5066 = vsub.f32 %v5061, %v4462
    %v5067 = vsub.f32 %v5065, %v4464
    %v5068 = vsub.f32 %v5061, %v4539
    %v5069 = vsub.f32 %v5065, %v4541
    %v5070 = vsub.f32 %v5061, %v4616
    %v5071 = vsub.f32 %v5065, %v4618
    %v5072 = vsub.f32 %v5061, %v4693
    %v5073 = vsub.f32 %v5065, %v4695
    %v5074 = vsub.f32 %v5061, %v4770
    %v5075 = vsub.f32 %v5065, %v4772
    %v5076 = vsub.f32 %v5061, %v4847
    %v5077 = vsub.f32 %v5065, %v4849
    %v5078 = vsub.f32 %v5061, %v4924
    %v5079 = vsub.f32 %v5065, %v4926
    %v5080 = vsub.f32 %v5061, %v5001
    %v5081 = vsub.f32 %v5065, %v5003
    %v5082 = vlaneseq
    %v5083 = vshrl.u32 %v5082, 7
    %v5084 = vsub.s32 1, %v5083
    %v5085 = vrot.slane %v5041, %v5084
    %v5086 = vlaneseq
    %v5087 = vshrl.u32 %v5086, 7
    %v5088 = vsub.s32 1, %v5087
    %v5089 = vrot.slane %v5045, %v5088
    %v5090 = vsub.f32 %v5085, %v4462
    %v5091 = vsub.f32 %v5089, %v4464
    %v5092 = vsub.f32 %v5085, %v4539
    %v5093 = vsub.f32 %v5089, %v4541
    %v5094 = vsub.f32 %v5085, %v4616
    %v5095 = vsub.f32 %v5089, %v4618
    %v5096 = vsub.f32 %v5085, %v4693
    %v5097 = vsub.f32 %v5089, %v4695
    %v5098 = vsub.f32 %v5085, %v4770
    %v5099 = vsub.f32 %v5089, %v4772
    %v5100 = vsub.f32 %v5085, %v4847
    %v5101 = vsub.f32 %v5089, %v4849
    %v5102 = vsub.f32 %v5085, %v4924
    %v5103 = vsub.f32 %v5089, %v4926
    %v5104 = vsub.f32 %v5085, %v5001
    %v5105 = vsub.f32 %v5089, %v5003
    %v5106 = vlaneseq
    %v5107 = vshrl.u32 %v5106, 7
    %v5108 = vsub.s32 2, %v5107
    %v5109 = vrot.slane %v5051, %v5108
    %v5110 = vlaneseq
    %v5111 = vshrl.u32 %v5110, 7
    %v5112 = vsub.s32 2, %v5111
    %v5113 = vrot.slane %v5055, %v5112
    %v5114 = vsub.f32 %v5109, %v4462
    %v5115 = vsub.f32 %v5113, %v4464
    %v5116 = vsub.f32 %v5109, %v4539
    %v5117 = vsub.f32 %v5113, %v4541
    %v5118 = vsub.f32 %v5109, %v4616
    %v5119 = vsub.f32 %v5113, %v4618
    %v5120 = vsub.f32 %v5109, %v4693
    %v5121 = vsub.f32 %v5113, %v4695
    %v5122 = vsub.f32 %v5109, %v4770
    %v5123 = vsub.f32 %v5113, %v4772
    %v5124 = vsub.f32 %v5109, %v4847
    %v5125 = vsub.f32 %v5113, %v4849
    %v5126 = vsub.f32 %v5109, %v4924
    %v5127 = vsub.f32 %v5113, %v4926
    %v5128 = vsub.f32 %v5109, %v5001
    %v5129 = vsub.f32 %v5113, %v5003
    %v5130 = vmul.f32 %v5066, %v5066
    %v5131 = vmul.f32 %v5067, %v5067
    %v5132 = vmul.f32 %v5068, %v5068
    %v5133 = vmul.f32 %v5069, %v5069
    %v5134 = vmul.f32 %v5070, %v5070
    %v5135 = vmul.f32 %v5071, %v5071
    %v5136 = vmul.f32 %v5072, %v5072
    %v5137 = vmul.f32 %v5073, %v5073
    %v5138 = vmul.f32 %v5074, %v5074
    %v5139 = vmul.f32 %v5075, %v5075
    %v5140 = vmul.f32 %v5076, %v5076
    %v5141 = vmul.f32 %v5077, %v5077
    %v5142 = vmul.f32 %v5078, %v5078
    %v5143 = vmul.f32 %v5079, %v5079
    %v5144 = vmul.f32 %v5080, %v5080
    %v5145 = vmul.f32 %v5081, %v5081
    %v5146 = vmul.f32 %v5090, %v5090
    %v5147 = vmul.f32 %v5091, %v5091
    %v5148 = vmul.f32 %v5092, %v5092
    %v5149 = vmul.f32 %v5093, %v5093
    %v5150 = vmul.f32 %v5094, %v5094
    %v5151 = vmul.f32 %v5095, %v5095
    %v5152 = vmul.f32 %v5096, %v5096
    %v5153 = vmul.f32 %v5097, %v5097
    %v5154 = vmul.f32 %v5098, %v5098
    %v5155 = vmul.f32 %v5099, %v5099
    %v5156 = vmul.f32 %v5100, %v5100
    %v5157 = vmul.f32 %v5101, %v5101
    %v5158 = vmul.f32 %v5102, %v5102
    %v5159 = vmul.f32 %v5103, %v5103
    %v5160 = vmul.f32 %v5104, %v5104
    %v5161 = vmul.f32 %v5105, %v5105
    %v5178 = vrot.slane %v5146, 2
    %v5179 = vrot.slane %v5147, 2
    %v5180 = vrot.slane %v5148, 2
    %v5181 = vrot.slane %v5149, 2
    %v5182 = vrot.slane %v5150, 2
    %v5183 = vrot.slane %v5151, 2
    %v5184 = vrot.slane %v5152, 2
    %v5185 = vrot.slane %v5153, 2
    %v5186 = vrot.slane %v5154, 2
    %v5187 = vrot.slane %v5155, 2
    %v5188 = vrot.slane %v5156, 2
    %v5189 = vrot.slane %v5157, 2
    %v5190 = vrot.slane %v5158, 2
    %v5191 = vrot.slane %v5159, 2
    %v5192 = vrot.slane %v5160, 2
    %v5193 = vrot.slane %v5161, 2
    %v5210 = vadd.f32 %v5130, %v5178
    %v5211 = vadd.f32 %v5131, %v5179
    %v5212 = vadd.f32 %v5132, %v5180
    %v5213 = vadd.f32 %v5133, %v5181
    %v5214 = vadd.f32 %v5134, %v5182
    %v5215 = vadd.f32 %v5135, %v5183
    %v5216 = vadd.f32 %v5136, %v5184
    %v5217 = vadd.f32 %v5137, %v5185
    %v5218 = vadd.f32 %v5138, %v5186
    %v5219 = vadd.f32 %v5139, %v5187
    %v5220 = vadd.f32 %v5140, %v5188
    %v5221 = vadd.f32 %v5141, %v5189
    %v5222 = vadd.f32 %v5142, %v5190
    %v5223 = vadd.f32 %v5143, %v5191
    %v5224 = vadd.f32 %v5144, %v5192
    %v5225 = vadd.f32 %v5145, %v5193
    %v5226 = vmul.f32 %v5114, %v5114
    %v5227 = vmul.f32 %v5115, %v5115
    %v5228 = vmul.f32 %v5116, %v5116
    %v5229 = vmul.f32 %v5117, %v5117
    %v5230 = vmul.f32 %v5118, %v5118
    %v5231 = vmul.f32 %v5119, %v5119
    %v5232 = vmul.f32 %v5120, %v5120
    %v5233 = vmul.f32 %v5121, %v5121
    %v5234 = vmul.f32 %v5122, %v5122
    %v5235 = vmul.f32 %v5123, %v5123
    %v5236 = vmul.f32 %v5124, %v5124
    %v5237 = vmul.f32 %v5125, %v5125
    %v5238 = vmul.f32 %v5126, %v5126
    %v5239 = vmul.f32 %v5127, %v5127
    %v5240 = vmul.f32 %v5128, %v5128
    %v5241 = vmul.f32 %v5129, %v5129
    %v5258 = vrot.slane %v5226, 4
    %v5259 = vrot.slane %v5227, 4
    %v5260 = vrot.slane %v5228, 4
    %v5261 = vrot.slane %v5229, 4
    %v5262 = vrot.slane %v5230, 4
    %v5263 = vrot.slane %v5231, 4
    %v5264 = vrot.slane %v5232, 4
    %v5265 = vrot.slane %v5233, 4
    %v5266 = vrot.slane %v5234, 4
    %v5267 = vrot.slane %v5235, 4
    %v5268 = vrot.slane %v5236, 4
    %v5269 = vrot.slane %v5237, 4
    %v5270 = vrot.slane %v5238, 4
    %v5271 = vrot.slane %v5239, 4
    %v5272 = vrot.slane %v5240, 4
    %v5273 = vrot.slane %v5241, 4
    %v5290 = vadd.f32 %v5210, %v5258
    %v5291 = vadd.f32 %v5211, %v5259
    %v5292 = vadd.f32 %v5212, %v5260
    %v5293 = vadd.f32 %v5213, %v5261
    %v5294 = vadd.f32 %v5214, %v5262
    %v5295 = vadd.f32 %v5215, %v5263
    %v5296 = vadd.f32 %v5216, %v5264
    %v5297 = vadd.f32 %v5217, %v5265
    %v5298 = vadd.f32 %v5218, %v5266
    %v5299 = vadd.f32 %v5219, %v5267
    %v5300 = vadd.f32 %v5220, %v5268
    %v5301 = vadd.f32 %v5221, %v5269
    %v5302 = vadd.f32 %v5222, %v5270
    %v5303 = vadd.f32 %v5223, %v5271
    %v5304 = vadd.f32 %v5224, %v5272
    %v5305 = vadd.f32 %v5225, %v5273
    %v5306 = vmul.f32 %v5011, 2.0
    %v5307 = vmul.f32 %v5012, 2.0
    %v5308 = vmul.f32 %v5013, 2.0
    %v5309 = vmul.f32 %v5014, 2.0
    %v5310 = vmul.f32 %v5015, 2.0
    %v5311 = vmul.f32 %v5016, 2.0
    %v5312 = vmul.f32 %v5017, 2.0
    %v5313 = vmul.f32 %v5018, 2.0
    %v5314 = vmul.f32 %v5019, 2.0
    %v5315 = vmul.f32 %v5020, 2.0
    %v5316 = vmul.f32 %v5021, 2.0
    %v5317 = vmul.f32 %v5022, 2.0
    %v5318 = vmul.f32 %v5023, 2.0
    %v5319 = vmul.f32 %v5024, 2.0
    %v5320 = vmul.f32 %v5025, 2.0
    %v5321 = vmul.f32 %v5026, 2.0
    %v5322 = vmul.f32 %v5306, %v5011
    %v5323 = vmul.f32 %v5307, %v5012
    %v5324 = vmul.f32 %v5308, %v5013
    %v5325 = vmul.f32 %v5309, %v5014
    %v5326 = vmul.f32 %v5310, %v5015
    %v5327 = vmul.f32 %v5311, %v5016
    %v5328 = vmul.f32 %v5312, %v5017
    %v5329 = vmul.f32 %v5313, %v5018
    %v5330 = vmul.f32 %v5314, %v5019
    %v5331 = vmul.f32 %v5315, %v5020
    %v5332 = vmul.f32 %v5316, %v5021
    %v5333 = vmul.f32 %v5317, %v5022
    %v5334 = vmul.f32 %v5318, %v5023
    %v5335 = vmul.f32 %v5319, %v5024
    %v5336 = vmul.f32 %v5320, %v5025
    %v5337 = vmul.f32 %v5321, %v5026
    %v5338 = vadd.f32 %v5322, 1e-07
    %v5339 = vadd.f32 %v5323, 1e-07
    %v5340 = vadd.f32 %v5324, 1e-07
    %v5341 = vadd.f32 %v5325, 1e-07
    %v5342 = vadd.f32 %v5326, 1e-07
    %v5343 = vadd.f32 %v5327, 1e-07
    %v5344 = vadd.f32 %v5328, 1e-07
    %v5345 = vadd.f32 %v5329, 1e-07
    %v5346 = vadd.f32 %v5330, 1e-07
    %v5347 = vadd.f32 %v5331, 1e-07
    %v5348 = vadd.f32 %v5332, 1e-07
    %v5349 = vadd.f32 %v5333, 1e-07
    %v5350 = vadd.f32 %v5334, 1e-07
    %v5351 = vadd.f32 %v5335, 1e-07
    %v5352 = vadd.f32 %v5336, 1e-07
    %v5353 = vadd.f32 %v5337, 1e-07
    %v5370 = vrot.slane %v5338, 6
    %v5371 = vrot.slane %v5339, 6
    %v5372 = vrot.slane %v5340, 6
    %v5373 = vrot.slane %v5341, 6
    %v5374 = vrot.slane %v5342, 6
    %v5375 = vrot.slane %v5343, 6
    %v5376 = vrot.slane %v5344, 6
    %v5377 = vrot.slane %v5345, 6
    %v5378 = vrot.slane %v5346, 6
    %v5379 = vrot.slane %v5347, 6
    %v5380 = vrot.slane %v5348, 6
    %v5381 = vrot.slane %v5349, 6
    %v5382 = vrot.slane %v5350, 6
    %v5383 = vrot.slane %v5351, 6
    %v5384 = vrot.slane %v5352, 6
    %v5385 = vrot.slane %v5353, 6
    %v5402 = vrcp.pop %v5370
    %v5403 = vmul.f32 %v5290, %v5402
    %v5404 = vrcp.pop %v5371
    %v5405 = vmul.f32 %v5291, %v5404
    %v5406 = vrcp.pop %v5372
    %v5407 = vmul.f32 %v5292, %v5406
    %v5408 = vrcp.pop %v5373
    %v5409 = vmul.f32 %v5293, %v5408
    %v5410 = vrcp.pop %v5374
    %v5411 = vmul.f32 %v5294, %v5410
    %v5412 = vrcp.pop %v5375
    %v5413 = vmul.f32 %v5295, %v5412
    %v5414 = vrcp.pop %v5376
    %v5415 = vmul.f32 %v5296, %v5414
    %v5416 = vrcp.pop %v5377
    %v5417 = vmul.f32 %v5297, %v5416
    %v5418 = vrcp.pop %v5378
    %v5419 = vmul.f32 %v5298, %v5418
    %v5420 = vrcp.pop %v5379
    %v5421 = vmul.f32 %v5299, %v5420
    %v5422 = vrcp.pop %v5380
    %v5423 = vmul.f32 %v5300, %v5422
    %v5424 = vrcp.pop %v5381
    %v5425 = vmul.f32 %v5301, %v5424
    %v5426 = vrcp.pop %v5382
    %v5427 = vmul.f32 %v5302, %v5426
    %v5428 = vrcp.pop %v5383
    %v5429 = vmul.f32 %v5303, %v5428
    %v5430 = vrcp.pop %v5384
    %v5431 = vmul.f32 %v5304, %v5430
    %v5432 = vrcp.pop %v5385
    %v5433 = vmul.f32 %v5305, %v5432
    %v5434 = vsub.f32 0.0, %v5403
    %v5435 = vsub.f32 0.0, %v5405
    %v5436 = vsub.f32 0.0, %v5407
    %v5437 = vsub.f32 0.0, %v5409
    %v5438 = vsub.f32 0.0, %v5411
    %v5439 = vsub.f32 0.0, %v5413
    %v5440 = vsub.f32 0.0, %v5415
    %v5441 = vsub.f32 0.0, %v5417
    %v5442 = vsub.f32 0.0, %v5419
    %v5443 = vsub.f32 0.0, %v5421
    %v5444 = vsub.f32 0.0, %v5423
    %v5445 = vsub.f32 0.0, %v5425
    %v5446 = vsub.f32 0.0, %v5427
    %v5447 = vsub.f32 0.0, %v5429
    %v5448 = vsub.f32 0.0, %v5431
    %v5449 = vsub.f32 0.0, %v5433
    %v5450 = vmul.f32 %v5434, 1.442695
    %v5451 = vpow.pop %v5450
    %v5452 = vmul.f32 %v5435, 1.442695
    %v5453 = vpow.pop %v5452
    %v5454 = vmul.f32 %v5436, 1.442695
    %v5455 = vpow.pop %v5454
    %v5456 = vmul.f32 %v5437, 1.442695
    %v5457 = vpow.pop %v5456
    %v5458 = vmul.f32 %v5438, 1.442695
    %v5459 = vpow.pop %v5458
    %v5460 = vmul.f32 %v5439, 1.442695
    %v5461 = vpow.pop %v5460
    %v5462 = vmul.f32 %v5440, 1.442695
    %v5463 = vpow.pop %v5462
    %v5464 = vmul.f32 %v5441, 1.442695
    %v5465 = vpow.pop %v5464
    %v5466 = vmul.f32 %v5442, 1.442695
    %v5467 = vpow.pop %v5466
    %v5468 = vmul.f32 %v5443, 1.442695
    %v5469 = vpow.pop %v5468
    %v5470 = vmul.f32 %v5444, 1.442695
    %v5471 = vpow.pop %v5470
    %v5472 = vmul.f32 %v5445, 1.442695
    %v5473 = vpow.pop %v5472
    %v5474 = vmul.f32 %v5446, 1.442695
    %v5475 = vpow.pop %v5474
    %v5476 = vmul.f32 %v5447, 1.442695
    %v5477 = vpow.pop %v5476
    %v5478 = vmul.f32 %v5448, 1.442695
    %v5479 = vpow.pop %v5478
    %v5480 = vmul.f32 %v5449, 1.442695
    %v5481 = vpow.pop %v5480
    %v5482 = vmul.f32 %v5011, 2.5066283
    %v5483 = vmul.f32 %v5012, 2.5066283
    %v5484 = vmul.f32 %v5013, 2.5066283
    %v5485 = vmul.f32 %v5014, 2.5066283
    %v5486 = vmul.f32 %v5015, 2.5066283
    %v5487 = vmul.f32 %v5016, 2.5066283
    %v5488 = vmul.f32 %v5017, 2.5066283
    %v5489 = vmul.f32 %v5018, 2.5066283
    %v5490 = vmul.f32 %v5019, 2.5066283
    %v5491 = vmul.f32 %v5020, 2.5066283
    %v5492 = vmul.f32 %v5021, 2.5066283
    %v5493 = vmul.f32 %v5022, 2.5066283
    %v5494 = vmul.f32 %v5023, 2.5066283
    %v5495 = vmul.f32 %v5024, 2.5066283
    %v5496 = vmul.f32 %v5025, 2.5066283
    %v5497 = vmul.f32 %v5026, 2.5066283
    %v5498 = vadd.f32 %v5482, 1e-07
    %v5499 = vadd.f32 %v5483, 1e-07
    %v5500 = vadd.f32 %v5484, 1e-07
    %v5501 = vadd.f32 %v5485, 1e-07
    %v5502 = vadd.f32 %v5486, 1e-07
    %v5503 = vadd.f32 %v5487, 1e-07
    %v5504 = vadd.f32 %v5488, 1e-07
    %v5505 = vadd.f32 %v5489, 1e-07
    %v5506 = vadd.f32 %v5490, 1e-07
    %v5507 = vadd.f32 %v5491, 1e-07
    %v5508 = vadd.f32 %v5492, 1e-07
    %v5509 = vadd.f32 %v5493, 1e-07
    %v5510 = vadd.f32 %v5494, 1e-07
    %v5511 = vadd.f32 %v5495, 1e-07
    %v5512 = vadd.f32 %v5496, 1e-07
    %v5513 = vadd.f32 %v5497, 1e-07
    %v5530 = vrot.slane %v5498, 6
    %v5531 = vrot.slane %v5499, 6
    %v5532 = vrot.slane %v5500, 6
    %v5533 = vrot.slane %v5501, 6
    %v5534 = vrot.slane %v5502, 6
    %v5535 = vrot.slane %v5503, 6
    %v5536 = vrot.slane %v5504, 6
    %v5537 = vrot.slane %v5505, 6
    %v5538 = vrot.slane %v5506, 6
    %v5539 = vrot.slane %v5507, 6
    %v5540 = vrot.slane %v5508, 6
    %v5541 = vrot.slane %v5509, 6
    %v5542 = vrot.slane %v5510, 6
    %v5543 = vrot.slane %v5511, 6
    %v5544 = vrot.slane %v5512, 6
    %v5545 = vrot.slane %v5513, 6
    %v5562 = vrcp.pop %v5530
    %v5563 = vmul.f32 %v5451, %v5562
    %v5564 = vrcp.pop %v5531
    %v5565 = vmul.f32 %v5453, %v5564
    %v5566 = vrcp.pop %v5532
    %v5567 = vmul.f32 %v5455, %v5566
    %v5568 = vrcp.pop %v5533
    %v5569 = vmul.f32 %v5457, %v5568
    %v5570 = vrcp.pop %v5534
    %v5571 = vmul.f32 %v5459, %v5570
    %v5572 = vrcp.pop %v5535
    %v5573 = vmul.f32 %v5461, %v5572
    %v5574 = vrcp.pop %v5536
    %v5575 = vmul.f32 %v5463, %v5574
    %v5576 = vrcp.pop %v5537
    %v5577 = vmul.f32 %v5465, %v5576
    %v5578 = vrcp.pop %v5538
    %v5579 = vmul.f32 %v5467, %v5578
    %v5580 = vrcp.pop %v5539
    %v5581 = vmul.f32 %v5469, %v5580
    %v5582 = vrcp.pop %v5540
    %v5583 = vmul.f32 %v5471, %v5582
    %v5584 = vrcp.pop %v5541
    %v5585 = vmul.f32 %v5473, %v5584
    %v5586 = vrcp.pop %v5542
    %v5587 = vmul.f32 %v5475, %v5586
    %v5588 = vrcp.pop %v5543
    %v5589 = vmul.f32 %v5477, %v5588
    %v5590 = vrcp.pop %v5544
    %v5591 = vmul.f32 %v5479, %v5590
    %v5592 = vrcp.pop %v5545
    %v5593 = vmul.f32 %v5481, %v5592
    %v5594 = vmul.f32 %v5011, %v5011
    %v5595 = vmul.f32 %v5012, %v5012
    %v5596 = vmul.f32 %v5013, %v5013
    %v5597 = vmul.f32 %v5014, %v5014
    %v5598 = vmul.f32 %v5015, %v5015
    %v5599 = vmul.f32 %v5016, %v5016
    %v5600 = vmul.f32 %v5017, %v5017
    %v5601 = vmul.f32 %v5018, %v5018
    %v5602 = vmul.f32 %v5019, %v5019
    %v5603 = vmul.f32 %v5020, %v5020
    %v5604 = vmul.f32 %v5021, %v5021
    %v5605 = vmul.f32 %v5022, %v5022
    %v5606 = vmul.f32 %v5023, %v5023
    %v5607 = vmul.f32 %v5024, %v5024
    %v5608 = vmul.f32 %v5025, %v5025
    %v5609 = vmul.f32 %v5026, %v5026
    %v5626 = vrot.slane %v5594, 6
    %v5627 = vrot.slane %v5595, 6
    %v5628 = vrot.slane %v5596, 6
    %v5629 = vrot.slane %v5597, 6
    %v5630 = vrot.slane %v5598, 6
    %v5631 = vrot.slane %v5599, 6
    %v5632 = vrot.slane %v5600, 6
    %v5633 = vrot.slane %v5601, 6
    %v5634 = vrot.slane %v5602, 6
    %v5635 = vrot.slane %v5603, 6
    %v5636 = vrot.slane %v5604, 6
    %v5637 = vrot.slane %v5605, 6
    %v5638 = vrot.slane %v5606, 6
    %v5639 = vrot.slane %v5607, 6
    %v5640 = vrot.slane %v5608, 6
    %v5641 = vrot.slane %v5609, 6
    %v5658 = vrcp.pop %v5626
    %v5659 = vmul.f32 %v5290, %v5658
    %v5660 = vrcp.pop %v5627
    %v5661 = vmul.f32 %v5291, %v5660
    %v5662 = vrcp.pop %v5628
    %v5663 = vmul.f32 %v5292, %v5662
    %v5664 = vrcp.pop %v5629
    %v5665 = vmul.f32 %v5293, %v5664
    %v5666 = vrcp.pop %v5630
    %v5667 = vmul.f32 %v5294, %v5666
    %v5668 = vrcp.pop %v5631
    %v5669 = vmul.f32 %v5295, %v5668
    %v5670 = vrcp.pop %v5632
    %v5671 = vmul.f32 %v5296, %v5670
    %v5672 = vrcp.pop %v5633
    %v5673 = vmul.f32 %v5297, %v5672
    %v5674 = vrcp.pop %v5634
    %v5675 = vmul.f32 %v5298, %v5674
    %v5676 = vrcp.pop %v5635
    %v5677 = vmul.f32 %v5299, %v5676
    %v5678 = vrcp.pop %v5636
    %v5679 = vmul.f32 %v5300, %v5678
    %v5680 = vrcp.pop %v5637
    %v5681 = vmul.f32 %v5301, %v5680
    %v5682 = vrcp.pop %v5638
    %v5683 = vmul.f32 %v5302, %v5682
    %v5684 = vrcp.pop %v5639
    %v5685 = vmul.f32 %v5303, %v5684
    %v5686 = vrcp.pop %v5640
    %v5687 = vmul.f32 %v5304, %v5686
    %v5688 = vrcp.pop %v5641
    %v5689 = vmul.f32 %v5305, %v5688
    %v5690 = vmul.f32 %v5659, 0.5
    %v5691 = vmul.f32 %v5661, 0.5
    %v5692 = vmul.f32 %v5663, 0.5
    %v5693 = vmul.f32 %v5665, 0.5
    %v5694 = vmul.f32 %v5667, 0.5
    %v5695 = vmul.f32 %v5669, 0.5
    %v5696 = vmul.f32 %v5671, 0.5
    %v5697 = vmul.f32 %v5673, 0.5
    %v5698 = vmul.f32 %v5675, 0.5
    %v5699 = vmul.f32 %v5677, 0.5
    %v5700 = vmul.f32 %v5679, 0.5
    %v5701 = vmul.f32 %v5681, 0.5
    %v5702 = vmul.f32 %v5683, 0.5
    %v5703 = vmul.f32 %v5685, 0.5
    %v5704 = vmul.f32 %v5687, 0.5
    %v5705 = vmul.f32 %v5689, 0.5
    %v5706 = vadd.f32 %v2706, 1e-07
    %v5707 = vadd.f32 %v2710, 1e-07
    %v5708 = vadd.f32 %v2717, 1e-07
    %v5709 = vadd.f32 %v2721, 1e-07
    %v5710 = vadd.f32 %v2728, 1e-07
    %v5711 = vadd.f32 %v2732, 1e-07
    %v5712 = vadd.f32 %v2739, 1e-07
    %v5713 = vadd.f32 %v2743, 1e-07
    %v5714 = vadd.f32 %v2750, 1e-07
    %v5715 = vadd.f32 %v2754, 1e-07
    %v5716 = vadd.f32 %v2761, 1e-07
    %v5717 = vadd.f32 %v2765, 1e-07
    %v5718 = vadd.f32 %v2772, 1e-07
    %v5719 = vadd.f32 %v2776, 1e-07
    %v5720 = vadd.f32 %v2783, 1e-07
    %v5721 = vadd.f32 %v2787, 1e-07
    %v5722 = vlog2.pop %v5706
    %v5723 = vmul.f32 %v5722, 0.6931472
    %v5724 = vlog2.pop %v5707
    %v5725 = vmul.f32 %v5724, 0.6931472
    %v5726 = vlog2.pop %v5708
    %v5727 = vmul.f32 %v5726, 0.6931472
    %v5728 = vlog2.pop %v5709
    %v5729 = vmul.f32 %v5728, 0.6931472
    %v5730 = vlog2.pop %v5710
    %v5731 = vmul.f32 %v5730, 0.6931472
    %v5732 = vlog2.pop %v5711
    %v5733 = vmul.f32 %v5732, 0.6931472
    %v5734 = vlog2.pop %v5712
    %v5735 = vmul.f32 %v5734, 0.6931472
    %v5736 = vlog2.pop %v5713
    %v5737 = vmul.f32 %v5736, 0.6931472
    %v5738 = vlog2.pop %v5714
    %v5739 = vmul.f32 %v5738, 0.6931472
    %v5740 = vlog2.pop %v5715
    %v5741 = vmul.f32 %v5740, 0.6931472
    %v5742 = vlog2.pop %v5716
    %v5743 = vmul.f32 %v5742, 0.6931472
    %v5744 = vlog2.pop %v5717
    %v5745 = vmul.f32 %v5744, 0.6931472
    %v5746 = vlog2.pop %v5718
    %v5747 = vmul.f32 %v5746, 0.6931472
    %v5748 = vlog2.pop %v5719
    %v5749 = vmul.f32 %v5748, 0.6931472
    %v5750 = vlog2.pop %v5720
    %v5751 = vmul.f32 %v5750, 0.6931472
    %v5752 = vlog2.pop %v5721
    %v5753 = vmul.f32 %v5752, 0.6931472
    %v5754 = vlaneseq
    %v5755 = vshrl.u32 %v5754, 7
    %v5756 = vsub.s32 0, %v5755
    %v5757 = vrot.slane %v5723, %v5756
    %v5758 = vlaneseq
    %v5759 = vshrl.u32 %v5758, 7
    %v5760 = vsub.s32 0, %v5759
    %v5761 = vrot.slane %v5725, %v5760
    %v5762 = vlaneseq
    %v5763 = vshrl.u32 %v5762, 7
    %v5764 = vsub.s32 0, %v5763
    %v5765 = vrot.slane %v5727, %v5764
    %v5766 = vlaneseq
    %v5767 = vshrl.u32 %v5766, 7
    %v5768 = vsub.s32 0, %v5767
    %v5769 = vrot.slane %v5729, %v5768
    %v5770 = vlaneseq
    %v5771 = vshrl.u32 %v5770, 7
    %v5772 = vsub.s32 0, %v5771
    %v5773 = vrot.slane %v5731, %v5772
    %v5774 = vlaneseq
    %v5775 = vshrl.u32 %v5774, 7
    %v5776 = vsub.s32 0, %v5775
    %v5777 = vrot.slane %v5733, %v5776
    %v5778 = vlaneseq
    %v5779 = vshrl.u32 %v5778, 7
    %v5780 = vsub.s32 0, %v5779
    %v5781 = vrot.slane %v5735, %v5780
    %v5782 = vlaneseq
    %v5783 = vshrl.u32 %v5782, 7
    %v5784 = vsub.s32 0, %v5783
    %v5785 = vrot.slane %v5737, %v5784
    %v5786 = vlaneseq
    %v5787 = vshrl.u32 %v5786, 7
    %v5788 = vsub.s32 0, %v5787
    %v5789 = vrot.slane %v5739, %v5788
    %v5790 = vlaneseq
    %v5791 = vshrl.u32 %v5790, 7
    %v5792 = vsub.s32 0, %v5791
    %v5793 = vrot.slane %v5741, %v5792
    %v5794 = vlaneseq
    %v5795 = vshrl.u32 %v5794, 7
    %v5796 = vsub.s32 0, %v5795
    %v5797 = vrot.slane %v5743, %v5796
    %v5798 = vlaneseq
    %v5799 = vshrl.u32 %v5798, 7
    %v5800 = vsub.s32 0, %v5799
    %v5801 = vrot.slane %v5745, %v5800
    %v5802 = vlaneseq
    %v5803 = vshrl.u32 %v5802, 7
    %v5804 = vsub.s32 0, %v5803
    %v5805 = vrot.slane %v5747, %v5804
    %v5806 = vlaneseq
    %v5807 = vshrl.u32 %v5806, 7
    %v5808 = vsub.s32 0, %v5807
    %v5809 = vrot.slane %v5749, %v5808
    %v5810 = vlaneseq
    %v5811 = vshrl.u32 %v5810, 7
    %v5812 = vsub.s32 0, %v5811
    %v5813 = vrot.slane %v5751, %v5812
    %v5814 = vlaneseq
    %v5815 = vshrl.u32 %v5814, 7
    %v5816 = vsub.s32 0, %v5815
    %v5817 = vrot.slane %v5753, %v5816
    %v5818 = vsub.f32 %v5690, %v5757
    %v5819 = vsub.f32 %v5691, %v5761
    %v5820 = vsub.f32 %v5692, %v5765
    %v5821 = vsub.f32 %v5693, %v5769
    %v5822 = vsub.f32 %v5694, %v5773
    %v5823 = vsub.f32 %v5695, %v5777
    %v5824 = vsub.f32 %v5696, %v5781
    %v5825 = vsub.f32 %v5697, %v5785
    %v5826 = vsub.f32 %v5698, %v5789
    %v5827 = vsub.f32 %v5699, %v5793
    %v5828 = vsub.f32 %v5700, %v5797
    %v5829 = vsub.f32 %v5701, %v5801
    %v5830 = vsub.f32 %v5702, %v5805
    %v5831 = vsub.f32 %v5703, %v5809
    %v5832 = vsub.f32 %v5704, %v5813
    %v5833 = vsub.f32 %v5705, %v5817
    %vm5834 = vcmask 1041408
    %v5835 = vsel %vm5834, %v5818, inf
    %v5836 = vrot.slane %v5835, 4
    %v5837 = vmin.f32 %v5835, %v5836
    %v5838 = vrot.slane %v5837, 2
    %v5839 = vmin.f32 %v5837, %v5838
    %v5840 = vrot.slane %v5839, 1
    %v5841 = vmin.f32 %v5839, %v5840
    %v5842 = vsel %vm5834, %v5819, inf
    %v5843 = vrot.slane %v5842, 4
    %v5844 = vmin.f32 %v5842, %v5843
    %v5845 = vrot.slane %v5844, 2
    %v5846 = vmin.f32 %v5844, %v5845
    %v5847 = vrot.slane %v5846, 1
    %v5848 = vmin.f32 %v5846, %v5847
    %v5849 = vsel %vm5834, %v5820, inf
    %v5850 = vrot.slane %v5849, 4
    %v5851 = vmin.f32 %v5849, %v5850
    %v5852 = vrot.slane %v5851, 2
    %v5853 = vmin.f32 %v5851, %v5852
    %v5854 = vrot.slane %v5853, 1
    %v5855 = vmin.f32 %v5853, %v5854
    %v5856 = vsel %vm5834, %v5821, inf
    %v5857 = vrot.slane %v5856, 4
    %v5858 = vmin.f32 %v5856, %v5857
    %v5859 = vrot.slane %v5858, 2
    %v5860 = vmin.f32 %v5858, %v5859
    %v5861 = vrot.slane %v5860, 1
    %v5862 = vmin.f32 %v5860, %v5861
    %v5863 = vsel %vm5834, %v5822, inf
    %v5864 = vrot.slane %v5863, 4
    %v5865 = vmin.f32 %v5863, %v5864
    %v5866 = vrot.slane %v5865, 2
    %v5867 = vmin.f32 %v5865, %v5866
    %v5868 = vrot.slane %v5867, 1
    %v5869 = vmin.f32 %v5867, %v5868
    %v5870 = vsel %vm5834, %v5823, inf
    %v5871 = vrot.slane %v5870, 4
    %v5872 = vmin.f32 %v5870, %v5871
    %v5873 = vrot.slane %v5872, 2
    %v5874 = vmin.f32 %v5872, %v5873
    %v5875 = vrot.slane %v5874, 1
    %v5876 = vmin.f32 %v5874, %v5875
    %v5877 = vsel %vm5834, %v5824, inf
    %v5878 = vrot.slane %v5877, 4
    %v5879 = vmin.f32 %v5877, %v5878
    %v5880 = vrot.slane %v5879, 2
    %v5881 = vmin.f32 %v5879, %v5880
    %v5882 = vrot.slane %v5881, 1
    %v5883 = vmin.f32 %v5881, %v5882
    %v5884 = vsel %vm5834, %v5825, inf
    %v5885 = vrot.slane %v5884, 4
    %v5886 = vmin.f32 %v5884, %v5885
    %v5887 = vrot.slane %v5886, 2
    %v5888 = vmin.f32 %v5886, %v5887
    %v5889 = vrot.slane %v5888, 1
    %v5890 = vmin.f32 %v5888, %v5889
    %v5891 = vsel %vm5834, %v5826, inf
    %v5892 = vrot.slane %v5891, 4
    %v5893 = vmin.f32 %v5891, %v5892
    %v5894 = vrot.slane %v5893, 2
    %v5895 = vmin.f32 %v5893, %v5894
    %v5896 = vrot.slane %v5895, 1
    %v5897 = vmin.f32 %v5895, %v5896
    %v5898 = vsel %vm5834, %v5827, inf
    %v5899 = vrot.slane %v5898, 4
    %v5900 = vmin.f32 %v5898, %v5899
    %v5901 = vrot.slane %v5900, 2
    %v5902 = vmin.f32 %v5900, %v5901
    %v5903 = vrot.slane %v5902, 1
    %v5904 = vmin.f32 %v5902, %v5903
    %v5905 = vsel %vm5834, %v5828, inf
    %v5906 = vrot.slane %v5905, 4
    %v5907 = vmin.f32 %v5905, %v5906
    %v5908 = vrot.slane %v5907, 2
    %v5909 = vmin.f32 %v5907, %v5908
    %v5910 = vrot.slane %v5909, 1
    %v5911 = vmin.f32 %v5909, %v5910
    %v5912 = vsel %vm5834, %v5829, inf
    %v5913 = vrot.slane %v5912, 4
    %v5914 = vmin.f32 %v5912, %v5913
    %v5915 = vrot.slane %v5914, 2
    %v5916 = vmin.f32 %v5914, %v5915
    %v5917 = vrot.slane %v5916, 1
    %v5918 = vmin.f32 %v5916, %v5917
    %v5919 = vsel %vm5834, %v5830, inf
    %v5920 = vrot.slane %v5919, 4
    %v5921 = vmin.f32 %v5919, %v5920
    %v5922 = vrot.slane %v5921, 2
    %v5923 = vmin.f32 %v5921, %v5922
    %v5924 = vrot.slane %v5923, 1
    %v5925 = vmin.f32 %v5923, %v5924
    %v5926 = vsel %vm5834, %v5831, inf
    %v5927 = vrot.slane %v5926, 4
    %v5928 = vmin.f32 %v5926, %v5927
    %v5929 = vrot.slane %v5928, 2
    %v5930 = vmin.f32 %v5928, %v5929
    %v5931 = vrot.slane %v5930, 1
    %v5932 = vmin.f32 %v5930, %v5931
    %v5933 = vsel %vm5834, %v5832, inf
    %v5934 = vrot.slane %v5933, 4
    %v5935 = vmin.f32 %v5933, %v5934
    %v5936 = vrot.slane %v5935, 2
    %v5937 = vmin.f32 %v5935, %v5936
    %v5938 = vrot.slane %v5937, 1
    %v5939 = vmin.f32 %v5937, %v5938
    %v5940 = vsel %vm5834, %v5833, inf
    %v5941 = vrot.slane %v5940, 4
    %v5942 = vmin.f32 %v5940, %v5941
    %v5943 = vrot.slane %v5942, 2
    %v5944 = vmin.f32 %v5942, %v5943
    %v5945 = vrot.slane %v5944, 1
    %v5946 = vmin.f32 %v5944, %v5945
    %v5947 = vmin.f32 %v5841, %v5855
    %v5948 = vmin.f32 %v5848, %v5862
    %v5949 = vmin.f32 %v5947, %v5869
    %v5950 = vmin.f32 %v5948, %v5876
    %v5951 = vmin.f32 %v5949, %v5883
    %v5952 = vmin.f32 %v5950, %v5890
    %v5953 = vmin.f32 %v5951, %v5897
    %v5954 = vmin.f32 %v5952, %v5904
    %v5955 = vmin.f32 %v5953, %v5911
    %v5956 = vmin.f32 %v5954, %v5918
    %v5957 = vmin.f32 %v5955, %v5925
    %v5958 = vmin.f32 %v5956, %v5932
    %v5959 = vmin.f32 %v5957, %v5939
    %v5960 = vmin.f32 %v5958, %v5946
    %v5961 = vmul.f32 %v4468, %v5563
    %v5962 = vmul.f32 %v4470, %v5565
    %v5963 = vmul.f32 %v4545, %v5567
    %v5964 = vmul.f32 %v4547, %v5569
    %v5965 = vmul.f32 %v4622, %v5571
    %v5966 = vmul.f32 %v4624, %v5573
    %v5967 = vmul.f32 %v4699, %v5575
    %v5968 = vmul.f32 %v4701, %v5577
    %v5969 = vmul.f32 %v4776, %v5579
    %v5970 = vmul.f32 %v4778, %v5581
    %v5971 = vmul.f32 %v4853, %v5583
    %v5972 = vmul.f32 %v4855, %v5585
    %v5973 = vmul.f32 %v4930, %v5587
    %v5974 = vmul.f32 %v4932, %v5589
    %v5975 = vmul.f32 %v5007, %v5591
    %v5976 = vmul.f32 %v5009, %v5593
    %v5977 = vsel %vm5834, %v5961, 0.0
    %v5978 = vrot.slane %v5977, 4
    %v5979 = vadd.f32 %v5977, %v5978
    %v5980 = vrot.slane %v5979, 2
    %v5981 = vadd.f32 %v5979, %v5980
    %v5982 = vrot.slane %v5981, 1
    %v5983 = vadd.f32 %v5981, %v5982
    %v5984 = vsel %vm5834, %v5962, 0.0
    %v5985 = vrot.slane %v5984, 4
    %v5986 = vadd.f32 %v5984, %v5985
    %v5987 = vrot.slane %v5986, 2
    %v5988 = vadd.f32 %v5986, %v5987
    %v5989 = vrot.slane %v5988, 1
    %v5990 = vadd.f32 %v5988, %v5989
    %v5991 = vsel %vm5834, %v5963, 0.0
    %v5992 = vrot.slane %v5991, 4
    %v5993 = vadd.f32 %v5991, %v5992
    %v5994 = vrot.slane %v5993, 2
    %v5995 = vadd.f32 %v5993, %v5994
    %v5996 = vrot.slane %v5995, 1
    %v5997 = vadd.f32 %v5995, %v5996
    %v5998 = vsel %vm5834, %v5964, 0.0
    %v5999 = vrot.slane %v5998, 4
    %v6000 = vadd.f32 %v5998, %v5999
    %v6001 = vrot.slane %v6000, 2
    %v6002 = vadd.f32 %v6000, %v6001
    %v6003 = vrot.slane %v6002, 1
    %v6004 = vadd.f32 %v6002, %v6003
    %v6005 = vsel %vm5834, %v5965, 0.0
    %v6006 = vrot.slane %v6005, 4
    %v6007 = vadd.f32 %v6005, %v6006
    %v6008 = vrot.slane %v6007, 2
    %v6009 = vadd.f32 %v6007, %v6008
    %v6010 = vrot.slane %v6009, 1
    %v6011 = vadd.f32 %v6009, %v6010
    %v6012 = vsel %vm5834, %v5966, 0.0
    %v6013 = vrot.slane %v6012, 4
    %v6014 = vadd.f32 %v6012, %v6013
    %v6015 = vrot.slane %v6014, 2
    %v6016 = vadd.f32 %v6014, %v6015
    %v6017 = vrot.slane %v6016, 1
    %v6018 = vadd.f32 %v6016, %v6017
    %v6019 = vsel %vm5834, %v5967, 0.0
    %v6020 = vrot.slane %v6019, 4
    %v6021 = vadd.f32 %v6019, %v6020
    %v6022 = vrot.slane %v6021, 2
    %v6023 = vadd.f32 %v6021, %v6022
    %v6024 = vrot.slane %v6023, 1
    %v6025 = vadd.f32 %v6023, %v6024
    %v6026 = vsel %vm5834, %v5968, 0.0
    %v6027 = vrot.slane %v6026, 4
    %v6028 = vadd.f32 %v6026, %v6027
    %v6029 = vrot.slane %v6028, 2
    %v6030 = vadd.f32 %v6028, %v6029
    %v6031 = vrot.slane %v6030, 1
    %v6032 = vadd.f32 %v6030, %v6031
    %v6033 = vsel %vm5834, %v5969, 0.0
    %v6034 = vrot.slane %v6033, 4
    %v6035 = vadd.f32 %v6033, %v6034
    %v6036 = vrot.slane %v6035, 2
    %v6037 = vadd.f32 %v6035, %v6036
    %v6038 = vrot.slane %v6037, 1
    %v6039 = vadd.f32 %v6037, %v6038
    %v6040 = vsel %vm5834, %v5970, 0.0
    %v6041 = vrot.slane %v6040, 4
    %v6042 = vadd.f32 %v6040, %v6041
    %v6043 = vrot.slane %v6042, 2
    %v6044 = vadd.f32 %v6042, %v6043
    %v6045 = vrot.slane %v6044, 1
    %v6046 = vadd.f32 %v6044, %v6045
    %v6047 = vsel %vm5834, %v5971, 0.0
    %v6048 = vrot.slane %v6047, 4
    %v6049 = vadd.f32 %v6047, %v6048
    %v6050 = vrot.slane %v6049, 2
    %v6051 = vadd.f32 %v6049, %v6050
    %v6052 = vrot.slane %v6051, 1
    %v6053 = vadd.f32 %v6051, %v6052
    %v6054 = vsel %vm5834, %v5972, 0.0
    %v6055 = vrot.slane %v6054, 4
    %v6056 = vadd.f32 %v6054, %v6055
    %v6057 = vrot.slane %v6056, 2
    %v6058 = vadd.f32 %v6056, %v6057
    %v6059 = vrot.slane %v6058, 1
    %v6060 = vadd.f32 %v6058, %v6059
    %v6061 = vsel %vm5834, %v5973, 0.0
    %v6062 = vrot.slane %v6061, 4
    %v6063 = vadd.f32 %v6061, %v6062
    %v6064 = vrot.slane %v6063, 2
    %v6065 = vadd.f32 %v6063, %v6064
    %v6066 = vrot.slane %v6065, 1
    %v6067 = vadd.f32 %v6065, %v6066
    %v6068 = vsel %vm5834, %v5974, 0.0
    %v6069 = vrot.slane %v6068, 4
    %v6070 = vadd.f32 %v6068, %v6069
    %v6071 = vrot.slane %v6070, 2
    %v6072 = vadd.f32 %v6070, %v6071
    %v6073 = vrot.slane %v6072, 1
    %v6074 = vadd.f32 %v6072, %v6073
    %v6075 = vsel %vm5834, %v5975, 0.0
    %v6076 = vrot.slane %v6075, 4
    %v6077 = vadd.f32 %v6075, %v6076
    %v6078 = vrot.slane %v6077, 2
    %v6079 = vadd.f32 %v6077, %v6078
    %v6080 = vrot.slane %v6079, 1
    %v6081 = vadd.f32 %v6079, %v6080
    %v6082 = vsel %vm5834, %v5976, 0.0
    %v6083 = vrot.slane %v6082, 4
    %v6084 = vadd.f32 %v6082, %v6083
    %v6085 = vrot.slane %v6084, 2
    %v6086 = vadd.f32 %v6084, %v6085
    %v6087 = vrot.slane %v6086, 1
    %v6088 = vadd.f32 %v6086, %v6087
    %v6089 = vmul.f32 %v5983, %v2706
    %v6090 = vmul.f32 %v5990, %v2710
    %v6091 = vmul.f32 %v5997, %v2717
    %v6092 = vmul.f32 %v6004, %v2721
    %v6093 = vmul.f32 %v6011, %v2728
    %v6094 = vmul.f32 %v6018, %v2732
    %v6095 = vmul.f32 %v6025, %v2739
    %v6096 = vmul.f32 %v6032, %v2743
    %v6097 = vmul.f32 %v6039, %v2750
    %v6098 = vmul.f32 %v6046, %v2754
    %v6099 = vmul.f32 %v6053, %v2761
    %v6100 = vmul.f32 %v6060, %v2765
    %v6101 = vmul.f32 %v6067, %v2772
    %v6102 = vmul.f32 %v6074, %v2776
    %v6103 = vmul.f32 %v6081, %v2783
    %v6104 = vmul.f32 %v6088, %v2787
    %v6105 = vadd.f32 %v6089, %v6091
    %v6106 = vadd.f32 %v6090, %v6092
    %v6107 = vadd.f32 %v6105, %v6093
    %v6108 = vadd.f32 %v6106, %v6094
    %v6109 = vadd.f32 %v6107, %v6095
    %v6110 = vadd.f32 %v6108, %v6096
    %v6111 = vadd.f32 %v6109, %v6097
    %v6112 = vadd.f32 %v6110, %v6098
    %v6113 = vadd.f32 %v6111, %v6099
    %v6114 = vadd.f32 %v6112, %v6100
    %v6115 = vadd.f32 %v6113, %v6101
    %v6116 = vadd.f32 %v6114, %v6102
    %v6117 = vadd.f32 %v6115, %v6103
    %v6118 = vadd.f32 %v6116, %v6104
    %v6135 = vrot.slane %v5563, 6
    %v6136 = vrot.slane %v5565, 6
    %v6137 = vrot.slane %v5567, 6
    %v6138 = vrot.slane %v5569, 6
    %v6139 = vrot.slane %v5571, 6
    %v6140 = vrot.slane %v5573, 6
    %v6141 = vrot.slane %v5575, 6
    %v6142 = vrot.slane %v5577, 6
    %v6143 = vrot.slane %v5579, 6
    %v6144 = vrot.slane %v5581, 6
    %v6145 = vrot.slane %v5583, 6
    %v6146 = vrot.slane %v5585, 6
    %v6147 = vrot.slane %v5587, 6
    %v6148 = vrot.slane %v5589, 6
    %v6149 = vrot.slane %v5591, 6
    %v6150 = vrot.slane %v5593, 6
    %v6167 = vmul.f32 %v4468, %v6135
    %v6168 = vmul.f32 %v4470, %v6136
    %v6169 = vmul.f32 %v4545, %v6137
    %v6170 = vmul.f32 %v4547, %v6138
    %v6171 = vmul.f32 %v4622, %v6139
    %v6172 = vmul.f32 %v4624, %v6140
    %v6173 = vmul.f32 %v4699, %v6141
    %v6174 = vmul.f32 %v4701, %v6142
    %v6175 = vmul.f32 %v4776, %v6143
    %v6176 = vmul.f32 %v4778, %v6144
    %v6177 = vmul.f32 %v4853, %v6145
    %v6178 = vmul.f32 %v4855, %v6146
    %v6179 = vmul.f32 %v4930, %v6147
    %v6180 = vmul.f32 %v4932, %v6148
    %v6181 = vmul.f32 %v5007, %v6149
    %v6182 = vmul.f32 %v5009, %v6150
    %v6199 = vrot.slane %v6167, 2
    %v6200 = vrot.slane %v6168, 2
    %v6201 = vrot.slane %v6169, 2
    %v6202 = vrot.slane %v6170, 2
    %v6203 = vrot.slane %v6171, 2
    %v6204 = vrot.slane %v6172, 2
    %v6205 = vrot.slane %v6173, 2
    %v6206 = vrot.slane %v6174, 2
    %v6207 = vrot.slane %v6175, 2
    %v6208 = vrot.slane %v6176, 2
    %v6209 = vrot.slane %v6177, 2
    %v6210 = vrot.slane %v6178, 2
    %v6211 = vrot.slane %v6179, 2
    %v6212 = vrot.slane %v6180, 2
    %v6213 = vrot.slane %v6181, 2
    %v6214 = vrot.slane %v6182, 2
    %v6231 = vsel %vm5834, %v6199, 0.0
    %v6232 = vrot.slane %v6231, 4
    %v6233 = vadd.f32 %v6231, %v6232
    %v6234 = vrot.slane %v6233, 2
    %v6235 = vadd.f32 %v6233, %v6234
    %v6236 = vrot.slane %v6235, 1
    %v6237 = vadd.f32 %v6235, %v6236
    %v6238 = vsel %vm5834, %v6200, 0.0
    %v6239 = vrot.slane %v6238, 4
    %v6240 = vadd.f32 %v6238, %v6239
    %v6241 = vrot.slane %v6240, 2
    %v6242 = vadd.f32 %v6240, %v6241
    %v6243 = vrot.slane %v6242, 1
    %v6244 = vadd.f32 %v6242, %v6243
    %v6245 = vsel %vm5834, %v6201, 0.0
    %v6246 = vrot.slane %v6245, 4
    %v6247 = vadd.f32 %v6245, %v6246
    %v6248 = vrot.slane %v6247, 2
    %v6249 = vadd.f32 %v6247, %v6248
    %v6250 = vrot.slane %v6249, 1
    %v6251 = vadd.f32 %v6249, %v6250
    %v6252 = vsel %vm5834, %v6202, 0.0
    %v6253 = vrot.slane %v6252, 4
    %v6254 = vadd.f32 %v6252, %v6253
    %v6255 = vrot.slane %v6254, 2
    %v6256 = vadd.f32 %v6254, %v6255
    %v6257 = vrot.slane %v6256, 1
    %v6258 = vadd.f32 %v6256, %v6257
    %v6259 = vsel %vm5834, %v6203, 0.0
    %v6260 = vrot.slane %v6259, 4
    %v6261 = vadd.f32 %v6259, %v6260
    %v6262 = vrot.slane %v6261, 2
    %v6263 = vadd.f32 %v6261, %v6262
    %v6264 = vrot.slane %v6263, 1
    %v6265 = vadd.f32 %v6263, %v6264
    %v6266 = vsel %vm5834, %v6204, 0.0
    %v6267 = vrot.slane %v6266, 4
    %v6268 = vadd.f32 %v6266, %v6267
    %v6269 = vrot.slane %v6268, 2
    %v6270 = vadd.f32 %v6268, %v6269
    %v6271 = vrot.slane %v6270, 1
    %v6272 = vadd.f32 %v6270, %v6271
    %v6273 = vsel %vm5834, %v6205, 0.0
    %v6274 = vrot.slane %v6273, 4
    %v6275 = vadd.f32 %v6273, %v6274
    %v6276 = vrot.slane %v6275, 2
    %v6277 = vadd.f32 %v6275, %v6276
    %v6278 = vrot.slane %v6277, 1
    %v6279 = vadd.f32 %v6277, %v6278
    %v6280 = vsel %vm5834, %v6206, 0.0
    %v6281 = vrot.slane %v6280, 4
    %v6282 = vadd.f32 %v6280, %v6281
    %v6283 = vrot.slane %v6282, 2
    %v6284 = vadd.f32 %v6282, %v6283
    %v6285 = vrot.slane %v6284, 1
    %v6286 = vadd.f32 %v6284, %v6285
    %v6287 = vsel %vm5834, %v6207, 0.0
    %v6288 = vrot.slane %v6287, 4
    %v6289 = vadd.f32 %v6287, %v6288
    %v6290 = vrot.slane %v6289, 2
    %v6291 = vadd.f32 %v6289, %v6290
    %v6292 = vrot.slane %v6291, 1
    %v6293 = vadd.f32 %v6291, %v6292
    %v6294 = vsel %vm5834, %v6208, 0.0
    %v6295 = vrot.slane %v6294, 4
    %v6296 = vadd.f32 %v6294, %v6295
    %v6297 = vrot.slane %v6296, 2
    %v6298 = vadd.f32 %v6296, %v6297
    %v6299 = vrot.slane %v6298, 1
    %v6300 = vadd.f32 %v6298, %v6299
    %v6301 = vsel %vm5834, %v6209, 0.0
    %v6302 = vrot.slane %v6301, 4
    %v6303 = vadd.f32 %v6301, %v6302
    %v6304 = vrot.slane %v6303, 2
    %v6305 = vadd.f32 %v6303, %v6304
    %v6306 = vrot.slane %v6305, 1
    %v6307 = vadd.f32 %v6305, %v6306
    %v6308 = vsel %vm5834, %v6210, 0.0
    %v6309 = vrot.slane %v6308, 4
    %v6310 = vadd.f32 %v6308, %v6309
    %v6311 = vrot.slane %v6310, 2
    %v6312 = vadd.f32 %v6310, %v6311
    %v6313 = vrot.slane %v6312, 1
    %v6314 = vadd.f32 %v6312, %v6313
    %v6315 = vsel %vm5834, %v6211, 0.0
    %v6316 = vrot.slane %v6315, 4
    %v6317 = vadd.f32 %v6315, %v6316
    %v6318 = vrot.slane %v6317, 2
    %v6319 = vadd.f32 %v6317, %v6318
    %v6320 = vrot.slane %v6319, 1
    %v6321 = vadd.f32 %v6319, %v6320
    %v6322 = vsel %vm5834, %v6212, 0.0
    %v6323 = vrot.slane %v6322, 4
    %v6324 = vadd.f32 %v6322, %v6323
    %v6325 = vrot.slane %v6324, 2
    %v6326 = vadd.f32 %v6324, %v6325
    %v6327 = vrot.slane %v6326, 1
    %v6328 = vadd.f32 %v6326, %v6327
    %v6329 = vsel %vm5834, %v6213, 0.0
    %v6330 = vrot.slane %v6329, 4
    %v6331 = vadd.f32 %v6329, %v6330
    %v6332 = vrot.slane %v6331, 2
    %v6333 = vadd.f32 %v6331, %v6332
    %v6334 = vrot.slane %v6333, 1
    %v6335 = vadd.f32 %v6333, %v6334
    %v6336 = vsel %vm5834, %v6214, 0.0
    %v6337 = vrot.slane %v6336, 4
    %v6338 = vadd.f32 %v6336, %v6337
    %v6339 = vrot.slane %v6338, 2
    %v6340 = vadd.f32 %v6338, %v6339
    %v6341 = vrot.slane %v6340, 1
    %v6342 = vadd.f32 %v6340, %v6341
    %v6343 = vmul.f32 %v6237, %v2706
    %v6344 = vmul.f32 %v6244, %v2710
    %v6345 = vmul.f32 %v6251, %v2717
    %v6346 = vmul.f32 %v6258, %v2721
    %v6347 = vmul.f32 %v6265, %v2728
    %v6348 = vmul.f32 %v6272, %v2732
    %v6349 = vmul.f32 %v6279, %v2739
    %v6350 = vmul.f32 %v6286, %v2743
    %v6351 = vmul.f32 %v6293, %v2750
    %v6352 = vmul.f32 %v6300, %v2754
    %v6353 = vmul.f32 %v6307, %v2761
    %v6354 = vmul.f32 %v6314, %v2765
    %v6355 = vmul.f32 %v6321, %v2772
    %v6356 = vmul.f32 %v6328, %v2776
    %v6357 = vmul.f32 %v6335, %v2783
    %v6358 = vmul.f32 %v6342, %v2787
    %v6359 = vadd.f32 %v6343, %v6345
    %v6360 = vadd.f32 %v6344, %v6346
    %v6361 = vadd.f32 %v6359, %v6347
    %v6362 = vadd.f32 %v6360, %v6348
    %v6363 = vadd.f32 %v6361, %v6349
    %v6364 = vadd.f32 %v6362, %v6350
    %v6365 = vadd.f32 %v6363, %v6351
    %v6366 = vadd.f32 %v6364, %v6352
    %v6367 = vadd.f32 %v6365, %v6353
    %v6368 = vadd.f32 %v6366, %v6354
    %v6369 = vadd.f32 %v6367, %v6355
    %v6370 = vadd.f32 %v6368, %v6356
    %v6371 = vadd.f32 %v6369, %v6357
    %v6372 = vadd.f32 %v6370, %v6358
    %v6375 = vrot.slane %v6371, 7
    %v6376 = vrot.slane %v6372, 7
    %vm6379 = vcmask 1040384
    %v6380 = vsel %vm6379, %v6117, %v6375
    %v6381 = vsel %vm6379, %v6118, %v6376
    %v6382 = vld [vmem:[#allocation10] sm:$0xff]
    %v6383 = vld [vmem:[#allocation10 + $0x8] sm:$0xff]
    %v6384 = vld [vmem:[#allocation10 + $0x10] sm:$0xff]
    %v6385 = vld [vmem:[#allocation10 + $0x18] sm:$0xff]
    %v6386 = vld [vmem:[#allocation10 + $0x20] sm:$0xff]
    %v6387 = vld [vmem:[#allocation10 + $0x28] sm:$0xff]
    %v6388 = vmul.f32 %v86, 13.0
    %v6389 = vmax.f32 %v6388, 0.0
    %v6390 = vmin.f32 %v6389, 11.999
    %v6391 = vfloor.f32 %v6390
    %v6392 = vsub.f32 %v6390, %v6391
    %v6393 = vsub.f32 1.0, %v6392
    %v6394 = vcvt.f32.s32.to.zero.pseudo %v6391
    %v6396 = vrot.slane %v6393, 5
    %v6397 = vrot.slane %v6396, 4
    %v6399 = vmul.f32 %v6393, %v6397
    %v6400 = vrot.slane %v6393, 6
    %v6401 = vrot.slane %v6400, 4
    %v6403 = vmul.f32 %v6399, %v6401
    %v6404 = vand.u32 %v6394, 255
    %v6405 = vmul.u32 %v6394, 177
    %v6406 = vand.u32 %v6405, 255
    %v6407 = vrot.slane %v6406, 5
    %v6408 = vrot.slane %v6407, 4
    %v6409 = vxor.u32 %v6404, %v6408
    %v6410 = vmul.u32 %v6394, 149
    %v6411 = vand.u32 %v6410, 255
    %v6412 = vrot.slane %v6411, 6
    %v6413 = vrot.slane %v6412, 4
    %v6414 = vxor.u32 %v6409, %v6413
    %v6415 = vand.u32 %v6414, 255
    %v6416 = vadd.s32 %v6394, 1
    %v6418 = vrot.slane %v6392, 6
    %v6419 = vrot.slane %v6418, 4
    %v6421 = vmul.f32 %v6399, %v6419
    %v6422 = vmul.u32 %v6416, 149
    %v6423 = vand.u32 %v6422, 255
    %v6424 = vrot.slane %v6423, 6
    %v6425 = vrot.slane %v6424, 4
    %v6426 = vxor.u32 %v6409, %v6425
    %v6427 = vand.u32 %v6426, 255
    %v6428 = vrot.slane %v6392, 5
    %v6429 = vrot.slane %v6428, 4
    %v6431 = vmul.f32 %v6393, %v6429
    %v6432 = vmul.f32 %v6431, %v6401
    %v6433 = vmul.u32 %v6416, 177
    %v6434 = vand.u32 %v6433, 255
    %v6435 = vrot.slane %v6434, 5
    %v6436 = vrot.slane %v6435, 4
    %v6437 = vxor.u32 %v6404, %v6436
    %v6438 = vxor.u32 %v6437, %v6413
    %v6439 = vand.u32 %v6438, 255
    %v6440 = vmul.f32 %v6431, %v6419
    %v6441 = vxor.u32 %v6437, %v6425
    %v6442 = vand.u32 %v6441, 255
    %v6443 = vmul.f32 %v6392, %v6397
    %v6444 = vmul.f32 %v6443, %v6401
    %v6445 = vand.u32 %v6416, 255
    %v6446 = vxor.u32 %v6445, %v6408
    %v6447 = vxor.u32 %v6446, %v6413
    %v6448 = vand.u32 %v6447, 255
    %v6449 = vmul.f32 %v6443, %v6419
    %v6450 = vxor.u32 %v6446, %v6425
    %v6451 = vand.u32 %v6450, 255
    %v6452 = vmul.f32 %v6392, %v6429
    %v6453 = vmul.f32 %v6452, %v6401
    %v6454 = vxor.u32 %v6445, %v6436
    %v6455 = vxor.u32 %v6454, %v6413
    %v6456 = vand.u32 %v6455, 255
    %v6457 = vmul.f32 %v6452, %v6419
    %v6458 = vxor.u32 %v6454, %v6425
    %v6459 = vand.u32 %v6458, 255
    %v6460 = vlaneseq
    %v6461 = vshrl.u32 %v6460, 7
    %v6462 = vsub.s32 0, %v6461
    %v6463 = vrot.slane %v6415, %v6462
    %v6464 = vlaneseq
    %v6465 = vshrl.u32 %v6464, 7
    %v6466 = vsub.s32 4, %v6465
    %v6467 = vrot.slane %v6415, %v6466
    %v6468 = vlaneseq
    %v6469 = vshrl.u32 %v6468, 7
    %v6470 = vsub.s32 0, %v6469
    %v6471 = vrot.slane %v6427, %v6470
    %v6472 = vlaneseq
    %v6473 = vshrl.u32 %v6472, 7
    %v6474 = vsub.s32 4, %v6473
    %v6475 = vrot.slane %v6427, %v6474
    %v6476 = vlaneseq
    %v6477 = vshrl.u32 %v6476, 7
    %v6478 = vsub.s32 0, %v6477
    %v6479 = vrot.slane %v6439, %v6478
    %v6480 = vlaneseq
    %v6481 = vshrl.u32 %v6480, 7
    %v6482 = vsub.s32 4, %v6481
    %v6483 = vrot.slane %v6439, %v6482
    %v6484 = vlaneseq
    %v6485 = vshrl.u32 %v6484, 7
    %v6486 = vsub.s32 0, %v6485
    %v6487 = vrot.slane %v6442, %v6486
    %v6488 = vlaneseq
    %v6489 = vshrl.u32 %v6488, 7
    %v6490 = vsub.s32 4, %v6489
    %v6491 = vrot.slane %v6442, %v6490
    %v6492 = vlaneseq
    %v6493 = vshrl.u32 %v6492, 7
    %v6494 = vsub.s32 0, %v6493
    %v6495 = vrot.slane %v6448, %v6494
    %v6496 = vlaneseq
    %v6497 = vshrl.u32 %v6496, 7
    %v6498 = vsub.s32 4, %v6497
    %v6499 = vrot.slane %v6448, %v6498
    %v6500 = vlaneseq
    %v6501 = vshrl.u32 %v6500, 7
    %v6502 = vsub.s32 0, %v6501
    %v6503 = vrot.slane %v6451, %v6502
    %v6504 = vlaneseq
    %v6505 = vshrl.u32 %v6504, 7
    %v6506 = vsub.s32 4, %v6505
    %v6507 = vrot.slane %v6451, %v6506
    %v6508 = vlaneseq
    %v6509 = vshrl.u32 %v6508, 7
    %v6510 = vsub.s32 0, %v6509
    %v6511 = vrot.slane %v6456, %v6510
    %v6512 = vlaneseq
    %v6513 = vshrl.u32 %v6512, 7
    %v6514 = vsub.s32 4, %v6513
    %v6515 = vrot.slane %v6456, %v6514
    %v6516 = vlaneseq
    %v6517 = vshrl.u32 %v6516, 7
    %v6518 = vsub.s32 0, %v6517
    %v6519 = vrot.slane %v6459, %v6518
    %v6520 = vlaneseq
    %v6521 = vshrl.u32 %v6520, 7
    %v6522 = vsub.s32 4, %v6521
    %v6523 = vrot.slane %v6459, %v6522
    %v6525 = vlaneseq
    %v6526 = vshrl.u32 %v6525, 7
    %v6527 = vsub.s32 0, %v6526
    %v6528 = vrot.slane %v6403, %v6527
    %v6529 = vlaneseq
    %v6530 = vshrl.u32 %v6529, 7
    %v6531 = vsub.s32 4, %v6530
    %v6532 = vrot.slane %v6403, %v6531
    %v6536 = vlaneseq
    %v6537 = vshrl.u32 %v6536, 7
    %v6538 = vsub.s32 0, %v6537
    %v6539 = vrot.slane %v6421, %v6538
    %v6540 = vlaneseq
    %v6541 = vshrl.u32 %v6540, 7
    %v6542 = vsub.s32 4, %v6541
    %v6543 = vrot.slane %v6421, %v6542
    %v6547 = vlaneseq
    %v6548 = vshrl.u32 %v6547, 7
    %v6549 = vsub.s32 0, %v6548
    %v6550 = vrot.slane %v6432, %v6549
    %v6551 = vlaneseq
    %v6552 = vshrl.u32 %v6551, 7
    %v6553 = vsub.s32 4, %v6552
    %v6554 = vrot.slane %v6432, %v6553
    %v6558 = vlaneseq
    %v6559 = vshrl.u32 %v6558, 7
    %v6560 = vsub.s32 0, %v6559
    %v6561 = vrot.slane %v6440, %v6560
    %v6562 = vlaneseq
    %v6563 = vshrl.u32 %v6562, 7
    %v6564 = vsub.s32 4, %v6563
    %v6565 = vrot.slane %v6440, %v6564
    %v6569 = vlaneseq
    %v6570 = vshrl.u32 %v6569, 7
    %v6571 = vsub.s32 0, %v6570
    %v6572 = vrot.slane %v6444, %v6571
    %v6573 = vlaneseq
    %v6574 = vshrl.u32 %v6573, 7
    %v6575 = vsub.s32 4, %v6574
    %v6576 = vrot.slane %v6444, %v6575
    %v6580 = vlaneseq
    %v6581 = vshrl.u32 %v6580, 7
    %v6582 = vsub.s32 0, %v6581
    %v6583 = vrot.slane %v6449, %v6582
    %v6584 = vlaneseq
    %v6585 = vshrl.u32 %v6584, 7
    %v6586 = vsub.s32 4, %v6585
    %v6587 = vrot.slane %v6449, %v6586
    %v6591 = vlaneseq
    %v6592 = vshrl.u32 %v6591, 7
    %v6593 = vsub.s32 0, %v6592
    %v6594 = vrot.slane %v6453, %v6593
    %v6595 = vlaneseq
    %v6596 = vshrl.u32 %v6595, 7
    %v6597 = vsub.s32 4, %v6596
    %v6598 = vrot.slane %v6453, %v6597
    %v6602 = vlaneseq
    %v6603 = vshrl.u32 %v6602, 7
    %v6604 = vsub.s32 0, %v6603
    %v6605 = vrot.slane %v6457, %v6604
    %v6606 = vlaneseq
    %v6607 = vshrl.u32 %v6606, 7
    %v6608 = vsub.s32 4, %v6607
    %v6609 = vrot.slane %v6457, %v6608
    %v6612 = vlaneseq
    %v6613 = vshrl.u32 %v6612, 7
    %v6614 = vsub.s32 0, %v6613
    %v6615 = vrot.slane %v6463, %v6614
    %v6616 = vlaneseq
    %v6617 = vshrl.u32 %v6616, 7
    %v6618 = vsub.s32 0, %v6617
    %v6619 = vrot.slane %v6467, %v6618
    %v6620 = vlaneseq
    %v6621 = vshrl.u32 %v6620, 7
    %v6622 = vsub.s32 0, %v6621
    %v6623 = vrot.slane %v6471, %v6622
    %v6624 = vlaneseq
    %v6625 = vshrl.u32 %v6624, 7
    %v6626 = vsub.s32 0, %v6625
    %v6627 = vrot.slane %v6475, %v6626
    %v6628 = vlaneseq
    %v6629 = vshrl.u32 %v6628, 7
    %v6630 = vsub.s32 0, %v6629
    %v6631 = vrot.slane %v6479, %v6630
    %v6632 = vlaneseq
    %v6633 = vshrl.u32 %v6632, 7
    %v6634 = vsub.s32 0, %v6633
    %v6635 = vrot.slane %v6483, %v6634
    %v6636 = vlaneseq
    %v6637 = vshrl.u32 %v6636, 7
    %v6638 = vsub.s32 0, %v6637
    %v6639 = vrot.slane %v6487, %v6638
    %v6640 = vlaneseq
    %v6641 = vshrl.u32 %v6640, 7
    %v6642 = vsub.s32 0, %v6641
    %v6643 = vrot.slane %v6491, %v6642
    %v6644 = vlaneseq
    %v6645 = vshrl.u32 %v6644, 7
    %v6646 = vsub.s32 0, %v6645
    %v6647 = vrot.slane %v6495, %v6646
    %v6648 = vlaneseq
    %v6649 = vshrl.u32 %v6648, 7
    %v6650 = vsub.s32 0, %v6649
    %v6651 = vrot.slane %v6499, %v6650
    %v6652 = vlaneseq
    %v6653 = vshrl.u32 %v6652, 7
    %v6654 = vsub.s32 0, %v6653
    %v6655 = vrot.slane %v6503, %v6654
    %v6656 = vlaneseq
    %v6657 = vshrl.u32 %v6656, 7
    %v6658 = vsub.s32 0, %v6657
    %v6659 = vrot.slane %v6507, %v6658
    %v6660 = vlaneseq
    %v6661 = vshrl.u32 %v6660, 7
    %v6662 = vsub.s32 0, %v6661
    %v6663 = vrot.slane %v6511, %v6662
    %v6664 = vlaneseq
    %v6665 = vshrl.u32 %v6664, 7
    %v6666 = vsub.s32 0, %v6665
    %v6667 = vrot.slane %v6515, %v6666
    %v6668 = vlaneseq
    %v6669 = vshrl.u32 %v6668, 7
    %v6670 = vsub.s32 0, %v6669
    %v6671 = vrot.slane %v6519, %v6670
    %v6672 = vlaneseq
    %v6673 = vshrl.u32 %v6672, 7
    %v6674 = vsub.s32 0, %v6673
    %v6675 = vrot.slane %v6523, %v6674
    %vm6676 = vcmp.eq.s32.totalorder %v147, %v6615
    %vm6677 = vcmp.eq.s32.totalorder %v147, %v6619
    %vm6678 = vcmp.eq.s32.totalorder %v147, %v6623
    %vm6679 = vcmp.eq.s32.totalorder %v147, %v6627
    %vm6680 = vcmp.eq.s32.totalorder %v147, %v6631
    %vm6681 = vcmp.eq.s32.totalorder %v147, %v6635
    %vm6682 = vcmp.eq.s32.totalorder %v147, %v6639
    %vm6683 = vcmp.eq.s32.totalorder %v147, %v6643
    %vm6684 = vcmp.eq.s32.totalorder %v147, %v6647
    %vm6685 = vcmp.eq.s32.totalorder %v147, %v6651
    %vm6686 = vcmp.eq.s32.totalorder %v147, %v6655
    %vm6687 = vcmp.eq.s32.totalorder %v147, %v6659
    %vm6688 = vcmp.eq.s32.totalorder %v147, %v6663
    %vm6689 = vcmp.eq.s32.totalorder %v147, %v6667
    %vm6690 = vcmp.eq.s32.totalorder %v147, %v6671
    %vm6691 = vcmp.eq.s32.totalorder %v147, %v6675
    %vm6692 = vcmp.eq.s32.totalorder %v148, %v6615
    %vm6693 = vcmp.eq.s32.totalorder %v148, %v6619
    %vm6694 = vcmp.eq.s32.totalorder %v148, %v6623
    %vm6695 = vcmp.eq.s32.totalorder %v148, %v6627
    %vm6696 = vcmp.eq.s32.totalorder %v148, %v6631
    %vm6697 = vcmp.eq.s32.totalorder %v148, %v6635
    %vm6698 = vcmp.eq.s32.totalorder %v148, %v6639
    %vm6699 = vcmp.eq.s32.totalorder %v148, %v6643
    %vm6700 = vcmp.eq.s32.totalorder %v148, %v6647
    %vm6701 = vcmp.eq.s32.totalorder %v148, %v6651
    %vm6702 = vcmp.eq.s32.totalorder %v148, %v6655
    %vm6703 = vcmp.eq.s32.totalorder %v148, %v6659
    %vm6704 = vcmp.eq.s32.totalorder %v148, %v6663
    %vm6705 = vcmp.eq.s32.totalorder %v148, %v6667
    %vm6706 = vcmp.eq.s32.totalorder %v148, %v6671
    %vm6707 = vcmp.eq.s32.totalorder %v148, %v6675
    %vm6708 = vcmp.eq.s32.totalorder %v149, %v6615
    %vm6709 = vcmp.eq.s32.totalorder %v149, %v6619
    %vm6710 = vcmp.eq.s32.totalorder %v149, %v6623
    %vm6711 = vcmp.eq.s32.totalorder %v149, %v6627
    %vm6712 = vcmp.eq.s32.totalorder %v149, %v6631
    %vm6713 = vcmp.eq.s32.totalorder %v149, %v6635
    %vm6714 = vcmp.eq.s32.totalorder %v149, %v6639
    %vm6715 = vcmp.eq.s32.totalorder %v149, %v6643
    %vm6716 = vcmp.eq.s32.totalorder %v149, %v6647
    %vm6717 = vcmp.eq.s32.totalorder %v149, %v6651
    %vm6718 = vcmp.eq.s32.totalorder %v149, %v6655
    %vm6719 = vcmp.eq.s32.totalorder %v149, %v6659
    %vm6720 = vcmp.eq.s32.totalorder %v149, %v6663
    %vm6721 = vcmp.eq.s32.totalorder %v149, %v6667
    %vm6722 = vcmp.eq.s32.totalorder %v149, %v6671
    %vm6723 = vcmp.eq.s32.totalorder %v149, %v6675
    %vm6724 = vcmp.eq.s32.totalorder %v150, %v6615
    %vm6725 = vcmp.eq.s32.totalorder %v150, %v6619
    %vm6726 = vcmp.eq.s32.totalorder %v150, %v6623
    %vm6727 = vcmp.eq.s32.totalorder %v150, %v6627
    %vm6728 = vcmp.eq.s32.totalorder %v150, %v6631
    %vm6729 = vcmp.eq.s32.totalorder %v150, %v6635
    %vm6730 = vcmp.eq.s32.totalorder %v150, %v6639
    %vm6731 = vcmp.eq.s32.totalorder %v150, %v6643
    %vm6732 = vcmp.eq.s32.totalorder %v150, %v6647
    %vm6733 = vcmp.eq.s32.totalorder %v150, %v6651
    %vm6734 = vcmp.eq.s32.totalorder %v150, %v6655
    %vm6735 = vcmp.eq.s32.totalorder %v150, %v6659
    %vm6736 = vcmp.eq.s32.totalorder %v150, %v6663
    %vm6737 = vcmp.eq.s32.totalorder %v150, %v6667
    %vm6738 = vcmp.eq.s32.totalorder %v150, %v6671
    %vm6739 = vcmp.eq.s32.totalorder %v150, %v6675
    %vm6740 = vcmp.eq.s32.totalorder %v151, %v6615
    %vm6741 = vcmp.eq.s32.totalorder %v151, %v6619
    %vm6742 = vcmp.eq.s32.totalorder %v151, %v6623
    %vm6743 = vcmp.eq.s32.totalorder %v151, %v6627
    %vm6744 = vcmp.eq.s32.totalorder %v151, %v6631
    %vm6745 = vcmp.eq.s32.totalorder %v151, %v6635
    %vm6746 = vcmp.eq.s32.totalorder %v151, %v6639
    %vm6747 = vcmp.eq.s32.totalorder %v151, %v6643
    %vm6748 = vcmp.eq.s32.totalorder %v151, %v6647
    %vm6749 = vcmp.eq.s32.totalorder %v151, %v6651
    %vm6750 = vcmp.eq.s32.totalorder %v151, %v6655
    %vm6751 = vcmp.eq.s32.totalorder %v151, %v6659
    %vm6752 = vcmp.eq.s32.totalorder %v151, %v6663
    %vm6753 = vcmp.eq.s32.totalorder %v151, %v6667
    %vm6754 = vcmp.eq.s32.totalorder %v151, %v6671
    %vm6755 = vcmp.eq.s32.totalorder %v151, %v6675
    %vm6756 = vcmp.eq.s32.totalorder %v152, %v6615
    %vm6757 = vcmp.eq.s32.totalorder %v152, %v6619
    %vm6758 = vcmp.eq.s32.totalorder %v152, %v6623
    %vm6759 = vcmp.eq.s32.totalorder %v152, %v6627
    %vm6760 = vcmp.eq.s32.totalorder %v152, %v6631
    %vm6761 = vcmp.eq.s32.totalorder %v152, %v6635
    %vm6762 = vcmp.eq.s32.totalorder %v152, %v6639
    %vm6763 = vcmp.eq.s32.totalorder %v152, %v6643
    %vm6764 = vcmp.eq.s32.totalorder %v152, %v6647
    %vm6765 = vcmp.eq.s32.totalorder %v152, %v6651
    %vm6766 = vcmp.eq.s32.totalorder %v152, %v6655
    %vm6767 = vcmp.eq.s32.totalorder %v152, %v6659
    %vm6768 = vcmp.eq.s32.totalorder %v152, %v6663
    %vm6769 = vcmp.eq.s32.totalorder %v152, %v6667
    %vm6770 = vcmp.eq.s32.totalorder %v152, %v6671
    %vm6771 = vcmp.eq.s32.totalorder %v152, %v6675
    %vm6772 = vcmp.eq.s32.totalorder %v153, %v6615
    %vm6773 = vcmp.eq.s32.totalorder %v153, %v6619
    %vm6774 = vcmp.eq.s32.totalorder %v153, %v6623
    %vm6775 = vcmp.eq.s32.totalorder %v153, %v6627
    %vm6776 = vcmp.eq.s32.totalorder %v153, %v6631
    %vm6777 = vcmp.eq.s32.totalorder %v153, %v6635
    %vm6778 = vcmp.eq.s32.totalorder %v153, %v6639
    %vm6779 = vcmp.eq.s32.totalorder %v153, %v6643
    %vm6780 = vcmp.eq.s32.totalorder %v153, %v6647
    %vm6781 = vcmp.eq.s32.totalorder %v153, %v6651
    %vm6782 = vcmp.eq.s32.totalorder %v153, %v6655
    %vm6783 = vcmp.eq.s32.totalorder %v153, %v6659
    %vm6784 = vcmp.eq.s32.totalorder %v153, %v6663
    %vm6785 = vcmp.eq.s32.totalorder %v153, %v6667
    %vm6786 = vcmp.eq.s32.totalorder %v153, %v6671
    %vm6787 = vcmp.eq.s32.totalorder %v153, %v6675
    %vm6788 = vcmp.eq.s32.totalorder %v154, %v6615
    %vm6789 = vcmp.eq.s32.totalorder %v154, %v6619
    %vm6790 = vcmp.eq.s32.totalorder %v154, %v6623
    %vm6791 = vcmp.eq.s32.totalorder %v154, %v6627
    %vm6792 = vcmp.eq.s32.totalorder %v154, %v6631
    %vm6793 = vcmp.eq.s32.totalorder %v154, %v6635
    %vm6794 = vcmp.eq.s32.totalorder %v154, %v6639
    %vm6795 = vcmp.eq.s32.totalorder %v154, %v6643
    %vm6796 = vcmp.eq.s32.totalorder %v154, %v6647
    %vm6797 = vcmp.eq.s32.totalorder %v154, %v6651
    %vm6798 = vcmp.eq.s32.totalorder %v154, %v6655
    %vm6799 = vcmp.eq.s32.totalorder %v154, %v6659
    %vm6800 = vcmp.eq.s32.totalorder %v154, %v6663
    %vm6801 = vcmp.eq.s32.totalorder %v154, %v6667
    %vm6802 = vcmp.eq.s32.totalorder %v154, %v6671
    %vm6803 = vcmp.eq.s32.totalorder %v154, %v6675
    %vm6804 = vcmp.eq.s32.totalorder %v937, %v6615
    %vm6805 = vcmp.eq.s32.totalorder %v937, %v6619
    %vm6806 = vcmp.eq.s32.totalorder %v937, %v6623
    %vm6807 = vcmp.eq.s32.totalorder %v937, %v6627
    %vm6808 = vcmp.eq.s32.totalorder %v937, %v6631
    %vm6809 = vcmp.eq.s32.totalorder %v937, %v6635
    %vm6810 = vcmp.eq.s32.totalorder %v937, %v6639
    %vm6811 = vcmp.eq.s32.totalorder %v937, %v6643
    %vm6812 = vcmp.eq.s32.totalorder %v937, %v6647
    %vm6813 = vcmp.eq.s32.totalorder %v937, %v6651
    %vm6814 = vcmp.eq.s32.totalorder %v937, %v6655
    %vm6815 = vcmp.eq.s32.totalorder %v937, %v6659
    %vm6816 = vcmp.eq.s32.totalorder %v937, %v6663
    %vm6817 = vcmp.eq.s32.totalorder %v937, %v6667
    %vm6818 = vcmp.eq.s32.totalorder %v937, %v6671
    %vm6819 = vcmp.eq.s32.totalorder %v937, %v6675
    %vm6820 = vcmp.eq.s32.totalorder %v938, %v6615
    %vm6821 = vcmp.eq.s32.totalorder %v938, %v6619
    %vm6822 = vcmp.eq.s32.totalorder %v938, %v6623
    %vm6823 = vcmp.eq.s32.totalorder %v938, %v6627
    %vm6824 = vcmp.eq.s32.totalorder %v938, %v6631
    %vm6825 = vcmp.eq.s32.totalorder %v938, %v6635
    %vm6826 = vcmp.eq.s32.totalorder %v938, %v6639
    %vm6827 = vcmp.eq.s32.totalorder %v938, %v6643
    %vm6828 = vcmp.eq.s32.totalorder %v938, %v6647
    %vm6829 = vcmp.eq.s32.totalorder %v938, %v6651
    %vm6830 = vcmp.eq.s32.totalorder %v938, %v6655
    %vm6831 = vcmp.eq.s32.totalorder %v938, %v6659
    %vm6832 = vcmp.eq.s32.totalorder %v938, %v6663
    %vm6833 = vcmp.eq.s32.totalorder %v938, %v6667
    %vm6834 = vcmp.eq.s32.totalorder %v938, %v6671
    %vm6835 = vcmp.eq.s32.totalorder %v938, %v6675
    %vm6836 = vcmp.eq.s32.totalorder %v939, %v6615
    %vm6837 = vcmp.eq.s32.totalorder %v939, %v6619
    %vm6838 = vcmp.eq.s32.totalorder %v939, %v6623
    %vm6839 = vcmp.eq.s32.totalorder %v939, %v6627
    %vm6840 = vcmp.eq.s32.totalorder %v939, %v6631
    %vm6841 = vcmp.eq.s32.totalorder %v939, %v6635
    %vm6842 = vcmp.eq.s32.totalorder %v939, %v6639
    %vm6843 = vcmp.eq.s32.totalorder %v939, %v6643
    %vm6844 = vcmp.eq.s32.totalorder %v939, %v6647
    %vm6845 = vcmp.eq.s32.totalorder %v939, %v6651
    %vm6846 = vcmp.eq.s32.totalorder %v939, %v6655
    %vm6847 = vcmp.eq.s32.totalorder %v939, %v6659
    %vm6848 = vcmp.eq.s32.totalorder %v939, %v6663
    %vm6849 = vcmp.eq.s32.totalorder %v939, %v6667
    %vm6850 = vcmp.eq.s32.totalorder %v939, %v6671
    %vm6851 = vcmp.eq.s32.totalorder %v939, %v6675
    %vm6852 = vcmp.eq.s32.totalorder %v940, %v6615
    %vm6853 = vcmp.eq.s32.totalorder %v940, %v6619
    %vm6854 = vcmp.eq.s32.totalorder %v940, %v6623
    %vm6855 = vcmp.eq.s32.totalorder %v940, %v6627
    %vm6856 = vcmp.eq.s32.totalorder %v940, %v6631
    %vm6857 = vcmp.eq.s32.totalorder %v940, %v6635
    %vm6858 = vcmp.eq.s32.totalorder %v940, %v6639
    %vm6859 = vcmp.eq.s32.totalorder %v940, %v6643
    %vm6860 = vcmp.eq.s32.totalorder %v940, %v6647
    %vm6861 = vcmp.eq.s32.totalorder %v940, %v6651
    %vm6862 = vcmp.eq.s32.totalorder %v940, %v6655
    %vm6863 = vcmp.eq.s32.totalorder %v940, %v6659
    %vm6864 = vcmp.eq.s32.totalorder %v940, %v6663
    %vm6865 = vcmp.eq.s32.totalorder %v940, %v6667
    %vm6866 = vcmp.eq.s32.totalorder %v940, %v6671
    %vm6867 = vcmp.eq.s32.totalorder %v940, %v6675
    %vm6868 = vcmp.eq.s32.totalorder %v941, %v6615
    %vm6869 = vcmp.eq.s32.totalorder %v941, %v6619
    %vm6870 = vcmp.eq.s32.totalorder %v941, %v6623
    %vm6871 = vcmp.eq.s32.totalorder %v941, %v6627
    %vm6872 = vcmp.eq.s32.totalorder %v941, %v6631
    %vm6873 = vcmp.eq.s32.totalorder %v941, %v6635
    %vm6874 = vcmp.eq.s32.totalorder %v941, %v6639
    %vm6875 = vcmp.eq.s32.totalorder %v941, %v6643
    %vm6876 = vcmp.eq.s32.totalorder %v941, %v6647
    %vm6877 = vcmp.eq.s32.totalorder %v941, %v6651
    %vm6878 = vcmp.eq.s32.totalorder %v941, %v6655
    %vm6879 = vcmp.eq.s32.totalorder %v941, %v6659
    %vm6880 = vcmp.eq.s32.totalorder %v941, %v6663
    %vm6881 = vcmp.eq.s32.totalorder %v941, %v6667
    %vm6882 = vcmp.eq.s32.totalorder %v941, %v6671
    %vm6883 = vcmp.eq.s32.totalorder %v941, %v6675
    %vm6884 = vcmp.eq.s32.totalorder %v942, %v6615
    %vm6885 = vcmp.eq.s32.totalorder %v942, %v6619
    %vm6886 = vcmp.eq.s32.totalorder %v942, %v6623
    %vm6887 = vcmp.eq.s32.totalorder %v942, %v6627
    %vm6888 = vcmp.eq.s32.totalorder %v942, %v6631
    %vm6889 = vcmp.eq.s32.totalorder %v942, %v6635
    %vm6890 = vcmp.eq.s32.totalorder %v942, %v6639
    %vm6891 = vcmp.eq.s32.totalorder %v942, %v6643
    %vm6892 = vcmp.eq.s32.totalorder %v942, %v6647
    %vm6893 = vcmp.eq.s32.totalorder %v942, %v6651
    %vm6894 = vcmp.eq.s32.totalorder %v942, %v6655
    %vm6895 = vcmp.eq.s32.totalorder %v942, %v6659
    %vm6896 = vcmp.eq.s32.totalorder %v942, %v6663
    %vm6897 = vcmp.eq.s32.totalorder %v942, %v6667
    %vm6898 = vcmp.eq.s32.totalorder %v942, %v6671
    %vm6899 = vcmp.eq.s32.totalorder %v942, %v6675
    %vm6900 = vcmp.eq.s32.totalorder %v943, %v6615
    %vm6901 = vcmp.eq.s32.totalorder %v943, %v6619
    %vm6902 = vcmp.eq.s32.totalorder %v943, %v6623
    %vm6903 = vcmp.eq.s32.totalorder %v943, %v6627
    %vm6904 = vcmp.eq.s32.totalorder %v943, %v6631
    %vm6905 = vcmp.eq.s32.totalorder %v943, %v6635
    %vm6906 = vcmp.eq.s32.totalorder %v943, %v6639
    %vm6907 = vcmp.eq.s32.totalorder %v943, %v6643
    %vm6908 = vcmp.eq.s32.totalorder %v943, %v6647
    %vm6909 = vcmp.eq.s32.totalorder %v943, %v6651
    %vm6910 = vcmp.eq.s32.totalorder %v943, %v6655
    %vm6911 = vcmp.eq.s32.totalorder %v943, %v6659
    %vm6912 = vcmp.eq.s32.totalorder %v943, %v6663
    %vm6913 = vcmp.eq.s32.totalorder %v943, %v6667
    %vm6914 = vcmp.eq.s32.totalorder %v943, %v6671
    %vm6915 = vcmp.eq.s32.totalorder %v943, %v6675
    %vm6916 = vcmp.eq.s32.totalorder %v944, %v6615
    %vm6917 = vcmp.eq.s32.totalorder %v944, %v6619
    %vm6918 = vcmp.eq.s32.totalorder %v944, %v6623
    %vm6919 = vcmp.eq.s32.totalorder %v944, %v6627
    %vm6920 = vcmp.eq.s32.totalorder %v944, %v6631
    %vm6921 = vcmp.eq.s32.totalorder %v944, %v6635
    %vm6922 = vcmp.eq.s32.totalorder %v944, %v6639
    %vm6923 = vcmp.eq.s32.totalorder %v944, %v6643
    %vm6924 = vcmp.eq.s32.totalorder %v944, %v6647
    %vm6925 = vcmp.eq.s32.totalorder %v944, %v6651
    %vm6926 = vcmp.eq.s32.totalorder %v944, %v6655
    %vm6927 = vcmp.eq.s32.totalorder %v944, %v6659
    %vm6928 = vcmp.eq.s32.totalorder %v944, %v6663
    %vm6929 = vcmp.eq.s32.totalorder %v944, %v6667
    %vm6930 = vcmp.eq.s32.totalorder %v944, %v6671
    %vm6931 = vcmp.eq.s32.totalorder %v944, %v6675
    %vm6932 = vcmp.eq.s32.totalorder %v945, %v6615
    %vm6933 = vcmp.eq.s32.totalorder %v945, %v6619
    %vm6934 = vcmp.eq.s32.totalorder %v945, %v6623
    %vm6935 = vcmp.eq.s32.totalorder %v945, %v6627
    %vm6936 = vcmp.eq.s32.totalorder %v945, %v6631
    %vm6937 = vcmp.eq.s32.totalorder %v945, %v6635
    %vm6938 = vcmp.eq.s32.totalorder %v945, %v6639
    %vm6939 = vcmp.eq.s32.totalorder %v945, %v6643
    %vm6940 = vcmp.eq.s32.totalorder %v945, %v6647
    %vm6941 = vcmp.eq.s32.totalorder %v945, %v6651
    %vm6942 = vcmp.eq.s32.totalorder %v945, %v6655
    %vm6943 = vcmp.eq.s32.totalorder %v945, %v6659
    %vm6944 = vcmp.eq.s32.totalorder %v945, %v6663
    %vm6945 = vcmp.eq.s32.totalorder %v945, %v6667
    %vm6946 = vcmp.eq.s32.totalorder %v945, %v6671
    %vm6947 = vcmp.eq.s32.totalorder %v945, %v6675
    %vm6948 = vcmp.eq.s32.totalorder %v946, %v6615
    %vm6949 = vcmp.eq.s32.totalorder %v946, %v6619
    %vm6950 = vcmp.eq.s32.totalorder %v946, %v6623
    %vm6951 = vcmp.eq.s32.totalorder %v946, %v6627
    %vm6952 = vcmp.eq.s32.totalorder %v946, %v6631
    %vm6953 = vcmp.eq.s32.totalorder %v946, %v6635
    %vm6954 = vcmp.eq.s32.totalorder %v946, %v6639
    %vm6955 = vcmp.eq.s32.totalorder %v946, %v6643
    %vm6956 = vcmp.eq.s32.totalorder %v946, %v6647
    %vm6957 = vcmp.eq.s32.totalorder %v946, %v6651
    %vm6958 = vcmp.eq.s32.totalorder %v946, %v6655
    %vm6959 = vcmp.eq.s32.totalorder %v946, %v6659
    %vm6960 = vcmp.eq.s32.totalorder %v946, %v6663
    %vm6961 = vcmp.eq.s32.totalorder %v946, %v6667
    %vm6962 = vcmp.eq.s32.totalorder %v946, %v6671
    %vm6963 = vcmp.eq.s32.totalorder %v946, %v6675
    %vm6964 = vcmp.eq.s32.totalorder %v947, %v6615
    %vm6965 = vcmp.eq.s32.totalorder %v947, %v6619
    %vm6966 = vcmp.eq.s32.totalorder %v947, %v6623
    %vm6967 = vcmp.eq.s32.totalorder %v947, %v6627
    %vm6968 = vcmp.eq.s32.totalorder %v947, %v6631
    %vm6969 = vcmp.eq.s32.totalorder %v947, %v6635
    %vm6970 = vcmp.eq.s32.totalorder %v947, %v6639
    %vm6971 = vcmp.eq.s32.totalorder %v947, %v6643
    %vm6972 = vcmp.eq.s32.totalorder %v947, %v6647
    %vm6973 = vcmp.eq.s32.totalorder %v947, %v6651
    %vm6974 = vcmp.eq.s32.totalorder %v947, %v6655
    %vm6975 = vcmp.eq.s32.totalorder %v947, %v6659
    %vm6976 = vcmp.eq.s32.totalorder %v947, %v6663
    %vm6977 = vcmp.eq.s32.totalorder %v947, %v6667
    %vm6978 = vcmp.eq.s32.totalorder %v947, %v6671
    %vm6979 = vcmp.eq.s32.totalorder %v947, %v6675
    %vm6980 = vcmp.eq.s32.totalorder %v948, %v6615
    %vm6981 = vcmp.eq.s32.totalorder %v948, %v6619
    %vm6982 = vcmp.eq.s32.totalorder %v948, %v6623
    %vm6983 = vcmp.eq.s32.totalorder %v948, %v6627
    %vm6984 = vcmp.eq.s32.totalorder %v948, %v6631
    %vm6985 = vcmp.eq.s32.totalorder %v948, %v6635
    %vm6986 = vcmp.eq.s32.totalorder %v948, %v6639
    %vm6987 = vcmp.eq.s32.totalorder %v948, %v6643
    %vm6988 = vcmp.eq.s32.totalorder %v948, %v6647
    %vm6989 = vcmp.eq.s32.totalorder %v948, %v6651
    %vm6990 = vcmp.eq.s32.totalorder %v948, %v6655
    %vm6991 = vcmp.eq.s32.totalorder %v948, %v6659
    %vm6992 = vcmp.eq.s32.totalorder %v948, %v6663
    %vm6993 = vcmp.eq.s32.totalorder %v948, %v6667
    %vm6994 = vcmp.eq.s32.totalorder %v948, %v6671
    %vm6995 = vcmp.eq.s32.totalorder %v948, %v6675
    %vm6996 = vcmp.eq.s32.totalorder %v949, %v6615
    %vm6997 = vcmp.eq.s32.totalorder %v949, %v6619
    %vm6998 = vcmp.eq.s32.totalorder %v949, %v6623
    %vm6999 = vcmp.eq.s32.totalorder %v949, %v6627
    %vm7000 = vcmp.eq.s32.totalorder %v949, %v6631
    %vm7001 = vcmp.eq.s32.totalorder %v949, %v6635
    %vm7002 = vcmp.eq.s32.totalorder %v949, %v6639
    %vm7003 = vcmp.eq.s32.totalorder %v949, %v6643
    %vm7004 = vcmp.eq.s32.totalorder %v949, %v6647
    %vm7005 = vcmp.eq.s32.totalorder %v949, %v6651
    %vm7006 = vcmp.eq.s32.totalorder %v949, %v6655
    %vm7007 = vcmp.eq.s32.totalorder %v949, %v6659
    %vm7008 = vcmp.eq.s32.totalorder %v949, %v6663
    %vm7009 = vcmp.eq.s32.totalorder %v949, %v6667
    %vm7010 = vcmp.eq.s32.totalorder %v949, %v6671
    %vm7011 = vcmp.eq.s32.totalorder %v949, %v6675
    %vm7012 = vcmp.eq.s32.totalorder %v950, %v6615
    %vm7013 = vcmp.eq.s32.totalorder %v950, %v6619
    %vm7014 = vcmp.eq.s32.totalorder %v950, %v6623
    %vm7015 = vcmp.eq.s32.totalorder %v950, %v6627
    %vm7016 = vcmp.eq.s32.totalorder %v950, %v6631
    %vm7017 = vcmp.eq.s32.totalorder %v950, %v6635
    %vm7018 = vcmp.eq.s32.totalorder %v950, %v6639
    %vm7019 = vcmp.eq.s32.totalorder %v950, %v6643
    %vm7020 = vcmp.eq.s32.totalorder %v950, %v6647
    %vm7021 = vcmp.eq.s32.totalorder %v950, %v6651
    %vm7022 = vcmp.eq.s32.totalorder %v950, %v6655
    %vm7023 = vcmp.eq.s32.totalorder %v950, %v6659
    %vm7024 = vcmp.eq.s32.totalorder %v950, %v6663
    %vm7025 = vcmp.eq.s32.totalorder %v950, %v6667
    %vm7026 = vcmp.eq.s32.totalorder %v950, %v6671
    %vm7027 = vcmp.eq.s32.totalorder %v950, %v6675
    %vm7028 = vcmp.eq.s32.totalorder %v951, %v6615
    %vm7029 = vcmp.eq.s32.totalorder %v951, %v6619
    %vm7030 = vcmp.eq.s32.totalorder %v951, %v6623
    %vm7031 = vcmp.eq.s32.totalorder %v951, %v6627
    %vm7032 = vcmp.eq.s32.totalorder %v951, %v6631
    %vm7033 = vcmp.eq.s32.totalorder %v951, %v6635
    %vm7034 = vcmp.eq.s32.totalorder %v951, %v6639
    %vm7035 = vcmp.eq.s32.totalorder %v951, %v6643
    %vm7036 = vcmp.eq.s32.totalorder %v951, %v6647
    %vm7037 = vcmp.eq.s32.totalorder %v951, %v6651
    %vm7038 = vcmp.eq.s32.totalorder %v951, %v6655
    %vm7039 = vcmp.eq.s32.totalorder %v951, %v6659
    %vm7040 = vcmp.eq.s32.totalorder %v951, %v6663
    %vm7041 = vcmp.eq.s32.totalorder %v951, %v6667
    %vm7042 = vcmp.eq.s32.totalorder %v951, %v6671
    %vm7043 = vcmp.eq.s32.totalorder %v951, %v6675
    %vm7044 = vcmp.eq.s32.totalorder %v952, %v6615
    %vm7045 = vcmp.eq.s32.totalorder %v952, %v6619
    %vm7046 = vcmp.eq.s32.totalorder %v952, %v6623
    %vm7047 = vcmp.eq.s32.totalorder %v952, %v6627
    %vm7048 = vcmp.eq.s32.totalorder %v952, %v6631
    %vm7049 = vcmp.eq.s32.totalorder %v952, %v6635
    %vm7050 = vcmp.eq.s32.totalorder %v952, %v6639
    %vm7051 = vcmp.eq.s32.totalorder %v952, %v6643
    %vm7052 = vcmp.eq.s32.totalorder %v952, %v6647
    %vm7053 = vcmp.eq.s32.totalorder %v952, %v6651
    %vm7054 = vcmp.eq.s32.totalorder %v952, %v6655
    %vm7055 = vcmp.eq.s32.totalorder %v952, %v6659
    %vm7056 = vcmp.eq.s32.totalorder %v952, %v6663
    %vm7057 = vcmp.eq.s32.totalorder %v952, %v6667
    %vm7058 = vcmp.eq.s32.totalorder %v952, %v6671
    %vm7059 = vcmp.eq.s32.totalorder %v952, %v6675
    %vm7060 = vcmp.eq.s32.totalorder %v953, %v6615
    %vm7061 = vcmp.eq.s32.totalorder %v953, %v6619
    %vm7062 = vcmp.eq.s32.totalorder %v953, %v6623
    %vm7063 = vcmp.eq.s32.totalorder %v953, %v6627
    %vm7064 = vcmp.eq.s32.totalorder %v953, %v6631
    %vm7065 = vcmp.eq.s32.totalorder %v953, %v6635
    %vm7066 = vcmp.eq.s32.totalorder %v953, %v6639
    %vm7067 = vcmp.eq.s32.totalorder %v953, %v6643
    %vm7068 = vcmp.eq.s32.totalorder %v953, %v6647
    %vm7069 = vcmp.eq.s32.totalorder %v953, %v6651
    %vm7070 = vcmp.eq.s32.totalorder %v953, %v6655
    %vm7071 = vcmp.eq.s32.totalorder %v953, %v6659
    %vm7072 = vcmp.eq.s32.totalorder %v953, %v6663
    %vm7073 = vcmp.eq.s32.totalorder %v953, %v6667
    %vm7074 = vcmp.eq.s32.totalorder %v953, %v6671
    %vm7075 = vcmp.eq.s32.totalorder %v953, %v6675
    %vm7076 = vcmp.eq.s32.totalorder %v954, %v6615
    %vm7077 = vcmp.eq.s32.totalorder %v954, %v6619
    %vm7078 = vcmp.eq.s32.totalorder %v954, %v6623
    %vm7079 = vcmp.eq.s32.totalorder %v954, %v6627
    %vm7080 = vcmp.eq.s32.totalorder %v954, %v6631
    %vm7081 = vcmp.eq.s32.totalorder %v954, %v6635
    %vm7082 = vcmp.eq.s32.totalorder %v954, %v6639
    %vm7083 = vcmp.eq.s32.totalorder %v954, %v6643
    %vm7084 = vcmp.eq.s32.totalorder %v954, %v6647
    %vm7085 = vcmp.eq.s32.totalorder %v954, %v6651
    %vm7086 = vcmp.eq.s32.totalorder %v954, %v6655
    %vm7087 = vcmp.eq.s32.totalorder %v954, %v6659
    %vm7088 = vcmp.eq.s32.totalorder %v954, %v6663
    %vm7089 = vcmp.eq.s32.totalorder %v954, %v6667
    %vm7090 = vcmp.eq.s32.totalorder %v954, %v6671
    %vm7091 = vcmp.eq.s32.totalorder %v954, %v6675
    %vm7092 = vcmp.eq.s32.totalorder %v955, %v6615
    %vm7093 = vcmp.eq.s32.totalorder %v955, %v6619
    %vm7094 = vcmp.eq.s32.totalorder %v955, %v6623
    %vm7095 = vcmp.eq.s32.totalorder %v955, %v6627
    %vm7096 = vcmp.eq.s32.totalorder %v955, %v6631
    %vm7097 = vcmp.eq.s32.totalorder %v955, %v6635
    %vm7098 = vcmp.eq.s32.totalorder %v955, %v6639
    %vm7099 = vcmp.eq.s32.totalorder %v955, %v6643
    %vm7100 = vcmp.eq.s32.totalorder %v955, %v6647
    %vm7101 = vcmp.eq.s32.totalorder %v955, %v6651
    %vm7102 = vcmp.eq.s32.totalorder %v955, %v6655
    %vm7103 = vcmp.eq.s32.totalorder %v955, %v6659
    %vm7104 = vcmp.eq.s32.totalorder %v955, %v6663
    %vm7105 = vcmp.eq.s32.totalorder %v955, %v6667
    %vm7106 = vcmp.eq.s32.totalorder %v955, %v6671
    %vm7107 = vcmp.eq.s32.totalorder %v955, %v6675
    %vm7108 = vcmp.eq.s32.totalorder %v2790, %v6615
    %vm7109 = vcmp.eq.s32.totalorder %v2790, %v6619
    %vm7110 = vcmp.eq.s32.totalorder %v2790, %v6623
    %vm7111 = vcmp.eq.s32.totalorder %v2790, %v6627
    %vm7112 = vcmp.eq.s32.totalorder %v2790, %v6631
    %vm7113 = vcmp.eq.s32.totalorder %v2790, %v6635
    %vm7114 = vcmp.eq.s32.totalorder %v2790, %v6639
    %vm7115 = vcmp.eq.s32.totalorder %v2790, %v6643
    %vm7116 = vcmp.eq.s32.totalorder %v2790, %v6647
    %vm7117 = vcmp.eq.s32.totalorder %v2790, %v6651
    %vm7118 = vcmp.eq.s32.totalorder %v2790, %v6655
    %vm7119 = vcmp.eq.s32.totalorder %v2790, %v6659
    %vm7120 = vcmp.eq.s32.totalorder %v2790, %v6663
    %vm7121 = vcmp.eq.s32.totalorder %v2790, %v6667
    %vm7122 = vcmp.eq.s32.totalorder %v2790, %v6671
    %vm7123 = vcmp.eq.s32.totalorder %v2790, %v6675
    %vm7124 = vcmp.eq.s32.totalorder %v2791, %v6615
    %vm7125 = vcmp.eq.s32.totalorder %v2791, %v6619
    %vm7126 = vcmp.eq.s32.totalorder %v2791, %v6623
    %vm7127 = vcmp.eq.s32.totalorder %v2791, %v6627
    %vm7128 = vcmp.eq.s32.totalorder %v2791, %v6631
    %vm7129 = vcmp.eq.s32.totalorder %v2791, %v6635
    %vm7130 = vcmp.eq.s32.totalorder %v2791, %v6639
    %vm7131 = vcmp.eq.s32.totalorder %v2791, %v6643
    %vm7132 = vcmp.eq.s32.totalorder %v2791, %v6647
    %vm7133 = vcmp.eq.s32.totalorder %v2791, %v6651
    %vm7134 = vcmp.eq.s32.totalorder %v2791, %v6655
    %vm7135 = vcmp.eq.s32.totalorder %v2791, %v6659
    %vm7136 = vcmp.eq.s32.totalorder %v2791, %v6663
    %vm7137 = vcmp.eq.s32.totalorder %v2791, %v6667
    %vm7138 = vcmp.eq.s32.totalorder %v2791, %v6671
    %vm7139 = vcmp.eq.s32.totalorder %v2791, %v6675
    %vm7140 = vcmp.eq.s32.totalorder %v2792, %v6615
    %vm7141 = vcmp.eq.s32.totalorder %v2792, %v6619
    %vm7142 = vcmp.eq.s32.totalorder %v2792, %v6623
    %vm7143 = vcmp.eq.s32.totalorder %v2792, %v6627
    %vm7144 = vcmp.eq.s32.totalorder %v2792, %v6631
    %vm7145 = vcmp.eq.s32.totalorder %v2792, %v6635
    %vm7146 = vcmp.eq.s32.totalorder %v2792, %v6639
    %vm7147 = vcmp.eq.s32.totalorder %v2792, %v6643
    %vm7148 = vcmp.eq.s32.totalorder %v2792, %v6647
    %vm7149 = vcmp.eq.s32.totalorder %v2792, %v6651
    %vm7150 = vcmp.eq.s32.totalorder %v2792, %v6655
    %vm7151 = vcmp.eq.s32.totalorder %v2792, %v6659
    %vm7152 = vcmp.eq.s32.totalorder %v2792, %v6663
    %vm7153 = vcmp.eq.s32.totalorder %v2792, %v6667
    %vm7154 = vcmp.eq.s32.totalorder %v2792, %v6671
    %vm7155 = vcmp.eq.s32.totalorder %v2792, %v6675
    %vm7156 = vcmp.eq.s32.totalorder %v2793, %v6615
    %vm7157 = vcmp.eq.s32.totalorder %v2793, %v6619
    %vm7158 = vcmp.eq.s32.totalorder %v2793, %v6623
    %vm7159 = vcmp.eq.s32.totalorder %v2793, %v6627
    %vm7160 = vcmp.eq.s32.totalorder %v2793, %v6631
    %vm7161 = vcmp.eq.s32.totalorder %v2793, %v6635
    %vm7162 = vcmp.eq.s32.totalorder %v2793, %v6639
    %vm7163 = vcmp.eq.s32.totalorder %v2793, %v6643
    %vm7164 = vcmp.eq.s32.totalorder %v2793, %v6647
    %vm7165 = vcmp.eq.s32.totalorder %v2793, %v6651
    %vm7166 = vcmp.eq.s32.totalorder %v2793, %v6655
    %vm7167 = vcmp.eq.s32.totalorder %v2793, %v6659
    %vm7168 = vcmp.eq.s32.totalorder %v2793, %v6663
    %vm7169 = vcmp.eq.s32.totalorder %v2793, %v6667
    %vm7170 = vcmp.eq.s32.totalorder %v2793, %v6671
    %vm7171 = vcmp.eq.s32.totalorder %v2793, %v6675
    %vm7172 = vcmp.eq.s32.totalorder %v2794, %v6615
    %vm7173 = vcmp.eq.s32.totalorder %v2794, %v6619
    %vm7174 = vcmp.eq.s32.totalorder %v2794, %v6623
    %vm7175 = vcmp.eq.s32.totalorder %v2794, %v6627
    %vm7176 = vcmp.eq.s32.totalorder %v2794, %v6631
    %vm7177 = vcmp.eq.s32.totalorder %v2794, %v6635
    %vm7178 = vcmp.eq.s32.totalorder %v2794, %v6639
    %vm7179 = vcmp.eq.s32.totalorder %v2794, %v6643
    %vm7180 = vcmp.eq.s32.totalorder %v2794, %v6647
    %vm7181 = vcmp.eq.s32.totalorder %v2794, %v6651
    %vm7182 = vcmp.eq.s32.totalorder %v2794, %v6655
    %vm7183 = vcmp.eq.s32.totalorder %v2794, %v6659
    %vm7184 = vcmp.eq.s32.totalorder %v2794, %v6663
    %vm7185 = vcmp.eq.s32.totalorder %v2794, %v6667
    %vm7186 = vcmp.eq.s32.totalorder %v2794, %v6671
    %vm7187 = vcmp.eq.s32.totalorder %v2794, %v6675
    %v7188 = vsel %vm6676, 1, 0
    %v7189 = vsel %vm6677, 1, 0
    %v7190 = vsel %vm6678, 1, 0
    %v7191 = vsel %vm6679, 1, 0
    %v7192 = vsel %vm6680, 1, 0
    %v7193 = vsel %vm6681, 1, 0
    %v7194 = vsel %vm6682, 1, 0
    %v7195 = vsel %vm6683, 1, 0
    %v7196 = vsel %vm6684, 1, 0
    %v7197 = vsel %vm6685, 1, 0
    %v7198 = vsel %vm6686, 1, 0
    %v7199 = vsel %vm6687, 1, 0
    %v7200 = vsel %vm6688, 1, 0
    %v7201 = vsel %vm6689, 1, 0
    %v7202 = vsel %vm6690, 1, 0
    %v7203 = vsel %vm6691, 1, 0
    %v7204 = vsel %vm6692, 1, 0
    %v7205 = vsel %vm6693, 1, 0
    %v7206 = vsel %vm6694, 1, 0
    %v7207 = vsel %vm6695, 1, 0
    %v7208 = vsel %vm6696, 1, 0
    %v7209 = vsel %vm6697, 1, 0
    %v7210 = vsel %vm6698, 1, 0
    %v7211 = vsel %vm6699, 1, 0
    %v7212 = vsel %vm6700, 1, 0
    %v7213 = vsel %vm6701, 1, 0
    %v7214 = vsel %vm6702, 1, 0
    %v7215 = vsel %vm6703, 1, 0
    %v7216 = vsel %vm6704, 1, 0
    %v7217 = vsel %vm6705, 1, 0
    %v7218 = vsel %vm6706, 1, 0
    %v7219 = vsel %vm6707, 1, 0
    %v7220 = vsel %vm6708, 1, 0
    %v7221 = vsel %vm6709, 1, 0
    %v7222 = vsel %vm6710, 1, 0
    %v7223 = vsel %vm6711, 1, 0
    %v7224 = vsel %vm6712, 1, 0
    %v7225 = vsel %vm6713, 1, 0
    %v7226 = vsel %vm6714, 1, 0
    %v7227 = vsel %vm6715, 1, 0
    %v7228 = vsel %vm6716, 1, 0
    %v7229 = vsel %vm6717, 1, 0
    %v7230 = vsel %vm6718, 1, 0
    %v7231 = vsel %vm6719, 1, 0
    %v7232 = vsel %vm6720, 1, 0
    %v7233 = vsel %vm6721, 1, 0
    %v7234 = vsel %vm6722, 1, 0
    %v7235 = vsel %vm6723, 1, 0
    %v7236 = vsel %vm6724, 1, 0
    %v7237 = vsel %vm6725, 1, 0
    %v7238 = vsel %vm6726, 1, 0
    %v7239 = vsel %vm6727, 1, 0
    %v7240 = vsel %vm6728, 1, 0
    %v7241 = vsel %vm6729, 1, 0
    %v7242 = vsel %vm6730, 1, 0
    %v7243 = vsel %vm6731, 1, 0
    %v7244 = vsel %vm6732, 1, 0
    %v7245 = vsel %vm6733, 1, 0
    %v7246 = vsel %vm6734, 1, 0
    %v7247 = vsel %vm6735, 1, 0
    %v7248 = vsel %vm6736, 1, 0
    %v7249 = vsel %vm6737, 1, 0
    %v7250 = vsel %vm6738, 1, 0
    %v7251 = vsel %vm6739, 1, 0
    %v7252 = vsel %vm6740, 1, 0
    %v7253 = vsel %vm6741, 1, 0
    %v7254 = vsel %vm6742, 1, 0
    %v7255 = vsel %vm6743, 1, 0
    %v7256 = vsel %vm6744, 1, 0
    %v7257 = vsel %vm6745, 1, 0
    %v7258 = vsel %vm6746, 1, 0
    %v7259 = vsel %vm6747, 1, 0
    %v7260 = vsel %vm6748, 1, 0
    %v7261 = vsel %vm6749, 1, 0
    %v7262 = vsel %vm6750, 1, 0
    %v7263 = vsel %vm6751, 1, 0
    %v7264 = vsel %vm6752, 1, 0
    %v7265 = vsel %vm6753, 1, 0
    %v7266 = vsel %vm6754, 1, 0
    %v7267 = vsel %vm6755, 1, 0
    %v7268 = vsel %vm6756, 1, 0
    %v7269 = vsel %vm6757, 1, 0
    %v7270 = vsel %vm6758, 1, 0
    %v7271 = vsel %vm6759, 1, 0
    %v7272 = vsel %vm6760, 1, 0
    %v7273 = vsel %vm6761, 1, 0
    %v7274 = vsel %vm6762, 1, 0
    %v7275 = vsel %vm6763, 1, 0
    %v7276 = vsel %vm6764, 1, 0
    %v7277 = vsel %vm6765, 1, 0
    %v7278 = vsel %vm6766, 1, 0
    %v7279 = vsel %vm6767, 1, 0
    %v7280 = vsel %vm6768, 1, 0
    %v7281 = vsel %vm6769, 1, 0
    %v7282 = vsel %vm6770, 1, 0
    %v7283 = vsel %vm6771, 1, 0
    %v7284 = vsel %vm6772, 1, 0
    %v7285 = vsel %vm6773, 1, 0
    %v7286 = vsel %vm6774, 1, 0
    %v7287 = vsel %vm6775, 1, 0
    %v7288 = vsel %vm6776, 1, 0
    %v7289 = vsel %vm6777, 1, 0
    %v7290 = vsel %vm6778, 1, 0
    %v7291 = vsel %vm6779, 1, 0
    %v7292 = vsel %vm6780, 1, 0
    %v7293 = vsel %vm6781, 1, 0
    %v7294 = vsel %vm6782, 1, 0
    %v7295 = vsel %vm6783, 1, 0
    %v7296 = vsel %vm6784, 1, 0
    %v7297 = vsel %vm6785, 1, 0
    %v7298 = vsel %vm6786, 1, 0
    %v7299 = vsel %vm6787, 1, 0
    %v7300 = vsel %vm6788, 1, 0
    %v7301 = vsel %vm6789, 1, 0
    %v7302 = vsel %vm6790, 1, 0
    %v7303 = vsel %vm6791, 1, 0
    %v7304 = vsel %vm6792, 1, 0
    %v7305 = vsel %vm6793, 1, 0
    %v7306 = vsel %vm6794, 1, 0
    %v7307 = vsel %vm6795, 1, 0
    %v7308 = vsel %vm6796, 1, 0
    %v7309 = vsel %vm6797, 1, 0
    %v7310 = vsel %vm6798, 1, 0
    %v7311 = vsel %vm6799, 1, 0
    %v7312 = vsel %vm6800, 1, 0
    %v7313 = vsel %vm6801, 1, 0
    %v7314 = vsel %vm6802, 1, 0
    %v7315 = vsel %vm6803, 1, 0
    %v7316 = vsel %vm6804, 1, 0
    %v7317 = vsel %vm6805, 1, 0
    %v7318 = vsel %vm6806, 1, 0
    %v7319 = vsel %vm6807, 1, 0
    %v7320 = vsel %vm6808, 1, 0
    %v7321 = vsel %vm6809, 1, 0
    %v7322 = vsel %vm6810, 1, 0
    %v7323 = vsel %vm6811, 1, 0
    %v7324 = vsel %vm6812, 1, 0
    %v7325 = vsel %vm6813, 1, 0
    %v7326 = vsel %vm6814, 1, 0
    %v7327 = vsel %vm6815, 1, 0
    %v7328 = vsel %vm6816, 1, 0
    %v7329 = vsel %vm6817, 1, 0
    %v7330 = vsel %vm6818, 1, 0
    %v7331 = vsel %vm6819, 1, 0
    %v7332 = vsel %vm6820, 1, 0
    %v7333 = vsel %vm6821, 1, 0
    %v7334 = vsel %vm6822, 1, 0
    %v7335 = vsel %vm6823, 1, 0
    %v7336 = vsel %vm6824, 1, 0
    %v7337 = vsel %vm6825, 1, 0
    %v7338 = vsel %vm6826, 1, 0
    %v7339 = vsel %vm6827, 1, 0
    %v7340 = vsel %vm6828, 1, 0
    %v7341 = vsel %vm6829, 1, 0
    %v7342 = vsel %vm6830, 1, 0
    %v7343 = vsel %vm6831, 1, 0
    %v7344 = vsel %vm6832, 1, 0
    %v7345 = vsel %vm6833, 1, 0
    %v7346 = vsel %vm6834, 1, 0
    %v7347 = vsel %vm6835, 1, 0
    %v7348 = vsel %vm6836, 1, 0
    %v7349 = vsel %vm6837, 1, 0
    %v7350 = vsel %vm6838, 1, 0
    %v7351 = vsel %vm6839, 1, 0
    %v7352 = vsel %vm6840, 1, 0
    %v7353 = vsel %vm6841, 1, 0
    %v7354 = vsel %vm6842, 1, 0
    %v7355 = vsel %vm6843, 1, 0
    %v7356 = vsel %vm6844, 1, 0
    %v7357 = vsel %vm6845, 1, 0
    %v7358 = vsel %vm6846, 1, 0
    %v7359 = vsel %vm6847, 1, 0
    %v7360 = vsel %vm6848, 1, 0
    %v7361 = vsel %vm6849, 1, 0
    %v7362 = vsel %vm6850, 1, 0
    %v7363 = vsel %vm6851, 1, 0
    %v7364 = vsel %vm6852, 1, 0
    %v7365 = vsel %vm6853, 1, 0
    %v7366 = vsel %vm6854, 1, 0
    %v7367 = vsel %vm6855, 1, 0
    %v7368 = vsel %vm6856, 1, 0
    %v7369 = vsel %vm6857, 1, 0
    %v7370 = vsel %vm6858, 1, 0
    %v7371 = vsel %vm6859, 1, 0
    %v7372 = vsel %vm6860, 1, 0
    %v7373 = vsel %vm6861, 1, 0
    %v7374 = vsel %vm6862, 1, 0
    %v7375 = vsel %vm6863, 1, 0
    %v7376 = vsel %vm6864, 1, 0
    %v7377 = vsel %vm6865, 1, 0
    %v7378 = vsel %vm6866, 1, 0
    %v7379 = vsel %vm6867, 1, 0
    %v7380 = vsel %vm6868, 1, 0
    %v7381 = vsel %vm6869, 1, 0
    %v7382 = vsel %vm6870, 1, 0
    %v7383 = vsel %vm6871, 1, 0
    %v7384 = vsel %vm6872, 1, 0
    %v7385 = vsel %vm6873, 1, 0
    %v7386 = vsel %vm6874, 1, 0
    %v7387 = vsel %vm6875, 1, 0
    %v7388 = vsel %vm6876, 1, 0
    %v7389 = vsel %vm6877, 1, 0
    %v7390 = vsel %vm6878, 1, 0
    %v7391 = vsel %vm6879, 1, 0
    %v7392 = vsel %vm6880, 1, 0
    %v7393 = vsel %vm6881, 1, 0
    %v7394 = vsel %vm6882, 1, 0
    %v7395 = vsel %vm6883, 1, 0
    %v7396 = vsel %vm6884, 1, 0
    %v7397 = vsel %vm6885, 1, 0
    %v7398 = vsel %vm6886, 1, 0
    %v7399 = vsel %vm6887, 1, 0
    %v7400 = vsel %vm6888, 1, 0
    %v7401 = vsel %vm6889, 1, 0
    %v7402 = vsel %vm6890, 1, 0
    %v7403 = vsel %vm6891, 1, 0
    %v7404 = vsel %vm6892, 1, 0
    %v7405 = vsel %vm6893, 1, 0
    %v7406 = vsel %vm6894, 1, 0
    %v7407 = vsel %vm6895, 1, 0
    %v7408 = vsel %vm6896, 1, 0
    %v7409 = vsel %vm6897, 1, 0
    %v7410 = vsel %vm6898, 1, 0
    %v7411 = vsel %vm6899, 1, 0
    %v7412 = vsel %vm6900, 1, 0
    %v7413 = vsel %vm6901, 1, 0
    %v7414 = vsel %vm6902, 1, 0
    %v7415 = vsel %vm6903, 1, 0
    %v7416 = vsel %vm6904, 1, 0
    %v7417 = vsel %vm6905, 1, 0
    %v7418 = vsel %vm6906, 1, 0
    %v7419 = vsel %vm6907, 1, 0
    %v7420 = vsel %vm6908, 1, 0
    %v7421 = vsel %vm6909, 1, 0
    %v7422 = vsel %vm6910, 1, 0
    %v7423 = vsel %vm6911, 1, 0
    %v7424 = vsel %vm6912, 1, 0
    %v7425 = vsel %vm6913, 1, 0
    %v7426 = vsel %vm6914, 1, 0
    %v7427 = vsel %vm6915, 1, 0
    %v7428 = vsel %vm6916, 1, 0
    %v7429 = vsel %vm6917, 1, 0
    %v7430 = vsel %vm6918, 1, 0
    %v7431 = vsel %vm6919, 1, 0
    %v7432 = vsel %vm6920, 1, 0
    %v7433 = vsel %vm6921, 1, 0
    %v7434 = vsel %vm6922, 1, 0
    %v7435 = vsel %vm6923, 1, 0
    %v7436 = vsel %vm6924, 1, 0
    %v7437 = vsel %vm6925, 1, 0
    %v7438 = vsel %vm6926, 1, 0
    %v7439 = vsel %vm6927, 1, 0
    %v7440 = vsel %vm6928, 1, 0
    %v7441 = vsel %vm6929, 1, 0
    %v7442 = vsel %vm6930, 1, 0
    %v7443 = vsel %vm6931, 1, 0
    %v7444 = vsel %vm6932, 1, 0
    %v7445 = vsel %vm6933, 1, 0
    %v7446 = vsel %vm6934, 1, 0
    %v7447 = vsel %vm6935, 1, 0
    %v7448 = vsel %vm6936, 1, 0
    %v7449 = vsel %vm6937, 1, 0
    %v7450 = vsel %vm6938, 1, 0
    %v7451 = vsel %vm6939, 1, 0
    %v7452 = vsel %vm6940, 1, 0
    %v7453 = vsel %vm6941, 1, 0
    %v7454 = vsel %vm6942, 1, 0
    %v7455 = vsel %vm6943, 1, 0
    %v7456 = vsel %vm6944, 1, 0
    %v7457 = vsel %vm6945, 1, 0
    %v7458 = vsel %vm6946, 1, 0
    %v7459 = vsel %vm6947, 1, 0
    %v7460 = vsel %vm6948, 1, 0
    %v7461 = vsel %vm6949, 1, 0
    %v7462 = vsel %vm6950, 1, 0
    %v7463 = vsel %vm6951, 1, 0
    %v7464 = vsel %vm6952, 1, 0
    %v7465 = vsel %vm6953, 1, 0
    %v7466 = vsel %vm6954, 1, 0
    %v7467 = vsel %vm6955, 1, 0
    %v7468 = vsel %vm6956, 1, 0
    %v7469 = vsel %vm6957, 1, 0
    %v7470 = vsel %vm6958, 1, 0
    %v7471 = vsel %vm6959, 1, 0
    %v7472 = vsel %vm6960, 1, 0
    %v7473 = vsel %vm6961, 1, 0
    %v7474 = vsel %vm6962, 1, 0
    %v7475 = vsel %vm6963, 1, 0
    %v7476 = vsel %vm6964, 1, 0
    %v7477 = vsel %vm6965, 1, 0
    %v7478 = vsel %vm6966, 1, 0
    %v7479 = vsel %vm6967, 1, 0
    %v7480 = vsel %vm6968, 1, 0
    %v7481 = vsel %vm6969, 1, 0
    %v7482 = vsel %vm6970, 1, 0
    %v7483 = vsel %vm6971, 1, 0
    %v7484 = vsel %vm6972, 1, 0
    %v7485 = vsel %vm6973, 1, 0
    %v7486 = vsel %vm6974, 1, 0
    %v7487 = vsel %vm6975, 1, 0
    %v7488 = vsel %vm6976, 1, 0
    %v7489 = vsel %vm6977, 1, 0
    %v7490 = vsel %vm6978, 1, 0
    %v7491 = vsel %vm6979, 1, 0
    %v7492 = vsel %vm6980, 1, 0
    %v7493 = vsel %vm6981, 1, 0
    %v7494 = vsel %vm6982, 1, 0
    %v7495 = vsel %vm6983, 1, 0
    %v7496 = vsel %vm6984, 1, 0
    %v7497 = vsel %vm6985, 1, 0
    %v7498 = vsel %vm6986, 1, 0
    %v7499 = vsel %vm6987, 1, 0
    %v7500 = vsel %vm6988, 1, 0
    %v7501 = vsel %vm6989, 1, 0
    %v7502 = vsel %vm6990, 1, 0
    %v7503 = vsel %vm6991, 1, 0
    %v7504 = vsel %vm6992, 1, 0
    %v7505 = vsel %vm6993, 1, 0
    %v7506 = vsel %vm6994, 1, 0
    %v7507 = vsel %vm6995, 1, 0
    %v7508 = vsel %vm6996, 1, 0
    %v7509 = vsel %vm6997, 1, 0
    %v7510 = vsel %vm6998, 1, 0
    %v7511 = vsel %vm6999, 1, 0
    %v7512 = vsel %vm7000, 1, 0
    %v7513 = vsel %vm7001, 1, 0
    %v7514 = vsel %vm7002, 1, 0
    %v7515 = vsel %vm7003, 1, 0
    %v7516 = vsel %vm7004, 1, 0
    %v7517 = vsel %vm7005, 1, 0
    %v7518 = vsel %vm7006, 1, 0
    %v7519 = vsel %vm7007, 1, 0
    %v7520 = vsel %vm7008, 1, 0
    %v7521 = vsel %vm7009, 1, 0
    %v7522 = vsel %vm7010, 1, 0
    %v7523 = vsel %vm7011, 1, 0
    %v7524 = vsel %vm7012, 1, 0
    %v7525 = vsel %vm7013, 1, 0
    %v7526 = vsel %vm7014, 1, 0
    %v7527 = vsel %vm7015, 1, 0
    %v7528 = vsel %vm7016, 1, 0
    %v7529 = vsel %vm7017, 1, 0
    %v7530 = vsel %vm7018, 1, 0
    %v7531 = vsel %vm7019, 1, 0
    %v7532 = vsel %vm7020, 1, 0
    %v7533 = vsel %vm7021, 1, 0
    %v7534 = vsel %vm7022, 1, 0
    %v7535 = vsel %vm7023, 1, 0
    %v7536 = vsel %vm7024, 1, 0
    %v7537 = vsel %vm7025, 1, 0
    %v7538 = vsel %vm7026, 1, 0
    %v7539 = vsel %vm7027, 1, 0
    %v7540 = vsel %vm7028, 1, 0
    %v7541 = vsel %vm7029, 1, 0
    %v7542 = vsel %vm7030, 1, 0
    %v7543 = vsel %vm7031, 1, 0
    %v7544 = vsel %vm7032, 1, 0
    %v7545 = vsel %vm7033, 1, 0
    %v7546 = vsel %vm7034, 1, 0
    %v7547 = vsel %vm7035, 1, 0
    %v7548 = vsel %vm7036, 1, 0
    %v7549 = vsel %vm7037, 1, 0
    %v7550 = vsel %vm7038, 1, 0
    %v7551 = vsel %vm7039, 1, 0
    %v7552 = vsel %vm7040, 1, 0
    %v7553 = vsel %vm7041, 1, 0
    %v7554 = vsel %vm7042, 1, 0
    %v7555 = vsel %vm7043, 1, 0
    %v7556 = vsel %vm7044, 1, 0
    %v7557 = vsel %vm7045, 1, 0
    %v7558 = vsel %vm7046, 1, 0
    %v7559 = vsel %vm7047, 1, 0
    %v7560 = vsel %vm7048, 1, 0
    %v7561 = vsel %vm7049, 1, 0
    %v7562 = vsel %vm7050, 1, 0
    %v7563 = vsel %vm7051, 1, 0
    %v7564 = vsel %vm7052, 1, 0
    %v7565 = vsel %vm7053, 1, 0
    %v7566 = vsel %vm7054, 1, 0
    %v7567 = vsel %vm7055, 1, 0
    %v7568 = vsel %vm7056, 1, 0
    %v7569 = vsel %vm7057, 1, 0
    %v7570 = vsel %vm7058, 1, 0
    %v7571 = vsel %vm7059, 1, 0
    %v7572 = vsel %vm7060, 1, 0
    %v7573 = vsel %vm7061, 1, 0
    %v7574 = vsel %vm7062, 1, 0
    %v7575 = vsel %vm7063, 1, 0
    %v7576 = vsel %vm7064, 1, 0
    %v7577 = vsel %vm7065, 1, 0
    %v7578 = vsel %vm7066, 1, 0
    %v7579 = vsel %vm7067, 1, 0
    %v7580 = vsel %vm7068, 1, 0
    %v7581 = vsel %vm7069, 1, 0
    %v7582 = vsel %vm7070, 1, 0
    %v7583 = vsel %vm7071, 1, 0
    %v7584 = vsel %vm7072, 1, 0
    %v7585 = vsel %vm7073, 1, 0
    %v7586 = vsel %vm7074, 1, 0
    %v7587 = vsel %vm7075, 1, 0
    %v7588 = vsel %vm7076, 1, 0
    %v7589 = vsel %vm7077, 1, 0
    %v7590 = vsel %vm7078, 1, 0
    %v7591 = vsel %vm7079, 1, 0
    %v7592 = vsel %vm7080, 1, 0
    %v7593 = vsel %vm7081, 1, 0
    %v7594 = vsel %vm7082, 1, 0
    %v7595 = vsel %vm7083, 1, 0
    %v7596 = vsel %vm7084, 1, 0
    %v7597 = vsel %vm7085, 1, 0
    %v7598 = vsel %vm7086, 1, 0
    %v7599 = vsel %vm7087, 1, 0
    %v7600 = vsel %vm7088, 1, 0
    %v7601 = vsel %vm7089, 1, 0
    %v7602 = vsel %vm7090, 1, 0
    %v7603 = vsel %vm7091, 1, 0
    %v7604 = vsel %vm7092, 1, 0
    %v7605 = vsel %vm7093, 1, 0
    %v7606 = vsel %vm7094, 1, 0
    %v7607 = vsel %vm7095, 1, 0
    %v7608 = vsel %vm7096, 1, 0
    %v7609 = vsel %vm7097, 1, 0
    %v7610 = vsel %vm7098, 1, 0
    %v7611 = vsel %vm7099, 1, 0
    %v7612 = vsel %vm7100, 1, 0
    %v7613 = vsel %vm7101, 1, 0
    %v7614 = vsel %vm7102, 1, 0
    %v7615 = vsel %vm7103, 1, 0
    %v7616 = vsel %vm7104, 1, 0
    %v7617 = vsel %vm7105, 1, 0
    %v7618 = vsel %vm7106, 1, 0
    %v7619 = vsel %vm7107, 1, 0
    %v7620 = vsel %vm7108, 1, 0
    %v7621 = vsel %vm7109, 1, 0
    %v7622 = vsel %vm7110, 1, 0
    %v7623 = vsel %vm7111, 1, 0
    %v7624 = vsel %vm7112, 1, 0
    %v7625 = vsel %vm7113, 1, 0
    %v7626 = vsel %vm7114, 1, 0
    %v7627 = vsel %vm7115, 1, 0
    %v7628 = vsel %vm7116, 1, 0
    %v7629 = vsel %vm7117, 1, 0
    %v7630 = vsel %vm7118, 1, 0
    %v7631 = vsel %vm7119, 1, 0
    %v7632 = vsel %vm7120, 1, 0
    %v7633 = vsel %vm7121, 1, 0
    %v7634 = vsel %vm7122, 1, 0
    %v7635 = vsel %vm7123, 1, 0
    %v7636 = vsel %vm7124, 1, 0
    %v7637 = vsel %vm7125, 1, 0
    %v7638 = vsel %vm7126, 1, 0
    %v7639 = vsel %vm7127, 1, 0
    %v7640 = vsel %vm7128, 1, 0
    %v7641 = vsel %vm7129, 1, 0
    %v7642 = vsel %vm7130, 1, 0
    %v7643 = vsel %vm7131, 1, 0
    %v7644 = vsel %vm7132, 1, 0
    %v7645 = vsel %vm7133, 1, 0
    %v7646 = vsel %vm7134, 1, 0
    %v7647 = vsel %vm7135, 1, 0
    %v7648 = vsel %vm7136, 1, 0
    %v7649 = vsel %vm7137, 1, 0
    %v7650 = vsel %vm7138, 1, 0
    %v7651 = vsel %vm7139, 1, 0
    %v7652 = vsel %vm7140, 1, 0
    %v7653 = vsel %vm7141, 1, 0
    %v7654 = vsel %vm7142, 1, 0
    %v7655 = vsel %vm7143, 1, 0
    %v7656 = vsel %vm7144, 1, 0
    %v7657 = vsel %vm7145, 1, 0
    %v7658 = vsel %vm7146, 1, 0
    %v7659 = vsel %vm7147, 1, 0
    %v7660 = vsel %vm7148, 1, 0
    %v7661 = vsel %vm7149, 1, 0
    %v7662 = vsel %vm7150, 1, 0
    %v7663 = vsel %vm7151, 1, 0
    %v7664 = vsel %vm7152, 1, 0
    %v7665 = vsel %vm7153, 1, 0
    %v7666 = vsel %vm7154, 1, 0
    %v7667 = vsel %vm7155, 1, 0
    %v7668 = vsel %vm7156, 1, 0
    %v7669 = vsel %vm7157, 1, 0
    %v7670 = vsel %vm7158, 1, 0
    %v7671 = vsel %vm7159, 1, 0
    %v7672 = vsel %vm7160, 1, 0
    %v7673 = vsel %vm7161, 1, 0
    %v7674 = vsel %vm7162, 1, 0
    %v7675 = vsel %vm7163, 1, 0
    %v7676 = vsel %vm7164, 1, 0
    %v7677 = vsel %vm7165, 1, 0
    %v7678 = vsel %vm7166, 1, 0
    %v7679 = vsel %vm7167, 1, 0
    %v7680 = vsel %vm7168, 1, 0
    %v7681 = vsel %vm7169, 1, 0
    %v7682 = vsel %vm7170, 1, 0
    %v7683 = vsel %vm7171, 1, 0
    %v7684 = vsel %vm7172, 1, 0
    %v7685 = vsel %vm7173, 1, 0
    %v7686 = vsel %vm7174, 1, 0
    %v7687 = vsel %vm7175, 1, 0
    %v7688 = vsel %vm7176, 1, 0
    %v7689 = vsel %vm7177, 1, 0
    %v7690 = vsel %vm7178, 1, 0
    %v7691 = vsel %vm7179, 1, 0
    %v7692 = vsel %vm7180, 1, 0
    %v7693 = vsel %vm7181, 1, 0
    %v7694 = vsel %vm7182, 1, 0
    %v7695 = vsel %vm7183, 1, 0
    %v7696 = vsel %vm7184, 1, 0
    %v7697 = vsel %vm7185, 1, 0
    %v7698 = vsel %vm7186, 1, 0
    %v7699 = vsel %vm7187, 1, 0
    %v7700 = vcvt.s32.f32 %v7188
    %v7701 = vcvt.s32.f32 %v7189
    %v7702 = vcvt.s32.f32 %v7190
    %v7703 = vcvt.s32.f32 %v7191
    %v7704 = vcvt.s32.f32 %v7192
    %v7705 = vcvt.s32.f32 %v7193
    %v7706 = vcvt.s32.f32 %v7194
    %v7707 = vcvt.s32.f32 %v7195
    %v7708 = vcvt.s32.f32 %v7196
    %v7709 = vcvt.s32.f32 %v7197
    %v7710 = vcvt.s32.f32 %v7198
    %v7711 = vcvt.s32.f32 %v7199
    %v7712 = vcvt.s32.f32 %v7200
    %v7713 = vcvt.s32.f32 %v7201
    %v7714 = vcvt.s32.f32 %v7202
    %v7715 = vcvt.s32.f32 %v7203
    %v7716 = vcvt.s32.f32 %v7204
    %v7717 = vcvt.s32.f32 %v7205
    %v7718 = vcvt.s32.f32 %v7206
    %v7719 = vcvt.s32.f32 %v7207
    %v7720 = vcvt.s32.f32 %v7208
    %v7721 = vcvt.s32.f32 %v7209
    %v7722 = vcvt.s32.f32 %v7210
    %v7723 = vcvt.s32.f32 %v7211
    %v7724 = vcvt.s32.f32 %v7212
    %v7725 = vcvt.s32.f32 %v7213
    %v7726 = vcvt.s32.f32 %v7214
    %v7727 = vcvt.s32.f32 %v7215
    %v7728 = vcvt.s32.f32 %v7216
    %v7729 = vcvt.s32.f32 %v7217
    %v7730 = vcvt.s32.f32 %v7218
    %v7731 = vcvt.s32.f32 %v7219
    %v7732 = vcvt.s32.f32 %v7220
    %v7733 = vcvt.s32.f32 %v7221
    %v7734 = vcvt.s32.f32 %v7222
    %v7735 = vcvt.s32.f32 %v7223
    %v7736 = vcvt.s32.f32 %v7224
    %v7737 = vcvt.s32.f32 %v7225
    %v7738 = vcvt.s32.f32 %v7226
    %v7739 = vcvt.s32.f32 %v7227
    %v7740 = vcvt.s32.f32 %v7228
    %v7741 = vcvt.s32.f32 %v7229
    %v7742 = vcvt.s32.f32 %v7230
    %v7743 = vcvt.s32.f32 %v7231
    %v7744 = vcvt.s32.f32 %v7232
    %v7745 = vcvt.s32.f32 %v7233
    %v7746 = vcvt.s32.f32 %v7234
    %v7747 = vcvt.s32.f32 %v7235
    %v7748 = vcvt.s32.f32 %v7236
    %v7749 = vcvt.s32.f32 %v7237
    %v7750 = vcvt.s32.f32 %v7238
    %v7751 = vcvt.s32.f32 %v7239
    %v7752 = vcvt.s32.f32 %v7240
    %v7753 = vcvt.s32.f32 %v7241
    %v7754 = vcvt.s32.f32 %v7242
    %v7755 = vcvt.s32.f32 %v7243
    %v7756 = vcvt.s32.f32 %v7244
    %v7757 = vcvt.s32.f32 %v7245
    %v7758 = vcvt.s32.f32 %v7246
    %v7759 = vcvt.s32.f32 %v7247
    %v7760 = vcvt.s32.f32 %v7248
    %v7761 = vcvt.s32.f32 %v7249
    %v7762 = vcvt.s32.f32 %v7250
    %v7763 = vcvt.s32.f32 %v7251
    %v7764 = vcvt.s32.f32 %v7252
    %v7765 = vcvt.s32.f32 %v7253
    %v7766 = vcvt.s32.f32 %v7254
    %v7767 = vcvt.s32.f32 %v7255
    %v7768 = vcvt.s32.f32 %v7256
    %v7769 = vcvt.s32.f32 %v7257
    %v7770 = vcvt.s32.f32 %v7258
    %v7771 = vcvt.s32.f32 %v7259
    %v7772 = vcvt.s32.f32 %v7260
    %v7773 = vcvt.s32.f32 %v7261
    %v7774 = vcvt.s32.f32 %v7262
    %v7775 = vcvt.s32.f32 %v7263
    %v7776 = vcvt.s32.f32 %v7264
    %v7777 = vcvt.s32.f32 %v7265
    %v7778 = vcvt.s32.f32 %v7266
    %v7779 = vcvt.s32.f32 %v7267
    %v7780 = vcvt.s32.f32 %v7268
    %v7781 = vcvt.s32.f32 %v7269
    %v7782 = vcvt.s32.f32 %v7270
    %v7783 = vcvt.s32.f32 %v7271
    %v7784 = vcvt.s32.f32 %v7272
    %v7785 = vcvt.s32.f32 %v7273
    %v7786 = vcvt.s32.f32 %v7274
    %v7787 = vcvt.s32.f32 %v7275
    %v7788 = vcvt.s32.f32 %v7276
    %v7789 = vcvt.s32.f32 %v7277
    %v7790 = vcvt.s32.f32 %v7278
    %v7791 = vcvt.s32.f32 %v7279
    %v7792 = vcvt.s32.f32 %v7280
    %v7793 = vcvt.s32.f32 %v7281
    %v7794 = vcvt.s32.f32 %v7282
    %v7795 = vcvt.s32.f32 %v7283
    %v7796 = vcvt.s32.f32 %v7284
    %v7797 = vcvt.s32.f32 %v7285
    %v7798 = vcvt.s32.f32 %v7286
    %v7799 = vcvt.s32.f32 %v7287
    %v7800 = vcvt.s32.f32 %v7288
    %v7801 = vcvt.s32.f32 %v7289
    %v7802 = vcvt.s32.f32 %v7290
    %v7803 = vcvt.s32.f32 %v7291
    %v7804 = vcvt.s32.f32 %v7292
    %v7805 = vcvt.s32.f32 %v7293
    %v7806 = vcvt.s32.f32 %v7294
    %v7807 = vcvt.s32.f32 %v7295
    %v7808 = vcvt.s32.f32 %v7296
    %v7809 = vcvt.s32.f32 %v7297
    %v7810 = vcvt.s32.f32 %v7298
    %v7811 = vcvt.s32.f32 %v7299
    %v7812 = vcvt.s32.f32 %v7300
    %v7813 = vcvt.s32.f32 %v7301
    %v7814 = vcvt.s32.f32 %v7302
    %v7815 = vcvt.s32.f32 %v7303
    %v7816 = vcvt.s32.f32 %v7304
    %v7817 = vcvt.s32.f32 %v7305
    %v7818 = vcvt.s32.f32 %v7306
    %v7819 = vcvt.s32.f32 %v7307
    %v7820 = vcvt.s32.f32 %v7308
    %v7821 = vcvt.s32.f32 %v7309
    %v7822 = vcvt.s32.f32 %v7310
    %v7823 = vcvt.s32.f32 %v7311
    %v7824 = vcvt.s32.f32 %v7312
    %v7825 = vcvt.s32.f32 %v7313
    %v7826 = vcvt.s32.f32 %v7314
    %v7827 = vcvt.s32.f32 %v7315
    %v7828 = vcvt.s32.f32 %v7316
    %v7829 = vcvt.s32.f32 %v7317
    %v7830 = vcvt.s32.f32 %v7318
    %v7831 = vcvt.s32.f32 %v7319
    %v7832 = vcvt.s32.f32 %v7320
    %v7833 = vcvt.s32.f32 %v7321
    %v7834 = vcvt.s32.f32 %v7322
    %v7835 = vcvt.s32.f32 %v7323
    %v7836 = vcvt.s32.f32 %v7324
    %v7837 = vcvt.s32.f32 %v7325
    %v7838 = vcvt.s32.f32 %v7326
    %v7839 = vcvt.s32.f32 %v7327
    %v7840 = vcvt.s32.f32 %v7328
    %v7841 = vcvt.s32.f32 %v7329
    %v7842 = vcvt.s32.f32 %v7330
    %v7843 = vcvt.s32.f32 %v7331
    %v7844 = vcvt.s32.f32 %v7332
    %v7845 = vcvt.s32.f32 %v7333
    %v7846 = vcvt.s32.f32 %v7334
    %v7847 = vcvt.s32.f32 %v7335
    %v7848 = vcvt.s32.f32 %v7336
    %v7849 = vcvt.s32.f32 %v7337
    %v7850 = vcvt.s32.f32 %v7338
    %v7851 = vcvt.s32.f32 %v7339
    %v7852 = vcvt.s32.f32 %v7340
    %v7853 = vcvt.s32.f32 %v7341
    %v7854 = vcvt.s32.f32 %v7342
    %v7855 = vcvt.s32.f32 %v7343
    %v7856 = vcvt.s32.f32 %v7344
    %v7857 = vcvt.s32.f32 %v7345
    %v7858 = vcvt.s32.f32 %v7346
    %v7859 = vcvt.s32.f32 %v7347
    %v7860 = vcvt.s32.f32 %v7348
    %v7861 = vcvt.s32.f32 %v7349
    %v7862 = vcvt.s32.f32 %v7350
    %v7863 = vcvt.s32.f32 %v7351
    %v7864 = vcvt.s32.f32 %v7352
    %v7865 = vcvt.s32.f32 %v7353
    %v7866 = vcvt.s32.f32 %v7354
    %v7867 = vcvt.s32.f32 %v7355
    %v7868 = vcvt.s32.f32 %v7356
    %v7869 = vcvt.s32.f32 %v7357
    %v7870 = vcvt.s32.f32 %v7358
    %v7871 = vcvt.s32.f32 %v7359
    %v7872 = vcvt.s32.f32 %v7360
    %v7873 = vcvt.s32.f32 %v7361
    %v7874 = vcvt.s32.f32 %v7362
    %v7875 = vcvt.s32.f32 %v7363
    %v7876 = vcvt.s32.f32 %v7364
    %v7877 = vcvt.s32.f32 %v7365
    %v7878 = vcvt.s32.f32 %v7366
    %v7879 = vcvt.s32.f32 %v7367
    %v7880 = vcvt.s32.f32 %v7368
    %v7881 = vcvt.s32.f32 %v7369
    %v7882 = vcvt.s32.f32 %v7370
    %v7883 = vcvt.s32.f32 %v7371
    %v7884 = vcvt.s32.f32 %v7372
    %v7885 = vcvt.s32.f32 %v7373
    %v7886 = vcvt.s32.f32 %v7374
    %v7887 = vcvt.s32.f32 %v7375
    %v7888 = vcvt.s32.f32 %v7376
    %v7889 = vcvt.s32.f32 %v7377
    %v7890 = vcvt.s32.f32 %v7378
    %v7891 = vcvt.s32.f32 %v7379
    %v7892 = vcvt.s32.f32 %v7380
    %v7893 = vcvt.s32.f32 %v7381
    %v7894 = vcvt.s32.f32 %v7382
    %v7895 = vcvt.s32.f32 %v7383
    %v7896 = vcvt.s32.f32 %v7384
    %v7897 = vcvt.s32.f32 %v7385
    %v7898 = vcvt.s32.f32 %v7386
    %v7899 = vcvt.s32.f32 %v7387
    %v7900 = vcvt.s32.f32 %v7388
    %v7901 = vcvt.s32.f32 %v7389
    %v7902 = vcvt.s32.f32 %v7390
    %v7903 = vcvt.s32.f32 %v7391
    %v7904 = vcvt.s32.f32 %v7392
    %v7905 = vcvt.s32.f32 %v7393
    %v7906 = vcvt.s32.f32 %v7394
    %v7907 = vcvt.s32.f32 %v7395
    %v7908 = vcvt.s32.f32 %v7396
    %v7909 = vcvt.s32.f32 %v7397
    %v7910 = vcvt.s32.f32 %v7398
    %v7911 = vcvt.s32.f32 %v7399
    %v7912 = vcvt.s32.f32 %v7400
    %v7913 = vcvt.s32.f32 %v7401
    %v7914 = vcvt.s32.f32 %v7402
    %v7915 = vcvt.s32.f32 %v7403
    %v7916 = vcvt.s32.f32 %v7404
    %v7917 = vcvt.s32.f32 %v7405
    %v7918 = vcvt.s32.f32 %v7406
    %v7919 = vcvt.s32.f32 %v7407
    %v7920 = vcvt.s32.f32 %v7408
    %v7921 = vcvt.s32.f32 %v7409
    %v7922 = vcvt.s32.f32 %v7410
    %v7923 = vcvt.s32.f32 %v7411
    %v7924 = vcvt.s32.f32 %v7412
    %v7925 = vcvt.s32.f32 %v7413
    %v7926 = vcvt.s32.f32 %v7414
    %v7927 = vcvt.s32.f32 %v7415
    %v7928 = vcvt.s32.f32 %v7416
    %v7929 = vcvt.s32.f32 %v7417
    %v7930 = vcvt.s32.f32 %v7418
    %v7931 = vcvt.s32.f32 %v7419
    %v7932 = vcvt.s32.f32 %v7420
    %v7933 = vcvt.s32.f32 %v7421
    %v7934 = vcvt.s32.f32 %v7422
    %v7935 = vcvt.s32.f32 %v7423
    %v7936 = vcvt.s32.f32 %v7424
    %v7937 = vcvt.s32.f32 %v7425
    %v7938 = vcvt.s32.f32 %v7426
    %v7939 = vcvt.s32.f32 %v7427
    %v7940 = vcvt.s32.f32 %v7428
    %v7941 = vcvt.s32.f32 %v7429
    %v7942 = vcvt.s32.f32 %v7430
    %v7943 = vcvt.s32.f32 %v7431
    %v7944 = vcvt.s32.f32 %v7432
    %v7945 = vcvt.s32.f32 %v7433
    %v7946 = vcvt.s32.f32 %v7434
    %v7947 = vcvt.s32.f32 %v7435
    %v7948 = vcvt.s32.f32 %v7436
    %v7949 = vcvt.s32.f32 %v7437
    %v7950 = vcvt.s32.f32 %v7438
    %v7951 = vcvt.s32.f32 %v7439
    %v7952 = vcvt.s32.f32 %v7440
    %v7953 = vcvt.s32.f32 %v7441
    %v7954 = vcvt.s32.f32 %v7442
    %v7955 = vcvt.s32.f32 %v7443
    %v7956 = vcvt.s32.f32 %v7444
    %v7957 = vcvt.s32.f32 %v7445
    %v7958 = vcvt.s32.f32 %v7446
    %v7959 = vcvt.s32.f32 %v7447
    %v7960 = vcvt.s32.f32 %v7448
    %v7961 = vcvt.s32.f32 %v7449
    %v7962 = vcvt.s32.f32 %v7450
    %v7963 = vcvt.s32.f32 %v7451
    %v7964 = vcvt.s32.f32 %v7452
    %v7965 = vcvt.s32.f32 %v7453
    %v7966 = vcvt.s32.f32 %v7454
    %v7967 = vcvt.s32.f32 %v7455
    %v7968 = vcvt.s32.f32 %v7456
    %v7969 = vcvt.s32.f32 %v7457
    %v7970 = vcvt.s32.f32 %v7458
    %v7971 = vcvt.s32.f32 %v7459
    %v7972 = vcvt.s32.f32 %v7460
    %v7973 = vcvt.s32.f32 %v7461
    %v7974 = vcvt.s32.f32 %v7462
    %v7975 = vcvt.s32.f32 %v7463
    %v7976 = vcvt.s32.f32 %v7464
    %v7977 = vcvt.s32.f32 %v7465
    %v7978 = vcvt.s32.f32 %v7466
    %v7979 = vcvt.s32.f32 %v7467
    %v7980 = vcvt.s32.f32 %v7468
    %v7981 = vcvt.s32.f32 %v7469
    %v7982 = vcvt.s32.f32 %v7470
    %v7983 = vcvt.s32.f32 %v7471
    %v7984 = vcvt.s32.f32 %v7472
    %v7985 = vcvt.s32.f32 %v7473
    %v7986 = vcvt.s32.f32 %v7474
    %v7987 = vcvt.s32.f32 %v7475
    %v7988 = vcvt.s32.f32 %v7476
    %v7989 = vcvt.s32.f32 %v7477
    %v7990 = vcvt.s32.f32 %v7478
    %v7991 = vcvt.s32.f32 %v7479
    %v7992 = vcvt.s32.f32 %v7480
    %v7993 = vcvt.s32.f32 %v7481
    %v7994 = vcvt.s32.f32 %v7482
    %v7995 = vcvt.s32.f32 %v7483
    %v7996 = vcvt.s32.f32 %v7484
    %v7997 = vcvt.s32.f32 %v7485
    %v7998 = vcvt.s32.f32 %v7486
    %v7999 = vcvt.s32.f32 %v7487
    %v8000 = vcvt.s32.f32 %v7488
    %v8001 = vcvt.s32.f32 %v7489
    %v8002 = vcvt.s32.f32 %v7490
    %v8003 = vcvt.s32.f32 %v7491
    %v8004 = vcvt.s32.f32 %v7492
    %v8005 = vcvt.s32.f32 %v7493
    %v8006 = vcvt.s32.f32 %v7494
    %v8007 = vcvt.s32.f32 %v7495
    %v8008 = vcvt.s32.f32 %v7496
    %v8009 = vcvt.s32.f32 %v7497
    %v8010 = vcvt.s32.f32 %v7498
    %v8011 = vcvt.s32.f32 %v7499
    %v8012 = vcvt.s32.f32 %v7500
    %v8013 = vcvt.s32.f32 %v7501
    %v8014 = vcvt.s32.f32 %v7502
    %v8015 = vcvt.s32.f32 %v7503
    %v8016 = vcvt.s32.f32 %v7504
    %v8017 = vcvt.s32.f32 %v7505
    %v8018 = vcvt.s32.f32 %v7506
    %v8019 = vcvt.s32.f32 %v7507
    %v8020 = vcvt.s32.f32 %v7508
    %v8021 = vcvt.s32.f32 %v7509
    %v8022 = vcvt.s32.f32 %v7510
    %v8023 = vcvt.s32.f32 %v7511
    %v8024 = vcvt.s32.f32 %v7512
    %v8025 = vcvt.s32.f32 %v7513
    %v8026 = vcvt.s32.f32 %v7514
    %v8027 = vcvt.s32.f32 %v7515
    %v8028 = vcvt.s32.f32 %v7516
    %v8029 = vcvt.s32.f32 %v7517
    %v8030 = vcvt.s32.f32 %v7518
    %v8031 = vcvt.s32.f32 %v7519
    %v8032 = vcvt.s32.f32 %v7520
    %v8033 = vcvt.s32.f32 %v7521
    %v8034 = vcvt.s32.f32 %v7522
    %v8035 = vcvt.s32.f32 %v7523
    %v8036 = vcvt.s32.f32 %v7524
    %v8037 = vcvt.s32.f32 %v7525
    %v8038 = vcvt.s32.f32 %v7526
    %v8039 = vcvt.s32.f32 %v7527
    %v8040 = vcvt.s32.f32 %v7528
    %v8041 = vcvt.s32.f32 %v7529
    %v8042 = vcvt.s32.f32 %v7530
    %v8043 = vcvt.s32.f32 %v7531
    %v8044 = vcvt.s32.f32 %v7532
    %v8045 = vcvt.s32.f32 %v7533
    %v8046 = vcvt.s32.f32 %v7534
    %v8047 = vcvt.s32.f32 %v7535
    %v8048 = vcvt.s32.f32 %v7536
    %v8049 = vcvt.s32.f32 %v7537
    %v8050 = vcvt.s32.f32 %v7538
    %v8051 = vcvt.s32.f32 %v7539
    %v8052 = vcvt.s32.f32 %v7540
    %v8053 = vcvt.s32.f32 %v7541
    %v8054 = vcvt.s32.f32 %v7542
    %v8055 = vcvt.s32.f32 %v7543
    %v8056 = vcvt.s32.f32 %v7544
    %v8057 = vcvt.s32.f32 %v7545
    %v8058 = vcvt.s32.f32 %v7546
    %v8059 = vcvt.s32.f32 %v7547
    %v8060 = vcvt.s32.f32 %v7548
    %v8061 = vcvt.s32.f32 %v7549
    %v8062 = vcvt.s32.f32 %v7550
    %v8063 = vcvt.s32.f32 %v7551
    %v8064 = vcvt.s32.f32 %v7552
    %v8065 = vcvt.s32.f32 %v7553
    %v8066 = vcvt.s32.f32 %v7554
    %v8067 = vcvt.s32.f32 %v7555
    %v8068 = vcvt.s32.f32 %v7556
    %v8069 = vcvt.s32.f32 %v7557
    %v8070 = vcvt.s32.f32 %v7558
    %v8071 = vcvt.s32.f32 %v7559
    %v8072 = vcvt.s32.f32 %v7560
    %v8073 = vcvt.s32.f32 %v7561
    %v8074 = vcvt.s32.f32 %v7562
    %v8075 = vcvt.s32.f32 %v7563
    %v8076 = vcvt.s32.f32 %v7564
    %v8077 = vcvt.s32.f32 %v7565
    %v8078 = vcvt.s32.f32 %v7566
    %v8079 = vcvt.s32.f32 %v7567
    %v8080 = vcvt.s32.f32 %v7568
    %v8081 = vcvt.s32.f32 %v7569
    %v8082 = vcvt.s32.f32 %v7570
    %v8083 = vcvt.s32.f32 %v7571
    %v8084 = vcvt.s32.f32 %v7572
    %v8085 = vcvt.s32.f32 %v7573
    %v8086 = vcvt.s32.f32 %v7574
    %v8087 = vcvt.s32.f32 %v7575
    %v8088 = vcvt.s32.f32 %v7576
    %v8089 = vcvt.s32.f32 %v7577
    %v8090 = vcvt.s32.f32 %v7578
    %v8091 = vcvt.s32.f32 %v7579
    %v8092 = vcvt.s32.f32 %v7580
    %v8093 = vcvt.s32.f32 %v7581
    %v8094 = vcvt.s32.f32 %v7582
    %v8095 = vcvt.s32.f32 %v7583
    %v8096 = vcvt.s32.f32 %v7584
    %v8097 = vcvt.s32.f32 %v7585
    %v8098 = vcvt.s32.f32 %v7586
    %v8099 = vcvt.s32.f32 %v7587
    %v8100 = vcvt.s32.f32 %v7588
    %v8101 = vcvt.s32.f32 %v7589
    %v8102 = vcvt.s32.f32 %v7590
    %v8103 = vcvt.s32.f32 %v7591
    %v8104 = vcvt.s32.f32 %v7592
    %v8105 = vcvt.s32.f32 %v7593
    %v8106 = vcvt.s32.f32 %v7594
    %v8107 = vcvt.s32.f32 %v7595
    %v8108 = vcvt.s32.f32 %v7596
    %v8109 = vcvt.s32.f32 %v7597
    %v8110 = vcvt.s32.f32 %v7598
    %v8111 = vcvt.s32.f32 %v7599
    %v8112 = vcvt.s32.f32 %v7600
    %v8113 = vcvt.s32.f32 %v7601
    %v8114 = vcvt.s32.f32 %v7602
    %v8115 = vcvt.s32.f32 %v7603
    %v8116 = vcvt.s32.f32 %v7604
    %v8117 = vcvt.s32.f32 %v7605
    %v8118 = vcvt.s32.f32 %v7606
    %v8119 = vcvt.s32.f32 %v7607
    %v8120 = vcvt.s32.f32 %v7608
    %v8121 = vcvt.s32.f32 %v7609
    %v8122 = vcvt.s32.f32 %v7610
    %v8123 = vcvt.s32.f32 %v7611
    %v8124 = vcvt.s32.f32 %v7612
    %v8125 = vcvt.s32.f32 %v7613
    %v8126 = vcvt.s32.f32 %v7614
    %v8127 = vcvt.s32.f32 %v7615
    %v8128 = vcvt.s32.f32 %v7616
    %v8129 = vcvt.s32.f32 %v7617
    %v8130 = vcvt.s32.f32 %v7618
    %v8131 = vcvt.s32.f32 %v7619
    %v8132 = vcvt.s32.f32 %v7620
    %v8133 = vcvt.s32.f32 %v7621
    %v8134 = vcvt.s32.f32 %v7622
    %v8135 = vcvt.s32.f32 %v7623
    %v8136 = vcvt.s32.f32 %v7624
    %v8137 = vcvt.s32.f32 %v7625
    %v8138 = vcvt.s32.f32 %v7626
    %v8139 = vcvt.s32.f32 %v7627
    %v8140 = vcvt.s32.f32 %v7628
    %v8141 = vcvt.s32.f32 %v7629
    %v8142 = vcvt.s32.f32 %v7630
    %v8143 = vcvt.s32.f32 %v7631
    %v8144 = vcvt.s32.f32 %v7632
    %v8145 = vcvt.s32.f32 %v7633
    %v8146 = vcvt.s32.f32 %v7634
    %v8147 = vcvt.s32.f32 %v7635
    %v8148 = vcvt.s32.f32 %v7636
    %v8149 = vcvt.s32.f32 %v7637
    %v8150 = vcvt.s32.f32 %v7638
    %v8151 = vcvt.s32.f32 %v7639
    %v8152 = vcvt.s32.f32 %v7640
    %v8153 = vcvt.s32.f32 %v7641
    %v8154 = vcvt.s32.f32 %v7642
    %v8155 = vcvt.s32.f32 %v7643
    %v8156 = vcvt.s32.f32 %v7644
    %v8157 = vcvt.s32.f32 %v7645
    %v8158 = vcvt.s32.f32 %v7646
    %v8159 = vcvt.s32.f32 %v7647
    %v8160 = vcvt.s32.f32 %v7648
    %v8161 = vcvt.s32.f32 %v7649
    %v8162 = vcvt.s32.f32 %v7650
    %v8163 = vcvt.s32.f32 %v7651
    %v8164 = vcvt.s32.f32 %v7652
    %v8165 = vcvt.s32.f32 %v7653
    %v8166 = vcvt.s32.f32 %v7654
    %v8167 = vcvt.s32.f32 %v7655
    %v8168 = vcvt.s32.f32 %v7656
    %v8169 = vcvt.s32.f32 %v7657
    %v8170 = vcvt.s32.f32 %v7658
    %v8171 = vcvt.s32.f32 %v7659
    %v8172 = vcvt.s32.f32 %v7660
    %v8173 = vcvt.s32.f32 %v7661
    %v8174 = vcvt.s32.f32 %v7662
    %v8175 = vcvt.s32.f32 %v7663
    %v8176 = vcvt.s32.f32 %v7664
    %v8177 = vcvt.s32.f32 %v7665
    %v8178 = vcvt.s32.f32 %v7666
    %v8179 = vcvt.s32.f32 %v7667
    %v8180 = vcvt.s32.f32 %v7668
    %v8181 = vcvt.s32.f32 %v7669
    %v8182 = vcvt.s32.f32 %v7670
    %v8183 = vcvt.s32.f32 %v7671
    %v8184 = vcvt.s32.f32 %v7672
    %v8185 = vcvt.s32.f32 %v7673
    %v8186 = vcvt.s32.f32 %v7674
    %v8187 = vcvt.s32.f32 %v7675
    %v8188 = vcvt.s32.f32 %v7676
    %v8189 = vcvt.s32.f32 %v7677
    %v8190 = vcvt.s32.f32 %v7678
    %v8191 = vcvt.s32.f32 %v7679
    %v8192 = vcvt.s32.f32 %v7680
    %v8193 = vcvt.s32.f32 %v7681
    %v8194 = vcvt.s32.f32 %v7682
    %v8195 = vcvt.s32.f32 %v7683
    %v8196 = vcvt.s32.f32 %v7684
    %v8197 = vcvt.s32.f32 %v7685
    %v8198 = vcvt.s32.f32 %v7686
    %v8199 = vcvt.s32.f32 %v7687
    %v8200 = vcvt.s32.f32 %v7688
    %v8201 = vcvt.s32.f32 %v7689
    %v8202 = vcvt.s32.f32 %v7690
    %v8203 = vcvt.s32.f32 %v7691
    %v8204 = vcvt.s32.f32 %v7692
    %v8205 = vcvt.s32.f32 %v7693
    %v8206 = vcvt.s32.f32 %v7694
    %v8207 = vcvt.s32.f32 %v7695
    %v8208 = vcvt.s32.f32 %v7696
    %v8209 = vcvt.s32.f32 %v7697
    %v8210 = vcvt.s32.f32 %v7698
    %v8211 = vcvt.s32.f32 %v7699
    %8212 = vmatprep.subr.mxu0 %v7941
    %8213 = vmatpush1.msra.mxu0 %v7940
    %8214 = vmatprep.subr.mxu0 %v7925
    %8215 = vmatpush1.msra.mxu0 %v7924
    %8216 = vmatprep.subr.mxu0 %v7909
    %8217 = vmatpush1.msra.mxu0 %v7908
    %8218 = vmatprep.subr.mxu0 %v7893
    %8219 = vmatpush1.msra.mxu0 %v7892
    %8220 = vmatprep.subr.mxu0 %v7877
    %8221 = vmatpush1.msra.mxu0 %v7876
    %8222 = vmatprep.subr.mxu0 %v7861
    %8223 = vmatpush1.msra.mxu0 %v7860
    %8224 = vmatprep.subr.mxu0 %v7845
    %8225 = vmatpush1.msra.mxu0 %v7844
    %8226 = vmatprep.subr.mxu0 %v7829
    %8227 = vmatpush1.msra.mxu0 %v7828
    %8228 = vmatprep.subr.mxu0 %v7813
    %8229 = vmatpush1.msra.mxu0 %v7812
    %8230 = vmatprep.subr.mxu0 %v7797
    %8231 = vmatpush1.msra.mxu0 %v7796
    %8232 = vmatprep.subr.mxu0 %v7781
    %8233 = vmatpush1.msra.mxu0 %v7780
    %8234 = vmatprep.subr.mxu0 %v7765
    %8235 = vmatpush1.msra.mxu0 %v7764
    %8236 = vmatprep.subr.mxu0 %v7749
    %8237 = vmatpush1.msra.mxu0 %v7748
    %8238 = vmatprep.subr.mxu0 %v7733
    %8239 = vmatpush1.msra.mxu0 %v7732
    %8240 = vmatprep.subr.mxu0 %v7717
    %8241 = vmatpush1.msra.mxu0 %v7716
    %8242 = vmatprep.subr.mxu0 %v7701
    %8243 = vmatpush1.msra.mxu0 %v7700
    %8244 = vmatprep.subr.mxu0 %v8197
    %8245 = vmatpush2.msra.mxu0 %v8196
    %8246 = vmatprep.subr.mxu0 %v8181
    %8247 = vmatpush2.msra.mxu0 %v8180
    %8248 = vmatprep.subr.mxu0 %v8165
    %8249 = vmatpush2.msra.mxu0 %v8164
    %8250 = vmatprep.subr.mxu0 %v8149
    %8251 = vmatpush2.msra.mxu0 %v8148
    %8252 = vmatprep.subr.mxu0 %v8133
    %8253 = vmatpush2.msra.mxu0 %v8132
    %8254 = vmatprep.subr.mxu0 %v8117
    %8255 = vmatpush2.msra.mxu0 %v8116
    %8256 = vmatprep.subr.mxu0 %v8101
    %8257 = vmatpush2.msra.mxu0 %v8100
    %8258 = vmatprep.subr.mxu0 %v8085
    %8259 = vmatpush2.msra.mxu0 %v8084
    %8260 = vmatprep.subr.mxu0 %v8069
    %8261 = vmatpush2.msra.mxu0 %v8068
    %8262 = vmatprep.subr.mxu0 %v8053
    %8263 = vmatpush2.msra.mxu0 %v8052
    %8264 = vmatprep.subr.mxu0 %v8037
    %8265 = vmatpush2.msra.mxu0 %v8036
    %8266 = vmatprep.subr.mxu0 %v8021
    %8267 = vmatpush2.msra.mxu0 %v8020
    %8268 = vmatprep.subr.mxu0 %v8005
    %8269 = vmatpush2.msra.mxu0 %v8004
    %8270 = vmatprep.subr.mxu0 %v7989
    %8271 = vmatpush2.msra.mxu0 %v7988
    %8272 = vmatprep.subr.mxu0 %v7973
    %8273 = vmatpush2.msra.mxu0 %v7972
    %8274 = vmatprep.subr.mxu0 %v7957
    %8275 = vmatpush2.msra.mxu0 %v7956
    %8276 = vmatprep.mubr.f32.mxu0 %v6383
    %8277 = vmatmul.mubr.f32.gmra.mxu0 %v6382
    %v8278 = vpop.f32.mrf.mxu0
    %v8279 = vadd.f32 0.0, %v8278
    %v8280 = vpop.f32.mrf.mxu0
    %v8281 = vadd.f32 0.0, %v8280
    %8282 = vmatprep.mubr.f32.mxu0 %v6385
    %8283 = vmatmul.mubr.f32.gmra.mxu0 %v6384
    %v8284 = vpop.f32.mrf.mxu0
    %v8285 = vadd.f32 0.0, %v8284
    %v8286 = vpop.f32.mrf.mxu0
    %v8287 = vadd.f32 0.0, %v8286
    %8288 = vmatprep.mubr.f32.mxu0 %v6387
    %8289 = vmatmul.mubr.f32.gmra.mxu0 %v6386
    %v8290 = vpop.f32.mrf.mxu0
    %v8291 = vadd.f32 0.0, %v8290
    %v8292 = vpop.f32.mrf.mxu0
    %v8293 = vadd.f32 0.0, %v8292
    %8294 = vdwg.mxu0
    %8295 = vmatprep.subr.mxu0 %v7943
    %8296 = vmatpush1.msra.mxu0 %v7942
    %8297 = vmatprep.subr.mxu0 %v7927
    %8298 = vmatpush1.msra.mxu0 %v7926
    %8299 = vmatprep.subr.mxu0 %v7911
    %8300 = vmatpush1.msra.mxu0 %v7910
    %8301 = vmatprep.subr.mxu0 %v7895
    %8302 = vmatpush1.msra.mxu0 %v7894
    %8303 = vmatprep.subr.mxu0 %v7879
    %8304 = vmatpush1.msra.mxu0 %v7878
    %8305 = vmatprep.subr.mxu0 %v7863
    %8306 = vmatpush1.msra.mxu0 %v7862
    %8307 = vmatprep.subr.mxu0 %v7847
    %8308 = vmatpush1.msra.mxu0 %v7846
    %8309 = vmatprep.subr.mxu0 %v7831
    %8310 = vmatpush1.msra.mxu0 %v7830
    %8311 = vmatprep.subr.mxu0 %v7815
    %8312 = vmatpush1.msra.mxu0 %v7814
    %8313 = vmatprep.subr.mxu0 %v7799
    %8314 = vmatpush1.msra.mxu0 %v7798
    %8315 = vmatprep.subr.mxu0 %v7783
    %8316 = vmatpush1.msra.mxu0 %v7782
    %8317 = vmatprep.subr.mxu0 %v7767
    %8318 = vmatpush1.msra.mxu0 %v7766
    %8319 = vmatprep.subr.mxu0 %v7751
    %8320 = vmatpush1.msra.mxu0 %v7750
    %8321 = vmatprep.subr.mxu0 %v7735
    %8322 = vmatpush1.msra.mxu0 %v7734
    %8323 = vmatprep.subr.mxu0 %v7719
    %8324 = vmatpush1.msra.mxu0 %v7718
    %8325 = vmatprep.subr.mxu0 %v7703
    %8326 = vmatpush1.msra.mxu0 %v7702
    %8327 = vmatprep.subr.mxu0 %v8199
    %8328 = vmatpush2.msra.mxu0 %v8198
    %8329 = vmatprep.subr.mxu0 %v8183
    %8330 = vmatpush2.msra.mxu0 %v8182
    %8331 = vmatprep.subr.mxu0 %v8167
    %8332 = vmatpush2.msra.mxu0 %v8166
    %8333 = vmatprep.subr.mxu0 %v8151
    %8334 = vmatpush2.msra.mxu0 %v8150
    %8335 = vmatprep.subr.mxu0 %v8135
    %8336 = vmatpush2.msra.mxu0 %v8134
    %8337 = vmatprep.subr.mxu0 %v8119
    %8338 = vmatpush2.msra.mxu0 %v8118
    %8339 = vmatprep.subr.mxu0 %v8103
    %8340 = vmatpush2.msra.mxu0 %v8102
    %8341 = vmatprep.subr.mxu0 %v8087
    %8342 = vmatpush2.msra.mxu0 %v8086
    %8343 = vmatprep.subr.mxu0 %v8071
    %8344 = vmatpush2.msra.mxu0 %v8070
    %8345 = vmatprep.subr.mxu0 %v8055
    %8346 = vmatpush2.msra.mxu0 %v8054
    %8347 = vmatprep.subr.mxu0 %v8039
    %8348 = vmatpush2.msra.mxu0 %v8038
    %8349 = vmatprep.subr.mxu0 %v8023
    %8350 = vmatpush2.msra.mxu0 %v8022
    %8351 = vmatprep.subr.mxu0 %v8007
    %8352 = vmatpush2.msra.mxu0 %v8006
    %8353 = vmatprep.subr.mxu0 %v7991
    %8354 = vmatpush2.msra.mxu0 %v7990
    %8355 = vmatprep.subr.mxu0 %v7975
    %8356 = vmatpush2.msra.mxu0 %v7974
    %8357 = vmatprep.subr.mxu0 %v7959
    %8358 = vmatpush2.msra.mxu0 %v7958
    %8359 = vmatprep.mubr.f32.mxu0 %v6383
    %8360 = vmatmul.mubr.f32.gmra.mxu0 %v6382
    %v8361 = vpop.f32.mrf.mxu0
    %v8362 = vadd.f32 0.0, %v8361
    %v8363 = vpop.f32.mrf.mxu0
    %v8364 = vadd.f32 0.0, %v8363
    %8365 = vmatprep.mubr.f32.mxu0 %v6385
    %8366 = vmatmul.mubr.f32.gmra.mxu0 %v6384
    %v8367 = vpop.f32.mrf.mxu0
    %v8368 = vadd.f32 0.0, %v8367
    %v8369 = vpop.f32.mrf.mxu0
    %v8370 = vadd.f32 0.0, %v8369
    %8371 = vmatprep.mubr.f32.mxu0 %v6387
    %8372 = vmatmul.mubr.f32.gmra.mxu0 %v6386
    %v8373 = vpop.f32.mrf.mxu0
    %v8374 = vadd.f32 0.0, %v8373
    %v8375 = vpop.f32.mrf.mxu0
    %v8376 = vadd.f32 0.0, %v8375
    %8377 = vdwg.mxu0
    %8378 = vmatprep.subr.mxu0 %v7945
    %8379 = vmatpush1.msra.mxu0 %v7944
    %8380 = vmatprep.subr.mxu0 %v7929
    %8381 = vmatpush1.msra.mxu0 %v7928
    %8382 = vmatprep.subr.mxu0 %v7913
    %8383 = vmatpush1.msra.mxu0 %v7912
    %8384 = vmatprep.subr.mxu0 %v7897
    %8385 = vmatpush1.msra.mxu0 %v7896
    %8386 = vmatprep.subr.mxu0 %v7881
    %8387 = vmatpush1.msra.mxu0 %v7880
    %8388 = vmatprep.subr.mxu0 %v7865
    %8389 = vmatpush1.msra.mxu0 %v7864
    %8390 = vmatprep.subr.mxu0 %v7849
    %8391 = vmatpush1.msra.mxu0 %v7848
    %8392 = vmatprep.subr.mxu0 %v7833
    %8393 = vmatpush1.msra.mxu0 %v7832
    %8394 = vmatprep.subr.mxu0 %v7817
    %8395 = vmatpush1.msra.mxu0 %v7816
    %8396 = vmatprep.subr.mxu0 %v7801
    %8397 = vmatpush1.msra.mxu0 %v7800
    %8398 = vmatprep.subr.mxu0 %v7785
    %8399 = vmatpush1.msra.mxu0 %v7784
    %8400 = vmatprep.subr.mxu0 %v7769
    %8401 = vmatpush1.msra.mxu0 %v7768
    %8402 = vmatprep.subr.mxu0 %v7753
    %8403 = vmatpush1.msra.mxu0 %v7752
    %8404 = vmatprep.subr.mxu0 %v7737
    %8405 = vmatpush1.msra.mxu0 %v7736
    %8406 = vmatprep.subr.mxu0 %v7721
    %8407 = vmatpush1.msra.mxu0 %v7720
    %8408 = vmatprep.subr.mxu0 %v7705
    %8409 = vmatpush1.msra.mxu0 %v7704
    %8410 = vmatprep.subr.mxu0 %v8201
    %8411 = vmatpush2.msra.mxu0 %v8200
    %8412 = vmatprep.subr.mxu0 %v8185
    %8413 = vmatpush2.msra.mxu0 %v8184
    %8414 = vmatprep.subr.mxu0 %v8169
    %8415 = vmatpush2.msra.mxu0 %v8168
    %8416 = vmatprep.subr.mxu0 %v8153
    %8417 = vmatpush2.msra.mxu0 %v8152
    %8418 = vmatprep.subr.mxu0 %v8137
    %8419 = vmatpush2.msra.mxu0 %v8136
    %8420 = vmatprep.subr.mxu0 %v8121
    %8421 = vmatpush2.msra.mxu0 %v8120
    %8422 = vmatprep.subr.mxu0 %v8105
    %8423 = vmatpush2.msra.mxu0 %v8104
    %8424 = vmatprep.subr.mxu0 %v8089
    %8425 = vmatpush2.msra.mxu0 %v8088
    %8426 = vmatprep.subr.mxu0 %v8073
    %8427 = vmatpush2.msra.mxu0 %v8072
    %8428 = vmatprep.subr.mxu0 %v8057
    %8429 = vmatpush2.msra.mxu0 %v8056
    %8430 = vmatprep.subr.mxu0 %v8041
    %8431 = vmatpush2.msra.mxu0 %v8040
    %8432 = vmatprep.subr.mxu0 %v8025
    %8433 = vmatpush2.msra.mxu0 %v8024
    %8434 = vmatprep.subr.mxu0 %v8009
    %8435 = vmatpush2.msra.mxu0 %v8008
    %8436 = vmatprep.subr.mxu0 %v7993
    %8437 = vmatpush2.msra.mxu0 %v7992
    %8438 = vmatprep.subr.mxu0 %v7977
    %8439 = vmatpush2.msra.mxu0 %v7976
    %8440 = vmatprep.subr.mxu0 %v7961
    %8441 = vmatpush2.msra.mxu0 %v7960
    %8442 = vmatprep.mubr.f32.mxu0 %v6383
    %8443 = vmatmul.mubr.f32.gmra.mxu0 %v6382
    %v8444 = vpop.f32.mrf.mxu0
    %v8445 = vadd.f32 0.0, %v8444
    %v8446 = vpop.f32.mrf.mxu0
    %v8447 = vadd.f32 0.0, %v8446
    %8448 = vmatprep.mubr.f32.mxu0 %v6385
    %8449 = vmatmul.mubr.f32.gmra.mxu0 %v6384
    %v8450 = vpop.f32.mrf.mxu0
    %v8451 = vadd.f32 0.0, %v8450
    %v8452 = vpop.f32.mrf.mxu0
    %v8453 = vadd.f32 0.0, %v8452
    %8454 = vmatprep.mubr.f32.mxu0 %v6387
    %8455 = vmatmul.mubr.f32.gmra.mxu0 %v6386
    %v8456 = vpop.f32.mrf.mxu0
    %v8457 = vadd.f32 0.0, %v8456
    %v8458 = vpop.f32.mrf.mxu0
    %v8459 = vadd.f32 0.0, %v8458
    %8460 = vdwg.mxu0
    %8461 = vmatprep.subr.mxu0 %v7947
    %8462 = vmatpush1.msra.mxu0 %v7946
    %8463 = vmatprep.subr.mxu0 %v7931
    %8464 = vmatpush1.msra.mxu0 %v7930
    %8465 = vmatprep.subr.mxu0 %v7915
    %8466 = vmatpush1.msra.mxu0 %v7914
    %8467 = vmatprep.subr.mxu0 %v7899
    %8468 = vmatpush1.msra.mxu0 %v7898
    %8469 = vmatprep.subr.mxu0 %v7883
    %8470 = vmatpush1.msra.mxu0 %v7882
    %8471 = vmatprep.subr.mxu0 %v7867
    %8472 = vmatpush1.msra.mxu0 %v7866
    %8473 = vmatprep.subr.mxu0 %v7851
    %8474 = vmatpush1.msra.mxu0 %v7850
    %8475 = vmatprep.subr.mxu0 %v7835
    %8476 = vmatpush1.msra.mxu0 %v7834
    %8477 = vmatprep.subr.mxu0 %v7819
    %8478 = vmatpush1.msra.mxu0 %v7818
    %8479 = vmatprep.subr.mxu0 %v7803
    %8480 = vmatpush1.msra.mxu0 %v7802
    %8481 = vmatprep.subr.mxu0 %v7787
    %8482 = vmatpush1.msra.mxu0 %v7786
    %8483 = vmatprep.subr.mxu0 %v7771
    %8484 = vmatpush1.msra.mxu0 %v7770
    %8485 = vmatprep.subr.mxu0 %v7755
    %8486 = vmatpush1.msra.mxu0 %v7754
    %8487 = vmatprep.subr.mxu0 %v7739
    %8488 = vmatpush1.msra.mxu0 %v7738
    %8489 = vmatprep.subr.mxu0 %v7723
    %8490 = vmatpush1.msra.mxu0 %v7722
    %8491 = vmatprep.subr.mxu0 %v7707
    %8492 = vmatpush1.msra.mxu0 %v7706
    %8493 = vmatprep.subr.mxu0 %v8203
    %8494 = vmatpush2.msra.mxu0 %v8202
    %8495 = vmatprep.subr.mxu0 %v8187
    %8496 = vmatpush2.msra.mxu0 %v8186
    %8497 = vmatprep.subr.mxu0 %v8171
    %8498 = vmatpush2.msra.mxu0 %v8170
    %8499 = vmatprep.subr.mxu0 %v8155
    %8500 = vmatpush2.msra.mxu0 %v8154
    %8501 = vmatprep.subr.mxu0 %v8139
    %8502 = vmatpush2.msra.mxu0 %v8138
    %8503 = vmatprep.subr.mxu0 %v8123
    %8504 = vmatpush2.msra.mxu0 %v8122
    %8505 = vmatprep.subr.mxu0 %v8107
    %8506 = vmatpush2.msra.mxu0 %v8106
    %8507 = vmatprep.subr.mxu0 %v8091
    %8508 = vmatpush2.msra.mxu0 %v8090
    %8509 = vmatprep.subr.mxu0 %v8075
    %8510 = vmatpush2.msra.mxu0 %v8074
    %8511 = vmatprep.subr.mxu0 %v8059
    %8512 = vmatpush2.msra.mxu0 %v8058
    %8513 = vmatprep.subr.mxu0 %v8043
    %8514 = vmatpush2.msra.mxu0 %v8042
    %8515 = vmatprep.subr.mxu0 %v8027
    %8516 = vmatpush2.msra.mxu0 %v8026
    %8517 = vmatprep.subr.mxu0 %v8011
    %8518 = vmatpush2.msra.mxu0 %v8010
    %8519 = vmatprep.subr.mxu0 %v7995
    %8520 = vmatpush2.msra.mxu0 %v7994
    %8521 = vmatprep.subr.mxu0 %v7979
    %8522 = vmatpush2.msra.mxu0 %v7978
    %8523 = vmatprep.subr.mxu0 %v7963
    %8524 = vmatpush2.msra.mxu0 %v7962
    %8525 = vmatprep.mubr.f32.mxu0 %v6383
    %8526 = vmatmul.mubr.f32.gmra.mxu0 %v6382
    %v8527 = vpop.f32.mrf.mxu0
    %v8528 = vadd.f32 0.0, %v8527
    %v8529 = vpop.f32.mrf.mxu0
    %v8530 = vadd.f32 0.0, %v8529
    %8531 = vmatprep.mubr.f32.mxu0 %v6385
    %8532 = vmatmul.mubr.f32.gmra.mxu0 %v6384
    %v8533 = vpop.f32.mrf.mxu0
    %v8534 = vadd.f32 0.0, %v8533
    %v8535 = vpop.f32.mrf.mxu0
    %v8536 = vadd.f32 0.0, %v8535
    %8537 = vmatprep.mubr.f32.mxu0 %v6387
    %8538 = vmatmul.mubr.f32.gmra.mxu0 %v6386
    %v8539 = vpop.f32.mrf.mxu0
    %v8540 = vadd.f32 0.0, %v8539
    %v8541 = vpop.f32.mrf.mxu0
    %v8542 = vadd.f32 0.0, %v8541
    %8543 = vdwg.mxu0
    %8544 = vmatprep.subr.mxu0 %v7949
    %8545 = vmatpush1.msra.mxu0 %v7948
    %8546 = vmatprep.subr.mxu0 %v7933
    %8547 = vmatpush1.msra.mxu0 %v7932
    %8548 = vmatprep.subr.mxu0 %v7917
    %8549 = vmatpush1.msra.mxu0 %v7916
    %8550 = vmatprep.subr.mxu0 %v7901
    %8551 = vmatpush1.msra.mxu0 %v7900
    %8552 = vmatprep.subr.mxu0 %v7885
    %8553 = vmatpush1.msra.mxu0 %v7884
    %8554 = vmatprep.subr.mxu0 %v7869
    %8555 = vmatpush1.msra.mxu0 %v7868
    %8556 = vmatprep.subr.mxu0 %v7853
    %8557 = vmatpush1.msra.mxu0 %v7852
    %8558 = vmatprep.subr.mxu0 %v7837
    %8559 = vmatpush1.msra.mxu0 %v7836
    %8560 = vmatprep.subr.mxu0 %v7821
    %8561 = vmatpush1.msra.mxu0 %v7820
    %8562 = vmatprep.subr.mxu0 %v7805
    %8563 = vmatpush1.msra.mxu0 %v7804
    %8564 = vmatprep.subr.mxu0 %v7789
    %8565 = vmatpush1.msra.mxu0 %v7788
    %8566 = vmatprep.subr.mxu0 %v7773
    %8567 = vmatpush1.msra.mxu0 %v7772
    %8568 = vmatprep.subr.mxu0 %v7757
    %8569 = vmatpush1.msra.mxu0 %v7756
    %8570 = vmatprep.subr.mxu0 %v7741
    %8571 = vmatpush1.msra.mxu0 %v7740
    %8572 = vmatprep.subr.mxu0 %v7725
    %8573 = vmatpush1.msra.mxu0 %v7724
    %8574 = vmatprep.subr.mxu0 %v7709
    %8575 = vmatpush1.msra.mxu0 %v7708
    %8576 = vmatprep.subr.mxu0 %v8205
    %8577 = vmatpush2.msra.mxu0 %v8204
    %8578 = vmatprep.subr.mxu0 %v8189
    %8579 = vmatpush2.msra.mxu0 %v8188
    %8580 = vmatprep.subr.mxu0 %v8173
    %8581 = vmatpush2.msra.mxu0 %v8172
    %8582 = vmatprep.subr.mxu0 %v8157
    %8583 = vmatpush2.msra.mxu0 %v8156
    %8584 = vmatprep.subr.mxu0 %v8141
    %8585 = vmatpush2.msra.mxu0 %v8140
    %8586 = vmatprep.subr.mxu0 %v8125
    %8587 = vmatpush2.msra.mxu0 %v8124
    %8588 = vmatprep.subr.mxu0 %v8109
    %8589 = vmatpush2.msra.mxu0 %v8108
    %8590 = vmatprep.subr.mxu0 %v8093
    %8591 = vmatpush2.msra.mxu0 %v8092
    %8592 = vmatprep.subr.mxu0 %v8077
    %8593 = vmatpush2.msra.mxu0 %v8076
    %8594 = vmatprep.subr.mxu0 %v8061
    %8595 = vmatpush2.msra.mxu0 %v8060
    %8596 = vmatprep.subr.mxu0 %v8045
    %8597 = vmatpush2.msra.mxu0 %v8044
    %8598 = vmatprep.subr.mxu0 %v8029
    %8599 = vmatpush2.msra.mxu0 %v8028
    %8600 = vmatprep.subr.mxu0 %v8013
    %8601 = vmatpush2.msra.mxu0 %v8012
    %8602 = vmatprep.subr.mxu0 %v7997
    %8603 = vmatpush2.msra.mxu0 %v7996
    %8604 = vmatprep.subr.mxu0 %v7981
    %8605 = vmatpush2.msra.mxu0 %v7980
    %8606 = vmatprep.subr.mxu0 %v7965
    %8607 = vmatpush2.msra.mxu0 %v7964
    %8608 = vmatprep.mubr.f32.mxu0 %v6383
    %8609 = vmatmul.mubr.f32.gmra.mxu0 %v6382
    %v8610 = vpop.f32.mrf.mxu0
    %v8611 = vadd.f32 0.0, %v8610
    %v8612 = vpop.f32.mrf.mxu0
    %v8613 = vadd.f32 0.0, %v8612
    %8614 = vmatprep.mubr.f32.mxu0 %v6385
    %8615 = vmatmul.mubr.f32.gmra.mxu0 %v6384
    %v8616 = vpop.f32.mrf.mxu0
    %v8617 = vadd.f32 0.0, %v8616
    %v8618 = vpop.f32.mrf.mxu0
    %v8619 = vadd.f32 0.0, %v8618
    %8620 = vmatprep.mubr.f32.mxu0 %v6387
    %8621 = vmatmul.mubr.f32.gmra.mxu0 %v6386
    %v8622 = vpop.f32.mrf.mxu0
    %v8623 = vadd.f32 0.0, %v8622
    %v8624 = vpop.f32.mrf.mxu0
    %v8625 = vadd.f32 0.0, %v8624
    %8626 = vdwg.mxu0
    %8627 = vmatprep.subr.mxu0 %v7951
    %8628 = vmatpush1.msra.mxu0 %v7950
    %8629 = vmatprep.subr.mxu0 %v7935
    %8630 = vmatpush1.msra.mxu0 %v7934
    %8631 = vmatprep.subr.mxu0 %v7919
    %8632 = vmatpush1.msra.mxu0 %v7918
    %8633 = vmatprep.subr.mxu0 %v7903
    %8634 = vmatpush1.msra.mxu0 %v7902
    %8635 = vmatprep.subr.mxu0 %v7887
    %8636 = vmatpush1.msra.mxu0 %v7886
    %8637 = vmatprep.subr.mxu0 %v7871
    %8638 = vmatpush1.msra.mxu0 %v7870
    %8639 = vmatprep.subr.mxu0 %v7855
    %8640 = vmatpush1.msra.mxu0 %v7854
    %8641 = vmatprep.subr.mxu0 %v7839
    %8642 = vmatpush1.msra.mxu0 %v7838
    %8643 = vmatprep.subr.mxu0 %v7823
    %8644 = vmatpush1.msra.mxu0 %v7822
    %8645 = vmatprep.subr.mxu0 %v7807
    %8646 = vmatpush1.msra.mxu0 %v7806
    %8647 = vmatprep.subr.mxu0 %v7791
    %8648 = vmatpush1.msra.mxu0 %v7790
    %8649 = vmatprep.subr.mxu0 %v7775
    %8650 = vmatpush1.msra.mxu0 %v7774
    %8651 = vmatprep.subr.mxu0 %v7759
    %8652 = vmatpush1.msra.mxu0 %v7758
    %8653 = vmatprep.subr.mxu0 %v7743
    %8654 = vmatpush1.msra.mxu0 %v7742
    %8655 = vmatprep.subr.mxu0 %v7727
    %8656 = vmatpush1.msra.mxu0 %v7726
    %8657 = vmatprep.subr.mxu0 %v7711
    %8658 = vmatpush1.msra.mxu0 %v7710
    %8659 = vmatprep.subr.mxu0 %v8207
    %8660 = vmatpush2.msra.mxu0 %v8206
    %8661 = vmatprep.subr.mxu0 %v8191
    %8662 = vmatpush2.msra.mxu0 %v8190
    %8663 = vmatprep.subr.mxu0 %v8175
    %8664 = vmatpush2.msra.mxu0 %v8174
    %8665 = vmatprep.subr.mxu0 %v8159
    %8666 = vmatpush2.msra.mxu0 %v8158
    %8667 = vmatprep.subr.mxu0 %v8143
    %8668 = vmatpush2.msra.mxu0 %v8142
    %8669 = vmatprep.subr.mxu0 %v8127
    %8670 = vmatpush2.msra.mxu0 %v8126
    %8671 = vmatprep.subr.mxu0 %v8111
    %8672 = vmatpush2.msra.mxu0 %v8110
    %8673 = vmatprep.subr.mxu0 %v8095
    %8674 = vmatpush2.msra.mxu0 %v8094
    %8675 = vmatprep.subr.mxu0 %v8079
    %8676 = vmatpush2.msra.mxu0 %v8078
    %8677 = vmatprep.subr.mxu0 %v8063
    %8678 = vmatpush2.msra.mxu0 %v8062
    %8679 = vmatprep.subr.mxu0 %v8047
    %8680 = vmatpush2.msra.mxu0 %v8046
    %8681 = vmatprep.subr.mxu0 %v8031
    %8682 = vmatpush2.msra.mxu0 %v8030
    %8683 = vmatprep.subr.mxu0 %v8015
    %8684 = vmatpush2.msra.mxu0 %v8014
    %8685 = vmatprep.subr.mxu0 %v7999
    %8686 = vmatpush2.msra.mxu0 %v7998
    %8687 = vmatprep.subr.mxu0 %v7983
    %8688 = vmatpush2.msra.mxu0 %v7982
    %8689 = vmatprep.subr.mxu0 %v7967
    %8690 = vmatpush2.msra.mxu0 %v7966
    %8691 = vmatprep.mubr.f32.mxu0 %v6383
    %8692 = vmatmul.mubr.f32.gmra.mxu0 %v6382
    %v8693 = vpop.f32.mrf.mxu0
    %v8694 = vadd.f32 0.0, %v8693
    %v8695 = vpop.f32.mrf.mxu0
    %v8696 = vadd.f32 0.0, %v8695
    %8697 = vmatprep.mubr.f32.mxu0 %v6385
    %8698 = vmatmul.mubr.f32.gmra.mxu0 %v6384
    %v8699 = vpop.f32.mrf.mxu0
    %v8700 = vadd.f32 0.0, %v8699
    %v8701 = vpop.f32.mrf.mxu0
    %v8702 = vadd.f32 0.0, %v8701
    %8703 = vmatprep.mubr.f32.mxu0 %v6387
    %8704 = vmatmul.mubr.f32.gmra.mxu0 %v6386
    %v8705 = vpop.f32.mrf.mxu0
    %v8706 = vadd.f32 0.0, %v8705
    %v8707 = vpop.f32.mrf.mxu0
    %v8708 = vadd.f32 0.0, %v8707
    %8709 = vdwg.mxu0
    %8710 = vmatprep.subr.mxu0 %v7953
    %8711 = vmatpush1.msra.mxu0 %v7952
    %8712 = vmatprep.subr.mxu0 %v7937
    %8713 = vmatpush1.msra.mxu0 %v7936
    %8714 = vmatprep.subr.mxu0 %v7921
    %8715 = vmatpush1.msra.mxu0 %v7920
    %8716 = vmatprep.subr.mxu0 %v7905
    %8717 = vmatpush1.msra.mxu0 %v7904
    %8718 = vmatprep.subr.mxu0 %v7889
    %8719 = vmatpush1.msra.mxu0 %v7888
    %8720 = vmatprep.subr.mxu0 %v7873
    %8721 = vmatpush1.msra.mxu0 %v7872
    %8722 = vmatprep.subr.mxu0 %v7857
    %8723 = vmatpush1.msra.mxu0 %v7856
    %8724 = vmatprep.subr.mxu0 %v7841
    %8725 = vmatpush1.msra.mxu0 %v7840
    %8726 = vmatprep.subr.mxu0 %v7825
    %8727 = vmatpush1.msra.mxu0 %v7824
    %8728 = vmatprep.subr.mxu0 %v7809
    %8729 = vmatpush1.msra.mxu0 %v7808
    %8730 = vmatprep.subr.mxu0 %v7793
    %8731 = vmatpush1.msra.mxu0 %v7792
    %8732 = vmatprep.subr.mxu0 %v7777
    %8733 = vmatpush1.msra.mxu0 %v7776
    %8734 = vmatprep.subr.mxu0 %v7761
    %8735 = vmatpush1.msra.mxu0 %v7760
    %8736 = vmatprep.subr.mxu0 %v7745
    %8737 = vmatpush1.msra.mxu0 %v7744
    %8738 = vmatprep.subr.mxu0 %v7729
    %8739 = vmatpush1.msra.mxu0 %v7728
    %8740 = vmatprep.subr.mxu0 %v7713
    %8741 = vmatpush1.msra.mxu0 %v7712
    %8742 = vmatprep.subr.mxu0 %v8209
    %8743 = vmatpush2.msra.mxu0 %v8208
    %8744 = vmatprep.subr.mxu0 %v8193
    %8745 = vmatpush2.msra.mxu0 %v8192
    %8746 = vmatprep.subr.mxu0 %v8177
    %8747 = vmatpush2.msra.mxu0 %v8176
    %8748 = vmatprep.subr.mxu0 %v8161
    %8749 = vmatpush2.msra.mxu0 %v8160
    %8750 = vmatprep.subr.mxu0 %v8145
    %8751 = vmatpush2.msra.mxu0 %v8144
    %8752 = vmatprep.subr.mxu0 %v8129
    %8753 = vmatpush2.msra.mxu0 %v8128
    %8754 = vmatprep.subr.mxu0 %v8113
    %8755 = vmatpush2.msra.mxu0 %v8112
    %8756 = vmatprep.subr.mxu0 %v8097
    %8757 = vmatpush2.msra.mxu0 %v8096
    %8758 = vmatprep.subr.mxu0 %v8081
    %8759 = vmatpush2.msra.mxu0 %v8080
    %8760 = vmatprep.subr.mxu0 %v8065
    %8761 = vmatpush2.msra.mxu0 %v8064
    %8762 = vmatprep.subr.mxu0 %v8049
    %8763 = vmatpush2.msra.mxu0 %v8048
    %8764 = vmatprep.subr.mxu0 %v8033
    %8765 = vmatpush2.msra.mxu0 %v8032
    %8766 = vmatprep.subr.mxu0 %v8017
    %8767 = vmatpush2.msra.mxu0 %v8016
    %8768 = vmatprep.subr.mxu0 %v8001
    %8769 = vmatpush2.msra.mxu0 %v8000
    %8770 = vmatprep.subr.mxu0 %v7985
    %8771 = vmatpush2.msra.mxu0 %v7984
    %8772 = vmatprep.subr.mxu0 %v7969
    %8773 = vmatpush2.msra.mxu0 %v7968
    %8774 = vmatprep.mubr.f32.mxu0 %v6383
    %8775 = vmatmul.mubr.f32.gmra.mxu0 %v6382
    %v8776 = vpop.f32.mrf.mxu0
    %v8777 = vadd.f32 0.0, %v8776
    %v8778 = vpop.f32.mrf.mxu0
    %v8779 = vadd.f32 0.0, %v8778
    %8780 = vmatprep.mubr.f32.mxu0 %v6385
    %8781 = vmatmul.mubr.f32.gmra.mxu0 %v6384
    %v8782 = vpop.f32.mrf.mxu0
    %v8783 = vadd.f32 0.0, %v8782
    %v8784 = vpop.f32.mrf.mxu0
    %v8785 = vadd.f32 0.0, %v8784
    %8786 = vmatprep.mubr.f32.mxu0 %v6387
    %8787 = vmatmul.mubr.f32.gmra.mxu0 %v6386
    %v8788 = vpop.f32.mrf.mxu0
    %v8789 = vadd.f32 0.0, %v8788
    %v8790 = vpop.f32.mrf.mxu0
    %v8791 = vadd.f32 0.0, %v8790
    %8792 = vdwg.mxu0
    %8793 = vmatprep.subr.mxu0 %v7955
    %8794 = vmatpush1.msra.mxu0 %v7954
    %8795 = vmatprep.subr.mxu0 %v7939
    %8796 = vmatpush1.msra.mxu0 %v7938
    %8797 = vmatprep.subr.mxu0 %v7923
    %8798 = vmatpush1.msra.mxu0 %v7922
    %8799 = vmatprep.subr.mxu0 %v7907
    %8800 = vmatpush1.msra.mxu0 %v7906
    %8801 = vmatprep.subr.mxu0 %v7891
    %8802 = vmatpush1.msra.mxu0 %v7890
    %8803 = vmatprep.subr.mxu0 %v7875
    %8804 = vmatpush1.msra.mxu0 %v7874
    %8805 = vmatprep.subr.mxu0 %v7859
    %8806 = vmatpush1.msra.mxu0 %v7858
    %8807 = vmatprep.subr.mxu0 %v7843
    %8808 = vmatpush1.msra.mxu0 %v7842
    %8809 = vmatprep.subr.mxu0 %v7827
    %8810 = vmatpush1.msra.mxu0 %v7826
    %8811 = vmatprep.subr.mxu0 %v7811
    %8812 = vmatpush1.msra.mxu0 %v7810
    %8813 = vmatprep.subr.mxu0 %v7795
    %8814 = vmatpush1.msra.mxu0 %v7794
    %8815 = vmatprep.subr.mxu0 %v7779
    %8816 = vmatpush1.msra.mxu0 %v7778
    %8817 = vmatprep.subr.mxu0 %v7763
    %8818 = vmatpush1.msra.mxu0 %v7762
    %8819 = vmatprep.subr.mxu0 %v7747
    %8820 = vmatpush1.msra.mxu0 %v7746
    %8821 = vmatprep.subr.mxu0 %v7731
    %8822 = vmatpush1.msra.mxu0 %v7730
    %8823 = vmatprep.subr.mxu0 %v7715
    %8824 = vmatpush1.msra.mxu0 %v7714
    %8825 = vmatprep.subr.mxu0 %v8211
    %8826 = vmatpush2.msra.mxu0 %v8210
    %8827 = vmatprep.subr.mxu0 %v8195
    %8828 = vmatpush2.msra.mxu0 %v8194
    %8829 = vmatprep.subr.mxu0 %v8179
    %8830 = vmatpush2.msra.mxu0 %v8178
    %8831 = vmatprep.subr.mxu0 %v8163
    %8832 = vmatpush2.msra.mxu0 %v8162
    %8833 = vmatprep.subr.mxu0 %v8147
    %8834 = vmatpush2.msra.mxu0 %v8146
    %8835 = vmatprep.subr.mxu0 %v8131
    %8836 = vmatpush2.msra.mxu0 %v8130
    %8837 = vmatprep.subr.mxu0 %v8115
    %8838 = vmatpush2.msra.mxu0 %v8114
    %8839 = vmatprep.subr.mxu0 %v8099
    %8840 = vmatpush2.msra.mxu0 %v8098
    %8841 = vmatprep.subr.mxu0 %v8083
    %8842 = vmatpush2.msra.mxu0 %v8082
    %8843 = vmatprep.subr.mxu0 %v8067
    %8844 = vmatpush2.msra.mxu0 %v8066
    %8845 = vmatprep.subr.mxu0 %v8051
    %8846 = vmatpush2.msra.mxu0 %v8050
    %8847 = vmatprep.subr.mxu0 %v8035
    %8848 = vmatpush2.msra.mxu0 %v8034
    %8849 = vmatprep.subr.mxu0 %v8019
    %8850 = vmatpush2.msra.mxu0 %v8018
    %8851 = vmatprep.subr.mxu0 %v8003
    %8852 = vmatpush2.msra.mxu0 %v8002
    %8853 = vmatprep.subr.mxu0 %v7987
    %8854 = vmatpush2.msra.mxu0 %v7986
    %8855 = vmatprep.subr.mxu0 %v7971
    %8856 = vmatpush2.msra.mxu0 %v7970
    %8857 = vmatprep.mubr.f32.mxu0 %v6383
    %8858 = vmatmul.mubr.f32.gmra.mxu0 %v6382
    %v8859 = vpop.f32.mrf.mxu0
    %v8860 = vadd.f32 0.0, %v8859
    %v8861 = vpop.f32.mrf.mxu0
    %v8862 = vadd.f32 0.0, %v8861
    %8863 = vmatprep.mubr.f32.mxu0 %v6385
    %8864 = vmatmul.mubr.f32.gmra.mxu0 %v6384
    %v8865 = vpop.f32.mrf.mxu0
    %v8866 = vadd.f32 0.0, %v8865
    %v8867 = vpop.f32.mrf.mxu0
    %v8868 = vadd.f32 0.0, %v8867
    %8869 = vmatprep.mubr.f32.mxu0 %v6387
    %8870 = vmatmul.mubr.f32.gmra.mxu0 %v6386
    %v8871 = vpop.f32.mrf.mxu0
    %v8872 = vadd.f32 0.0, %v8871
    %v8873 = vpop.f32.mrf.mxu0
    %v8874 = vadd.f32 0.0, %v8873
    %8875 = vdwg.mxu0
    %v8876 = vand.u32 2147483647, %v8285
    %v8877 = vand.u32 2147483647, %v8287
    %v8878 = vand.u32 2147483647, %v8368
    %v8879 = vand.u32 2147483647, %v8370
    %v8880 = vand.u32 2147483647, %v8451
    %v8881 = vand.u32 2147483647, %v8453
    %v8882 = vand.u32 2147483647, %v8534
    %v8883 = vand.u32 2147483647, %v8536
    %v8884 = vand.u32 2147483647, %v8617
    %v8885 = vand.u32 2147483647, %v8619
    %v8886 = vand.u32 2147483647, %v8700
    %v8887 = vand.u32 2147483647, %v8702
    %v8888 = vand.u32 2147483647, %v8783
    %v8889 = vand.u32 2147483647, %v8785
    %v8890 = vand.u32 2147483647, %v8866
    %v8891 = vand.u32 2147483647, %v8868
    %v8892 = vsub.f32 %v5061, %v8279
    %v8893 = vsub.f32 %v5065, %v8281
    %v8894 = vsub.f32 %v5061, %v8362
    %v8895 = vsub.f32 %v5065, %v8364
    %v8896 = vsub.f32 %v5061, %v8445
    %v8897 = vsub.f32 %v5065, %v8447
    %v8898 = vsub.f32 %v5061, %v8528
    %v8899 = vsub.f32 %v5065, %v8530
    %v8900 = vsub.f32 %v5061, %v8611
    %v8901 = vsub.f32 %v5065, %v8613
    %v8902 = vsub.f32 %v5061, %v8694
    %v8903 = vsub.f32 %v5065, %v8696
    %v8904 = vsub.f32 %v5061, %v8777
    %v8905 = vsub.f32 %v5065, %v8779
    %v8906 = vsub.f32 %v5061, %v8860
    %v8907 = vsub.f32 %v5065, %v8862
    %v8908 = vsub.f32 %v5085, %v8279
    %v8909 = vsub.f32 %v5089, %v8281
    %v8910 = vsub.f32 %v5085, %v8362
    %v8911 = vsub.f32 %v5089, %v8364
    %v8912 = vsub.f32 %v5085, %v8445
    %v8913 = vsub.f32 %v5089, %v8447
    %v8914 = vsub.f32 %v5085, %v8528
    %v8915 = vsub.f32 %v5089, %v8530
    %v8916 = vsub.f32 %v5085, %v8611
    %v8917 = vsub.f32 %v5089, %v8613
    %v8918 = vsub.f32 %v5085, %v8694
    %v8919 = vsub.f32 %v5089, %v8696
    %v8920 = vsub.f32 %v5085, %v8777
    %v8921 = vsub.f32 %v5089, %v8779
    %v8922 = vsub.f32 %v5085, %v8860
    %v8923 = vsub.f32 %v5089, %v8862
    %v8924 = vsub.f32 %v5109, %v8285
    %v8925 = vsub.f32 %v5113, %v8287
    %v8926 = vsub.f32 %v5109, %v8368
    %v8927 = vsub.f32 %v5113, %v8370
    %v8928 = vsub.f32 %v5109, %v8451
    %v8929 = vsub.f32 %v5113, %v8453
    %v8930 = vsub.f32 %v5109, %v8534
    %v8931 = vsub.f32 %v5113, %v8536
    %v8932 = vsub.f32 %v5109, %v8617
    %v8933 = vsub.f32 %v5113, %v8619
    %v8934 = vsub.f32 %v5109, %v8700
    %v8935 = vsub.f32 %v5113, %v8702
    %v8936 = vsub.f32 %v5109, %v8783
    %v8937 = vsub.f32 %v5113, %v8785
    %v8938 = vsub.f32 %v5109, %v8866
    %v8939 = vsub.f32 %v5113, %v8868
    %v8940 = vmul.f32 %v8892, %v8892
    %v8941 = vmul.f32 %v8893, %v8893
    %v8942 = vmul.f32 %v8894, %v8894
    %v8943 = vmul.f32 %v8895, %v8895
    %v8944 = vmul.f32 %v8896, %v8896
    %v8945 = vmul.f32 %v8897, %v8897
    %v8946 = vmul.f32 %v8898, %v8898
    %v8947 = vmul.f32 %v8899, %v8899
    %v8948 = vmul.f32 %v8900, %v8900
    %v8949 = vmul.f32 %v8901, %v8901
    %v8950 = vmul.f32 %v8902, %v8902
    %v8951 = vmul.f32 %v8903, %v8903
    %v8952 = vmul.f32 %v8904, %v8904
    %v8953 = vmul.f32 %v8905, %v8905
    %v8954 = vmul.f32 %v8906, %v8906
    %v8955 = vmul.f32 %v8907, %v8907
    %v8956 = vmul.f32 %v8908, %v8908
    %v8957 = vmul.f32 %v8909, %v8909
    %v8958 = vmul.f32 %v8910, %v8910
    %v8959 = vmul.f32 %v8911, %v8911
    %v8960 = vmul.f32 %v8912, %v8912
    %v8961 = vmul.f32 %v8913, %v8913
    %v8962 = vmul.f32 %v8914, %v8914
    %v8963 = vmul.f32 %v8915, %v8915
    %v8964 = vmul.f32 %v8916, %v8916
    %v8965 = vmul.f32 %v8917, %v8917
    %v8966 = vmul.f32 %v8918, %v8918
    %v8967 = vmul.f32 %v8919, %v8919
    %v8968 = vmul.f32 %v8920, %v8920
    %v8969 = vmul.f32 %v8921, %v8921
    %v8970 = vmul.f32 %v8922, %v8922
    %v8971 = vmul.f32 %v8923, %v8923
    %v8988 = vrot.slane %v8956, 4
    %v8989 = vrot.slane %v8957, 4
    %v8990 = vrot.slane %v8958, 4
    %v8991 = vrot.slane %v8959, 4
    %v8992 = vrot.slane %v8960, 4
    %v8993 = vrot.slane %v8961, 4
    %v8994 = vrot.slane %v8962, 4
    %v8995 = vrot.slane %v8963, 4
    %v8996 = vrot.slane %v8964, 4
    %v8997 = vrot.slane %v8965, 4
    %v8998 = vrot.slane %v8966, 4
    %v8999 = vrot.slane %v8967, 4
    %v9000 = vrot.slane %v8968, 4
    %v9001 = vrot.slane %v8969, 4
    %v9002 = vrot.slane %v8970, 4
    %v9003 = vrot.slane %v8971, 4
    %v9020 = vadd.f32 %v8940, %v8988
    %v9021 = vadd.f32 %v8941, %v8989
    %v9022 = vadd.f32 %v8942, %v8990
    %v9023 = vadd.f32 %v8943, %v8991
    %v9024 = vadd.f32 %v8944, %v8992
    %v9025 = vadd.f32 %v8945, %v8993
    %v9026 = vadd.f32 %v8946, %v8994
    %v9027 = vadd.f32 %v8947, %v8995
    %v9028 = vadd.f32 %v8948, %v8996
    %v9029 = vadd.f32 %v8949, %v8997
    %v9030 = vadd.f32 %v8950, %v8998
    %v9031 = vadd.f32 %v8951, %v8999
    %v9032 = vadd.f32 %v8952, %v9000
    %v9033 = vadd.f32 %v8953, %v9001
    %v9034 = vadd.f32 %v8954, %v9002
    %v9035 = vadd.f32 %v8955, %v9003
    %v9036 = vmul.f32 %v8924, %v8924
    %v9037 = vmul.f32 %v8925, %v8925
    %v9038 = vmul.f32 %v8926, %v8926
    %v9039 = vmul.f32 %v8927, %v8927
    %v9040 = vmul.f32 %v8928, %v8928
    %v9041 = vmul.f32 %v8929, %v8929
    %v9042 = vmul.f32 %v8930, %v8930
    %v9043 = vmul.f32 %v8931, %v8931
    %v9044 = vmul.f32 %v8932, %v8932
    %v9045 = vmul.f32 %v8933, %v8933
    %v9046 = vmul.f32 %v8934, %v8934
    %v9047 = vmul.f32 %v8935, %v8935
    %v9048 = vmul.f32 %v8936, %v8936
    %v9049 = vmul.f32 %v8937, %v8937
    %v9050 = vmul.f32 %v8938, %v8938
    %v9051 = vmul.f32 %v8939, %v8939
    %v9052 = vadd.f32 %v9020, %v9036
    %v9053 = vadd.f32 %v9021, %v9037
    %v9054 = vadd.f32 %v9022, %v9038
    %v9055 = vadd.f32 %v9023, %v9039
    %v9056 = vadd.f32 %v9024, %v9040
    %v9057 = vadd.f32 %v9025, %v9041
    %v9058 = vadd.f32 %v9026, %v9042
    %v9059 = vadd.f32 %v9027, %v9043
    %v9060 = vadd.f32 %v9028, %v9044
    %v9061 = vadd.f32 %v9029, %v9045
    %v9062 = vadd.f32 %v9030, %v9046
    %v9063 = vadd.f32 %v9031, %v9047
    %v9064 = vadd.f32 %v9032, %v9048
    %v9065 = vadd.f32 %v9033, %v9049
    %v9066 = vadd.f32 %v9034, %v9050
    %v9067 = vadd.f32 %v9035, %v9051
    %v9068 = vmul.f32 %v8876, 2.0
    %v9069 = vmul.f32 %v8877, 2.0
    %v9070 = vmul.f32 %v8878, 2.0
    %v9071 = vmul.f32 %v8879, 2.0
    %v9072 = vmul.f32 %v8880, 2.0
    %v9073 = vmul.f32 %v8881, 2.0
    %v9074 = vmul.f32 %v8882, 2.0
    %v9075 = vmul.f32 %v8883, 2.0
    %v9076 = vmul.f32 %v8884, 2.0
    %v9077 = vmul.f32 %v8885, 2.0
    %v9078 = vmul.f32 %v8886, 2.0
    %v9079 = vmul.f32 %v8887, 2.0
    %v9080 = vmul.f32 %v8888, 2.0
    %v9081 = vmul.f32 %v8889, 2.0
    %v9082 = vmul.f32 %v8890, 2.0
    %v9083 = vmul.f32 %v8891, 2.0
    %v9084 = vmul.f32 %v9068, %v8876
    %v9085 = vmul.f32 %v9069, %v8877
    %v9086 = vmul.f32 %v9070, %v8878
    %v9087 = vmul.f32 %v9071, %v8879
    %v9088 = vmul.f32 %v9072, %v8880
    %v9089 = vmul.f32 %v9073, %v8881
    %v9090 = vmul.f32 %v9074, %v8882
    %v9091 = vmul.f32 %v9075, %v8883
    %v9092 = vmul.f32 %v9076, %v8884
    %v9093 = vmul.f32 %v9077, %v8885
    %v9094 = vmul.f32 %v9078, %v8886
    %v9095 = vmul.f32 %v9079, %v8887
    %v9096 = vmul.f32 %v9080, %v8888
    %v9097 = vmul.f32 %v9081, %v8889
    %v9098 = vmul.f32 %v9082, %v8890
    %v9099 = vmul.f32 %v9083, %v8891
    %v9100 = vadd.f32 %v9084, 1e-07
    %v9101 = vadd.f32 %v9085, 1e-07
    %v9102 = vadd.f32 %v9086, 1e-07
    %v9103 = vadd.f32 %v9087, 1e-07
    %v9104 = vadd.f32 %v9088, 1e-07
    %v9105 = vadd.f32 %v9089, 1e-07
    %v9106 = vadd.f32 %v9090, 1e-07
    %v9107 = vadd.f32 %v9091, 1e-07
    %v9108 = vadd.f32 %v9092, 1e-07
    %v9109 = vadd.f32 %v9093, 1e-07
    %v9110 = vadd.f32 %v9094, 1e-07
    %v9111 = vadd.f32 %v9095, 1e-07
    %v9112 = vadd.f32 %v9096, 1e-07
    %v9113 = vadd.f32 %v9097, 1e-07
    %v9114 = vadd.f32 %v9098, 1e-07
    %v9115 = vadd.f32 %v9099, 1e-07
    %v9132 = vrot.slane %v9100, 4
    %v9133 = vrot.slane %v9101, 4
    %v9134 = vrot.slane %v9102, 4
    %v9135 = vrot.slane %v9103, 4
    %v9136 = vrot.slane %v9104, 4
    %v9137 = vrot.slane %v9105, 4
    %v9138 = vrot.slane %v9106, 4
    %v9139 = vrot.slane %v9107, 4
    %v9140 = vrot.slane %v9108, 4
    %v9141 = vrot.slane %v9109, 4
    %v9142 = vrot.slane %v9110, 4
    %v9143 = vrot.slane %v9111, 4
    %v9144 = vrot.slane %v9112, 4
    %v9145 = vrot.slane %v9113, 4
    %v9146 = vrot.slane %v9114, 4
    %v9147 = vrot.slane %v9115, 4
    %v9164 = vrcp.pop %v9132
    %v9165 = vmul.f32 %v9052, %v9164
    %v9166 = vrcp.pop %v9133
    %v9167 = vmul.f32 %v9053, %v9166
    %v9168 = vrcp.pop %v9134
    %v9169 = vmul.f32 %v9054, %v9168
    %v9170 = vrcp.pop %v9135
    %v9171 = vmul.f32 %v9055, %v9170
    %v9172 = vrcp.pop %v9136
    %v9173 = vmul.f32 %v9056, %v9172
    %v9174 = vrcp.pop %v9137
    %v9175 = vmul.f32 %v9057, %v9174
    %v9176 = vrcp.pop %v9138
    %v9177 = vmul.f32 %v9058, %v9176
    %v9178 = vrcp.pop %v9139
    %v9179 = vmul.f32 %v9059, %v9178
    %v9180 = vrcp.pop %v9140
    %v9181 = vmul.f32 %v9060, %v9180
    %v9182 = vrcp.pop %v9141
    %v9183 = vmul.f32 %v9061, %v9182
    %v9184 = vrcp.pop %v9142
    %v9185 = vmul.f32 %v9062, %v9184
    %v9186 = vrcp.pop %v9143
    %v9187 = vmul.f32 %v9063, %v9186
    %v9188 = vrcp.pop %v9144
    %v9189 = vmul.f32 %v9064, %v9188
    %v9190 = vrcp.pop %v9145
    %v9191 = vmul.f32 %v9065, %v9190
    %v9192 = vrcp.pop %v9146
    %v9193 = vmul.f32 %v9066, %v9192
    %v9194 = vrcp.pop %v9147
    %v9195 = vmul.f32 %v9067, %v9194
    %v9196 = vsub.f32 0.0, %v9165
    %v9197 = vsub.f32 0.0, %v9167
    %v9198 = vsub.f32 0.0, %v9169
    %v9199 = vsub.f32 0.0, %v9171
    %v9200 = vsub.f32 0.0, %v9173
    %v9201 = vsub.f32 0.0, %v9175
    %v9202 = vsub.f32 0.0, %v9177
    %v9203 = vsub.f32 0.0, %v9179
    %v9204 = vsub.f32 0.0, %v9181
    %v9205 = vsub.f32 0.0, %v9183
    %v9206 = vsub.f32 0.0, %v9185
    %v9207 = vsub.f32 0.0, %v9187
    %v9208 = vsub.f32 0.0, %v9189
    %v9209 = vsub.f32 0.0, %v9191
    %v9210 = vsub.f32 0.0, %v9193
    %v9211 = vsub.f32 0.0, %v9195
    %v9212 = vmul.f32 %v9196, 1.442695
    %v9213 = vpow.pop %v9212
    %v9214 = vmul.f32 %v9197, 1.442695
    %v9215 = vpow.pop %v9214
    %v9216 = vmul.f32 %v9198, 1.442695
    %v9217 = vpow.pop %v9216
    %v9218 = vmul.f32 %v9199, 1.442695
    %v9219 = vpow.pop %v9218
    %v9220 = vmul.f32 %v9200, 1.442695
    %v9221 = vpow.pop %v9220
    %v9222 = vmul.f32 %v9201, 1.442695
    %v9223 = vpow.pop %v9222
    %v9224 = vmul.f32 %v9202, 1.442695
    %v9225 = vpow.pop %v9224
    %v9226 = vmul.f32 %v9203, 1.442695
    %v9227 = vpow.pop %v9226
    %v9228 = vmul.f32 %v9204, 1.442695
    %v9229 = vpow.pop %v9228
    %v9230 = vmul.f32 %v9205, 1.442695
    %v9231 = vpow.pop %v9230
    %v9232 = vmul.f32 %v9206, 1.442695
    %v9233 = vpow.pop %v9232
    %v9234 = vmul.f32 %v9207, 1.442695
    %v9235 = vpow.pop %v9234
    %v9236 = vmul.f32 %v9208, 1.442695
    %v9237 = vpow.pop %v9236
    %v9238 = vmul.f32 %v9209, 1.442695
    %v9239 = vpow.pop %v9238
    %v9240 = vmul.f32 %v9210, 1.442695
    %v9241 = vpow.pop %v9240
    %v9242 = vmul.f32 %v9211, 1.442695
    %v9243 = vpow.pop %v9242
    %v9244 = vmul.f32 %v8876, 2.5066283
    %v9245 = vmul.f32 %v8877, 2.5066283
    %v9246 = vmul.f32 %v8878, 2.5066283
    %v9247 = vmul.f32 %v8879, 2.5066283
    %v9248 = vmul.f32 %v8880, 2.5066283
    %v9249 = vmul.f32 %v8881, 2.5066283
    %v9250 = vmul.f32 %v8882, 2.5066283
    %v9251 = vmul.f32 %v8883, 2.5066283
    %v9252 = vmul.f32 %v8884, 2.5066283
    %v9253 = vmul.f32 %v8885, 2.5066283
    %v9254 = vmul.f32 %v8886, 2.5066283
    %v9255 = vmul.f32 %v8887, 2.5066283
    %v9256 = vmul.f32 %v8888, 2.5066283
    %v9257 = vmul.f32 %v8889, 2.5066283
    %v9258 = vmul.f32 %v8890, 2.5066283
    %v9259 = vmul.f32 %v8891, 2.5066283
    %v9260 = vadd.f32 %v9244, 1e-07
    %v9261 = vadd.f32 %v9245, 1e-07
    %v9262 = vadd.f32 %v9246, 1e-07
    %v9263 = vadd.f32 %v9247, 1e-07
    %v9264 = vadd.f32 %v9248, 1e-07
    %v9265 = vadd.f32 %v9249, 1e-07
    %v9266 = vadd.f32 %v9250, 1e-07
    %v9267 = vadd.f32 %v9251, 1e-07
    %v9268 = vadd.f32 %v9252, 1e-07
    %v9269 = vadd.f32 %v9253, 1e-07
    %v9270 = vadd.f32 %v9254, 1e-07
    %v9271 = vadd.f32 %v9255, 1e-07
    %v9272 = vadd.f32 %v9256, 1e-07
    %v9273 = vadd.f32 %v9257, 1e-07
    %v9274 = vadd.f32 %v9258, 1e-07
    %v9275 = vadd.f32 %v9259, 1e-07
    %v9292 = vrot.slane %v9260, 4
    %v9293 = vrot.slane %v9261, 4
    %v9294 = vrot.slane %v9262, 4
    %v9295 = vrot.slane %v9263, 4
    %v9296 = vrot.slane %v9264, 4
    %v9297 = vrot.slane %v9265, 4
    %v9298 = vrot.slane %v9266, 4
    %v9299 = vrot.slane %v9267, 4
    %v9300 = vrot.slane %v9268, 4
    %v9301 = vrot.slane %v9269, 4
    %v9302 = vrot.slane %v9270, 4
    %v9303 = vrot.slane %v9271, 4
    %v9304 = vrot.slane %v9272, 4
    %v9305 = vrot.slane %v9273, 4
    %v9306 = vrot.slane %v9274, 4
    %v9307 = vrot.slane %v9275, 4
    %v9324 = vrcp.pop %v9292
    %v9325 = vmul.f32 %v9213, %v9324
    %v9326 = vrcp.pop %v9293
    %v9327 = vmul.f32 %v9215, %v9326
    %v9328 = vrcp.pop %v9294
    %v9329 = vmul.f32 %v9217, %v9328
    %v9330 = vrcp.pop %v9295
    %v9331 = vmul.f32 %v9219, %v9330
    %v9332 = vrcp.pop %v9296
    %v9333 = vmul.f32 %v9221, %v9332
    %v9334 = vrcp.pop %v9297
    %v9335 = vmul.f32 %v9223, %v9334
    %v9336 = vrcp.pop %v9298
    %v9337 = vmul.f32 %v9225, %v9336
    %v9338 = vrcp.pop %v9299
    %v9339 = vmul.f32 %v9227, %v9338
    %v9340 = vrcp.pop %v9300
    %v9341 = vmul.f32 %v9229, %v9340
    %v9342 = vrcp.pop %v9301
    %v9343 = vmul.f32 %v9231, %v9342
    %v9344 = vrcp.pop %v9302
    %v9345 = vmul.f32 %v9233, %v9344
    %v9346 = vrcp.pop %v9303
    %v9347 = vmul.f32 %v9235, %v9346
    %v9348 = vrcp.pop %v9304
    %v9349 = vmul.f32 %v9237, %v9348
    %v9350 = vrcp.pop %v9305
    %v9351 = vmul.f32 %v9239, %v9350
    %v9352 = vrcp.pop %v9306
    %v9353 = vmul.f32 %v9241, %v9352
    %v9354 = vrcp.pop %v9307
    %v9355 = vmul.f32 %v9243, %v9354
    %v9356 = vmul.f32 %v8876, %v8876
    %v9357 = vmul.f32 %v8877, %v8877
    %v9358 = vmul.f32 %v8878, %v8878
    %v9359 = vmul.f32 %v8879, %v8879
    %v9360 = vmul.f32 %v8880, %v8880
    %v9361 = vmul.f32 %v8881, %v8881
    %v9362 = vmul.f32 %v8882, %v8882
    %v9363 = vmul.f32 %v8883, %v8883
    %v9364 = vmul.f32 %v8884, %v8884
    %v9365 = vmul.f32 %v8885, %v8885
    %v9366 = vmul.f32 %v8886, %v8886
    %v9367 = vmul.f32 %v8887, %v8887
    %v9368 = vmul.f32 %v8888, %v8888
    %v9369 = vmul.f32 %v8889, %v8889
    %v9370 = vmul.f32 %v8890, %v8890
    %v9371 = vmul.f32 %v8891, %v8891
    %v9388 = vrot.slane %v9356, 4
    %v9389 = vrot.slane %v9357, 4
    %v9390 = vrot.slane %v9358, 4
    %v9391 = vrot.slane %v9359, 4
    %v9392 = vrot.slane %v9360, 4
    %v9393 = vrot.slane %v9361, 4
    %v9394 = vrot.slane %v9362, 4
    %v9395 = vrot.slane %v9363, 4
    %v9396 = vrot.slane %v9364, 4
    %v9397 = vrot.slane %v9365, 4
    %v9398 = vrot.slane %v9366, 4
    %v9399 = vrot.slane %v9367, 4
    %v9400 = vrot.slane %v9368, 4
    %v9401 = vrot.slane %v9369, 4
    %v9402 = vrot.slane %v9370, 4
    %v9403 = vrot.slane %v9371, 4
    %v9420 = vrcp.pop %v9388
    %v9421 = vmul.f32 %v9052, %v9420
    %v9422 = vrcp.pop %v9389
    %v9423 = vmul.f32 %v9053, %v9422
    %v9424 = vrcp.pop %v9390
    %v9425 = vmul.f32 %v9054, %v9424
    %v9426 = vrcp.pop %v9391
    %v9427 = vmul.f32 %v9055, %v9426
    %v9428 = vrcp.pop %v9392
    %v9429 = vmul.f32 %v9056, %v9428
    %v9430 = vrcp.pop %v9393
    %v9431 = vmul.f32 %v9057, %v9430
    %v9432 = vrcp.pop %v9394
    %v9433 = vmul.f32 %v9058, %v9432
    %v9434 = vrcp.pop %v9395
    %v9435 = vmul.f32 %v9059, %v9434
    %v9436 = vrcp.pop %v9396
    %v9437 = vmul.f32 %v9060, %v9436
    %v9438 = vrcp.pop %v9397
    %v9439 = vmul.f32 %v9061, %v9438
    %v9440 = vrcp.pop %v9398
    %v9441 = vmul.f32 %v9062, %v9440
    %v9442 = vrcp.pop %v9399
    %v9443 = vmul.f32 %v9063, %v9442
    %v9444 = vrcp.pop %v9400
    %v9445 = vmul.f32 %v9064, %v9444
    %v9446 = vrcp.pop %v9401
    %v9447 = vmul.f32 %v9065, %v9446
    %v9448 = vrcp.pop %v9402
    %v9449 = vmul.f32 %v9066, %v9448
    %v9450 = vrcp.pop %v9403
    %v9451 = vmul.f32 %v9067, %v9450
    %v9452 = vmul.f32 %v9421, 0.5
    %v9453 = vmul.f32 %v9423, 0.5
    %v9454 = vmul.f32 %v9425, 0.5
    %v9455 = vmul.f32 %v9427, 0.5
    %v9456 = vmul.f32 %v9429, 0.5
    %v9457 = vmul.f32 %v9431, 0.5
    %v9458 = vmul.f32 %v9433, 0.5
    %v9459 = vmul.f32 %v9435, 0.5
    %v9460 = vmul.f32 %v9437, 0.5
    %v9461 = vmul.f32 %v9439, 0.5
    %v9462 = vmul.f32 %v9441, 0.5
    %v9463 = vmul.f32 %v9443, 0.5
    %v9464 = vmul.f32 %v9445, 0.5
    %v9465 = vmul.f32 %v9447, 0.5
    %v9466 = vmul.f32 %v9449, 0.5
    %v9467 = vmul.f32 %v9451, 0.5
    %v9468 = vadd.f32 %v6528, 1e-07
    %v9469 = vadd.f32 %v6532, 1e-07
    %v9470 = vadd.f32 %v6539, 1e-07
    %v9471 = vadd.f32 %v6543, 1e-07
    %v9472 = vadd.f32 %v6550, 1e-07
    %v9473 = vadd.f32 %v6554, 1e-07
    %v9474 = vadd.f32 %v6561, 1e-07
    %v9475 = vadd.f32 %v6565, 1e-07
    %v9476 = vadd.f32 %v6572, 1e-07
    %v9477 = vadd.f32 %v6576, 1e-07
    %v9478 = vadd.f32 %v6583, 1e-07
    %v9479 = vadd.f32 %v6587, 1e-07
    %v9480 = vadd.f32 %v6594, 1e-07
    %v9481 = vadd.f32 %v6598, 1e-07
    %v9482 = vadd.f32 %v6605, 1e-07
    %v9483 = vadd.f32 %v6609, 1e-07
    %v9484 = vlog2.pop %v9468
    %v9485 = vmul.f32 %v9484, 0.6931472
    %v9486 = vlog2.pop %v9469
    %v9487 = vmul.f32 %v9486, 0.6931472
    %v9488 = vlog2.pop %v9470
    %v9489 = vmul.f32 %v9488, 0.6931472
    %v9490 = vlog2.pop %v9471
    %v9491 = vmul.f32 %v9490, 0.6931472
    %v9492 = vlog2.pop %v9472
    %v9493 = vmul.f32 %v9492, 0.6931472
    %v9494 = vlog2.pop %v9473
    %v9495 = vmul.f32 %v9494, 0.6931472
    %v9496 = vlog2.pop %v9474
    %v9497 = vmul.f32 %v9496, 0.6931472
    %v9498 = vlog2.pop %v9475
    %v9499 = vmul.f32 %v9498, 0.6931472
    %v9500 = vlog2.pop %v9476
    %v9501 = vmul.f32 %v9500, 0.6931472
    %v9502 = vlog2.pop %v9477
    %v9503 = vmul.f32 %v9502, 0.6931472
    %v9504 = vlog2.pop %v9478
    %v9505 = vmul.f32 %v9504, 0.6931472
    %v9506 = vlog2.pop %v9479
    %v9507 = vmul.f32 %v9506, 0.6931472
    %v9508 = vlog2.pop %v9480
    %v9509 = vmul.f32 %v9508, 0.6931472
    %v9510 = vlog2.pop %v9481
    %v9511 = vmul.f32 %v9510, 0.6931472
    %v9512 = vlog2.pop %v9482
    %v9513 = vmul.f32 %v9512, 0.6931472
    %v9514 = vlog2.pop %v9483
    %v9515 = vmul.f32 %v9514, 0.6931472
    %v9516 = vlaneseq
    %v9517 = vshrl.u32 %v9516, 7
    %v9518 = vsub.s32 0, %v9517
    %v9519 = vrot.slane %v9485, %v9518
    %v9520 = vlaneseq
    %v9521 = vshrl.u32 %v9520, 7
    %v9522 = vsub.s32 0, %v9521
    %v9523 = vrot.slane %v9487, %v9522
    %v9524 = vlaneseq
    %v9525 = vshrl.u32 %v9524, 7
    %v9526 = vsub.s32 0, %v9525
    %v9527 = vrot.slane %v9489, %v9526
    %v9528 = vlaneseq
    %v9529 = vshrl.u32 %v9528, 7
    %v9530 = vsub.s32 0, %v9529
    %v9531 = vrot.slane %v9491, %v9530
    %v9532 = vlaneseq
    %v9533 = vshrl.u32 %v9532, 7
    %v9534 = vsub.s32 0, %v9533
    %v9535 = vrot.slane %v9493, %v9534
    %v9536 = vlaneseq
    %v9537 = vshrl.u32 %v9536, 7
    %v9538 = vsub.s32 0, %v9537
    %v9539 = vrot.slane %v9495, %v9538
    %v9540 = vlaneseq
    %v9541 = vshrl.u32 %v9540, 7
    %v9542 = vsub.s32 0, %v9541
    %v9543 = vrot.slane %v9497, %v9542
    %v9544 = vlaneseq
    %v9545 = vshrl.u32 %v9544, 7
    %v9546 = vsub.s32 0, %v9545
    %v9547 = vrot.slane %v9499, %v9546
    %v9548 = vlaneseq
    %v9549 = vshrl.u32 %v9548, 7
    %v9550 = vsub.s32 0, %v9549
    %v9551 = vrot.slane %v9501, %v9550
    %v9552 = vlaneseq
    %v9553 = vshrl.u32 %v9552, 7
    %v9554 = vsub.s32 0, %v9553
    %v9555 = vrot.slane %v9503, %v9554
    %v9556 = vlaneseq
    %v9557 = vshrl.u32 %v9556, 7
    %v9558 = vsub.s32 0, %v9557
    %v9559 = vrot.slane %v9505, %v9558
    %v9560 = vlaneseq
    %v9561 = vshrl.u32 %v9560, 7
    %v9562 = vsub.s32 0, %v9561
    %v9563 = vrot.slane %v9507, %v9562
    %v9564 = vlaneseq
    %v9565 = vshrl.u32 %v9564, 7
    %v9566 = vsub.s32 0, %v9565
    %v9567 = vrot.slane %v9509, %v9566
    %v9568 = vlaneseq
    %v9569 = vshrl.u32 %v9568, 7
    %v9570 = vsub.s32 0, %v9569
    %v9571 = vrot.slane %v9511, %v9570
    %v9572 = vlaneseq
    %v9573 = vshrl.u32 %v9572, 7
    %v9574 = vsub.s32 0, %v9573
    %v9575 = vrot.slane %v9513, %v9574
    %v9576 = vlaneseq
    %v9577 = vshrl.u32 %v9576, 7
    %v9578 = vsub.s32 0, %v9577
    %v9579 = vrot.slane %v9515, %v9578
    %v9580 = vsub.f32 %v9452, %v9519
    %v9581 = vsub.f32 %v9453, %v9523
    %v9582 = vsub.f32 %v9454, %v9527
    %v9583 = vsub.f32 %v9455, %v9531
    %v9584 = vsub.f32 %v9456, %v9535
    %v9585 = vsub.f32 %v9457, %v9539
    %v9586 = vsub.f32 %v9458, %v9543
    %v9587 = vsub.f32 %v9459, %v9547
    %v9588 = vsub.f32 %v9460, %v9551
    %v9589 = vsub.f32 %v9461, %v9555
    %v9590 = vsub.f32 %v9462, %v9559
    %v9591 = vsub.f32 %v9463, %v9563
    %v9592 = vsub.f32 %v9464, %v9567
    %v9593 = vsub.f32 %v9465, %v9571
    %v9594 = vsub.f32 %v9466, %v9575
    %v9595 = vsub.f32 %v9467, %v9579
    %vm9596 = vcmask 1043456
    %v9597 = vsel %vm9596, %v9580, inf
    %v9598 = vrot.slane %v9597, 4
    %v9599 = vmin.f32 %v9597, %v9598
    %v9600 = vrot.slane %v9599, 2
    %v9601 = vmin.f32 %v9599, %v9600
    %v9602 = vrot.slane %v9601, 1
    %v9603 = vmin.f32 %v9601, %v9602
    %v9604 = vsel %vm9596, %v9581, inf
    %v9605 = vrot.slane %v9604, 4
    %v9606 = vmin.f32 %v9604, %v9605
    %v9607 = vrot.slane %v9606, 2
    %v9608 = vmin.f32 %v9606, %v9607
    %v9609 = vrot.slane %v9608, 1
    %v9610 = vmin.f32 %v9608, %v9609
    %v9611 = vsel %vm9596, %v9582, inf
    %v9612 = vrot.slane %v9611, 4
    %v9613 = vmin.f32 %v9611, %v9612
    %v9614 = vrot.slane %v9613, 2
    %v9615 = vmin.f32 %v9613, %v9614
    %v9616 = vrot.slane %v9615, 1
    %v9617 = vmin.f32 %v9615, %v9616
    %v9618 = vsel %vm9596, %v9583, inf
    %v9619 = vrot.slane %v9618, 4
    %v9620 = vmin.f32 %v9618, %v9619
    %v9621 = vrot.slane %v9620, 2
    %v9622 = vmin.f32 %v9620, %v9621
    %v9623 = vrot.slane %v9622, 1
    %v9624 = vmin.f32 %v9622, %v9623
    %v9625 = vsel %vm9596, %v9584, inf
    %v9626 = vrot.slane %v9625, 4
    %v9627 = vmin.f32 %v9625, %v9626
    %v9628 = vrot.slane %v9627, 2
    %v9629 = vmin.f32 %v9627, %v9628
    %v9630 = vrot.slane %v9629, 1
    %v9631 = vmin.f32 %v9629, %v9630
    %v9632 = vsel %vm9596, %v9585, inf
    %v9633 = vrot.slane %v9632, 4
    %v9634 = vmin.f32 %v9632, %v9633
    %v9635 = vrot.slane %v9634, 2
    %v9636 = vmin.f32 %v9634, %v9635
    %v9637 = vrot.slane %v9636, 1
    %v9638 = vmin.f32 %v9636, %v9637
    %v9639 = vsel %vm9596, %v9586, inf
    %v9640 = vrot.slane %v9639, 4
    %v9641 = vmin.f32 %v9639, %v9640
    %v9642 = vrot.slane %v9641, 2
    %v9643 = vmin.f32 %v9641, %v9642
    %v9644 = vrot.slane %v9643, 1
    %v9645 = vmin.f32 %v9643, %v9644
    %v9646 = vsel %vm9596, %v9587, inf
    %v9647 = vrot.slane %v9646, 4
    %v9648 = vmin.f32 %v9646, %v9647
    %v9649 = vrot.slane %v9648, 2
    %v9650 = vmin.f32 %v9648, %v9649
    %v9651 = vrot.slane %v9650, 1
    %v9652 = vmin.f32 %v9650, %v9651
    %v9653 = vsel %vm9596, %v9588, inf
    %v9654 = vrot.slane %v9653, 4
    %v9655 = vmin.f32 %v9653, %v9654
    %v9656 = vrot.slane %v9655, 2
    %v9657 = vmin.f32 %v9655, %v9656
    %v9658 = vrot.slane %v9657, 1
    %v9659 = vmin.f32 %v9657, %v9658
    %v9660 = vsel %vm9596, %v9589, inf
    %v9661 = vrot.slane %v9660, 4
    %v9662 = vmin.f32 %v9660, %v9661
    %v9663 = vrot.slane %v9662, 2
    %v9664 = vmin.f32 %v9662, %v9663
    %v9665 = vrot.slane %v9664, 1
    %v9666 = vmin.f32 %v9664, %v9665
    %v9667 = vsel %vm9596, %v9590, inf
    %v9668 = vrot.slane %v9667, 4
    %v9669 = vmin.f32 %v9667, %v9668
    %v9670 = vrot.slane %v9669, 2
    %v9671 = vmin.f32 %v9669, %v9670
    %v9672 = vrot.slane %v9671, 1
    %v9673 = vmin.f32 %v9671, %v9672
    %v9674 = vsel %vm9596, %v9591, inf
    %v9675 = vrot.slane %v9674, 4
    %v9676 = vmin.f32 %v9674, %v9675
    %v9677 = vrot.slane %v9676, 2
    %v9678 = vmin.f32 %v9676, %v9677
    %v9679 = vrot.slane %v9678, 1
    %v9680 = vmin.f32 %v9678, %v9679
    %v9681 = vsel %vm9596, %v9592, inf
    %v9682 = vrot.slane %v9681, 4
    %v9683 = vmin.f32 %v9681, %v9682
    %v9684 = vrot.slane %v9683, 2
    %v9685 = vmin.f32 %v9683, %v9684
    %v9686 = vrot.slane %v9685, 1
    %v9687 = vmin.f32 %v9685, %v9686
    %v9688 = vsel %vm9596, %v9593, inf
    %v9689 = vrot.slane %v9688, 4
    %v9690 = vmin.f32 %v9688, %v9689
    %v9691 = vrot.slane %v9690, 2
    %v9692 = vmin.f32 %v9690, %v9691
    %v9693 = vrot.slane %v9692, 1
    %v9694 = vmin.f32 %v9692, %v9693
    %v9695 = vsel %vm9596, %v9594, inf
    %v9696 = vrot.slane %v9695, 4
    %v9697 = vmin.f32 %v9695, %v9696
    %v9698 = vrot.slane %v9697, 2
    %v9699 = vmin.f32 %v9697, %v9698
    %v9700 = vrot.slane %v9699, 1
    %v9701 = vmin.f32 %v9699, %v9700
    %v9702 = vsel %vm9596, %v9595, inf
    %v9703 = vrot.slane %v9702, 4
    %v9704 = vmin.f32 %v9702, %v9703
    %v9705 = vrot.slane %v9704, 2
    %v9706 = vmin.f32 %v9704, %v9705
    %v9707 = vrot.slane %v9706, 1
    %v9708 = vmin.f32 %v9706, %v9707
    %v9709 = vmin.f32 %v9603, %v9617
    %v9710 = vmin.f32 %v9610, %v9624
    %v9711 = vmin.f32 %v9709, %v9631
    %v9712 = vmin.f32 %v9710, %v9638
    %v9713 = vmin.f32 %v9711, %v9645
    %v9714 = vmin.f32 %v9712, %v9652
    %v9715 = vmin.f32 %v9713, %v9659
    %v9716 = vmin.f32 %v9714, %v9666
    %v9717 = vmin.f32 %v9715, %v9673
    %v9718 = vmin.f32 %v9716, %v9680
    %v9719 = vmin.f32 %v9717, %v9687
    %v9720 = vmin.f32 %v9718, %v9694
    %v9721 = vmin.f32 %v9719, %v9701
    %v9722 = vmin.f32 %v9720, %v9708
    %v9723 = vmul.f32 %v8291, %v9325
    %v9724 = vmul.f32 %v8293, %v9327
    %v9725 = vmul.f32 %v8374, %v9329
    %v9726 = vmul.f32 %v8376, %v9331
    %v9727 = vmul.f32 %v8457, %v9333
    %v9728 = vmul.f32 %v8459, %v9335
    %v9729 = vmul.f32 %v8540, %v9337
    %v9730 = vmul.f32 %v8542, %v9339
    %v9731 = vmul.f32 %v8623, %v9341
    %v9732 = vmul.f32 %v8625, %v9343
    %v9733 = vmul.f32 %v8706, %v9345
    %v9734 = vmul.f32 %v8708, %v9347
    %v9735 = vmul.f32 %v8789, %v9349
    %v9736 = vmul.f32 %v8791, %v9351
    %v9737 = vmul.f32 %v8872, %v9353
    %v9738 = vmul.f32 %v8874, %v9355
    %v9739 = vsel %vm9596, %v9723, 0.0
    %v9740 = vrot.slane %v9739, 4
    %v9741 = vadd.f32 %v9739, %v9740
    %v9742 = vrot.slane %v9741, 2
    %v9743 = vadd.f32 %v9741, %v9742
    %v9744 = vrot.slane %v9743, 1
    %v9745 = vadd.f32 %v9743, %v9744
    %v9746 = vsel %vm9596, %v9724, 0.0
    %v9747 = vrot.slane %v9746, 4
    %v9748 = vadd.f32 %v9746, %v9747
    %v9749 = vrot.slane %v9748, 2
    %v9750 = vadd.f32 %v9748, %v9749
    %v9751 = vrot.slane %v9750, 1
    %v9752 = vadd.f32 %v9750, %v9751
    %v9753 = vsel %vm9596, %v9725, 0.0
    %v9754 = vrot.slane %v9753, 4
    %v9755 = vadd.f32 %v9753, %v9754
    %v9756 = vrot.slane %v9755, 2
    %v9757 = vadd.f32 %v9755, %v9756
    %v9758 = vrot.slane %v9757, 1
    %v9759 = vadd.f32 %v9757, %v9758
    %v9760 = vsel %vm9596, %v9726, 0.0
    %v9761 = vrot.slane %v9760, 4
    %v9762 = vadd.f32 %v9760, %v9761
    %v9763 = vrot.slane %v9762, 2
    %v9764 = vadd.f32 %v9762, %v9763
    %v9765 = vrot.slane %v9764, 1
    %v9766 = vadd.f32 %v9764, %v9765
    %v9767 = vsel %vm9596, %v9727, 0.0
    %v9768 = vrot.slane %v9767, 4
    %v9769 = vadd.f32 %v9767, %v9768
    %v9770 = vrot.slane %v9769, 2
    %v9771 = vadd.f32 %v9769, %v9770
    %v9772 = vrot.slane %v9771, 1
    %v9773 = vadd.f32 %v9771, %v9772
    %v9774 = vsel %vm9596, %v9728, 0.0
    %v9775 = vrot.slane %v9774, 4
    %v9776 = vadd.f32 %v9774, %v9775
    %v9777 = vrot.slane %v9776, 2
    %v9778 = vadd.f32 %v9776, %v9777
    %v9779 = vrot.slane %v9778, 1
    %v9780 = vadd.f32 %v9778, %v9779
    %v9781 = vsel %vm9596, %v9729, 0.0
    %v9782 = vrot.slane %v9781, 4
    %v9783 = vadd.f32 %v9781, %v9782
    %v9784 = vrot.slane %v9783, 2
    %v9785 = vadd.f32 %v9783, %v9784
    %v9786 = vrot.slane %v9785, 1
    %v9787 = vadd.f32 %v9785, %v9786
    %v9788 = vsel %vm9596, %v9730, 0.0
    %v9789 = vrot.slane %v9788, 4
    %v9790 = vadd.f32 %v9788, %v9789
    %v9791 = vrot.slane %v9790, 2
    %v9792 = vadd.f32 %v9790, %v9791
    %v9793 = vrot.slane %v9792, 1
    %v9794 = vadd.f32 %v9792, %v9793
    %v9795 = vsel %vm9596, %v9731, 0.0
    %v9796 = vrot.slane %v9795, 4
    %v9797 = vadd.f32 %v9795, %v9796
    %v9798 = vrot.slane %v9797, 2
    %v9799 = vadd.f32 %v9797, %v9798
    %v9800 = vrot.slane %v9799, 1
    %v9801 = vadd.f32 %v9799, %v9800
    %v9802 = vsel %vm9596, %v9732, 0.0
    %v9803 = vrot.slane %v9802, 4
    %v9804 = vadd.f32 %v9802, %v9803
    %v9805 = vrot.slane %v9804, 2
    %v9806 = vadd.f32 %v9804, %v9805
    %v9807 = vrot.slane %v9806, 1
    %v9808 = vadd.f32 %v9806, %v9807
    %v9809 = vsel %vm9596, %v9733, 0.0
    %v9810 = vrot.slane %v9809, 4
    %v9811 = vadd.f32 %v9809, %v9810
    %v9812 = vrot.slane %v9811, 2
    %v9813 = vadd.f32 %v9811, %v9812
    %v9814 = vrot.slane %v9813, 1
    %v9815 = vadd.f32 %v9813, %v9814
    %v9816 = vsel %vm9596, %v9734, 0.0
    %v9817 = vrot.slane %v9816, 4
    %v9818 = vadd.f32 %v9816, %v9817
    %v9819 = vrot.slane %v9818, 2
    %v9820 = vadd.f32 %v9818, %v9819
    %v9821 = vrot.slane %v9820, 1
    %v9822 = vadd.f32 %v9820, %v9821
    %v9823 = vsel %vm9596, %v9735, 0.0
    %v9824 = vrot.slane %v9823, 4
    %v9825 = vadd.f32 %v9823, %v9824
    %v9826 = vrot.slane %v9825, 2
    %v9827 = vadd.f32 %v9825, %v9826
    %v9828 = vrot.slane %v9827, 1
    %v9829 = vadd.f32 %v9827, %v9828
    %v9830 = vsel %vm9596, %v9736, 0.0
    %v9831 = vrot.slane %v9830, 4
    %v9832 = vadd.f32 %v9830, %v9831
    %v9833 = vrot.slane %v9832, 2
    %v9834 = vadd.f32 %v9832, %v9833
    %v9835 = vrot.slane %v9834, 1
    %v9836 = vadd.f32 %v9834, %v9835
    %v9837 = vsel %vm9596, %v9737, 0.0
    %v9838 = vrot.slane %v9837, 4
    %v9839 = vadd.f32 %v9837, %v9838
    %v9840 = vrot.slane %v9839, 2
    %v9841 = vadd.f32 %v9839, %v9840
    %v9842 = vrot.slane %v9841, 1
    %v9843 = vadd.f32 %v9841, %v9842
    %v9844 = vsel %vm9596, %v9738, 0.0
    %v9845 = vrot.slane %v9844, 4
    %v9846 = vadd.f32 %v9844, %v9845
    %v9847 = vrot.slane %v9846, 2
    %v9848 = vadd.f32 %v9846, %v9847
    %v9849 = vrot.slane %v9848, 1
    %v9850 = vadd.f32 %v9848, %v9849
    %v9851 = vmul.f32 %v9745, %v6528
    %v9852 = vmul.f32 %v9752, %v6532
    %v9853 = vmul.f32 %v9759, %v6539
    %v9854 = vmul.f32 %v9766, %v6543
    %v9855 = vmul.f32 %v9773, %v6550
    %v9856 = vmul.f32 %v9780, %v6554
    %v9857 = vmul.f32 %v9787, %v6561
    %v9858 = vmul.f32 %v9794, %v6565
    %v9859 = vmul.f32 %v9801, %v6572
    %v9860 = vmul.f32 %v9808, %v6576
    %v9861 = vmul.f32 %v9815, %v6583
    %v9862 = vmul.f32 %v9822, %v6587
    %v9863 = vmul.f32 %v9829, %v6594
    %v9864 = vmul.f32 %v9836, %v6598
    %v9865 = vmul.f32 %v9843, %v6605
    %v9866 = vmul.f32 %v9850, %v6609
    %v9867 = vadd.f32 %v9851, %v9853
    %v9868 = vadd.f32 %v9852, %v9854
    %v9869 = vadd.f32 %v9867, %v9855
    %v9870 = vadd.f32 %v9868, %v9856
    %v9871 = vadd.f32 %v9869, %v9857
    %v9872 = vadd.f32 %v9870, %v9858
    %v9873 = vadd.f32 %v9871, %v9859
    %v9874 = vadd.f32 %v9872, %v9860
    %v9875 = vadd.f32 %v9873, %v9861
    %v9876 = vadd.f32 %v9874, %v9862
    %v9877 = vadd.f32 %v9875, %v9863
    %v9878 = vadd.f32 %v9876, %v9864
    %v9879 = vadd.f32 %v9877, %v9865
    %v9880 = vadd.f32 %v9878, %v9866
    %v9897 = vrot.slane %v9325, 4
    %v9898 = vrot.slane %v9327, 4
    %v9899 = vrot.slane %v9329, 4
    %v9900 = vrot.slane %v9331, 4
    %v9901 = vrot.slane %v9333, 4
    %v9902 = vrot.slane %v9335, 4
    %v9903 = vrot.slane %v9337, 4
    %v9904 = vrot.slane %v9339, 4
    %v9905 = vrot.slane %v9341, 4
    %v9906 = vrot.slane %v9343, 4
    %v9907 = vrot.slane %v9345, 4
    %v9908 = vrot.slane %v9347, 4
    %v9909 = vrot.slane %v9349, 4
    %v9910 = vrot.slane %v9351, 4
    %v9911 = vrot.slane %v9353, 4
    %v9912 = vrot.slane %v9355, 4
    %v9929 = vmul.f32 %v8291, %v9897
    %v9930 = vmul.f32 %v8293, %v9898
    %v9931 = vmul.f32 %v8374, %v9899
    %v9932 = vmul.f32 %v8376, %v9900
    %v9933 = vmul.f32 %v8457, %v9901
    %v9934 = vmul.f32 %v8459, %v9902
    %v9935 = vmul.f32 %v8540, %v9903
    %v9936 = vmul.f32 %v8542, %v9904
    %v9937 = vmul.f32 %v8623, %v9905
    %v9938 = vmul.f32 %v8625, %v9906
    %v9939 = vmul.f32 %v8706, %v9907
    %v9940 = vmul.f32 %v8708, %v9908
    %v9941 = vmul.f32 %v8789, %v9909
    %v9942 = vmul.f32 %v8791, %v9910
    %v9943 = vmul.f32 %v8872, %v9911
    %v9944 = vmul.f32 %v8874, %v9912
    %v9961 = vrot.slane %v9929, 4
    %v9962 = vrot.slane %v9930, 4
    %v9963 = vrot.slane %v9931, 4
    %v9964 = vrot.slane %v9932, 4
    %v9965 = vrot.slane %v9933, 4
    %v9966 = vrot.slane %v9934, 4
    %v9967 = vrot.slane %v9935, 4
    %v9968 = vrot.slane %v9936, 4
    %v9969 = vrot.slane %v9937, 4
    %v9970 = vrot.slane %v9938, 4
    %v9971 = vrot.slane %v9939, 4
    %v9972 = vrot.slane %v9940, 4
    %v9973 = vrot.slane %v9941, 4
    %v9974 = vrot.slane %v9942, 4
    %v9975 = vrot.slane %v9943, 4
    %v9976 = vrot.slane %v9944, 4
    %v9993 = vsel %vm9596, %v9961, 0.0
    %v9994 = vrot.slane %v9993, 4
    %v9995 = vadd.f32 %v9993, %v9994
    %v9996 = vrot.slane %v9995, 2
    %v9997 = vadd.f32 %v9995, %v9996
    %v9998 = vrot.slane %v9997, 1
    %v9999 = vadd.f32 %v9997, %v9998
    %v10000 = vsel %vm9596, %v9962, 0.0
    %v10001 = vrot.slane %v10000, 4
    %v10002 = vadd.f32 %v10000, %v10001
    %v10003 = vrot.slane %v10002, 2
    %v10004 = vadd.f32 %v10002, %v10003
    %v10005 = vrot.slane %v10004, 1
    %v10006 = vadd.f32 %v10004, %v10005
    %v10007 = vsel %vm9596, %v9963, 0.0
    %v10008 = vrot.slane %v10007, 4
    %v10009 = vadd.f32 %v10007, %v10008
    %v10010 = vrot.slane %v10009, 2
    %v10011 = vadd.f32 %v10009, %v10010
    %v10012 = vrot.slane %v10011, 1
    %v10013 = vadd.f32 %v10011, %v10012
    %v10014 = vsel %vm9596, %v9964, 0.0
    %v10015 = vrot.slane %v10014, 4
    %v10016 = vadd.f32 %v10014, %v10015
    %v10017 = vrot.slane %v10016, 2
    %v10018 = vadd.f32 %v10016, %v10017
    %v10019 = vrot.slane %v10018, 1
    %v10020 = vadd.f32 %v10018, %v10019
    %v10021 = vsel %vm9596, %v9965, 0.0
    %v10022 = vrot.slane %v10021, 4
    %v10023 = vadd.f32 %v10021, %v10022
    %v10024 = vrot.slane %v10023, 2
    %v10025 = vadd.f32 %v10023, %v10024
    %v10026 = vrot.slane %v10025, 1
    %v10027 = vadd.f32 %v10025, %v10026
    %v10028 = vsel %vm9596, %v9966, 0.0
    %v10029 = vrot.slane %v10028, 4
    %v10030 = vadd.f32 %v10028, %v10029
    %v10031 = vrot.slane %v10030, 2
    %v10032 = vadd.f32 %v10030, %v10031
    %v10033 = vrot.slane %v10032, 1
    %v10034 = vadd.f32 %v10032, %v10033
    %v10035 = vsel %vm9596, %v9967, 0.0
    %v10036 = vrot.slane %v10035, 4
    %v10037 = vadd.f32 %v10035, %v10036
    %v10038 = vrot.slane %v10037, 2
    %v10039 = vadd.f32 %v10037, %v10038
    %v10040 = vrot.slane %v10039, 1
    %v10041 = vadd.f32 %v10039, %v10040
    %v10042 = vsel %vm9596, %v9968, 0.0
    %v10043 = vrot.slane %v10042, 4
    %v10044 = vadd.f32 %v10042, %v10043
    %v10045 = vrot.slane %v10044, 2
    %v10046 = vadd.f32 %v10044, %v10045
    %v10047 = vrot.slane %v10046, 1
    %v10048 = vadd.f32 %v10046, %v10047
    %v10049 = vsel %vm9596, %v9969, 0.0
    %v10050 = vrot.slane %v10049, 4
    %v10051 = vadd.f32 %v10049, %v10050
    %v10052 = vrot.slane %v10051, 2
    %v10053 = vadd.f32 %v10051, %v10052
    %v10054 = vrot.slane %v10053, 1
    %v10055 = vadd.f32 %v10053, %v10054
    %v10056 = vsel %vm9596, %v9970, 0.0
    %v10057 = vrot.slane %v10056, 4
    %v10058 = vadd.f32 %v10056, %v10057
    %v10059 = vrot.slane %v10058, 2
    %v10060 = vadd.f32 %v10058, %v10059
    %v10061 = vrot.slane %v10060, 1
    %v10062 = vadd.f32 %v10060, %v10061
    %v10063 = vsel %vm9596, %v9971, 0.0
    %v10064 = vrot.slane %v10063, 4
    %v10065 = vadd.f32 %v10063, %v10064
    %v10066 = vrot.slane %v10065, 2
    %v10067 = vadd.f32 %v10065, %v10066
    %v10068 = vrot.slane %v10067, 1
    %v10069 = vadd.f32 %v10067, %v10068
    %v10070 = vsel %vm9596, %v9972, 0.0
    %v10071 = vrot.slane %v10070, 4
    %v10072 = vadd.f32 %v10070, %v10071
    %v10073 = vrot.slane %v10072, 2
    %v10074 = vadd.f32 %v10072, %v10073
    %v10075 = vrot.slane %v10074, 1
    %v10076 = vadd.f32 %v10074, %v10075
    %v10077 = vsel %vm9596, %v9973, 0.0
    %v10078 = vrot.slane %v10077, 4
    %v10079 = vadd.f32 %v10077, %v10078
    %v10080 = vrot.slane %v10079, 2
    %v10081 = vadd.f32 %v10079, %v10080
    %v10082 = vrot.slane %v10081, 1
    %v10083 = vadd.f32 %v10081, %v10082
    %v10084 = vsel %vm9596, %v9974, 0.0
    %v10085 = vrot.slane %v10084, 4
    %v10086 = vadd.f32 %v10084, %v10085
    %v10087 = vrot.slane %v10086, 2
    %v10088 = vadd.f32 %v10086, %v10087
    %v10089 = vrot.slane %v10088, 1
    %v10090 = vadd.f32 %v10088, %v10089
    %v10091 = vsel %vm9596, %v9975, 0.0
    %v10092 = vrot.slane %v10091, 4
    %v10093 = vadd.f32 %v10091, %v10092
    %v10094 = vrot.slane %v10093, 2
    %v10095 = vadd.f32 %v10093, %v10094
    %v10096 = vrot.slane %v10095, 1
    %v10097 = vadd.f32 %v10095, %v10096
    %v10098 = vsel %vm9596, %v9976, 0.0
    %v10099 = vrot.slane %v10098, 4
    %v10100 = vadd.f32 %v10098, %v10099
    %v10101 = vrot.slane %v10100, 2
    %v10102 = vadd.f32 %v10100, %v10101
    %v10103 = vrot.slane %v10102, 1
    %v10104 = vadd.f32 %v10102, %v10103
    %v10105 = vmul.f32 %v9999, %v6528
    %v10106 = vmul.f32 %v10006, %v6532
    %v10107 = vmul.f32 %v10013, %v6539
    %v10108 = vmul.f32 %v10020, %v6543
    %v10109 = vmul.f32 %v10027, %v6550
    %v10110 = vmul.f32 %v10034, %v6554
    %v10111 = vmul.f32 %v10041, %v6561
    %v10112 = vmul.f32 %v10048, %v6565
    %v10113 = vmul.f32 %v10055, %v6572
    %v10114 = vmul.f32 %v10062, %v6576
    %v10115 = vmul.f32 %v10069, %v6583
    %v10116 = vmul.f32 %v10076, %v6587
    %v10117 = vmul.f32 %v10083, %v6594
    %v10118 = vmul.f32 %v10090, %v6598
    %v10119 = vmul.f32 %v10097, %v6605
    %v10120 = vmul.f32 %v10104, %v6609
    %v10121 = vadd.f32 %v10105, %v10107
    %v10122 = vadd.f32 %v10106, %v10108
    %v10123 = vadd.f32 %v10121, %v10109
    %v10124 = vadd.f32 %v10122, %v10110
    %v10125 = vadd.f32 %v10123, %v10111
    %v10126 = vadd.f32 %v10124, %v10112
    %v10127 = vadd.f32 %v10125, %v10113
    %v10128 = vadd.f32 %v10126, %v10114
    %v10129 = vadd.f32 %v10127, %v10115
    %v10130 = vadd.f32 %v10128, %v10116
    %v10131 = vadd.f32 %v10129, %v10117
    %v10132 = vadd.f32 %v10130, %v10118
    %v10133 = vadd.f32 %v10131, %v10119
    %v10134 = vadd.f32 %v10132, %v10120
    %v10137 = vrot.slane %v10133, 7
    %v10138 = vrot.slane %v10134, 7
    %v10141 = vsel %vm6379, %v9879, %v10137
    %v10142 = vsel %vm6379, %v9880, %v10138
    %v10145 = vrot.slane %v2558, 6
    %v10146 = vrot.slane %v2560, 6
    %v10151 = vrot.slane %v6380, 4
    %v10152 = vrot.slane %v6381, 4
    %v10157 = vrot.slane %v10141, 2
    %v10158 = vrot.slane %v10142, 2
    %v10161 = vsel %vm5834, %v874, %v10145
    %v10162 = vsel %vm5834, %v876, %v10146
    %v10163 = vsel %vm9596, %v10161, %v10151
    %v10164 = vsel %vm9596, %v10162, %v10152
    %vm10165 = vcmask 1045504
    %v10166 = vsel %vm10165, %v10163, %v10157
    %v10167 = vsel %vm10165, %v10164, %v10158
    %10168 = vst [vmem:[#allocation11] sm:$0xff] %v10166
    %10169 = vst [vmem:[#allocation11 + $0x8] sm:$0xff] %v10167
    %v10170 = vsel %vm6379, %v5959, %v9721
    %v10171 = vsel %vm6379, %v5960, %v9722
    %v10174 = vcombine.low %v10170, %v10171
    %v10176 = vunpack.c.l.s4 1983009808
    %v10177 = vunpack.c.0.s8 %v10176
    %v10178 = vlaneseq
    %v10179 = vshrl.u32 %v10178, 7
    %v10180 = vsub.s32 %v10177, %v10179
    %v10181 = vrot.slane %v10174, %v10180
    %10183 = vst [vmem:[#allocation12] sm:$0xf] %v10181
    // Predicated region
    $region42: #{tpu_custom_call.1} parent=1 // pred_check
      _
    $region43: #{tpu_custom_call.1} parent=1 // pred_check_branch
      %10185 = sbr.rel (0) target = $region45
    $region44: #{tpu_custom_call.1} parent=1 // pred_region
      %s10187 = ssub.s32 256, 256
      %10188 = vsyncadd [#allocation4], %s10187
      %s10190 = sshll.u32 [#allocation11], 4
      %s10191 = int_to_ptr.vmem [resolvable:$true] %s10190
      %10193 = dma.vmem_to_hbm [thread:$0]  %s10191, 256, %s5, [#allocation4]
    $region45: #{tpu_custom_call.1} parent=1 // pred_fallthru
      _
    // Predicated region
    $region46: #{tpu_custom_call.1} parent=1 // pred_check
      _
    $region47: #{tpu_custom_call.1} parent=1 // pred_check_branch
      %10195 = sbr.rel (0) target = $region49
    $region48: #{tpu_custom_call.1} parent=1 // pred_region
      %s10197 = ssub.s32 64, 64
      %10198 = vsyncadd [#allocation13], %s10197
      %s10200 = sshll.u32 [#allocation12], 4
      %s10201 = int_to_ptr.vmem [resolvable:$true] %s10200
      %10203 = dma.vmem_to_hbm [thread:$0]  %s10201, 64, %s6, [#allocation13]
    $region49: #{tpu_custom_call.1} parent=1 // pred_fallthru
      _
    // Predicated region
    $region50: #{tpu_custom_call.1} parent=1 // pred_check
      _
    $region51: #{tpu_custom_call.1} parent=1 // pred_check_branch
      %10205 = sbr.rel (0) target = $region53
    $region52: #{tpu_custom_call.1} parent=1 // pred_region
      %10206 = dma.done [#allocation4], 256
    $region53: #{tpu_custom_call.1} parent=1 // pred_fallthru
      _
    // Predicated region
    $region54: #{tpu_custom_call.1} parent=1 // pred_check
      _
    $region55: #{tpu_custom_call.1} parent=1 // pred_check_branch
      %10208 = sbr.rel (0) target = $region57
    $region56: #{tpu_custom_call.1} parent=1 // pred_region
      %10209 = dma.done [#allocation13], 64
    $region57: #{tpu_custom_call.1} parent=1 // pred_fallthru
      _
    %10210 = vsyncpa [#allocation3], 1
    %10211 = vsyncpa [#allocation6], 1
    %10212 = vsyncpa [#allocation9], 1
    %10213 = vsyncpa [#allocation4], 1
    %10214 = vsyncpa [#allocation13], 1

</llo_original>
